<compile_context>
chip_gen: v7x
topology: tpu7x:2x2x1
jax: 0.10.0
libtpu: 0.0.40
codegen_flags: <defaults>
</compile_context>

<pallas_src>
import functools

import jax
import jax.numpy as jnp
from jax.experimental import pallas as pl
from jax.experimental.pallas import tpu as pltpu

_LANE = 128  # TPU vreg lane width


def _softplus(x):
    # softplus(x) = log(1 + exp(x)) = logaddexp(x, 0), numerically stable.
    return jnp.logaddexp(x, 0.0)


def physnet_output_kernel(x_ref, w1_ref, b1_ref, w2_ref, b2_ref,
                          wo_ref, bo_ref, out_ref, *, matmul_dtype):
    # x block: [TM, F]; all weights are VMEM-resident for every grid step.
    x = x_ref[...].astype(jnp.float32)
    n_res = w1_ref.shape[0]
    for r in range(n_res):  # static unroll: small fixed number of residual blocks
        b1 = b1_ref[r]                                          # [1, F] f32
        b2 = b2_ref[r]                                          # [1, F] f32
        h = _softplus(x)                                        # pre-activation (f32, EUP)
        h = _softplus(
            jnp.dot(h.astype(matmul_dtype), w1_ref[r],
                    preferred_element_type=jnp.float32) + b1)   # Dense(F, F, act)
        h = (jnp.dot(h.astype(matmul_dtype), w2_ref[r],
                     preferred_element_type=jnp.float32) + b2)  # Dense(F, F)
        x = x + h                                               # residual add
    y = (jnp.dot(x.astype(matmul_dtype), wo_ref[...],
                 preferred_element_type=jnp.float32)
         + bo_ref[...])                                         # output Dense(F, P_pad)
    out_ref[...] = y.astype(out_ref.dtype)                      # lane-dense store


def _pick_tile_m(n):
    """Largest tile in {1024,...,8} that still leaves >= 2 grid steps
    (so the 'parallel' axis can shard across both v7x TensorCores)."""
    for cand in (1024, 512, 256, 128, 64, 32, 16, 8):
        if n >= 2 * cand:
            return cand
    return 8


def physnet_output_forward(x, params, *, tile_m=None, use_bf16_matmul=True):
    """x: [N, F] float32; params = (w1[R,F,F], b1[R,1,F], w2[R,F,F], b2[R,1,F],
    wo[F,P], bo[1,P]).  Returns [N, P]."""
    w1, b1, w2, b2, wo, bo = params
    N, F = x.shape
    R = w1.shape[0]
    P = wo.shape[1]

    # ---- lane-dense output head: zero-pad P up to a multiple of 128 lanes ----
    P_pad = ((P + _LANE - 1) // _LANE) * _LANE
    if P_pad != P:
        wo = jnp.pad(wo, ((0, 0), (0, P_pad - P)))
        bo = jnp.pad(bo, ((0, 0), (0, P_pad - P)))

    # ---- matmul-operand dtype (f32 accumulation always) ----
    matmul_dtype = jnp.bfloat16 if use_bf16_matmul else jnp.float32
    w1c = w1.astype(matmul_dtype)
    w2c = w2.astype(matmul_dtype)
    woc = wo.astype(matmul_dtype)
    b1c = b1.astype(jnp.float32)
    b2c = b2.astype(jnp.float32)
    boc = bo.astype(jnp.float32)

    # ---- atom tiling: big tiles, >= 2 grid steps where possible ----
    if tile_m is None:
        tile_m = _pick_tile_m(N)
    assert tile_m % 8 == 0, "tile_m must be a multiple of the 8-sublane height"
    N_pad = ((N + tile_m - 1) // tile_m) * tile_m
    xp = x if N_pad == N else jnp.pad(x, ((0, N_pad - N), (0, 0)))

    grid = (N_pad // tile_m,)
    kernel = functools.partial(physnet_output_kernel, matmul_dtype=matmul_dtype)

    out = pl.pallas_call(
        kernel,
        out_shape=jax.ShapeDtypeStruct((N_pad, P_pad), x.dtype),
        grid_spec=pltpu.PrefetchScalarGridSpec(
            num_scalar_prefetch=0,
            grid=grid,
            in_specs=[
                pl.BlockSpec((tile_m, F), lambda i: (i, 0)),   # x tile over atoms
                pl.BlockSpec((R, F, F), lambda i: (0, 0, 0)),  # W1 (all blocks)
                pl.BlockSpec((R, 1, F), lambda i: (0, 0, 0)),  # b1
                pl.BlockSpec((R, F, F), lambda i: (0, 0, 0)),  # W2
                pl.BlockSpec((R, 1, F), lambda i: (0, 0, 0)),  # b2
                pl.BlockSpec((F, P_pad), lambda i: (0, 0)),    # W_out (lane-padded)
                pl.BlockSpec((1, P_pad), lambda i: (0, 0)),    # b_out (lane-padded)
            ],
            out_specs=pl.BlockSpec((tile_m, P_pad), lambda i: (i, 0)),
        ),
        compiler_params=pltpu.CompilerParams(
            dimension_semantics=("parallel",)),
    )(xp, w1c, b1c, w2c, b2c, woc, boc)

    return out[:N, :P]


def reference_forward(x, params, *, use_bf16_matmul=True):
    """Pure-JAX reference of PhysNetOutput.forward for verification.

    Mirrors the kernel's dtype policy: optional bf16 matmul operands with f32
    accumulation, everything else in f32."""
    w1, b1, w2, b2, wo, bo = params
    md = jnp.bfloat16 if use_bf16_matmul else jnp.float32
    for r in range(w1.shape[0]):
        h = jax.nn.softplus(x)
        h = jax.nn.softplus(
            jnp.dot(h.astype(md), w1[r].astype(md),
                    preferred_element_type=jnp.float32) + b1[r, 0])
        h = (jnp.dot(h.astype(md), w2[r].astype(md),
                     preferred_element_type=jnp.float32) + b2[r, 0])
        x = x + h
    return (jnp.dot(x.astype(md), wo.astype(md),
                    preferred_element_type=jnp.float32) + bo[0])


def make_params(key, F, P, R):
    """Deterministic synthetic init.

    Residual Dense layers: small random weights/biases (stand-in for the
    PyTorch defaults; only shapes matter).  Output DenseWithCustomDist uses
    weight_init=zeros_ (and zero bias), faithfully reproduced here.
    """
    ks = jax.random.split(key, 4)
    scale = 1.0 / jnp.sqrt(F)
    w1 = jax.random.normal(ks[0], (R, F, F), jnp.float32) * scale
    b1 = jax.random.normal(ks[1], (R, 1, F), jnp.float32) * 0.1
    w2 = jax.random.normal(ks[2], (R, F, F), jnp.float32) * scale
    b2 = jax.random.normal(ks[3], (R, 1, F), jnp.float32) * 0.1
    wo = jnp.zeros((F, P), jnp.float32)   # torch.nn.init.zeros_ on output weight
    bo = jnp.zeros((1, P), jnp.float32)
    return (w1, b1, w2, b2, wo, bo)


if __name__ == "__main__":
    N_ATOMS = 1024  # number of atoms (tile_m=512 -> 2 grid steps, shards both v7x TCs)
    F = 32          # number_of_per_atom_features
    P = 8           # number_of_atomic_properties
    R = 2           # number_of_residuals_in_output

    key = jax.random.PRNGKey(0)
    k_x, k_p, k_w = jax.random.split(key, 3)

    x = jax.random.normal(k_x, (N_ATOMS, F), jnp.float32)
    params = make_params(k_p, F, P, R)

    # Faithful run (output weight is zero-initialised per the module __init__).
    out = jax.block_until_ready(physnet_output_forward(x, params))
    ref = reference_forward(x, params)
    assert out.shape == (N_ATOMS, P)
    assert jnp.allclose(out, ref, atol=1e-4, rtol=1e-4)

    # Non-zero output head, f32 matmul path: tight check of the full math.
    wo_nz = jax.random.normal(k_w, (F, P), jnp.float32) * (1.0 / jnp.sqrt(F))
    bo_nz = jnp.full((1, P), 0.25, jnp.float32)
    params_nz = params[:4] + (wo_nz, bo_nz)
    out_f32 = jax.block_until_ready(
        physnet_output_forward(x, params_nz, use_bf16_matmul=False))
    ref_f32 = reference_forward(x, params_nz, use_bf16_matmul=False)
    assert jnp.allclose(out_f32, ref_f32, atol=1e-5, rtol=1e-5)

    # Non-zero output head, default bf16-operand matmul path (f32 accumulation):
    # compared against the full-f32 reference with a bf16-appropriate tolerance.
    out_bf16 = jax.block_until_ready(physnet_output_forward(x, params_nz))
    assert jnp.allclose(out_bf16, ref_f32, atol=5e-2, rtol=5e-2)

    # Ragged atom count (exercises the N-padding path) with a modest tile.
    x_odd = jax.random.normal(k_x, (301, F), jnp.float32)
    out_odd = jax.block_until_ready(
        physnet_output_forward(x_odd, params_nz, use_bf16_matmul=False))
    ref_odd = reference_forward(x_odd, params_nz, use_bf16_matmul=False)
    assert out_odd.shape == (301, P)
    assert jnp.allclose(out_odd, ref_odd, atol=1e-5, rtol=1e-5)

    print("KERNEL_OK")
</pallas_src>

<mosaic_0001>
module attributes {stable_mosaic.version = 11 : i64} {
  func.func @physnet_output_kernel(%arg0: i32, %arg1: memref<512x32xf32, #tpu.memory_space<vmem>>, %arg2: memref<2x32x32xbf16, #tpu.memory_space<vmem>>, %arg3: memref<2x1x32xf32, #tpu.memory_space<vmem>>, %arg4: memref<2x32x32xbf16, #tpu.memory_space<vmem>>, %arg5: memref<2x1x32xf32, #tpu.memory_space<vmem>>, %arg6: memref<32x128xbf16, #tpu.memory_space<vmem>>, %arg7: memref<1x128xf32, #tpu.memory_space<vmem>>, %arg8: memref<512x128xf32, #tpu.memory_space<vmem>>) attributes {dimension_semantics = [#tpu.dimension_semantics<parallel>], iteration_bounds = array<i64: 2>, scalar_prefetch = 0 : i64, scratch_operands = 0 : i64, tpu.core_type = #tpu.core_type<tc>, window_params = [{transform_indices = @transform_0, window_bounds = array<i64: 512, 32>}, {pipeline_mode = #tpu.pipeline_mode<synchronous>, transform_indices = @transform_1, window_bounds = array<i64: 2, 32, 32>}, {pipeline_mode = #tpu.pipeline_mode<synchronous>, transform_indices = @transform_2, window_bounds = array<i64: 2, 1, 32>}, {pipeline_mode = #tpu.pipeline_mode<synchronous>, transform_indices = @transform_3, window_bounds = array<i64: 2, 32, 32>}, {pipeline_mode = #tpu.pipeline_mode<synchronous>, transform_indices = @transform_4, window_bounds = array<i64: 2, 1, 32>}, {pipeline_mode = #tpu.pipeline_mode<synchronous>, transform_indices = @transform_5, window_bounds = array<i64: 32, 128>}, {pipeline_mode = #tpu.pipeline_mode<synchronous>, transform_indices = @transform_6, window_bounds = array<i64: 1, 128>}, {transform_indices = @transform_7, window_bounds = array<i64: 512, 128>}]} {
    %c0 = arith.constant 0 : index
    %c0_0 = arith.constant 0 : index
    %0 = vector.load %arg1[%c0, %c0_0] : memref<512x32xf32, #tpu.memory_space<vmem>>, vector<512x32xf32>
    %c0_1 = arith.constant 0 : index
    %c0_2 = arith.constant 0 : index
    %c0_3 = arith.constant 0 : index
    %1 = vector.load %arg3[%c0_1, %c0_2, %c0_3] : memref<2x1x32xf32, #tpu.memory_space<vmem>>, vector<1x1x32xf32>
    %2 = vector.shape_cast %1 : vector<1x1x32xf32> to vector<1x32xf32>
    %c0_4 = arith.constant 0 : index
    %c0_5 = arith.constant 0 : index
    %c0_6 = arith.constant 0 : index
    %3 = vector.load %arg5[%c0_4, %c0_5, %c0_6] : memref<2x1x32xf32, #tpu.memory_space<vmem>>, vector<1x1x32xf32>
    %4 = vector.shape_cast %3 : vector<1x1x32xf32> to vector<1x32xf32>
    %cst = arith.constant 0.000000e+00 : f32
    %5 = vector.broadcast %cst : f32 to vector<512x32xf32>
    %6 = arith.maximumf %0, %5 : vector<512x32xf32>
    %7 = vector.broadcast %cst : f32 to vector<512x32xf32>
    %8 = arith.subf %0, %7 : vector<512x32xf32>
    %9 = arith.cmpf one, %8, %8 : vector<512x32xf32>
    %10 = vector.broadcast %cst : f32 to vector<512x32xf32>
    %11 = arith.addf %0, %10 : vector<512x32xf32>
    %12 = math.absf %8 : vector<512x32xf32>
    %cst_7 = arith.constant 0.000000e+00 : f32
    %13 = vector.broadcast %cst_7 : f32 to vector<512x32xf32>
    %14 = arith.subf %13, %12 : vector<512x32xf32>
    %15 = math.exp %14 : vector<512x32xf32>
    %16 = math.log1p %15 : vector<512x32xf32>
    %17 = arith.addf %6, %16 : vector<512x32xf32>
    %18 = arith.select %9, %11, %17 : vector<512x32xi1>, vector<512x32xf32>
    %19 = arith.truncf %18 : vector<512x32xf32> to vector<512x32xbf16>
    %c0_8 = arith.constant 0 : index
    %c0_9 = arith.constant 0 : index
    %c0_10 = arith.constant 0 : index
    %20 = vector.load %arg2[%c0_8, %c0_9, %c0_10] : memref<2x32x32xbf16, #tpu.memory_space<vmem>>, vector<1x32x32xbf16>
    %21 = vector.shape_cast %20 : vector<1x32x32xbf16> to vector<32x32xbf16>
    %cst_11 = arith.constant dense<0.000000e+00> : vector<512x32xf32>
    %22 = tpu.matmul %19, %21, %cst_11 {dimension_numbers = #tpu.dot_dimension_numbers<[1], [0], [0], [1], [0, 0, 1, 1], [], []>} : vector<512x32xbf16>, vector<32x32xbf16>, vector<512x32xf32> -> vector<512x32xf32>
    %23 = vector.broadcast %2 : vector<1x32xf32> to vector<512x32xf32>
    %24 = arith.addf %22, %23 : vector<512x32xf32>
    %cst_12 = arith.constant 0.000000e+00 : f32
    %25 = vector.broadcast %cst_12 : f32 to vector<512x32xf32>
    %26 = arith.maximumf %24, %25 : vector<512x32xf32>
    %27 = vector.broadcast %cst_12 : f32 to vector<512x32xf32>
    %28 = arith.subf %24, %27 : vector<512x32xf32>
    %29 = arith.cmpf one, %28, %28 : vector<512x32xf32>
    %30 = vector.broadcast %cst_12 : f32 to vector<512x32xf32>
    %31 = arith.addf %24, %30 : vector<512x32xf32>
    %32 = math.absf %28 : vector<512x32xf32>
    %cst_13 = arith.constant 0.000000e+00 : f32
    %33 = vector.broadcast %cst_13 : f32 to vector<512x32xf32>
    %34 = arith.subf %33, %32 : vector<512x32xf32>
    %35 = math.exp %34 : vector<512x32xf32>
    %36 = math.log1p %35 : vector<512x32xf32>
    %37 = arith.addf %26, %36 : vector<512x32xf32>
    %38 = arith.select %29, %31, %37 : vector<512x32xi1>, vector<512x32xf32>
    %39 = arith.truncf %38 : vector<512x32xf32> to vector<512x32xbf16>
    %c0_14 = arith.constant 0 : index
    %c0_15 = arith.constant 0 : index
    %c0_16 = arith.constant 0 : index
    %40 = vector.load %arg4[%c0_14, %c0_15, %c0_16] : memref<2x32x32xbf16, #tpu.memory_space<vmem>>, vector<1x32x32xbf16>
    %41 = vector.shape_cast %40 : vector<1x32x32xbf16> to vector<32x32xbf16>
    %cst_17 = arith.constant dense<0.000000e+00> : vector<512x32xf32>
    %42 = tpu.matmul %39, %41, %cst_17 {dimension_numbers = #tpu.dot_dimension_numbers<[1], [0], [0], [1], [0, 0, 1, 1], [], []>} : vector<512x32xbf16>, vector<32x32xbf16>, vector<512x32xf32> -> vector<512x32xf32>
    %43 = vector.broadcast %4 : vector<1x32xf32> to vector<512x32xf32>
    %44 = arith.addf %42, %43 : vector<512x32xf32>
    %45 = arith.addf %0, %44 : vector<512x32xf32>
    %c1 = arith.constant 1 : index
    %c0_18 = arith.constant 0 : index
    %c0_19 = arith.constant 0 : index
    %46 = vector.load %arg3[%c1, %c0_18, %c0_19] : memref<2x1x32xf32, #tpu.memory_space<vmem>>, vector<1x1x32xf32>
    %47 = vector.shape_cast %46 : vector<1x1x32xf32> to vector<1x32xf32>
    %c1_20 = arith.constant 1 : index
    %c0_21 = arith.constant 0 : index
    %c0_22 = arith.constant 0 : index
    %48 = vector.load %arg5[%c1_20, %c0_21, %c0_22] : memref<2x1x32xf32, #tpu.memory_space<vmem>>, vector<1x1x32xf32>
    %49 = vector.shape_cast %48 : vector<1x1x32xf32> to vector<1x32xf32>
    %cst_23 = arith.constant 0.000000e+00 : f32
    %50 = vector.broadcast %cst_23 : f32 to vector<512x32xf32>
    %51 = arith.maximumf %45, %50 : vector<512x32xf32>
    %52 = vector.broadcast %cst_23 : f32 to vector<512x32xf32>
    %53 = arith.subf %45, %52 : vector<512x32xf32>
    %54 = arith.cmpf one, %53, %53 : vector<512x32xf32>
    %55 = vector.broadcast %cst_23 : f32 to vector<512x32xf32>
    %56 = arith.addf %45, %55 : vector<512x32xf32>
    %57 = math.absf %53 : vector<512x32xf32>
    %cst_24 = arith.constant 0.000000e+00 : f32
    %58 = vector.broadcast %cst_24 : f32 to vector<512x32xf32>
    %59 = arith.subf %58, %57 : vector<512x32xf32>
    %60 = math.exp %59 : vector<512x32xf32>
    %61 = math.log1p %60 : vector<512x32xf32>
    %62 = arith.addf %51, %61 : vector<512x32xf32>
    %63 = arith.select %54, %56, %62 : vector<512x32xi1>, vector<512x32xf32>
    %64 = arith.truncf %63 : vector<512x32xf32> to vector<512x32xbf16>
    %c1_25 = arith.constant 1 : index
    %c0_26 = arith.constant 0 : index
    %c0_27 = arith.constant 0 : index
    %65 = vector.load %arg2[%c1_25, %c0_26, %c0_27] : memref<2x32x32xbf16, #tpu.memory_space<vmem>>, vector<1x32x32xbf16>
    %66 = vector.shape_cast %65 : vector<1x32x32xbf16> to vector<32x32xbf16>
    %cst_28 = arith.constant dense<0.000000e+00> : vector<512x32xf32>
    %67 = tpu.matmul %64, %66, %cst_28 {dimension_numbers = #tpu.dot_dimension_numbers<[1], [0], [0], [1], [0, 0, 1, 1], [], []>} : vector<512x32xbf16>, vector<32x32xbf16>, vector<512x32xf32> -> vector<512x32xf32>
    %68 = vector.broadcast %47 : vector<1x32xf32> to vector<512x32xf32>
    %69 = arith.addf %67, %68 : vector<512x32xf32>
    %cst_29 = arith.constant 0.000000e+00 : f32
    %70 = vector.broadcast %cst_29 : f32 to vector<512x32xf32>
    %71 = arith.maximumf %69, %70 : vector<512x32xf32>
    %72 = vector.broadcast %cst_29 : f32 to vector<512x32xf32>
    %73 = arith.subf %69, %72 : vector<512x32xf32>
    %74 = arith.cmpf one, %73, %73 : vector<512x32xf32>
    %75 = vector.broadcast %cst_29 : f32 to vector<512x32xf32>
    %76 = arith.addf %69, %75 : vector<512x32xf32>
    %77 = math.absf %73 : vector<512x32xf32>
    %cst_30 = arith.constant 0.000000e+00 : f32
    %78 = vector.broadcast %cst_30 : f32 to vector<512x32xf32>
    %79 = arith.subf %78, %77 : vector<512x32xf32>
    %80 = math.exp %79 : vector<512x32xf32>
    %81 = math.log1p %80 : vector<512x32xf32>
    %82 = arith.addf %71, %81 : vector<512x32xf32>
    %83 = arith.select %74, %76, %82 : vector<512x32xi1>, vector<512x32xf32>
    %84 = arith.truncf %83 : vector<512x32xf32> to vector<512x32xbf16>
    %c1_31 = arith.constant 1 : index
    %c0_32 = arith.constant 0 : index
    %c0_33 = arith.constant 0 : index
    %85 = vector.load %arg4[%c1_31, %c0_32, %c0_33] : memref<2x32x32xbf16, #tpu.memory_space<vmem>>, vector<1x32x32xbf16>
    %86 = vector.shape_cast %85 : vector<1x32x32xbf16> to vector<32x32xbf16>
    %cst_34 = arith.constant dense<0.000000e+00> : vector<512x32xf32>
    %87 = tpu.matmul %84, %86, %cst_34 {dimension_numbers = #tpu.dot_dimension_numbers<[1], [0], [0], [1], [0, 0, 1, 1], [], []>} : vector<512x32xbf16>, vector<32x32xbf16>, vector<512x32xf32> -> vector<512x32xf32>
    %88 = vector.broadcast %49 : vector<1x32xf32> to vector<512x32xf32>
    %89 = arith.addf %87, %88 : vector<512x32xf32>
    %90 = arith.addf %45, %89 : vector<512x32xf32>
    %91 = arith.truncf %90 : vector<512x32xf32> to vector<512x32xbf16>
    %c0_35 = arith.constant 0 : index
    %c0_36 = arith.constant 0 : index
    %92 = vector.load %arg6[%c0_35, %c0_36] : memref<32x128xbf16, #tpu.memory_space<vmem>>, vector<32x128xbf16>
    %cst_37 = arith.constant dense<0.000000e+00> : vector<512x128xf32>
    %93 = tpu.matmul %91, %92, %cst_37 {dimension_numbers = #tpu.dot_dimension_numbers<[1], [0], [0], [1], [0, 0, 1, 1], [], []>} : vector<512x32xbf16>, vector<32x128xbf16>, vector<512x128xf32> -> vector<512x128xf32>
    %c0_38 = arith.constant 0 : index
    %c0_39 = arith.constant 0 : index
    %94 = vector.load %arg7[%c0_38, %c0_39] : memref<1x128xf32, #tpu.memory_space<vmem>>, vector<1x128xf32>
    %95 = vector.broadcast %94 : vector<1x128xf32> to vector<512x128xf32>
    %96 = arith.addf %93, %95 : vector<512x128xf32>
    %c0_40 = arith.constant 0 : index
    %c0_41 = arith.constant 0 : index
    %97 = vector.load %arg8[%c0_40, %c0_41] : memref<512x128xf32, #tpu.memory_space<vmem>>, vector<512x128xf32>
    tpu.vector_store %arg8[%c0_40, %c0_41], %96 {strides = array<i32>} : memref<512x128xf32, #tpu.memory_space<vmem>>, vector<512x128xf32>,
    return
  }
  func.func @transform_0(%arg0: i32) -> (i32, i32) {
    %c0_i32 = arith.constant 0 : i32
    %c0_i32_0 = arith.constant 0 : i32
    return %arg0, %c0_i32 : i32, i32
  }
  func.func @transform_1(%arg0: i32) -> (i32, i32, i32) {
    %c0_i32 = arith.constant 0 : i32
    %c0_i32_0 = arith.constant 0 : i32
    %c0_i32_1 = arith.constant 0 : i32
    %c0_i32_2 = arith.constant 0 : i32
    return %c0_i32, %c0_i32_0, %c0_i32_1 : i32, i32, i32
  }
  func.func @transform_2(%arg0: i32) -> (i32, i32, i32) {
    %c0_i32 = arith.constant 0 : i32
    %c0_i32_0 = arith.constant 0 : i32
    %c0_i32_1 = arith.constant 0 : i32
    %c0_i32_2 = arith.constant 0 : i32
    return %c0_i32, %c0_i32_0, %c0_i32_1 : i32, i32, i32
  }
  func.func @transform_3(%arg0: i32) -> (i32, i32, i32) {
    %c0_i32 = arith.constant 0 : i32
    %c0_i32_0 = arith.constant 0 : i32
    %c0_i32_1 = arith.constant 0 : i32
    %c0_i32_2 = arith.constant 0 : i32
    return %c0_i32, %c0_i32_0, %c0_i32_1 : i32, i32, i32
  }
  func.func @transform_4(%arg0: i32) -> (i32, i32, i32) {
    %c0_i32 = arith.constant 0 : i32
    %c0_i32_0 = arith.constant 0 : i32
    %c0_i32_1 = arith.constant 0 : i32
    %c0_i32_2 = arith.constant 0 : i32
    return %c0_i32, %c0_i32_0, %c0_i32_1 : i32, i32, i32
  }
  func.func @transform_5(%arg0: i32) -> (i32, i32) {
    %c0_i32 = arith.constant 0 : i32
    %c0_i32_0 = arith.constant 0 : i32
    %c0_i32_1 = arith.constant 0 : i32
    return %c0_i32, %c0_i32_0 : i32, i32
  }
  func.func @transform_6(%arg0: i32) -> (i32, i32) {
    %c0_i32 = arith.constant 0 : i32
    %c0_i32_0 = arith.constant 0 : i32
    %c0_i32_1 = arith.constant 0 : i32
    return %c0_i32, %c0_i32_0 : i32, i32
  }
  func.func @transform_7(%arg0: i32) -> (i32, i32) {
    %c0_i32 = arith.constant 0 : i32
    %c0_i32_0 = arith.constant 0 : i32
    return %arg0, %c0_i32 : i32, i32
  }
}

</mosaic_0001>

<llo_original>
// kernel: tpu_custom_call.1
$region0: #{tpu_custom_call.1}
  #allocation0 [shape = 'u32[]', space=smem, size = 0x4, offset = 0x4, fixed_abs, tag = 'smem constant byte address 0x4 - core index']
  #allocation1 [shape = 'u32[144,128]{1,0:T(1,128)}', space=vmem, size = 0x12000, scoped, tag = 'internal scratch']
  %s0 = inlined_call_operand.vmem [shape: f32[1024,32], index: 0, kind: input, shape index: {}]
  %s1 = inlined_call_operand.vmem [shape: bf16[2,32,32], index: 1, kind: input, shape index: {}]
  %s2 = inlined_call_operand.vmem [shape: f32[2,1,32], index: 2, kind: input, shape index: {}]
  %s3 = inlined_call_operand.vmem [shape: bf16[2,32,32], index: 3, kind: input, shape index: {}]
  %s4 = inlined_call_operand.vmem [shape: f32[2,1,32], index: 4, kind: input, shape index: {}]
  %s5 = inlined_call_operand.vmem [shape: bf16[32,128], index: 5, kind: input, shape index: {}]
  %s6 = inlined_call_operand.vmem [shape: f32[1,128], index: 6, kind: input, shape index: {}]
  %s7 = inlined_call_operand.hbm [shape: f32[1024,128], index: 7, kind: output, shape index: {}]
  %s8 = sld [smem:[#allocation0]]
  $region61: #{tpu_custom_call.1} parent=0
    _
  %s10 = ssub.s32 1, %s8
  %s11 = scalar_select 0, %s10, %s8
  $region1: #{tpu_custom_call.1} parent=0
    #allocation2 [shape = 'u8[524288]{0}', space=vmem, size = 0x80000, scoped, tag = 'output window, operand 0']
    #allocation3 [shape = 's32[2]{0}', space=sflag, size = 0x8, scoped, tag = 'scoped memory for tpu_custom_call.1']
    %12 = vsyncpa [#allocation3], 0
    %s13 = scalar_lea.sflag [#allocation3], 1
    %14 = vsyncpa %s13, 0
    loop: start=0, step=1, limit=4
    $region2: #{tpu_custom_call.1} parent=1 // loop_pre_header
      _
    $region3: #{tpu_custom_call.1} parent=1 // loop_header
      %s16 = sphi 0, %s20
      %p17 = scmp.ge.s32.totalorder %s16, 4
      %s26 = sphi 0, %s28
      %s29 = sphi 0, %s26
      %s30 = sphi 0, %s29
      %s46 = sphi 0, %s30
      %s50 = sphi 0, %s50
      %s52 = sphi 0, %s50
      %s53 = sphi 0, %s52
      %s67 = sphi 0, %s53
      %s71 = sphi 0, %s71
      %s73 = sphi 0, %s71
      %s74 = sphi 0, %s73
      %s88 = sphi 0, %s74
      %s92 = sphi 0, %s92
      %s94 = sphi 0, %s92
      %s95 = sphi 0, %s94
      %s109 = sphi 0, %s95
      %s113 = sphi 0, %s113
      %s115 = sphi 0, %s113
      %s116 = sphi 0, %s115
      %s130 = sphi 0, %s116
      %s134 = sphi 0, %s134
      %s136 = sphi 0, %s134
      %s137 = sphi 0, %s136
      %s151 = sphi 0, %s137
      %s155 = sphi 0, %s155
      %s157 = sphi 0, %s155
      %s158 = sphi 0, %s157
      %s172 = sphi 0, %s158
      %s178 = sphi 0, %s180
      %s181 = sphi 0, %s178
      %s182 = sphi 0, %s181
      %s198 = sphi 0, %s182
    $region4: #{tpu_custom_call.1} parent=1 // loop_header_branch
      %19 = sbr.rel (%p17) target = $region8
    $region5: #{tpu_custom_call.1} parent=1 // loop_body
      %s21 = ssub.s32 %s16, 1
      %s22 = ssub.s32 %s16, 2
      %s23 = sadd.s32 %s16, 1
      %s24 = ssub.s32 %s16, %s23
      %p25 = scmp.eq.s32.totalorder %s24, 0
      %s27 = sadd.s32 %s26, 1
      %s28 = scalar_select %p25, %s26, %s27
      %p31 = pneg %p25
      %p32 = scmp.eq.s32.totalorder %s16, 1
      %p33 = por %p31, %p32
      %p34 = scmp.ne.s32.totalorder %s26, %s29
      %p35 = scmp.eq.s32.totalorder %s16, 0
      %p36 = por %p34, %p35
      %p37 = scmp.ne.s32.totalorder %s26, %s29
      %p38 = scmp.eq.s32.totalorder %s21, 1
      %p39 = por %p37, %p38
      %p40 = scmp.ne.s32.totalorder %s29, %s30
      %p41 = scmp.eq.s32.totalorder %s21, 0
      %p42 = por %p40, %p41
      %p43 = scmp.ne.s32.totalorder %s29, %s30
      %p44 = scmp.eq.s32.totalorder %s22, 1
      %p45 = por %p43, %p44
      %p47 = scmp.ne.s32.totalorder %s30, %s46
      %p48 = scmp.eq.s32.totalorder %s22, 0
      %p49 = por %p47, %p48
      %s51 = sadd.s32 %s50, 1
      %p54 = scmp.eq.s32.totalorder %s16, 1
      %p55 = scmp.ne.s32.totalorder %s50, %s52
      %p56 = scmp.eq.s32.totalorder %s16, 0
      %p57 = por %p55, %p56
      %p58 = scmp.ne.s32.totalorder %s50, %s52
      %p59 = scmp.eq.s32.totalorder %s21, 1
      %p60 = por %p58, %p59
      %p61 = scmp.ne.s32.totalorder %s52, %s53
      %p62 = scmp.eq.s32.totalorder %s21, 0
      %p63 = por %p61, %p62
      %p64 = scmp.ne.s32.totalorder %s52, %s53
      %p65 = scmp.eq.s32.totalorder %s22, 1
      %p66 = por %p64, %p65
      %p68 = scmp.ne.s32.totalorder %s53, %s67
      %p69 = scmp.eq.s32.totalorder %s22, 0
      %p70 = por %p68, %p69
      %s72 = sadd.s32 %s71, 1
      %p75 = scmp.eq.s32.totalorder %s16, 1
      %p76 = scmp.ne.s32.totalorder %s71, %s73
      %p77 = scmp.eq.s32.totalorder %s16, 0
      %p78 = por %p76, %p77
      %p79 = scmp.ne.s32.totalorder %s71, %s73
      %p80 = scmp.eq.s32.totalorder %s21, 1
      %p81 = por %p79, %p80
      %p82 = scmp.ne.s32.totalorder %s73, %s74
      %p83 = scmp.eq.s32.totalorder %s21, 0
      %p84 = por %p82, %p83
      %p85 = scmp.ne.s32.totalorder %s73, %s74
      %p86 = scmp.eq.s32.totalorder %s22, 1
      %p87 = por %p85, %p86
      %p89 = scmp.ne.s32.totalorder %s74, %s88
      %p90 = scmp.eq.s32.totalorder %s22, 0
      %p91 = por %p89, %p90
      %s93 = sadd.s32 %s92, 1
      %p96 = scmp.eq.s32.totalorder %s16, 1
      %p97 = scmp.ne.s32.totalorder %s92, %s94
      %p98 = scmp.eq.s32.totalorder %s16, 0
      %p99 = por %p97, %p98
      %p100 = scmp.ne.s32.totalorder %s92, %s94
      %p101 = scmp.eq.s32.totalorder %s21, 1
      %p102 = por %p100, %p101
      %p103 = scmp.ne.s32.totalorder %s94, %s95
      %p104 = scmp.eq.s32.totalorder %s21, 0
      %p105 = por %p103, %p104
      %p106 = scmp.ne.s32.totalorder %s94, %s95
      %p107 = scmp.eq.s32.totalorder %s22, 1
      %p108 = por %p106, %p107
      %p110 = scmp.ne.s32.totalorder %s95, %s109
      %p111 = scmp.eq.s32.totalorder %s22, 0
      %p112 = por %p110, %p111
      %s114 = sadd.s32 %s113, 1
      %p117 = scmp.eq.s32.totalorder %s16, 1
      %p118 = scmp.ne.s32.totalorder %s113, %s115
      %p119 = scmp.eq.s32.totalorder %s16, 0
      %p120 = por %p118, %p119
      %p121 = scmp.ne.s32.totalorder %s113, %s115
      %p122 = scmp.eq.s32.totalorder %s21, 1
      %p123 = por %p121, %p122
      %p124 = scmp.ne.s32.totalorder %s115, %s116
      %p125 = scmp.eq.s32.totalorder %s21, 0
      %p126 = por %p124, %p125
      %p127 = scmp.ne.s32.totalorder %s115, %s116
      %p128 = scmp.eq.s32.totalorder %s22, 1
      %p129 = por %p127, %p128
      %p131 = scmp.ne.s32.totalorder %s116, %s130
      %p132 = scmp.eq.s32.totalorder %s22, 0
      %p133 = por %p131, %p132
      %s135 = sadd.s32 %s134, 1
      %p138 = scmp.eq.s32.totalorder %s16, 1
      %p139 = scmp.ne.s32.totalorder %s134, %s136
      %p140 = scmp.eq.s32.totalorder %s16, 0
      %p141 = por %p139, %p140
      %p142 = scmp.ne.s32.totalorder %s134, %s136
      %p143 = scmp.eq.s32.totalorder %s21, 1
      %p144 = por %p142, %p143
      %p145 = scmp.ne.s32.totalorder %s136, %s137
      %p146 = scmp.eq.s32.totalorder %s21, 0
      %p147 = por %p145, %p146
      %p148 = scmp.ne.s32.totalorder %s136, %s137
      %p149 = scmp.eq.s32.totalorder %s22, 1
      %p150 = por %p148, %p149
      %p152 = scmp.ne.s32.totalorder %s137, %s151
      %p153 = scmp.eq.s32.totalorder %s22, 0
      %p154 = por %p152, %p153
      %s156 = sadd.s32 %s155, 1
      %p159 = scmp.eq.s32.totalorder %s16, 1
      %p160 = scmp.ne.s32.totalorder %s155, %s157
      %p161 = scmp.eq.s32.totalorder %s16, 0
      %p162 = por %p160, %p161
      %p163 = scmp.ne.s32.totalorder %s155, %s157
      %p164 = scmp.eq.s32.totalorder %s21, 1
      %p165 = por %p163, %p164
      %p166 = scmp.ne.s32.totalorder %s157, %s158
      %p167 = scmp.eq.s32.totalorder %s21, 0
      %p168 = por %p166, %p167
      %p169 = scmp.ne.s32.totalorder %s157, %s158
      %p170 = scmp.eq.s32.totalorder %s22, 1
      %p171 = por %p169, %p170
      %p173 = scmp.ne.s32.totalorder %s158, %s172
      %p174 = scmp.eq.s32.totalorder %s22, 0
      %p175 = por %p173, %p174
      %s176 = ssub.s32 %s16, %s23
      %p177 = scmp.eq.s32.totalorder %s176, 0
      %s179 = sadd.s32 %s178, 1
      %s180 = scalar_select %p177, %s178, %s179
      %p183 = pneg %p177
      %p184 = scmp.eq.s32.totalorder %s16, 1
      %p185 = por %p183, %p184
      %p186 = scmp.ne.s32.totalorder %s178, %s181
      %p187 = scmp.eq.s32.totalorder %s16, 0
      %p188 = por %p186, %p187
      %p189 = scmp.ne.s32.totalorder %s178, %s181
      %p190 = scmp.eq.s32.totalorder %s21, 1
      %p191 = por %p189, %p190
      %p192 = scmp.ne.s32.totalorder %s181, %s182
      %p193 = scmp.eq.s32.totalorder %s21, 0
      %p194 = por %p192, %p193
      %p195 = scmp.ne.s32.totalorder %s181, %s182
      %p196 = scmp.eq.s32.totalorder %s22, 1
      %p197 = por %p195, %p196
      %p199 = scmp.ne.s32.totalorder %s182, %s198
      %p200 = scmp.eq.s32.totalorder %s22, 0
      %p201 = por %p199, %p200
      %p202 = scmp.le.s32.totalorder 1, %s16
      %p203 = scmp.lt.s32.totalorder %s16, 3
      %p204 = pnand %p202, %p203
      %p205 = pneg %p204
      // Predicated region
      $region9: #{tpu_custom_call.1} parent=5 // pred_check
        _
      $region10: #{tpu_custom_call.1} parent=5 // pred_check_branch
        %207 = sbr.rel (%p204) target = $region12
      $region11: #{tpu_custom_call.1} parent=5 // pred_region
        %s208 = ssub.s32 %s16, 1
        // Predicated region
        $region13: #{tpu_custom_call.1} parent=11 // pred_check
          %p209 = pneg %p63
        $region14: #{tpu_custom_call.1} parent=11 // pred_check_branch
          %211 = sbr.rel (%p209) target = $region16
        $region15: #{tpu_custom_call.1} parent=11 // pred_region
          _
        $region16: #{tpu_custom_call.1} parent=11 // pred_fallthru
          _
        // Predicated region
        $region17: #{tpu_custom_call.1} parent=11 // pred_check
          %p212 = pneg %p84
        $region18: #{tpu_custom_call.1} parent=11 // pred_check_branch
          %214 = sbr.rel (%p212) target = $region20
        $region19: #{tpu_custom_call.1} parent=11 // pred_region
          _
        $region20: #{tpu_custom_call.1} parent=11 // pred_fallthru
          _
        // Predicated region
        $region21: #{tpu_custom_call.1} parent=11 // pred_check
          %p215 = pneg %p105
        $region22: #{tpu_custom_call.1} parent=11 // pred_check_branch
          %217 = sbr.rel (%p215) target = $region24
        $region23: #{tpu_custom_call.1} parent=11 // pred_region
          _
        $region24: #{tpu_custom_call.1} parent=11 // pred_fallthru
          _
        // Predicated region
        $region25: #{tpu_custom_call.1} parent=11 // pred_check
          %p218 = pneg %p126
        $region26: #{tpu_custom_call.1} parent=11 // pred_check_branch
          %220 = sbr.rel (%p218) target = $region28
        $region27: #{tpu_custom_call.1} parent=11 // pred_region
          _
        $region28: #{tpu_custom_call.1} parent=11 // pred_fallthru
          _
        // Predicated region
        $region29: #{tpu_custom_call.1} parent=11 // pred_check
          %p221 = pneg %p147
        $region30: #{tpu_custom_call.1} parent=11 // pred_check_branch
          %223 = sbr.rel (%p221) target = $region32
        $region31: #{tpu_custom_call.1} parent=11 // pred_region
          _
        $region32: #{tpu_custom_call.1} parent=11 // pred_fallthru
          _
        // Predicated region
        $region33: #{tpu_custom_call.1} parent=11 // pred_check
          %p224 = pneg %p168
        $region34: #{tpu_custom_call.1} parent=11 // pred_check_branch
          %226 = sbr.rel (%p224) target = $region36
        $region35: #{tpu_custom_call.1} parent=11 // pred_region
          _
        $region36: #{tpu_custom_call.1} parent=11 // pred_fallthru
          _
      $region12: #{tpu_custom_call.1} parent=5 // pred_fallthru
        _
      %p227 = scmp.lt.s32.totalorder %s16, 2
      // Predicated region
      $region37: #{tpu_custom_call.1} parent=5 // pred_check
        %p228 = pneg %p227
      $region38: #{tpu_custom_call.1} parent=5 // pred_check_branch
        %230 = sbr.rel (%p228) target = $region40
      $region39: #{tpu_custom_call.1} parent=5 // pred_region
        // Predicated region
        $region41: #{tpu_custom_call.1} parent=39 // pred_check
          %p231 = pneg %p36
        $region42: #{tpu_custom_call.1} parent=39 // pred_check_branch
          %233 = sbr.rel (%p231) target = $region44
        $region43: #{tpu_custom_call.1} parent=39 // pred_region
          %s234 = smul.u32 64, %s16
          %p235 = scmp.lt.s32.totalorder %s234, 127
          %s236 = scalar_select %p235, %s234, 127
          %s237 = smul.addr %s236, 8
          %s238 = scalar_lea.vmem %s0, %s237
          %s239 = smul.u32 64, %s16
        $region44: #{tpu_custom_call.1} parent=39 // pred_fallthru
          _
      $region40: #{tpu_custom_call.1} parent=5 // pred_fallthru
        _
      %p240 = scmp.le.s32.totalorder 1, %s16
      %p241 = scmp.lt.s32.totalorder %s16, 3
      %p242 = pnand %p240, %p241
      %p243 = pneg %p242
      // Predicated region
      $region45: #{tpu_custom_call.1} parent=5 // pred_check
        _
      $region46: #{tpu_custom_call.1} parent=5 // pred_check_branch
        %245 = sbr.rel (%p242) target = $region48
      $region47: #{tpu_custom_call.1} parent=5 // pred_region
        %s246 = ssub.s32 %s16, 1
        %s247 = smul.u32 64, %s21
        %p248 = scmp.lt.s32.totalorder %s247, 127
        %s249 = scalar_select %p248, %s247, 127
        %s250 = smul.addr %s249, 8
        %s251 = scalar_lea.vmem %s0, %s250
        %p252 = pneg %p42
        %p253 = pneg %p39
        %p254 = pneg %p63
        %p255 = pneg %p60
        %p256 = pneg %p84
        %p257 = pneg %p81
        %p258 = pneg %p105
        %p259 = pneg %p102
        %p260 = pneg %p126
        %p261 = pneg %p123
        %p262 = pneg %p147
        %p263 = pneg %p144
        %p264 = pneg %p168
        %p265 = pneg %p165
        %p266 = pneg %p194
        %p267 = pneg %p191
        %s268 = sand.u32 %s181, 1
        %s269 = scalar_lea.sflag [#allocation3], %s268
        %s270 = sand.u32 %s181, 1
        %s271 = smul.addr %s270, 512
        %s272 = scalar_lea.vmem [#allocation2], %s271
        %s273 = smul.u32 64, %s21
        %p274 = scmp.lt.s32.totalorder %s273, 127
        %s275 = scalar_select %p274, %s273, 127
        %s276 = smul.addr %s275, 8
        %s277 = scalar_lea.vmem %s0, %s276
        %s278 = smul.u32 64, %s21
        %s279 = smul.u32 64, %s21
        %v281 = vld [vmem:[%s277] sm:$0xff]
        %v282 = vld [vmem:[%s277 + $0x8] sm:$0xff]
        %v283 = vld [vmem:[%s277 + $0x10] sm:$0xff]
        %v284 = vld [vmem:[%s277 + $0x18] sm:$0xff]
        %v285 = vld [vmem:[%s277 + $0x20] sm:$0xff]
        %v286 = vld [vmem:[%s277 + $0x28] sm:$0xff]
        %v287 = vld [vmem:[%s277 + $0x30] sm:$0xff]
        %v288 = vld [vmem:[%s277 + $0x38] sm:$0xff]
        %v289 = vld [vmem:[%s277 + $0x40] sm:$0xff]
        %v290 = vld [vmem:[%s277 + $0x48] sm:$0xff]
        %v291 = vld [vmem:[%s277 + $0x50] sm:$0xff]
        %v292 = vld [vmem:[%s277 + $0x58] sm:$0xff]
        %v293 = vld [vmem:[%s277 + $0x60] sm:$0xff]
        %v294 = vld [vmem:[%s277 + $0x68] sm:$0xff]
        %v295 = vld [vmem:[%s277 + $0x70] sm:$0xff]
        %v296 = vld [vmem:[%s277 + $0x78] sm:$0xff]
        %v297 = vld [vmem:[%s277 + $0x80] sm:$0xff]
        %v298 = vld [vmem:[%s277 + $0x88] sm:$0xff]
        %v299 = vld [vmem:[%s277 + $0x90] sm:$0xff]
        %v300 = vld [vmem:[%s277 + $0x98] sm:$0xff]
        %v301 = vld [vmem:[%s277 + $0xa0] sm:$0xff]
        %v302 = vld [vmem:[%s277 + $0xa8] sm:$0xff]
        %v303 = vld [vmem:[%s277 + $0xb0] sm:$0xff]
        %v304 = vld [vmem:[%s277 + $0xb8] sm:$0xff]
        %v305 = vld [vmem:[%s277 + $0xc0] sm:$0xff]
        %v306 = vld [vmem:[%s277 + $0xc8] sm:$0xff]
        %v307 = vld [vmem:[%s277 + $0xd0] sm:$0xff]
        %v308 = vld [vmem:[%s277 + $0xd8] sm:$0xff]
        %v309 = vld [vmem:[%s277 + $0xe0] sm:$0xff]
        %v310 = vld [vmem:[%s277 + $0xe8] sm:$0xff]
        %v311 = vld [vmem:[%s277 + $0xf0] sm:$0xff]
        %v312 = vld [vmem:[%s277 + $0xf8] sm:$0xff]
        %v313 = vld [vmem:[%s277 + $0x100] sm:$0xff]
        %v314 = vld [vmem:[%s277 + $0x108] sm:$0xff]
        %v315 = vld [vmem:[%s277 + $0x110] sm:$0xff]
        %v316 = vld [vmem:[%s277 + $0x118] sm:$0xff]
        %v317 = vld [vmem:[%s277 + $0x120] sm:$0xff]
        %v318 = vld [vmem:[%s277 + $0x128] sm:$0xff]
        %v319 = vld [vmem:[%s277 + $0x130] sm:$0xff]
        %v320 = vld [vmem:[%s277 + $0x138] sm:$0xff]
        %v321 = vld [vmem:[%s277 + $0x140] sm:$0xff]
        %v322 = vld [vmem:[%s277 + $0x148] sm:$0xff]
        %v323 = vld [vmem:[%s277 + $0x150] sm:$0xff]
        %v324 = vld [vmem:[%s277 + $0x158] sm:$0xff]
        %v325 = vld [vmem:[%s277 + $0x160] sm:$0xff]
        %v326 = vld [vmem:[%s277 + $0x168] sm:$0xff]
        %v327 = vld [vmem:[%s277 + $0x170] sm:$0xff]
        %v328 = vld [vmem:[%s277 + $0x178] sm:$0xff]
        %v329 = vld [vmem:[%s277 + $0x180] sm:$0xff]
        %v330 = vld [vmem:[%s277 + $0x188] sm:$0xff]
        %v331 = vld [vmem:[%s277 + $0x190] sm:$0xff]
        %v332 = vld [vmem:[%s277 + $0x198] sm:$0xff]
        %v333 = vld [vmem:[%s277 + $0x1a0] sm:$0xff]
        %v334 = vld [vmem:[%s277 + $0x1a8] sm:$0xff]
        %v335 = vld [vmem:[%s277 + $0x1b0] sm:$0xff]
        %v336 = vld [vmem:[%s277 + $0x1b8] sm:$0xff]
        %v337 = vld [vmem:[%s277 + $0x1c0] sm:$0xff]
        %v338 = vld [vmem:[%s277 + $0x1c8] sm:$0xff]
        %v339 = vld [vmem:[%s277 + $0x1d0] sm:$0xff]
        %v340 = vld [vmem:[%s277 + $0x1d8] sm:$0xff]
        %v341 = vld [vmem:[%s277 + $0x1e0] sm:$0xff]
        %v342 = vld [vmem:[%s277 + $0x1e8] sm:$0xff]
        %v343 = vld [vmem:[%s277 + $0x1f0] sm:$0xff]
        %v344 = vld [vmem:[%s277 + $0x1f8] sm:$0xff]
        %v345 = vld [vmem:[%s2] sm:$0x1]
        %v346 = vld [vmem:[%s4] sm:$0x1]
        %v347 = vmax.f32 %v281, 0.0
        %v348 = vmax.f32 %v282, 0.0
        %v349 = vmax.f32 %v283, 0.0
        %v350 = vmax.f32 %v284, 0.0
        %v351 = vmax.f32 %v285, 0.0
        %v352 = vmax.f32 %v286, 0.0
        %v353 = vmax.f32 %v287, 0.0
        %v354 = vmax.f32 %v288, 0.0
        %v355 = vmax.f32 %v289, 0.0
        %v356 = vmax.f32 %v290, 0.0
        %v357 = vmax.f32 %v291, 0.0
        %v358 = vmax.f32 %v292, 0.0
        %v359 = vmax.f32 %v293, 0.0
        %v360 = vmax.f32 %v294, 0.0
        %v361 = vmax.f32 %v295, 0.0
        %v362 = vmax.f32 %v296, 0.0
        %v363 = vmax.f32 %v297, 0.0
        %v364 = vmax.f32 %v298, 0.0
        %v365 = vmax.f32 %v299, 0.0
        %v366 = vmax.f32 %v300, 0.0
        %v367 = vmax.f32 %v301, 0.0
        %v368 = vmax.f32 %v302, 0.0
        %v369 = vmax.f32 %v303, 0.0
        %v370 = vmax.f32 %v304, 0.0
        %v371 = vmax.f32 %v305, 0.0
        %v372 = vmax.f32 %v306, 0.0
        %v373 = vmax.f32 %v307, 0.0
        %v374 = vmax.f32 %v308, 0.0
        %v375 = vmax.f32 %v309, 0.0
        %v376 = vmax.f32 %v310, 0.0
        %v377 = vmax.f32 %v311, 0.0
        %v378 = vmax.f32 %v312, 0.0
        %v379 = vmax.f32 %v313, 0.0
        %v380 = vmax.f32 %v314, 0.0
        %v381 = vmax.f32 %v315, 0.0
        %v382 = vmax.f32 %v316, 0.0
        %v383 = vmax.f32 %v317, 0.0
        %v384 = vmax.f32 %v318, 0.0
        %v385 = vmax.f32 %v319, 0.0
        %v386 = vmax.f32 %v320, 0.0
        %v387 = vmax.f32 %v321, 0.0
        %v388 = vmax.f32 %v322, 0.0
        %v389 = vmax.f32 %v323, 0.0
        %v390 = vmax.f32 %v324, 0.0
        %v391 = vmax.f32 %v325, 0.0
        %v392 = vmax.f32 %v326, 0.0
        %v393 = vmax.f32 %v327, 0.0
        %v394 = vmax.f32 %v328, 0.0
        %v395 = vmax.f32 %v329, 0.0
        %v396 = vmax.f32 %v330, 0.0
        %v397 = vmax.f32 %v331, 0.0
        %v398 = vmax.f32 %v332, 0.0
        %v399 = vmax.f32 %v333, 0.0
        %v400 = vmax.f32 %v334, 0.0
        %v401 = vmax.f32 %v335, 0.0
        %v402 = vmax.f32 %v336, 0.0
        %v403 = vmax.f32 %v337, 0.0
        %v404 = vmax.f32 %v338, 0.0
        %v405 = vmax.f32 %v339, 0.0
        %v406 = vmax.f32 %v340, 0.0
        %v407 = vmax.f32 %v341, 0.0
        %v408 = vmax.f32 %v342, 0.0
        %v409 = vmax.f32 %v343, 0.0
        %v410 = vmax.f32 %v344, 0.0
        %vm411 = vcmp.ne.f32.partialorder %v281, %v281
        %vm412 = vcmp.ne.f32.partialorder %v282, %v282
        %vm413 = vcmp.ne.f32.partialorder %v283, %v283
        %vm414 = vcmp.ne.f32.partialorder %v284, %v284
        %vm415 = vcmp.ne.f32.partialorder %v285, %v285
        %vm416 = vcmp.ne.f32.partialorder %v286, %v286
        %vm417 = vcmp.ne.f32.partialorder %v287, %v287
        %vm418 = vcmp.ne.f32.partialorder %v288, %v288
        %vm419 = vcmp.ne.f32.partialorder %v289, %v289
        %vm420 = vcmp.ne.f32.partialorder %v290, %v290
        %vm421 = vcmp.ne.f32.partialorder %v291, %v291
        %vm422 = vcmp.ne.f32.partialorder %v292, %v292
        %vm423 = vcmp.ne.f32.partialorder %v293, %v293
        %vm424 = vcmp.ne.f32.partialorder %v294, %v294
        %vm425 = vcmp.ne.f32.partialorder %v295, %v295
        %vm426 = vcmp.ne.f32.partialorder %v296, %v296
        %vm427 = vcmp.ne.f32.partialorder %v297, %v297
        %vm428 = vcmp.ne.f32.partialorder %v298, %v298
        %vm429 = vcmp.ne.f32.partialorder %v299, %v299
        %vm430 = vcmp.ne.f32.partialorder %v300, %v300
        %vm431 = vcmp.ne.f32.partialorder %v301, %v301
        %vm432 = vcmp.ne.f32.partialorder %v302, %v302
        %vm433 = vcmp.ne.f32.partialorder %v303, %v303
        %vm434 = vcmp.ne.f32.partialorder %v304, %v304
        %vm435 = vcmp.ne.f32.partialorder %v305, %v305
        %vm436 = vcmp.ne.f32.partialorder %v306, %v306
        %vm437 = vcmp.ne.f32.partialorder %v307, %v307
        %vm438 = vcmp.ne.f32.partialorder %v308, %v308
        %vm439 = vcmp.ne.f32.partialorder %v309, %v309
        %vm440 = vcmp.ne.f32.partialorder %v310, %v310
        %vm441 = vcmp.ne.f32.partialorder %v311, %v311
        %vm442 = vcmp.ne.f32.partialorder %v312, %v312
        %vm443 = vcmp.ne.f32.partialorder %v313, %v313
        %vm444 = vcmp.ne.f32.partialorder %v314, %v314
        %vm445 = vcmp.ne.f32.partialorder %v315, %v315
        %vm446 = vcmp.ne.f32.partialorder %v316, %v316
        %vm447 = vcmp.ne.f32.partialorder %v317, %v317
        %vm448 = vcmp.ne.f32.partialorder %v318, %v318
        %vm449 = vcmp.ne.f32.partialorder %v319, %v319
        %vm450 = vcmp.ne.f32.partialorder %v320, %v320
        %vm451 = vcmp.ne.f32.partialorder %v321, %v321
        %vm452 = vcmp.ne.f32.partialorder %v322, %v322
        %vm453 = vcmp.ne.f32.partialorder %v323, %v323
        %vm454 = vcmp.ne.f32.partialorder %v324, %v324
        %vm455 = vcmp.ne.f32.partialorder %v325, %v325
        %vm456 = vcmp.ne.f32.partialorder %v326, %v326
        %vm457 = vcmp.ne.f32.partialorder %v327, %v327
        %vm458 = vcmp.ne.f32.partialorder %v328, %v328
        %vm459 = vcmp.ne.f32.partialorder %v329, %v329
        %vm460 = vcmp.ne.f32.partialorder %v330, %v330
        %vm461 = vcmp.ne.f32.partialorder %v331, %v331
        %vm462 = vcmp.ne.f32.partialorder %v332, %v332
        %vm463 = vcmp.ne.f32.partialorder %v333, %v333
        %vm464 = vcmp.ne.f32.partialorder %v334, %v334
        %vm465 = vcmp.ne.f32.partialorder %v335, %v335
        %vm466 = vcmp.ne.f32.partialorder %v336, %v336
        %vm467 = vcmp.ne.f32.partialorder %v337, %v337
        %vm468 = vcmp.ne.f32.partialorder %v338, %v338
        %vm469 = vcmp.ne.f32.partialorder %v339, %v339
        %vm470 = vcmp.ne.f32.partialorder %v340, %v340
        %vm471 = vcmp.ne.f32.partialorder %v341, %v341
        %vm472 = vcmp.ne.f32.partialorder %v342, %v342
        %vm473 = vcmp.ne.f32.partialorder %v343, %v343
        %vm474 = vcmp.ne.f32.partialorder %v344, %v344
        %v475 = vadd.f32 %v281, 0.0
        %v476 = vadd.f32 %v282, 0.0
        %v477 = vadd.f32 %v283, 0.0
        %v478 = vadd.f32 %v284, 0.0
        %v479 = vadd.f32 %v285, 0.0
        %v480 = vadd.f32 %v286, 0.0
        %v481 = vadd.f32 %v287, 0.0
        %v482 = vadd.f32 %v288, 0.0
        %v483 = vadd.f32 %v289, 0.0
        %v484 = vadd.f32 %v290, 0.0
        %v485 = vadd.f32 %v291, 0.0
        %v486 = vadd.f32 %v292, 0.0
        %v487 = vadd.f32 %v293, 0.0
        %v488 = vadd.f32 %v294, 0.0
        %v489 = vadd.f32 %v295, 0.0
        %v490 = vadd.f32 %v296, 0.0
        %v491 = vadd.f32 %v297, 0.0
        %v492 = vadd.f32 %v298, 0.0
        %v493 = vadd.f32 %v299, 0.0
        %v494 = vadd.f32 %v300, 0.0
        %v495 = vadd.f32 %v301, 0.0
        %v496 = vadd.f32 %v302, 0.0
        %v497 = vadd.f32 %v303, 0.0
        %v498 = vadd.f32 %v304, 0.0
        %v499 = vadd.f32 %v305, 0.0
        %v500 = vadd.f32 %v306, 0.0
        %v501 = vadd.f32 %v307, 0.0
        %v502 = vadd.f32 %v308, 0.0
        %v503 = vadd.f32 %v309, 0.0
        %v504 = vadd.f32 %v310, 0.0
        %v505 = vadd.f32 %v311, 0.0
        %v506 = vadd.f32 %v312, 0.0
        %v507 = vadd.f32 %v313, 0.0
        %v508 = vadd.f32 %v314, 0.0
        %v509 = vadd.f32 %v315, 0.0
        %v510 = vadd.f32 %v316, 0.0
        %v511 = vadd.f32 %v317, 0.0
        %v512 = vadd.f32 %v318, 0.0
        %v513 = vadd.f32 %v319, 0.0
        %v514 = vadd.f32 %v320, 0.0
        %v515 = vadd.f32 %v321, 0.0
        %v516 = vadd.f32 %v322, 0.0
        %v517 = vadd.f32 %v323, 0.0
        %v518 = vadd.f32 %v324, 0.0
        %v519 = vadd.f32 %v325, 0.0
        %v520 = vadd.f32 %v326, 0.0
        %v521 = vadd.f32 %v327, 0.0
        %v522 = vadd.f32 %v328, 0.0
        %v523 = vadd.f32 %v329, 0.0
        %v524 = vadd.f32 %v330, 0.0
        %v525 = vadd.f32 %v331, 0.0
        %v526 = vadd.f32 %v332, 0.0
        %v527 = vadd.f32 %v333, 0.0
        %v528 = vadd.f32 %v334, 0.0
        %v529 = vadd.f32 %v335, 0.0
        %v530 = vadd.f32 %v336, 0.0
        %v531 = vadd.f32 %v337, 0.0
        %v532 = vadd.f32 %v338, 0.0
        %v533 = vadd.f32 %v339, 0.0
        %v534 = vadd.f32 %v340, 0.0
        %v535 = vadd.f32 %v341, 0.0
        %v536 = vadd.f32 %v342, 0.0
        %v537 = vadd.f32 %v343, 0.0
        %v538 = vadd.f32 %v344, 0.0
        %v539 = vand.u32 2147483647, %v281
        %v540 = vand.u32 2147483647, %v282
        %v541 = vand.u32 2147483647, %v283
        %v542 = vand.u32 2147483647, %v284
        %v543 = vand.u32 2147483647, %v285
        %v544 = vand.u32 2147483647, %v286
        %v545 = vand.u32 2147483647, %v287
        %v546 = vand.u32 2147483647, %v288
        %v547 = vand.u32 2147483647, %v289
        %v548 = vand.u32 2147483647, %v290
        %v549 = vand.u32 2147483647, %v291
        %v550 = vand.u32 2147483647, %v292
        %v551 = vand.u32 2147483647, %v293
        %v552 = vand.u32 2147483647, %v294
        %v553 = vand.u32 2147483647, %v295
        %v554 = vand.u32 2147483647, %v296
        %v555 = vand.u32 2147483647, %v297
        %v556 = vand.u32 2147483647, %v298
        %v557 = vand.u32 2147483647, %v299
        %v558 = vand.u32 2147483647, %v300
        %v559 = vand.u32 2147483647, %v301
        %v560 = vand.u32 2147483647, %v302
        %v561 = vand.u32 2147483647, %v303
        %v562 = vand.u32 2147483647, %v304
        %v563 = vand.u32 2147483647, %v305
        %v564 = vand.u32 2147483647, %v306
        %v565 = vand.u32 2147483647, %v307
        %v566 = vand.u32 2147483647, %v308
        %v567 = vand.u32 2147483647, %v309
        %v568 = vand.u32 2147483647, %v310
        %v569 = vand.u32 2147483647, %v311
        %v570 = vand.u32 2147483647, %v312
        %v571 = vand.u32 2147483647, %v313
        %v572 = vand.u32 2147483647, %v314
        %v573 = vand.u32 2147483647, %v315
        %v574 = vand.u32 2147483647, %v316
        %v575 = vand.u32 2147483647, %v317
        %v576 = vand.u32 2147483647, %v318
        %v577 = vand.u32 2147483647, %v319
        %v578 = vand.u32 2147483647, %v320
        %v579 = vand.u32 2147483647, %v321
        %v580 = vand.u32 2147483647, %v322
        %v581 = vand.u32 2147483647, %v323
        %v582 = vand.u32 2147483647, %v324
        %v583 = vand.u32 2147483647, %v325
        %v584 = vand.u32 2147483647, %v326
        %v585 = vand.u32 2147483647, %v327
        %v586 = vand.u32 2147483647, %v328
        %v587 = vand.u32 2147483647, %v329
        %v588 = vand.u32 2147483647, %v330
        %v589 = vand.u32 2147483647, %v331
        %v590 = vand.u32 2147483647, %v332
        %v591 = vand.u32 2147483647, %v333
        %v592 = vand.u32 2147483647, %v334
        %v593 = vand.u32 2147483647, %v335
        %v594 = vand.u32 2147483647, %v336
        %v595 = vand.u32 2147483647, %v337
        %v596 = vand.u32 2147483647, %v338
        %v597 = vand.u32 2147483647, %v339
        %v598 = vand.u32 2147483647, %v340
        %v599 = vand.u32 2147483647, %v341
        %v600 = vand.u32 2147483647, %v342
        %v601 = vand.u32 2147483647, %v343
        %v602 = vand.u32 2147483647, %v344
        %v603 = vsub.f32 0.0, %v539
        %v604 = vsub.f32 0.0, %v540
        %v605 = vsub.f32 0.0, %v541
        %v606 = vsub.f32 0.0, %v542
        %v607 = vsub.f32 0.0, %v543
        %v608 = vsub.f32 0.0, %v544
        %v609 = vsub.f32 0.0, %v545
        %v610 = vsub.f32 0.0, %v546
        %v611 = vsub.f32 0.0, %v547
        %v612 = vsub.f32 0.0, %v548
        %v613 = vsub.f32 0.0, %v549
        %v614 = vsub.f32 0.0, %v550
        %v615 = vsub.f32 0.0, %v551
        %v616 = vsub.f32 0.0, %v552
        %v617 = vsub.f32 0.0, %v553
        %v618 = vsub.f32 0.0, %v554
        %v619 = vsub.f32 0.0, %v555
        %v620 = vsub.f32 0.0, %v556
        %v621 = vsub.f32 0.0, %v557
        %v622 = vsub.f32 0.0, %v558
        %v623 = vsub.f32 0.0, %v559
        %v624 = vsub.f32 0.0, %v560
        %v625 = vsub.f32 0.0, %v561
        %v626 = vsub.f32 0.0, %v562
        %v627 = vsub.f32 0.0, %v563
        %v628 = vsub.f32 0.0, %v564
        %v629 = vsub.f32 0.0, %v565
        %v630 = vsub.f32 0.0, %v566
        %v631 = vsub.f32 0.0, %v567
        %v632 = vsub.f32 0.0, %v568
        %v633 = vsub.f32 0.0, %v569
        %v634 = vsub.f32 0.0, %v570
        %v635 = vsub.f32 0.0, %v571
        %v636 = vsub.f32 0.0, %v572
        %v637 = vsub.f32 0.0, %v573
        %v638 = vsub.f32 0.0, %v574
        %v639 = vsub.f32 0.0, %v575
        %v640 = vsub.f32 0.0, %v576
        %v641 = vsub.f32 0.0, %v577
        %v642 = vsub.f32 0.0, %v578
        %v643 = vsub.f32 0.0, %v579
        %v644 = vsub.f32 0.0, %v580
        %v645 = vsub.f32 0.0, %v581
        %v646 = vsub.f32 0.0, %v582
        %v647 = vsub.f32 0.0, %v583
        %v648 = vsub.f32 0.0, %v584
        %v649 = vsub.f32 0.0, %v585
        %v650 = vsub.f32 0.0, %v586
        %v651 = vsub.f32 0.0, %v587
        %v652 = vsub.f32 0.0, %v588
        %v653 = vsub.f32 0.0, %v589
        %v654 = vsub.f32 0.0, %v590
        %v655 = vsub.f32 0.0, %v591
        %v656 = vsub.f32 0.0, %v592
        %v657 = vsub.f32 0.0, %v593
        %v658 = vsub.f32 0.0, %v594
        %v659 = vsub.f32 0.0, %v595
        %v660 = vsub.f32 0.0, %v596
        %v661 = vsub.f32 0.0, %v597
        %v662 = vsub.f32 0.0, %v598
        %v663 = vsub.f32 0.0, %v599
        %v664 = vsub.f32 0.0, %v600
        %v665 = vsub.f32 0.0, %v601
        %v666 = vsub.f32 0.0, %v602
        %v667 = vmul.f32 %v603, 1.442695
        %v668 = vpow.pop %v667
        %v669 = vmul.f32 %v604, 1.442695
        %v670 = vpow.pop %v669
        %v671 = vmul.f32 %v605, 1.442695
        %v672 = vpow.pop %v671
        %v673 = vmul.f32 %v606, 1.442695
        %v674 = vpow.pop %v673
        %v675 = vmul.f32 %v607, 1.442695
        %v676 = vpow.pop %v675
        %v677 = vmul.f32 %v608, 1.442695
        %v678 = vpow.pop %v677
        %v679 = vmul.f32 %v609, 1.442695
        %v680 = vpow.pop %v679
        %v681 = vmul.f32 %v610, 1.442695
        %v682 = vpow.pop %v681
        %v683 = vmul.f32 %v611, 1.442695
        %v684 = vpow.pop %v683
        %v685 = vmul.f32 %v612, 1.442695
        %v686 = vpow.pop %v685
        %v687 = vmul.f32 %v613, 1.442695
        %v688 = vpow.pop %v687
        %v689 = vmul.f32 %v614, 1.442695
        %v690 = vpow.pop %v689
        %v691 = vmul.f32 %v615, 1.442695
        %v692 = vpow.pop %v691
        %v693 = vmul.f32 %v616, 1.442695
        %v694 = vpow.pop %v693
        %v695 = vmul.f32 %v617, 1.442695
        %v696 = vpow.pop %v695
        %v697 = vmul.f32 %v618, 1.442695
        %v698 = vpow.pop %v697
        %v699 = vmul.f32 %v619, 1.442695
        %v700 = vpow.pop %v699
        %v701 = vmul.f32 %v620, 1.442695
        %v702 = vpow.pop %v701
        %v703 = vmul.f32 %v621, 1.442695
        %v704 = vpow.pop %v703
        %v705 = vmul.f32 %v622, 1.442695
        %v706 = vpow.pop %v705
        %v707 = vmul.f32 %v623, 1.442695
        %v708 = vpow.pop %v707
        %v709 = vmul.f32 %v624, 1.442695
        %v710 = vpow.pop %v709
        %v711 = vmul.f32 %v625, 1.442695
        %v712 = vpow.pop %v711
        %v713 = vmul.f32 %v626, 1.442695
        %v714 = vpow.pop %v713
        %v715 = vmul.f32 %v627, 1.442695
        %v716 = vpow.pop %v715
        %v717 = vmul.f32 %v628, 1.442695
        %v718 = vpow.pop %v717
        %v719 = vmul.f32 %v629, 1.442695
        %v720 = vpow.pop %v719
        %v721 = vmul.f32 %v630, 1.442695
        %v722 = vpow.pop %v721
        %v723 = vmul.f32 %v631, 1.442695
        %v724 = vpow.pop %v723
        %v725 = vmul.f32 %v632, 1.442695
        %v726 = vpow.pop %v725
        %v727 = vmul.f32 %v633, 1.442695
        %v728 = vpow.pop %v727
        %v729 = vmul.f32 %v634, 1.442695
        %v730 = vpow.pop %v729
        %v731 = vmul.f32 %v635, 1.442695
        %v732 = vpow.pop %v731
        %v733 = vmul.f32 %v636, 1.442695
        %v734 = vpow.pop %v733
        %v735 = vmul.f32 %v637, 1.442695
        %v736 = vpow.pop %v735
        %v737 = vmul.f32 %v638, 1.442695
        %v738 = vpow.pop %v737
        %v739 = vmul.f32 %v639, 1.442695
        %v740 = vpow.pop %v739
        %v741 = vmul.f32 %v640, 1.442695
        %v742 = vpow.pop %v741
        %v743 = vmul.f32 %v641, 1.442695
        %v744 = vpow.pop %v743
        %v745 = vmul.f32 %v642, 1.442695
        %v746 = vpow.pop %v745
        %v747 = vmul.f32 %v643, 1.442695
        %v748 = vpow.pop %v747
        %v749 = vmul.f32 %v644, 1.442695
        %v750 = vpow.pop %v749
        %v751 = vmul.f32 %v645, 1.442695
        %v752 = vpow.pop %v751
        %v753 = vmul.f32 %v646, 1.442695
        %v754 = vpow.pop %v753
        %v755 = vmul.f32 %v647, 1.442695
        %v756 = vpow.pop %v755
        %v757 = vmul.f32 %v648, 1.442695
        %v758 = vpow.pop %v757
        %v759 = vmul.f32 %v649, 1.442695
        %v760 = vpow.pop %v759
        %v761 = vmul.f32 %v650, 1.442695
        %v762 = vpow.pop %v761
        %v763 = vmul.f32 %v651, 1.442695
        %v764 = vpow.pop %v763
        %v765 = vmul.f32 %v652, 1.442695
        %v766 = vpow.pop %v765
        %v767 = vmul.f32 %v653, 1.442695
        %v768 = vpow.pop %v767
        %v769 = vmul.f32 %v654, 1.442695
        %v770 = vpow.pop %v769
        %v771 = vmul.f32 %v655, 1.442695
        %v772 = vpow.pop %v771
        %v773 = vmul.f32 %v656, 1.442695
        %v774 = vpow.pop %v773
        %v775 = vmul.f32 %v657, 1.442695
        %v776 = vpow.pop %v775
        %v777 = vmul.f32 %v658, 1.442695
        %v778 = vpow.pop %v777
        %v779 = vmul.f32 %v659, 1.442695
        %v780 = vpow.pop %v779
        %v781 = vmul.f32 %v660, 1.442695
        %v782 = vpow.pop %v781
        %v783 = vmul.f32 %v661, 1.442695
        %v784 = vpow.pop %v783
        %v785 = vmul.f32 %v662, 1.442695
        %v786 = vpow.pop %v785
        %v787 = vmul.f32 %v663, 1.442695
        %v788 = vpow.pop %v787
        %v789 = vmul.f32 %v664, 1.442695
        %v790 = vpow.pop %v789
        %v791 = vmul.f32 %v665, 1.442695
        %v792 = vpow.pop %v791
        %v793 = vmul.f32 %v666, 1.442695
        %v794 = vpow.pop %v793
        %v795 = vadd.f32 %v668, 1.0
        %v796 = vlog2.pop %v795
        %v797 = vmul.f32 %v796, 0.6931472
        %v798 = vmul.f32 -0.5, %v668
        %v799 = vadd.f32 %v798, 1.0
        %v800 = vmul.f32 %v799, %v668
        %v801 = vand.u32 2147483647, %v668
        %vm802 = vcmp.lt.f32.partialorder %v801, 0.0004427343
        %v803 = vsel %vm802, %v800, %v797
        %v804 = vadd.f32 %v670, 1.0
        %v805 = vlog2.pop %v804
        %v806 = vmul.f32 %v805, 0.6931472
        %v807 = vmul.f32 -0.5, %v670
        %v808 = vadd.f32 %v807, 1.0
        %v809 = vmul.f32 %v808, %v670
        %v810 = vand.u32 2147483647, %v670
        %vm811 = vcmp.lt.f32.partialorder %v810, 0.0004427343
        %v812 = vsel %vm811, %v809, %v806
        %v813 = vadd.f32 %v672, 1.0
        %v814 = vlog2.pop %v813
        %v815 = vmul.f32 %v814, 0.6931472
        %v816 = vmul.f32 -0.5, %v672
        %v817 = vadd.f32 %v816, 1.0
        %v818 = vmul.f32 %v817, %v672
        %v819 = vand.u32 2147483647, %v672
        %vm820 = vcmp.lt.f32.partialorder %v819, 0.0004427343
        %v821 = vsel %vm820, %v818, %v815
        %v822 = vadd.f32 %v674, 1.0
        %v823 = vlog2.pop %v822
        %v824 = vmul.f32 %v823, 0.6931472
        %v825 = vmul.f32 -0.5, %v674
        %v826 = vadd.f32 %v825, 1.0
        %v827 = vmul.f32 %v826, %v674
        %v828 = vand.u32 2147483647, %v674
        %vm829 = vcmp.lt.f32.partialorder %v828, 0.0004427343
        %v830 = vsel %vm829, %v827, %v824
        %v831 = vadd.f32 %v676, 1.0
        %v832 = vlog2.pop %v831
        %v833 = vmul.f32 %v832, 0.6931472
        %v834 = vmul.f32 -0.5, %v676
        %v835 = vadd.f32 %v834, 1.0
        %v836 = vmul.f32 %v835, %v676
        %v837 = vand.u32 2147483647, %v676
        %vm838 = vcmp.lt.f32.partialorder %v837, 0.0004427343
        %v839 = vsel %vm838, %v836, %v833
        %v840 = vadd.f32 %v678, 1.0
        %v841 = vlog2.pop %v840
        %v842 = vmul.f32 %v841, 0.6931472
        %v843 = vmul.f32 -0.5, %v678
        %v844 = vadd.f32 %v843, 1.0
        %v845 = vmul.f32 %v844, %v678
        %v846 = vand.u32 2147483647, %v678
        %vm847 = vcmp.lt.f32.partialorder %v846, 0.0004427343
        %v848 = vsel %vm847, %v845, %v842
        %v849 = vadd.f32 %v680, 1.0
        %v850 = vlog2.pop %v849
        %v851 = vmul.f32 %v850, 0.6931472
        %v852 = vmul.f32 -0.5, %v680
        %v853 = vadd.f32 %v852, 1.0
        %v854 = vmul.f32 %v853, %v680
        %v855 = vand.u32 2147483647, %v680
        %vm856 = vcmp.lt.f32.partialorder %v855, 0.0004427343
        %v857 = vsel %vm856, %v854, %v851
        %v858 = vadd.f32 %v682, 1.0
        %v859 = vlog2.pop %v858
        %v860 = vmul.f32 %v859, 0.6931472
        %v861 = vmul.f32 -0.5, %v682
        %v862 = vadd.f32 %v861, 1.0
        %v863 = vmul.f32 %v862, %v682
        %v864 = vand.u32 2147483647, %v682
        %vm865 = vcmp.lt.f32.partialorder %v864, 0.0004427343
        %v866 = vsel %vm865, %v863, %v860
        %v867 = vadd.f32 %v684, 1.0
        %v868 = vlog2.pop %v867
        %v869 = vmul.f32 %v868, 0.6931472
        %v870 = vmul.f32 -0.5, %v684
        %v871 = vadd.f32 %v870, 1.0
        %v872 = vmul.f32 %v871, %v684
        %v873 = vand.u32 2147483647, %v684
        %vm874 = vcmp.lt.f32.partialorder %v873, 0.0004427343
        %v875 = vsel %vm874, %v872, %v869
        %v876 = vadd.f32 %v686, 1.0
        %v877 = vlog2.pop %v876
        %v878 = vmul.f32 %v877, 0.6931472
        %v879 = vmul.f32 -0.5, %v686
        %v880 = vadd.f32 %v879, 1.0
        %v881 = vmul.f32 %v880, %v686
        %v882 = vand.u32 2147483647, %v686
        %vm883 = vcmp.lt.f32.partialorder %v882, 0.0004427343
        %v884 = vsel %vm883, %v881, %v878
        %v885 = vadd.f32 %v688, 1.0
        %v886 = vlog2.pop %v885
        %v887 = vmul.f32 %v886, 0.6931472
        %v888 = vmul.f32 -0.5, %v688
        %v889 = vadd.f32 %v888, 1.0
        %v890 = vmul.f32 %v889, %v688
        %v891 = vand.u32 2147483647, %v688
        %vm892 = vcmp.lt.f32.partialorder %v891, 0.0004427343
        %v893 = vsel %vm892, %v890, %v887
        %v894 = vadd.f32 %v690, 1.0
        %v895 = vlog2.pop %v894
        %v896 = vmul.f32 %v895, 0.6931472
        %v897 = vmul.f32 -0.5, %v690
        %v898 = vadd.f32 %v897, 1.0
        %v899 = vmul.f32 %v898, %v690
        %v900 = vand.u32 2147483647, %v690
        %vm901 = vcmp.lt.f32.partialorder %v900, 0.0004427343
        %v902 = vsel %vm901, %v899, %v896
        %v903 = vadd.f32 %v692, 1.0
        %v904 = vlog2.pop %v903
        %v905 = vmul.f32 %v904, 0.6931472
        %v906 = vmul.f32 -0.5, %v692
        %v907 = vadd.f32 %v906, 1.0
        %v908 = vmul.f32 %v907, %v692
        %v909 = vand.u32 2147483647, %v692
        %vm910 = vcmp.lt.f32.partialorder %v909, 0.0004427343
        %v911 = vsel %vm910, %v908, %v905
        %v912 = vadd.f32 %v694, 1.0
        %v913 = vlog2.pop %v912
        %v914 = vmul.f32 %v913, 0.6931472
        %v915 = vmul.f32 -0.5, %v694
        %v916 = vadd.f32 %v915, 1.0
        %v917 = vmul.f32 %v916, %v694
        %v918 = vand.u32 2147483647, %v694
        %vm919 = vcmp.lt.f32.partialorder %v918, 0.0004427343
        %v920 = vsel %vm919, %v917, %v914
        %v921 = vadd.f32 %v696, 1.0
        %v922 = vlog2.pop %v921
        %v923 = vmul.f32 %v922, 0.6931472
        %v924 = vmul.f32 -0.5, %v696
        %v925 = vadd.f32 %v924, 1.0
        %v926 = vmul.f32 %v925, %v696
        %v927 = vand.u32 2147483647, %v696
        %vm928 = vcmp.lt.f32.partialorder %v927, 0.0004427343
        %v929 = vsel %vm928, %v926, %v923
        %v930 = vadd.f32 %v698, 1.0
        %v931 = vlog2.pop %v930
        %v932 = vmul.f32 %v931, 0.6931472
        %v933 = vmul.f32 -0.5, %v698
        %v934 = vadd.f32 %v933, 1.0
        %v935 = vmul.f32 %v934, %v698
        %v936 = vand.u32 2147483647, %v698
        %vm937 = vcmp.lt.f32.partialorder %v936, 0.0004427343
        %v938 = vsel %vm937, %v935, %v932
        %v939 = vadd.f32 %v700, 1.0
        %v940 = vlog2.pop %v939
        %v941 = vmul.f32 %v940, 0.6931472
        %v942 = vmul.f32 -0.5, %v700
        %v943 = vadd.f32 %v942, 1.0
        %v944 = vmul.f32 %v943, %v700
        %v945 = vand.u32 2147483647, %v700
        %vm946 = vcmp.lt.f32.partialorder %v945, 0.0004427343
        %v947 = vsel %vm946, %v944, %v941
        %v948 = vadd.f32 %v702, 1.0
        %v949 = vlog2.pop %v948
        %v950 = vmul.f32 %v949, 0.6931472
        %v951 = vmul.f32 -0.5, %v702
        %v952 = vadd.f32 %v951, 1.0
        %v953 = vmul.f32 %v952, %v702
        %v954 = vand.u32 2147483647, %v702
        %vm955 = vcmp.lt.f32.partialorder %v954, 0.0004427343
        %v956 = vsel %vm955, %v953, %v950
        %v957 = vadd.f32 %v704, 1.0
        %v958 = vlog2.pop %v957
        %v959 = vmul.f32 %v958, 0.6931472
        %v960 = vmul.f32 -0.5, %v704
        %v961 = vadd.f32 %v960, 1.0
        %v962 = vmul.f32 %v961, %v704
        %v963 = vand.u32 2147483647, %v704
        %vm964 = vcmp.lt.f32.partialorder %v963, 0.0004427343
        %v965 = vsel %vm964, %v962, %v959
        %v966 = vadd.f32 %v706, 1.0
        %v967 = vlog2.pop %v966
        %v968 = vmul.f32 %v967, 0.6931472
        %v969 = vmul.f32 -0.5, %v706
        %v970 = vadd.f32 %v969, 1.0
        %v971 = vmul.f32 %v970, %v706
        %v972 = vand.u32 2147483647, %v706
        %vm973 = vcmp.lt.f32.partialorder %v972, 0.0004427343
        %v974 = vsel %vm973, %v971, %v968
        %v975 = vadd.f32 %v708, 1.0
        %v976 = vlog2.pop %v975
        %v977 = vmul.f32 %v976, 0.6931472
        %v978 = vmul.f32 -0.5, %v708
        %v979 = vadd.f32 %v978, 1.0
        %v980 = vmul.f32 %v979, %v708
        %v981 = vand.u32 2147483647, %v708
        %vm982 = vcmp.lt.f32.partialorder %v981, 0.0004427343
        %v983 = vsel %vm982, %v980, %v977
        %v984 = vadd.f32 %v710, 1.0
        %v985 = vlog2.pop %v984
        %v986 = vmul.f32 %v985, 0.6931472
        %v987 = vmul.f32 -0.5, %v710
        %v988 = vadd.f32 %v987, 1.0
        %v989 = vmul.f32 %v988, %v710
        %v990 = vand.u32 2147483647, %v710
        %vm991 = vcmp.lt.f32.partialorder %v990, 0.0004427343
        %v992 = vsel %vm991, %v989, %v986
        %v993 = vadd.f32 %v712, 1.0
        %v994 = vlog2.pop %v993
        %v995 = vmul.f32 %v994, 0.6931472
        %v996 = vmul.f32 -0.5, %v712
        %v997 = vadd.f32 %v996, 1.0
        %v998 = vmul.f32 %v997, %v712
        %v999 = vand.u32 2147483647, %v712
        %vm1000 = vcmp.lt.f32.partialorder %v999, 0.0004427343
        %v1001 = vsel %vm1000, %v998, %v995
        %v1002 = vadd.f32 %v714, 1.0
        %v1003 = vlog2.pop %v1002
        %v1004 = vmul.f32 %v1003, 0.6931472
        %v1005 = vmul.f32 -0.5, %v714
        %v1006 = vadd.f32 %v1005, 1.0
        %v1007 = vmul.f32 %v1006, %v714
        %v1008 = vand.u32 2147483647, %v714
        %vm1009 = vcmp.lt.f32.partialorder %v1008, 0.0004427343
        %v1010 = vsel %vm1009, %v1007, %v1004
        %v1011 = vadd.f32 %v716, 1.0
        %v1012 = vlog2.pop %v1011
        %v1013 = vmul.f32 %v1012, 0.6931472
        %v1014 = vmul.f32 -0.5, %v716
        %v1015 = vadd.f32 %v1014, 1.0
        %v1016 = vmul.f32 %v1015, %v716
        %v1017 = vand.u32 2147483647, %v716
        %vm1018 = vcmp.lt.f32.partialorder %v1017, 0.0004427343
        %v1019 = vsel %vm1018, %v1016, %v1013
        %v1020 = vadd.f32 %v718, 1.0
        %v1021 = vlog2.pop %v1020
        %v1022 = vmul.f32 %v1021, 0.6931472
        %v1023 = vmul.f32 -0.5, %v718
        %v1024 = vadd.f32 %v1023, 1.0
        %v1025 = vmul.f32 %v1024, %v718
        %v1026 = vand.u32 2147483647, %v718
        %vm1027 = vcmp.lt.f32.partialorder %v1026, 0.0004427343
        %v1028 = vsel %vm1027, %v1025, %v1022
        %v1029 = vadd.f32 %v720, 1.0
        %v1030 = vlog2.pop %v1029
        %v1031 = vmul.f32 %v1030, 0.6931472
        %v1032 = vmul.f32 -0.5, %v720
        %v1033 = vadd.f32 %v1032, 1.0
        %v1034 = vmul.f32 %v1033, %v720
        %v1035 = vand.u32 2147483647, %v720
        %vm1036 = vcmp.lt.f32.partialorder %v1035, 0.0004427343
        %v1037 = vsel %vm1036, %v1034, %v1031
        %v1038 = vadd.f32 %v722, 1.0
        %v1039 = vlog2.pop %v1038
        %v1040 = vmul.f32 %v1039, 0.6931472
        %v1041 = vmul.f32 -0.5, %v722
        %v1042 = vadd.f32 %v1041, 1.0
        %v1043 = vmul.f32 %v1042, %v722
        %v1044 = vand.u32 2147483647, %v722
        %vm1045 = vcmp.lt.f32.partialorder %v1044, 0.0004427343
        %v1046 = vsel %vm1045, %v1043, %v1040
        %v1047 = vadd.f32 %v724, 1.0
        %v1048 = vlog2.pop %v1047
        %v1049 = vmul.f32 %v1048, 0.6931472
        %v1050 = vmul.f32 -0.5, %v724
        %v1051 = vadd.f32 %v1050, 1.0
        %v1052 = vmul.f32 %v1051, %v724
        %v1053 = vand.u32 2147483647, %v724
        %vm1054 = vcmp.lt.f32.partialorder %v1053, 0.0004427343
        %v1055 = vsel %vm1054, %v1052, %v1049
        %v1056 = vadd.f32 %v726, 1.0
        %v1057 = vlog2.pop %v1056
        %v1058 = vmul.f32 %v1057, 0.6931472
        %v1059 = vmul.f32 -0.5, %v726
        %v1060 = vadd.f32 %v1059, 1.0
        %v1061 = vmul.f32 %v1060, %v726
        %v1062 = vand.u32 2147483647, %v726
        %vm1063 = vcmp.lt.f32.partialorder %v1062, 0.0004427343
        %v1064 = vsel %vm1063, %v1061, %v1058
        %v1065 = vadd.f32 %v728, 1.0
        %v1066 = vlog2.pop %v1065
        %v1067 = vmul.f32 %v1066, 0.6931472
        %v1068 = vmul.f32 -0.5, %v728
        %v1069 = vadd.f32 %v1068, 1.0
        %v1070 = vmul.f32 %v1069, %v728
        %v1071 = vand.u32 2147483647, %v728
        %vm1072 = vcmp.lt.f32.partialorder %v1071, 0.0004427343
        %v1073 = vsel %vm1072, %v1070, %v1067
        %v1074 = vadd.f32 %v730, 1.0
        %v1075 = vlog2.pop %v1074
        %v1076 = vmul.f32 %v1075, 0.6931472
        %v1077 = vmul.f32 -0.5, %v730
        %v1078 = vadd.f32 %v1077, 1.0
        %v1079 = vmul.f32 %v1078, %v730
        %v1080 = vand.u32 2147483647, %v730
        %vm1081 = vcmp.lt.f32.partialorder %v1080, 0.0004427343
        %v1082 = vsel %vm1081, %v1079, %v1076
        %v1083 = vadd.f32 %v732, 1.0
        %v1084 = vlog2.pop %v1083
        %v1085 = vmul.f32 %v1084, 0.6931472
        %v1086 = vmul.f32 -0.5, %v732
        %v1087 = vadd.f32 %v1086, 1.0
        %v1088 = vmul.f32 %v1087, %v732
        %v1089 = vand.u32 2147483647, %v732
        %vm1090 = vcmp.lt.f32.partialorder %v1089, 0.0004427343
        %v1091 = vsel %vm1090, %v1088, %v1085
        %v1092 = vadd.f32 %v734, 1.0
        %v1093 = vlog2.pop %v1092
        %v1094 = vmul.f32 %v1093, 0.6931472
        %v1095 = vmul.f32 -0.5, %v734
        %v1096 = vadd.f32 %v1095, 1.0
        %v1097 = vmul.f32 %v1096, %v734
        %v1098 = vand.u32 2147483647, %v734
        %vm1099 = vcmp.lt.f32.partialorder %v1098, 0.0004427343
        %v1100 = vsel %vm1099, %v1097, %v1094
        %v1101 = vadd.f32 %v736, 1.0
        %v1102 = vlog2.pop %v1101
        %v1103 = vmul.f32 %v1102, 0.6931472
        %v1104 = vmul.f32 -0.5, %v736
        %v1105 = vadd.f32 %v1104, 1.0
        %v1106 = vmul.f32 %v1105, %v736
        %v1107 = vand.u32 2147483647, %v736
        %vm1108 = vcmp.lt.f32.partialorder %v1107, 0.0004427343
        %v1109 = vsel %vm1108, %v1106, %v1103
        %v1110 = vadd.f32 %v738, 1.0
        %v1111 = vlog2.pop %v1110
        %v1112 = vmul.f32 %v1111, 0.6931472
        %v1113 = vmul.f32 -0.5, %v738
        %v1114 = vadd.f32 %v1113, 1.0
        %v1115 = vmul.f32 %v1114, %v738
        %v1116 = vand.u32 2147483647, %v738
        %vm1117 = vcmp.lt.f32.partialorder %v1116, 0.0004427343
        %v1118 = vsel %vm1117, %v1115, %v1112
        %v1119 = vadd.f32 %v740, 1.0
        %v1120 = vlog2.pop %v1119
        %v1121 = vmul.f32 %v1120, 0.6931472
        %v1122 = vmul.f32 -0.5, %v740
        %v1123 = vadd.f32 %v1122, 1.0
        %v1124 = vmul.f32 %v1123, %v740
        %v1125 = vand.u32 2147483647, %v740
        %vm1126 = vcmp.lt.f32.partialorder %v1125, 0.0004427343
        %v1127 = vsel %vm1126, %v1124, %v1121
        %v1128 = vadd.f32 %v742, 1.0
        %v1129 = vlog2.pop %v1128
        %v1130 = vmul.f32 %v1129, 0.6931472
        %v1131 = vmul.f32 -0.5, %v742
        %v1132 = vadd.f32 %v1131, 1.0
        %v1133 = vmul.f32 %v1132, %v742
        %v1134 = vand.u32 2147483647, %v742
        %vm1135 = vcmp.lt.f32.partialorder %v1134, 0.0004427343
        %v1136 = vsel %vm1135, %v1133, %v1130
        %v1137 = vadd.f32 %v744, 1.0
        %v1138 = vlog2.pop %v1137
        %v1139 = vmul.f32 %v1138, 0.6931472
        %v1140 = vmul.f32 -0.5, %v744
        %v1141 = vadd.f32 %v1140, 1.0
        %v1142 = vmul.f32 %v1141, %v744
        %v1143 = vand.u32 2147483647, %v744
        %vm1144 = vcmp.lt.f32.partialorder %v1143, 0.0004427343
        %v1145 = vsel %vm1144, %v1142, %v1139
        %v1146 = vadd.f32 %v746, 1.0
        %v1147 = vlog2.pop %v1146
        %v1148 = vmul.f32 %v1147, 0.6931472
        %v1149 = vmul.f32 -0.5, %v746
        %v1150 = vadd.f32 %v1149, 1.0
        %v1151 = vmul.f32 %v1150, %v746
        %v1152 = vand.u32 2147483647, %v746
        %vm1153 = vcmp.lt.f32.partialorder %v1152, 0.0004427343
        %v1154 = vsel %vm1153, %v1151, %v1148
        %v1155 = vadd.f32 %v748, 1.0
        %v1156 = vlog2.pop %v1155
        %v1157 = vmul.f32 %v1156, 0.6931472
        %v1158 = vmul.f32 -0.5, %v748
        %v1159 = vadd.f32 %v1158, 1.0
        %v1160 = vmul.f32 %v1159, %v748
        %v1161 = vand.u32 2147483647, %v748
        %vm1162 = vcmp.lt.f32.partialorder %v1161, 0.0004427343
        %v1163 = vsel %vm1162, %v1160, %v1157
        %v1164 = vadd.f32 %v750, 1.0
        %v1165 = vlog2.pop %v1164
        %v1166 = vmul.f32 %v1165, 0.6931472
        %v1167 = vmul.f32 -0.5, %v750
        %v1168 = vadd.f32 %v1167, 1.0
        %v1169 = vmul.f32 %v1168, %v750
        %v1170 = vand.u32 2147483647, %v750
        %vm1171 = vcmp.lt.f32.partialorder %v1170, 0.0004427343
        %v1172 = vsel %vm1171, %v1169, %v1166
        %v1173 = vadd.f32 %v752, 1.0
        %v1174 = vlog2.pop %v1173
        %v1175 = vmul.f32 %v1174, 0.6931472
        %v1176 = vmul.f32 -0.5, %v752
        %v1177 = vadd.f32 %v1176, 1.0
        %v1178 = vmul.f32 %v1177, %v752
        %v1179 = vand.u32 2147483647, %v752
        %vm1180 = vcmp.lt.f32.partialorder %v1179, 0.0004427343
        %v1181 = vsel %vm1180, %v1178, %v1175
        %v1182 = vadd.f32 %v754, 1.0
        %v1183 = vlog2.pop %v1182
        %v1184 = vmul.f32 %v1183, 0.6931472
        %v1185 = vmul.f32 -0.5, %v754
        %v1186 = vadd.f32 %v1185, 1.0
        %v1187 = vmul.f32 %v1186, %v754
        %v1188 = vand.u32 2147483647, %v754
        %vm1189 = vcmp.lt.f32.partialorder %v1188, 0.0004427343
        %v1190 = vsel %vm1189, %v1187, %v1184
        %v1191 = vadd.f32 %v756, 1.0
        %v1192 = vlog2.pop %v1191
        %v1193 = vmul.f32 %v1192, 0.6931472
        %v1194 = vmul.f32 -0.5, %v756
        %v1195 = vadd.f32 %v1194, 1.0
        %v1196 = vmul.f32 %v1195, %v756
        %v1197 = vand.u32 2147483647, %v756
        %vm1198 = vcmp.lt.f32.partialorder %v1197, 0.0004427343
        %v1199 = vsel %vm1198, %v1196, %v1193
        %v1200 = vadd.f32 %v758, 1.0
        %v1201 = vlog2.pop %v1200
        %v1202 = vmul.f32 %v1201, 0.6931472
        %v1203 = vmul.f32 -0.5, %v758
        %v1204 = vadd.f32 %v1203, 1.0
        %v1205 = vmul.f32 %v1204, %v758
        %v1206 = vand.u32 2147483647, %v758
        %vm1207 = vcmp.lt.f32.partialorder %v1206, 0.0004427343
        %v1208 = vsel %vm1207, %v1205, %v1202
        %v1209 = vadd.f32 %v760, 1.0
        %v1210 = vlog2.pop %v1209
        %v1211 = vmul.f32 %v1210, 0.6931472
        %v1212 = vmul.f32 -0.5, %v760
        %v1213 = vadd.f32 %v1212, 1.0
        %v1214 = vmul.f32 %v1213, %v760
        %v1215 = vand.u32 2147483647, %v760
        %vm1216 = vcmp.lt.f32.partialorder %v1215, 0.0004427343
        %v1217 = vsel %vm1216, %v1214, %v1211
        %v1218 = vadd.f32 %v762, 1.0
        %v1219 = vlog2.pop %v1218
        %v1220 = vmul.f32 %v1219, 0.6931472
        %v1221 = vmul.f32 -0.5, %v762
        %v1222 = vadd.f32 %v1221, 1.0
        %v1223 = vmul.f32 %v1222, %v762
        %v1224 = vand.u32 2147483647, %v762
        %vm1225 = vcmp.lt.f32.partialorder %v1224, 0.0004427343
        %v1226 = vsel %vm1225, %v1223, %v1220
        %v1227 = vadd.f32 %v764, 1.0
        %v1228 = vlog2.pop %v1227
        %v1229 = vmul.f32 %v1228, 0.6931472
        %v1230 = vmul.f32 -0.5, %v764
        %v1231 = vadd.f32 %v1230, 1.0
        %v1232 = vmul.f32 %v1231, %v764
        %v1233 = vand.u32 2147483647, %v764
        %vm1234 = vcmp.lt.f32.partialorder %v1233, 0.0004427343
        %v1235 = vsel %vm1234, %v1232, %v1229
        %v1236 = vadd.f32 %v766, 1.0
        %v1237 = vlog2.pop %v1236
        %v1238 = vmul.f32 %v1237, 0.6931472
        %v1239 = vmul.f32 -0.5, %v766
        %v1240 = vadd.f32 %v1239, 1.0
        %v1241 = vmul.f32 %v1240, %v766
        %v1242 = vand.u32 2147483647, %v766
        %vm1243 = vcmp.lt.f32.partialorder %v1242, 0.0004427343
        %v1244 = vsel %vm1243, %v1241, %v1238
        %v1245 = vadd.f32 %v768, 1.0
        %v1246 = vlog2.pop %v1245
        %v1247 = vmul.f32 %v1246, 0.6931472
        %v1248 = vmul.f32 -0.5, %v768
        %v1249 = vadd.f32 %v1248, 1.0
        %v1250 = vmul.f32 %v1249, %v768
        %v1251 = vand.u32 2147483647, %v768
        %vm1252 = vcmp.lt.f32.partialorder %v1251, 0.0004427343
        %v1253 = vsel %vm1252, %v1250, %v1247
        %v1254 = vadd.f32 %v770, 1.0
        %v1255 = vlog2.pop %v1254
        %v1256 = vmul.f32 %v1255, 0.6931472
        %v1257 = vmul.f32 -0.5, %v770
        %v1258 = vadd.f32 %v1257, 1.0
        %v1259 = vmul.f32 %v1258, %v770
        %v1260 = vand.u32 2147483647, %v770
        %vm1261 = vcmp.lt.f32.partialorder %v1260, 0.0004427343
        %v1262 = vsel %vm1261, %v1259, %v1256
        %v1263 = vadd.f32 %v772, 1.0
        %v1264 = vlog2.pop %v1263
        %v1265 = vmul.f32 %v1264, 0.6931472
        %v1266 = vmul.f32 -0.5, %v772
        %v1267 = vadd.f32 %v1266, 1.0
        %v1268 = vmul.f32 %v1267, %v772
        %v1269 = vand.u32 2147483647, %v772
        %vm1270 = vcmp.lt.f32.partialorder %v1269, 0.0004427343
        %v1271 = vsel %vm1270, %v1268, %v1265
        %v1272 = vadd.f32 %v774, 1.0
        %v1273 = vlog2.pop %v1272
        %v1274 = vmul.f32 %v1273, 0.6931472
        %v1275 = vmul.f32 -0.5, %v774
        %v1276 = vadd.f32 %v1275, 1.0
        %v1277 = vmul.f32 %v1276, %v774
        %v1278 = vand.u32 2147483647, %v774
        %vm1279 = vcmp.lt.f32.partialorder %v1278, 0.0004427343
        %v1280 = vsel %vm1279, %v1277, %v1274
        %v1281 = vadd.f32 %v776, 1.0
        %v1282 = vlog2.pop %v1281
        %v1283 = vmul.f32 %v1282, 0.6931472
        %v1284 = vmul.f32 -0.5, %v776
        %v1285 = vadd.f32 %v1284, 1.0
        %v1286 = vmul.f32 %v1285, %v776
        %v1287 = vand.u32 2147483647, %v776
        %vm1288 = vcmp.lt.f32.partialorder %v1287, 0.0004427343
        %v1289 = vsel %vm1288, %v1286, %v1283
        %v1290 = vadd.f32 %v778, 1.0
        %v1291 = vlog2.pop %v1290
        %v1292 = vmul.f32 %v1291, 0.6931472
        %v1293 = vmul.f32 -0.5, %v778
        %v1294 = vadd.f32 %v1293, 1.0
        %v1295 = vmul.f32 %v1294, %v778
        %v1296 = vand.u32 2147483647, %v778
        %vm1297 = vcmp.lt.f32.partialorder %v1296, 0.0004427343
        %v1298 = vsel %vm1297, %v1295, %v1292
        %v1299 = vadd.f32 %v780, 1.0
        %v1300 = vlog2.pop %v1299
        %v1301 = vmul.f32 %v1300, 0.6931472
        %v1302 = vmul.f32 -0.5, %v780
        %v1303 = vadd.f32 %v1302, 1.0
        %v1304 = vmul.f32 %v1303, %v780
        %v1305 = vand.u32 2147483647, %v780
        %vm1306 = vcmp.lt.f32.partialorder %v1305, 0.0004427343
        %v1307 = vsel %vm1306, %v1304, %v1301
        %v1308 = vadd.f32 %v782, 1.0
        %v1309 = vlog2.pop %v1308
        %v1310 = vmul.f32 %v1309, 0.6931472
        %v1311 = vmul.f32 -0.5, %v782
        %v1312 = vadd.f32 %v1311, 1.0
        %v1313 = vmul.f32 %v1312, %v782
        %v1314 = vand.u32 2147483647, %v782
        %vm1315 = vcmp.lt.f32.partialorder %v1314, 0.0004427343
        %v1316 = vsel %vm1315, %v1313, %v1310
        %v1317 = vadd.f32 %v784, 1.0
        %v1318 = vlog2.pop %v1317
        %v1319 = vmul.f32 %v1318, 0.6931472
        %v1320 = vmul.f32 -0.5, %v784
        %v1321 = vadd.f32 %v1320, 1.0
        %v1322 = vmul.f32 %v1321, %v784
        %v1323 = vand.u32 2147483647, %v784
        %vm1324 = vcmp.lt.f32.partialorder %v1323, 0.0004427343
        %v1325 = vsel %vm1324, %v1322, %v1319
        %v1326 = vadd.f32 %v786, 1.0
        %v1327 = vlog2.pop %v1326
        %v1328 = vmul.f32 %v1327, 0.6931472
        %v1329 = vmul.f32 -0.5, %v786
        %v1330 = vadd.f32 %v1329, 1.0
        %v1331 = vmul.f32 %v1330, %v786
        %v1332 = vand.u32 2147483647, %v786
        %vm1333 = vcmp.lt.f32.partialorder %v1332, 0.0004427343
        %v1334 = vsel %vm1333, %v1331, %v1328
        %v1335 = vadd.f32 %v788, 1.0
        %v1336 = vlog2.pop %v1335
        %v1337 = vmul.f32 %v1336, 0.6931472
        %v1338 = vmul.f32 -0.5, %v788
        %v1339 = vadd.f32 %v1338, 1.0
        %v1340 = vmul.f32 %v1339, %v788
        %v1341 = vand.u32 2147483647, %v788
        %vm1342 = vcmp.lt.f32.partialorder %v1341, 0.0004427343
        %v1343 = vsel %vm1342, %v1340, %v1337
        %v1344 = vadd.f32 %v790, 1.0
        %v1345 = vlog2.pop %v1344
        %v1346 = vmul.f32 %v1345, 0.6931472
        %v1347 = vmul.f32 -0.5, %v790
        %v1348 = vadd.f32 %v1347, 1.0
        %v1349 = vmul.f32 %v1348, %v790
        %v1350 = vand.u32 2147483647, %v790
        %vm1351 = vcmp.lt.f32.partialorder %v1350, 0.0004427343
        %v1352 = vsel %vm1351, %v1349, %v1346
        %v1353 = vadd.f32 %v792, 1.0
        %v1354 = vlog2.pop %v1353
        %v1355 = vmul.f32 %v1354, 0.6931472
        %v1356 = vmul.f32 -0.5, %v792
        %v1357 = vadd.f32 %v1356, 1.0
        %v1358 = vmul.f32 %v1357, %v792
        %v1359 = vand.u32 2147483647, %v792
        %vm1360 = vcmp.lt.f32.partialorder %v1359, 0.0004427343
        %v1361 = vsel %vm1360, %v1358, %v1355
        %v1362 = vadd.f32 %v794, 1.0
        %v1363 = vlog2.pop %v1362
        %v1364 = vmul.f32 %v1363, 0.6931472
        %v1365 = vmul.f32 -0.5, %v794
        %v1366 = vadd.f32 %v1365, 1.0
        %v1367 = vmul.f32 %v1366, %v794
        %v1368 = vand.u32 2147483647, %v794
        %vm1369 = vcmp.lt.f32.partialorder %v1368, 0.0004427343
        %v1370 = vsel %vm1369, %v1367, %v1364
        %v1371 = vadd.f32 %v347, %v803
        %v1372 = vadd.f32 %v348, %v812
        %v1373 = vadd.f32 %v349, %v821
        %v1374 = vadd.f32 %v350, %v830
        %v1375 = vadd.f32 %v351, %v839
        %v1376 = vadd.f32 %v352, %v848
        %v1377 = vadd.f32 %v353, %v857
        %v1378 = vadd.f32 %v354, %v866
        %v1379 = vadd.f32 %v355, %v875
        %v1380 = vadd.f32 %v356, %v884
        %v1381 = vadd.f32 %v357, %v893
        %v1382 = vadd.f32 %v358, %v902
        %v1383 = vadd.f32 %v359, %v911
        %v1384 = vadd.f32 %v360, %v920
        %v1385 = vadd.f32 %v361, %v929
        %v1386 = vadd.f32 %v362, %v938
        %v1387 = vadd.f32 %v363, %v947
        %v1388 = vadd.f32 %v364, %v956
        %v1389 = vadd.f32 %v365, %v965
        %v1390 = vadd.f32 %v366, %v974
        %v1391 = vadd.f32 %v367, %v983
        %v1392 = vadd.f32 %v368, %v992
        %v1393 = vadd.f32 %v369, %v1001
        %v1394 = vadd.f32 %v370, %v1010
        %v1395 = vadd.f32 %v371, %v1019
        %v1396 = vadd.f32 %v372, %v1028
        %v1397 = vadd.f32 %v373, %v1037
        %v1398 = vadd.f32 %v374, %v1046
        %v1399 = vadd.f32 %v375, %v1055
        %v1400 = vadd.f32 %v376, %v1064
        %v1401 = vadd.f32 %v377, %v1073
        %v1402 = vadd.f32 %v378, %v1082
        %v1403 = vadd.f32 %v379, %v1091
        %v1404 = vadd.f32 %v380, %v1100
        %v1405 = vadd.f32 %v381, %v1109
        %v1406 = vadd.f32 %v382, %v1118
        %v1407 = vadd.f32 %v383, %v1127
        %v1408 = vadd.f32 %v384, %v1136
        %v1409 = vadd.f32 %v385, %v1145
        %v1410 = vadd.f32 %v386, %v1154
        %v1411 = vadd.f32 %v387, %v1163
        %v1412 = vadd.f32 %v388, %v1172
        %v1413 = vadd.f32 %v389, %v1181
        %v1414 = vadd.f32 %v390, %v1190
        %v1415 = vadd.f32 %v391, %v1199
        %v1416 = vadd.f32 %v392, %v1208
        %v1417 = vadd.f32 %v393, %v1217
        %v1418 = vadd.f32 %v394, %v1226
        %v1419 = vadd.f32 %v395, %v1235
        %v1420 = vadd.f32 %v396, %v1244
        %v1421 = vadd.f32 %v397, %v1253
        %v1422 = vadd.f32 %v398, %v1262
        %v1423 = vadd.f32 %v399, %v1271
        %v1424 = vadd.f32 %v400, %v1280
        %v1425 = vadd.f32 %v401, %v1289
        %v1426 = vadd.f32 %v402, %v1298
        %v1427 = vadd.f32 %v403, %v1307
        %v1428 = vadd.f32 %v404, %v1316
        %v1429 = vadd.f32 %v405, %v1325
        %v1430 = vadd.f32 %v406, %v1334
        %v1431 = vadd.f32 %v407, %v1343
        %v1432 = vadd.f32 %v408, %v1352
        %v1433 = vadd.f32 %v409, %v1361
        %v1434 = vadd.f32 %v410, %v1370
        %v1435 = vsel %vm411, %v475, %v1371
        %v1436 = vsel %vm412, %v476, %v1372
        %v1437 = vsel %vm413, %v477, %v1373
        %v1438 = vsel %vm414, %v478, %v1374
        %v1439 = vsel %vm415, %v479, %v1375
        %v1440 = vsel %vm416, %v480, %v1376
        %v1441 = vsel %vm417, %v481, %v1377
        %v1442 = vsel %vm418, %v482, %v1378
        %v1443 = vsel %vm419, %v483, %v1379
        %v1444 = vsel %vm420, %v484, %v1380
        %v1445 = vsel %vm421, %v485, %v1381
        %v1446 = vsel %vm422, %v486, %v1382
        %v1447 = vsel %vm423, %v487, %v1383
        %v1448 = vsel %vm424, %v488, %v1384
        %v1449 = vsel %vm425, %v489, %v1385
        %v1450 = vsel %vm426, %v490, %v1386
        %v1451 = vsel %vm427, %v491, %v1387
        %v1452 = vsel %vm428, %v492, %v1388
        %v1453 = vsel %vm429, %v493, %v1389
        %v1454 = vsel %vm430, %v494, %v1390
        %v1455 = vsel %vm431, %v495, %v1391
        %v1456 = vsel %vm432, %v496, %v1392
        %v1457 = vsel %vm433, %v497, %v1393
        %v1458 = vsel %vm434, %v498, %v1394
        %v1459 = vsel %vm435, %v499, %v1395
        %v1460 = vsel %vm436, %v500, %v1396
        %v1461 = vsel %vm437, %v501, %v1397
        %v1462 = vsel %vm438, %v502, %v1398
        %v1463 = vsel %vm439, %v503, %v1399
        %v1464 = vsel %vm440, %v504, %v1400
        %v1465 = vsel %vm441, %v505, %v1401
        %v1466 = vsel %vm442, %v506, %v1402
        %v1467 = vsel %vm443, %v507, %v1403
        %v1468 = vsel %vm444, %v508, %v1404
        %v1469 = vsel %vm445, %v509, %v1405
        %v1470 = vsel %vm446, %v510, %v1406
        %v1471 = vsel %vm447, %v511, %v1407
        %v1472 = vsel %vm448, %v512, %v1408
        %v1473 = vsel %vm449, %v513, %v1409
        %v1474 = vsel %vm450, %v514, %v1410
        %v1475 = vsel %vm451, %v515, %v1411
        %v1476 = vsel %vm452, %v516, %v1412
        %v1477 = vsel %vm453, %v517, %v1413
        %v1478 = vsel %vm454, %v518, %v1414
        %v1479 = vsel %vm455, %v519, %v1415
        %v1480 = vsel %vm456, %v520, %v1416
        %v1481 = vsel %vm457, %v521, %v1417
        %v1482 = vsel %vm458, %v522, %v1418
        %v1483 = vsel %vm459, %v523, %v1419
        %v1484 = vsel %vm460, %v524, %v1420
        %v1485 = vsel %vm461, %v525, %v1421
        %v1486 = vsel %vm462, %v526, %v1422
        %v1487 = vsel %vm463, %v527, %v1423
        %v1488 = vsel %vm464, %v528, %v1424
        %v1489 = vsel %vm465, %v529, %v1425
        %v1490 = vsel %vm466, %v530, %v1426
        %v1491 = vsel %vm467, %v531, %v1427
        %v1492 = vsel %vm468, %v532, %v1428
        %v1493 = vsel %vm469, %v533, %v1429
        %v1494 = vsel %vm470, %v534, %v1430
        %v1495 = vsel %vm471, %v535, %v1431
        %v1496 = vsel %vm472, %v536, %v1432
        %v1497 = vsel %vm473, %v537, %v1433
        %v1498 = vsel %vm474, %v538, %v1434
        %v1499 = vpack.c.bf16 %v1436, %v1435
        %v1500 = vpack.c.bf16 %v1438, %v1437
        %v1501 = vpack.c.bf16 %v1440, %v1439
        %v1502 = vpack.c.bf16 %v1442, %v1441
        %v1503 = vpack.c.bf16 %v1444, %v1443
        %v1504 = vpack.c.bf16 %v1446, %v1445
        %v1505 = vpack.c.bf16 %v1448, %v1447
        %v1506 = vpack.c.bf16 %v1450, %v1449
        %v1507 = vpack.c.bf16 %v1452, %v1451
        %v1508 = vpack.c.bf16 %v1454, %v1453
        %v1509 = vpack.c.bf16 %v1456, %v1455
        %v1510 = vpack.c.bf16 %v1458, %v1457
        %v1511 = vpack.c.bf16 %v1460, %v1459
        %v1512 = vpack.c.bf16 %v1462, %v1461
        %v1513 = vpack.c.bf16 %v1464, %v1463
        %v1514 = vpack.c.bf16 %v1466, %v1465
        %v1515 = vpack.c.bf16 %v1468, %v1467
        %v1516 = vpack.c.bf16 %v1470, %v1469
        %v1517 = vpack.c.bf16 %v1472, %v1471
        %v1518 = vpack.c.bf16 %v1474, %v1473
        %v1519 = vpack.c.bf16 %v1476, %v1475
        %v1520 = vpack.c.bf16 %v1478, %v1477
        %v1521 = vpack.c.bf16 %v1480, %v1479
        %v1522 = vpack.c.bf16 %v1482, %v1481
        %v1523 = vpack.c.bf16 %v1484, %v1483
        %v1524 = vpack.c.bf16 %v1486, %v1485
        %v1525 = vpack.c.bf16 %v1488, %v1487
        %v1526 = vpack.c.bf16 %v1490, %v1489
        %v1527 = vpack.c.bf16 %v1492, %v1491
        %v1528 = vpack.c.bf16 %v1494, %v1493
        %v1529 = vpack.c.bf16 %v1496, %v1495
        %v1530 = vpack.c.bf16 %v1498, %v1497
        %v1531 = vld [vmem:[%s1] sm:$0xf]
        %v1532 = vld [vmem:[%s1 + $0x4] sm:$0xf]
        %v1533 = vld [vmem:[%s1 + $0x8] sm:$0xf]
        %v1534 = vld [vmem:[%s1 + $0xc] sm:$0xf]
        %v1536 = vlaneseq
        %v1537 = vshrl.u32 %v1536, 7
        %v1538 = vsub.s32 0, %v1537
        %v1539 = vrot.slane %v345, %v1538
        %v1545 = vunpack.c.l.b16 %v1531
        %v1546 = vunpack.c.l.b16 %v1532
        %v1547 = vunpack.c.l.b16 %v1533
        %v1548 = vunpack.c.l.b16 %v1534
        %v1549 = vpack.c.b16 %v1546, %v1545
        %v1550 = vpack.c.b16 %v1548, %v1547
        %vm1553 = vcmask 261120
        %v1555 = vsel %vm1553, %v1499, 0
        %v1558 = vsel %vm1553, %v1500, 0
        %v1561 = vsel %vm1553, %v1501, 0
        %v1564 = vsel %vm1553, %v1502, 0
        %v1567 = vsel %vm1553, %v1503, 0
        %v1570 = vsel %vm1553, %v1504, 0
        %v1573 = vsel %vm1553, %v1505, 0
        %v1576 = vsel %vm1553, %v1506, 0
        %v1579 = vsel %vm1553, %v1507, 0
        %v1582 = vsel %vm1553, %v1508, 0
        %v1585 = vsel %vm1553, %v1509, 0
        %v1588 = vsel %vm1553, %v1510, 0
        %v1591 = vsel %vm1553, %v1511, 0
        %v1594 = vsel %vm1553, %v1512, 0
        %v1597 = vsel %vm1553, %v1513, 0
        %v1600 = vsel %vm1553, %v1514, 0
        %v1603 = vsel %vm1553, %v1515, 0
        %v1606 = vsel %vm1553, %v1516, 0
        %v1609 = vsel %vm1553, %v1517, 0
        %v1612 = vsel %vm1553, %v1518, 0
        %v1615 = vsel %vm1553, %v1519, 0
        %v1618 = vsel %vm1553, %v1520, 0
        %v1621 = vsel %vm1553, %v1521, 0
        %v1624 = vsel %vm1553, %v1522, 0
        %v1627 = vsel %vm1553, %v1523, 0
        %v1630 = vsel %vm1553, %v1524, 0
        %v1633 = vsel %vm1553, %v1525, 0
        %v1636 = vsel %vm1553, %v1526, 0
        %v1639 = vsel %vm1553, %v1527, 0
        %v1642 = vsel %vm1553, %v1528, 0
        %v1645 = vsel %vm1553, %v1529, 0
        %v1648 = vsel %vm1553, %v1530, 0
        %1650 = vmatprep.subr.bf16.mxu0 0
        %1651 = vmatpush1.bf16.msra.mxu0 %v1549
        %1652 = vmatprep.subr.bf16.mxu0 0
        %1653 = vmatpush1.bf16.msra.mxu0 %v1550
        %1654 = vmatprep.subr.bf16.mxu0 0
        %1655 = vmatpush1.bf16.msra.mxu0 0
        %1656 = vmatprep.subr.bf16.mxu0 0
        %1657 = vmatpush1.bf16.msra.mxu0 0
        %1658 = vmatprep.subr.bf16.mxu0 0
        %1659 = vmatpush1.bf16.msra.mxu0 0
        %1660 = vmatprep.subr.bf16.mxu0 0
        %1661 = vmatpush1.bf16.msra.mxu0 0
        %1662 = vmatprep.subr.bf16.mxu0 0
        %1663 = vmatpush1.bf16.msra.mxu0 0
        %1664 = vmatprep.subr.bf16.mxu0 0
        %1665 = vmatpush1.bf16.msra.mxu0 0
        %1666 = vmatprep.subr.bf16.mxu0 0
        %1667 = vmatpush1.bf16.msra.mxu0 0
        %1668 = vmatprep.subr.bf16.mxu0 0
        %1669 = vmatpush1.bf16.msra.mxu0 0
        %1670 = vmatprep.subr.bf16.mxu0 0
        %1671 = vmatpush1.bf16.msra.mxu0 0
        %1672 = vmatprep.subr.bf16.mxu0 0
        %1673 = vmatpush1.bf16.msra.mxu0 0
        %1674 = vmatprep.subr.bf16.mxu0 0
        %1675 = vmatpush1.bf16.msra.mxu0 0
        %1676 = vmatprep.subr.bf16.mxu0 0
        %1677 = vmatpush1.bf16.msra.mxu0 0
        %1678 = vmatprep.subr.bf16.mxu0 0
        %1679 = vmatpush1.bf16.msra.mxu0 0
        %1680 = vmatprep.subr.bf16.mxu0 0
        %1681 = vmatpush1.bf16.msra.mxu0 0
        %1682 = vmatprep.mubr.bf16.mxu0 0
        %1683 = vmatmul.mubr.bf16.gmra.mrb[0].mxu0 %v1555
        %v1684 = vpop.f32.mrb[0].mxu0
        %v1685 = vadd.f32 %v1539, %v1684
        %v1686 = vpop.f32.mrb[0].mxu0
        %v1687 = vpop.f32.mrb[0].mxu0
        %v1688 = vadd.f32 %v1539, %v1687
        %v1689 = vpop.f32.mrb[0].mxu0
        %1690 = vmatprep.mubr.bf16.mxu0 0
        %1691 = vmatmul.mubr.bf16.gmra.mrb[0].mxu0 %v1558
        %v1692 = vpop.f32.mrb[0].mxu0
        %v1693 = vadd.f32 %v1539, %v1692
        %v1694 = vpop.f32.mrb[0].mxu0
        %v1695 = vpop.f32.mrb[0].mxu0
        %v1696 = vadd.f32 %v1539, %v1695
        %v1697 = vpop.f32.mrb[0].mxu0
        %1698 = vmatprep.mubr.bf16.mxu0 0
        %1699 = vmatmul.mubr.bf16.gmra.mrb[0].mxu0 %v1561
        %v1700 = vpop.f32.mrb[0].mxu0
        %v1701 = vadd.f32 %v1539, %v1700
        %v1702 = vpop.f32.mrb[0].mxu0
        %v1703 = vpop.f32.mrb[0].mxu0
        %v1704 = vadd.f32 %v1539, %v1703
        %v1705 = vpop.f32.mrb[0].mxu0
        %1706 = vmatprep.mubr.bf16.mxu0 0
        %1707 = vmatmul.mubr.bf16.gmra.mrb[0].mxu0 %v1564
        %v1708 = vpop.f32.mrb[0].mxu0
        %v1709 = vadd.f32 %v1539, %v1708
        %v1710 = vpop.f32.mrb[0].mxu0
        %v1711 = vpop.f32.mrb[0].mxu0
        %v1712 = vadd.f32 %v1539, %v1711
        %v1713 = vpop.f32.mrb[0].mxu0
        %1714 = vmatprep.mubr.bf16.mxu0 0
        %1715 = vmatmul.mubr.bf16.gmra.mrb[0].mxu0 %v1567
        %v1716 = vpop.f32.mrb[0].mxu0
        %v1717 = vadd.f32 %v1539, %v1716
        %v1718 = vpop.f32.mrb[0].mxu0
        %v1719 = vpop.f32.mrb[0].mxu0
        %v1720 = vadd.f32 %v1539, %v1719
        %v1721 = vpop.f32.mrb[0].mxu0
        %1722 = vmatprep.mubr.bf16.mxu0 0
        %1723 = vmatmul.mubr.bf16.gmra.mrb[0].mxu0 %v1570
        %v1724 = vpop.f32.mrb[0].mxu0
        %v1725 = vadd.f32 %v1539, %v1724
        %v1726 = vpop.f32.mrb[0].mxu0
        %v1727 = vpop.f32.mrb[0].mxu0
        %v1728 = vadd.f32 %v1539, %v1727
        %v1729 = vpop.f32.mrb[0].mxu0
        %1730 = vmatprep.mubr.bf16.mxu0 0
        %1731 = vmatmul.mubr.bf16.gmra.mrb[0].mxu0 %v1573
        %v1732 = vpop.f32.mrb[0].mxu0
        %v1733 = vadd.f32 %v1539, %v1732
        %v1734 = vpop.f32.mrb[0].mxu0
        %v1735 = vpop.f32.mrb[0].mxu0
        %v1736 = vadd.f32 %v1539, %v1735
        %v1737 = vpop.f32.mrb[0].mxu0
        %1738 = vmatprep.mubr.bf16.mxu0 0
        %1739 = vmatmul.mubr.bf16.gmra.mrb[0].mxu0 %v1576
        %v1740 = vpop.f32.mrb[0].mxu0
        %v1741 = vadd.f32 %v1539, %v1740
        %v1742 = vpop.f32.mrb[0].mxu0
        %v1743 = vpop.f32.mrb[0].mxu0
        %v1744 = vadd.f32 %v1539, %v1743
        %v1745 = vpop.f32.mrb[0].mxu0
        %1746 = vmatprep.mubr.bf16.mxu0 0
        %1747 = vmatmul.mubr.bf16.gmra.mrb[0].mxu0 %v1579
        %v1748 = vpop.f32.mrb[0].mxu0
        %v1749 = vadd.f32 %v1539, %v1748
        %v1750 = vpop.f32.mrb[0].mxu0
        %v1751 = vpop.f32.mrb[0].mxu0
        %v1752 = vadd.f32 %v1539, %v1751
        %v1753 = vpop.f32.mrb[0].mxu0
        %1754 = vmatprep.mubr.bf16.mxu0 0
        %1755 = vmatmul.mubr.bf16.gmra.mrb[0].mxu0 %v1582
        %v1756 = vpop.f32.mrb[0].mxu0
        %v1757 = vadd.f32 %v1539, %v1756
        %v1758 = vpop.f32.mrb[0].mxu0
        %v1759 = vpop.f32.mrb[0].mxu0
        %v1760 = vadd.f32 %v1539, %v1759
        %v1761 = vpop.f32.mrb[0].mxu0
        %1762 = vmatprep.mubr.bf16.mxu0 0
        %1763 = vmatmul.mubr.bf16.gmra.mrb[0].mxu0 %v1585
        %v1764 = vpop.f32.mrb[0].mxu0
        %v1765 = vadd.f32 %v1539, %v1764
        %v1766 = vpop.f32.mrb[0].mxu0
        %v1767 = vpop.f32.mrb[0].mxu0
        %v1768 = vadd.f32 %v1539, %v1767
        %v1769 = vpop.f32.mrb[0].mxu0
        %1770 = vmatprep.mubr.bf16.mxu0 0
        %1771 = vmatmul.mubr.bf16.gmra.mrb[0].mxu0 %v1588
        %v1772 = vpop.f32.mrb[0].mxu0
        %v1773 = vadd.f32 %v1539, %v1772
        %v1774 = vpop.f32.mrb[0].mxu0
        %v1775 = vpop.f32.mrb[0].mxu0
        %v1776 = vadd.f32 %v1539, %v1775
        %v1777 = vpop.f32.mrb[0].mxu0
        %1778 = vmatprep.mubr.bf16.mxu0 0
        %1779 = vmatmul.mubr.bf16.gmra.mrb[0].mxu0 %v1591
        %v1780 = vpop.f32.mrb[0].mxu0
        %v1781 = vadd.f32 %v1539, %v1780
        %v1782 = vpop.f32.mrb[0].mxu0
        %v1783 = vpop.f32.mrb[0].mxu0
        %v1784 = vadd.f32 %v1539, %v1783
        %v1785 = vpop.f32.mrb[0].mxu0
        %1786 = vmatprep.mubr.bf16.mxu0 0
        %1787 = vmatmul.mubr.bf16.gmra.mrb[0].mxu0 %v1594
        %v1788 = vpop.f32.mrb[0].mxu0
        %v1789 = vadd.f32 %v1539, %v1788
        %v1790 = vpop.f32.mrb[0].mxu0
        %v1791 = vpop.f32.mrb[0].mxu0
        %v1792 = vadd.f32 %v1539, %v1791
        %v1793 = vpop.f32.mrb[0].mxu0
        %1794 = vmatprep.mubr.bf16.mxu0 0
        %1795 = vmatmul.mubr.bf16.gmra.mrb[0].mxu0 %v1597
        %v1796 = vpop.f32.mrb[0].mxu0
        %v1797 = vadd.f32 %v1539, %v1796
        %v1798 = vpop.f32.mrb[0].mxu0
        %v1799 = vpop.f32.mrb[0].mxu0
        %v1800 = vadd.f32 %v1539, %v1799
        %v1801 = vpop.f32.mrb[0].mxu0
        %1802 = vmatprep.mubr.bf16.mxu0 0
        %1803 = vmatmul.mubr.bf16.gmra.mrb[0].mxu0 %v1600
        %v1804 = vpop.f32.mrb[0].mxu0
        %v1805 = vadd.f32 %v1539, %v1804
        %v1806 = vpop.f32.mrb[0].mxu0
        %v1807 = vpop.f32.mrb[0].mxu0
        %v1808 = vadd.f32 %v1539, %v1807
        %v1809 = vpop.f32.mrb[0].mxu0
        %1810 = vmatprep.mubr.bf16.mxu0 0
        %1811 = vmatmul.mubr.bf16.gmra.mrb[0].mxu0 %v1603
        %v1812 = vpop.f32.mrb[0].mxu0
        %v1813 = vadd.f32 %v1539, %v1812
        %v1814 = vpop.f32.mrb[0].mxu0
        %v1815 = vpop.f32.mrb[0].mxu0
        %v1816 = vadd.f32 %v1539, %v1815
        %v1817 = vpop.f32.mrb[0].mxu0
        %1818 = vmatprep.mubr.bf16.mxu0 0
        %1819 = vmatmul.mubr.bf16.gmra.mrb[0].mxu0 %v1606
        %v1820 = vpop.f32.mrb[0].mxu0
        %v1821 = vadd.f32 %v1539, %v1820
        %v1822 = vpop.f32.mrb[0].mxu0
        %v1823 = vpop.f32.mrb[0].mxu0
        %v1824 = vadd.f32 %v1539, %v1823
        %v1825 = vpop.f32.mrb[0].mxu0
        %1826 = vmatprep.mubr.bf16.mxu0 0
        %1827 = vmatmul.mubr.bf16.gmra.mrb[0].mxu0 %v1609
        %v1828 = vpop.f32.mrb[0].mxu0
        %v1829 = vadd.f32 %v1539, %v1828
        %v1830 = vpop.f32.mrb[0].mxu0
        %v1831 = vpop.f32.mrb[0].mxu0
        %v1832 = vadd.f32 %v1539, %v1831
        %v1833 = vpop.f32.mrb[0].mxu0
        %1834 = vmatprep.mubr.bf16.mxu0 0
        %1835 = vmatmul.mubr.bf16.gmra.mrb[0].mxu0 %v1612
        %v1836 = vpop.f32.mrb[0].mxu0
        %v1837 = vadd.f32 %v1539, %v1836
        %v1838 = vpop.f32.mrb[0].mxu0
        %v1839 = vpop.f32.mrb[0].mxu0
        %v1840 = vadd.f32 %v1539, %v1839
        %v1841 = vpop.f32.mrb[0].mxu0
        %1842 = vmatprep.mubr.bf16.mxu0 0
        %1843 = vmatmul.mubr.bf16.gmra.mrb[0].mxu0 %v1615
        %v1844 = vpop.f32.mrb[0].mxu0
        %v1845 = vadd.f32 %v1539, %v1844
        %v1846 = vpop.f32.mrb[0].mxu0
        %v1847 = vpop.f32.mrb[0].mxu0
        %v1848 = vadd.f32 %v1539, %v1847
        %v1849 = vpop.f32.mrb[0].mxu0
        %1850 = vmatprep.mubr.bf16.mxu0 0
        %1851 = vmatmul.mubr.bf16.gmra.mrb[0].mxu0 %v1618
        %v1852 = vpop.f32.mrb[0].mxu0
        %v1853 = vadd.f32 %v1539, %v1852
        %v1854 = vpop.f32.mrb[0].mxu0
        %v1855 = vpop.f32.mrb[0].mxu0
        %v1856 = vadd.f32 %v1539, %v1855
        %v1857 = vpop.f32.mrb[0].mxu0
        %1858 = vmatprep.mubr.bf16.mxu0 0
        %1859 = vmatmul.mubr.bf16.gmra.mrb[0].mxu0 %v1621
        %v1860 = vpop.f32.mrb[0].mxu0
        %v1861 = vadd.f32 %v1539, %v1860
        %v1862 = vpop.f32.mrb[0].mxu0
        %v1863 = vpop.f32.mrb[0].mxu0
        %v1864 = vadd.f32 %v1539, %v1863
        %v1865 = vpop.f32.mrb[0].mxu0
        %1866 = vmatprep.mubr.bf16.mxu0 0
        %1867 = vmatmul.mubr.bf16.gmra.mrb[0].mxu0 %v1624
        %v1868 = vpop.f32.mrb[0].mxu0
        %v1869 = vadd.f32 %v1539, %v1868
        %v1870 = vpop.f32.mrb[0].mxu0
        %v1871 = vpop.f32.mrb[0].mxu0
        %v1872 = vadd.f32 %v1539, %v1871
        %v1873 = vpop.f32.mrb[0].mxu0
        %1874 = vmatprep.mubr.bf16.mxu0 0
        %1875 = vmatmul.mubr.bf16.gmra.mrb[0].mxu0 %v1627
        %v1876 = vpop.f32.mrb[0].mxu0
        %v1877 = vadd.f32 %v1539, %v1876
        %v1878 = vpop.f32.mrb[0].mxu0
        %v1879 = vpop.f32.mrb[0].mxu0
        %v1880 = vadd.f32 %v1539, %v1879
        %v1881 = vpop.f32.mrb[0].mxu0
        %1882 = vmatprep.mubr.bf16.mxu0 0
        %1883 = vmatmul.mubr.bf16.gmra.mrb[0].mxu0 %v1630
        %v1884 = vpop.f32.mrb[0].mxu0
        %v1885 = vadd.f32 %v1539, %v1884
        %v1886 = vpop.f32.mrb[0].mxu0
        %v1887 = vpop.f32.mrb[0].mxu0
        %v1888 = vadd.f32 %v1539, %v1887
        %v1889 = vpop.f32.mrb[0].mxu0
        %1890 = vmatprep.mubr.bf16.mxu0 0
        %1891 = vmatmul.mubr.bf16.gmra.mrb[0].mxu0 %v1633
        %v1892 = vpop.f32.mrb[0].mxu0
        %v1893 = vadd.f32 %v1539, %v1892
        %v1894 = vpop.f32.mrb[0].mxu0
        %v1895 = vpop.f32.mrb[0].mxu0
        %v1896 = vadd.f32 %v1539, %v1895
        %v1897 = vpop.f32.mrb[0].mxu0
        %1898 = vmatprep.mubr.bf16.mxu0 0
        %1899 = vmatmul.mubr.bf16.gmra.mrb[0].mxu0 %v1636
        %v1900 = vpop.f32.mrb[0].mxu0
        %v1901 = vadd.f32 %v1539, %v1900
        %v1902 = vpop.f32.mrb[0].mxu0
        %v1903 = vpop.f32.mrb[0].mxu0
        %v1904 = vadd.f32 %v1539, %v1903
        %v1905 = vpop.f32.mrb[0].mxu0
        %1906 = vmatprep.mubr.bf16.mxu0 0
        %1907 = vmatmul.mubr.bf16.gmra.mrb[0].mxu0 %v1639
        %v1908 = vpop.f32.mrb[0].mxu0
        %v1909 = vadd.f32 %v1539, %v1908
        %v1910 = vpop.f32.mrb[0].mxu0
        %v1911 = vpop.f32.mrb[0].mxu0
        %v1912 = vadd.f32 %v1539, %v1911
        %v1913 = vpop.f32.mrb[0].mxu0
        %1914 = vmatprep.mubr.bf16.mxu0 0
        %1915 = vmatmul.mubr.bf16.gmra.mrb[0].mxu0 %v1642
        %v1916 = vpop.f32.mrb[0].mxu0
        %v1917 = vadd.f32 %v1539, %v1916
        %v1918 = vpop.f32.mrb[0].mxu0
        %v1919 = vpop.f32.mrb[0].mxu0
        %v1920 = vadd.f32 %v1539, %v1919
        %v1921 = vpop.f32.mrb[0].mxu0
        %1922 = vmatprep.mubr.bf16.mxu0 0
        %1923 = vmatmul.mubr.bf16.gmra.mrb[0].mxu0 %v1645
        %v1924 = vpop.f32.mrb[0].mxu0
        %v1925 = vadd.f32 %v1539, %v1924
        %v1926 = vpop.f32.mrb[0].mxu0
        %v1927 = vpop.f32.mrb[0].mxu0
        %v1928 = vadd.f32 %v1539, %v1927
        %v1929 = vpop.f32.mrb[0].mxu0
        %1930 = vmatprep.mubr.bf16.mxu0 0
        %1931 = vmatmul.mubr.bf16.gmra.mrb[0].mxu0 %v1648
        %v1932 = vpop.f32.mrb[0].mxu0
        %v1933 = vadd.f32 %v1539, %v1932
        %v1934 = vpop.f32.mrb[0].mxu0
        %v1935 = vpop.f32.mrb[0].mxu0
        %v1936 = vadd.f32 %v1539, %v1935
        %v1937 = vpop.f32.mrb[0].mxu0
        %1938 = vdwg.mxu0
        %v1939 = vmax.f32 %v1685, 0.0
        %v1940 = vmax.f32 %v1688, 0.0
        %v1941 = vmax.f32 %v1693, 0.0
        %v1942 = vmax.f32 %v1696, 0.0
        %v1943 = vmax.f32 %v1701, 0.0
        %v1944 = vmax.f32 %v1704, 0.0
        %v1945 = vmax.f32 %v1709, 0.0
        %v1946 = vmax.f32 %v1712, 0.0
        %v1947 = vmax.f32 %v1717, 0.0
        %v1948 = vmax.f32 %v1720, 0.0
        %v1949 = vmax.f32 %v1725, 0.0
        %v1950 = vmax.f32 %v1728, 0.0
        %v1951 = vmax.f32 %v1733, 0.0
        %v1952 = vmax.f32 %v1736, 0.0
        %v1953 = vmax.f32 %v1741, 0.0
        %v1954 = vmax.f32 %v1744, 0.0
        %v1955 = vmax.f32 %v1749, 0.0
        %v1956 = vmax.f32 %v1752, 0.0
        %v1957 = vmax.f32 %v1757, 0.0
        %v1958 = vmax.f32 %v1760, 0.0
        %v1959 = vmax.f32 %v1765, 0.0
        %v1960 = vmax.f32 %v1768, 0.0
        %v1961 = vmax.f32 %v1773, 0.0
        %v1962 = vmax.f32 %v1776, 0.0
        %v1963 = vmax.f32 %v1781, 0.0
        %v1964 = vmax.f32 %v1784, 0.0
        %v1965 = vmax.f32 %v1789, 0.0
        %v1966 = vmax.f32 %v1792, 0.0
        %v1967 = vmax.f32 %v1797, 0.0
        %v1968 = vmax.f32 %v1800, 0.0
        %v1969 = vmax.f32 %v1805, 0.0
        %v1970 = vmax.f32 %v1808, 0.0
        %v1971 = vmax.f32 %v1813, 0.0
        %v1972 = vmax.f32 %v1816, 0.0
        %v1973 = vmax.f32 %v1821, 0.0
        %v1974 = vmax.f32 %v1824, 0.0
        %v1975 = vmax.f32 %v1829, 0.0
        %v1976 = vmax.f32 %v1832, 0.0
        %v1977 = vmax.f32 %v1837, 0.0
        %v1978 = vmax.f32 %v1840, 0.0
        %v1979 = vmax.f32 %v1845, 0.0
        %v1980 = vmax.f32 %v1848, 0.0
        %v1981 = vmax.f32 %v1853, 0.0
        %v1982 = vmax.f32 %v1856, 0.0
        %v1983 = vmax.f32 %v1861, 0.0
        %v1984 = vmax.f32 %v1864, 0.0
        %v1985 = vmax.f32 %v1869, 0.0
        %v1986 = vmax.f32 %v1872, 0.0
        %v1987 = vmax.f32 %v1877, 0.0
        %v1988 = vmax.f32 %v1880, 0.0
        %v1989 = vmax.f32 %v1885, 0.0
        %v1990 = vmax.f32 %v1888, 0.0
        %v1991 = vmax.f32 %v1893, 0.0
        %v1992 = vmax.f32 %v1896, 0.0
        %v1993 = vmax.f32 %v1901, 0.0
        %v1994 = vmax.f32 %v1904, 0.0
        %v1995 = vmax.f32 %v1909, 0.0
        %v1996 = vmax.f32 %v1912, 0.0
        %v1997 = vmax.f32 %v1917, 0.0
        %v1998 = vmax.f32 %v1920, 0.0
        %v1999 = vmax.f32 %v1925, 0.0
        %v2000 = vmax.f32 %v1928, 0.0
        %v2001 = vmax.f32 %v1933, 0.0
        %v2002 = vmax.f32 %v1936, 0.0
        %vm2003 = vcmp.ne.f32.partialorder %v1685, %v1685
        %vm2004 = vcmp.ne.f32.partialorder %v1688, %v1688
        %vm2005 = vcmp.ne.f32.partialorder %v1693, %v1693
        %vm2006 = vcmp.ne.f32.partialorder %v1696, %v1696
        %vm2007 = vcmp.ne.f32.partialorder %v1701, %v1701
        %vm2008 = vcmp.ne.f32.partialorder %v1704, %v1704
        %vm2009 = vcmp.ne.f32.partialorder %v1709, %v1709
        %vm2010 = vcmp.ne.f32.partialorder %v1712, %v1712
        %vm2011 = vcmp.ne.f32.partialorder %v1717, %v1717
        %vm2012 = vcmp.ne.f32.partialorder %v1720, %v1720
        %vm2013 = vcmp.ne.f32.partialorder %v1725, %v1725
        %vm2014 = vcmp.ne.f32.partialorder %v1728, %v1728
        %vm2015 = vcmp.ne.f32.partialorder %v1733, %v1733
        %vm2016 = vcmp.ne.f32.partialorder %v1736, %v1736
        %vm2017 = vcmp.ne.f32.partialorder %v1741, %v1741
        %vm2018 = vcmp.ne.f32.partialorder %v1744, %v1744
        %vm2019 = vcmp.ne.f32.partialorder %v1749, %v1749
        %vm2020 = vcmp.ne.f32.partialorder %v1752, %v1752
        %vm2021 = vcmp.ne.f32.partialorder %v1757, %v1757
        %vm2022 = vcmp.ne.f32.partialorder %v1760, %v1760
        %vm2023 = vcmp.ne.f32.partialorder %v1765, %v1765
        %vm2024 = vcmp.ne.f32.partialorder %v1768, %v1768
        %vm2025 = vcmp.ne.f32.partialorder %v1773, %v1773
        %vm2026 = vcmp.ne.f32.partialorder %v1776, %v1776
        %vm2027 = vcmp.ne.f32.partialorder %v1781, %v1781
        %vm2028 = vcmp.ne.f32.partialorder %v1784, %v1784
        %vm2029 = vcmp.ne.f32.partialorder %v1789, %v1789
        %vm2030 = vcmp.ne.f32.partialorder %v1792, %v1792
        %vm2031 = vcmp.ne.f32.partialorder %v1797, %v1797
        %vm2032 = vcmp.ne.f32.partialorder %v1800, %v1800
        %vm2033 = vcmp.ne.f32.partialorder %v1805, %v1805
        %vm2034 = vcmp.ne.f32.partialorder %v1808, %v1808
        %vm2035 = vcmp.ne.f32.partialorder %v1813, %v1813
        %vm2036 = vcmp.ne.f32.partialorder %v1816, %v1816
        %vm2037 = vcmp.ne.f32.partialorder %v1821, %v1821
        %vm2038 = vcmp.ne.f32.partialorder %v1824, %v1824
        %vm2039 = vcmp.ne.f32.partialorder %v1829, %v1829
        %vm2040 = vcmp.ne.f32.partialorder %v1832, %v1832
        %vm2041 = vcmp.ne.f32.partialorder %v1837, %v1837
        %vm2042 = vcmp.ne.f32.partialorder %v1840, %v1840
        %vm2043 = vcmp.ne.f32.partialorder %v1845, %v1845
        %vm2044 = vcmp.ne.f32.partialorder %v1848, %v1848
        %vm2045 = vcmp.ne.f32.partialorder %v1853, %v1853
        %vm2046 = vcmp.ne.f32.partialorder %v1856, %v1856
        %vm2047 = vcmp.ne.f32.partialorder %v1861, %v1861
        %vm2048 = vcmp.ne.f32.partialorder %v1864, %v1864
        %vm2049 = vcmp.ne.f32.partialorder %v1869, %v1869
        %vm2050 = vcmp.ne.f32.partialorder %v1872, %v1872
        %vm2051 = vcmp.ne.f32.partialorder %v1877, %v1877
        %vm2052 = vcmp.ne.f32.partialorder %v1880, %v1880
        %vm2053 = vcmp.ne.f32.partialorder %v1885, %v1885
        %vm2054 = vcmp.ne.f32.partialorder %v1888, %v1888
        %vm2055 = vcmp.ne.f32.partialorder %v1893, %v1893
        %vm2056 = vcmp.ne.f32.partialorder %v1896, %v1896
        %vm2057 = vcmp.ne.f32.partialorder %v1901, %v1901
        %vm2058 = vcmp.ne.f32.partialorder %v1904, %v1904
        %vm2059 = vcmp.ne.f32.partialorder %v1909, %v1909
        %vm2060 = vcmp.ne.f32.partialorder %v1912, %v1912
        %vm2061 = vcmp.ne.f32.partialorder %v1917, %v1917
        %vm2062 = vcmp.ne.f32.partialorder %v1920, %v1920
        %vm2063 = vcmp.ne.f32.partialorder %v1925, %v1925
        %vm2064 = vcmp.ne.f32.partialorder %v1928, %v1928
        %vm2065 = vcmp.ne.f32.partialorder %v1933, %v1933
        %vm2066 = vcmp.ne.f32.partialorder %v1936, %v1936
        %v2067 = vadd.f32 %v1685, 0.0
        %v2068 = vadd.f32 %v1688, 0.0
        %v2069 = vadd.f32 %v1693, 0.0
        %v2070 = vadd.f32 %v1696, 0.0
        %v2071 = vadd.f32 %v1701, 0.0
        %v2072 = vadd.f32 %v1704, 0.0
        %v2073 = vadd.f32 %v1709, 0.0
        %v2074 = vadd.f32 %v1712, 0.0
        %v2075 = vadd.f32 %v1717, 0.0
        %v2076 = vadd.f32 %v1720, 0.0
        %v2077 = vadd.f32 %v1725, 0.0
        %v2078 = vadd.f32 %v1728, 0.0
        %v2079 = vadd.f32 %v1733, 0.0
        %v2080 = vadd.f32 %v1736, 0.0
        %v2081 = vadd.f32 %v1741, 0.0
        %v2082 = vadd.f32 %v1744, 0.0
        %v2083 = vadd.f32 %v1749, 0.0
        %v2084 = vadd.f32 %v1752, 0.0
        %v2085 = vadd.f32 %v1757, 0.0
        %v2086 = vadd.f32 %v1760, 0.0
        %v2087 = vadd.f32 %v1765, 0.0
        %v2088 = vadd.f32 %v1768, 0.0
        %v2089 = vadd.f32 %v1773, 0.0
        %v2090 = vadd.f32 %v1776, 0.0
        %v2091 = vadd.f32 %v1781, 0.0
        %v2092 = vadd.f32 %v1784, 0.0
        %v2093 = vadd.f32 %v1789, 0.0
        %v2094 = vadd.f32 %v1792, 0.0
        %v2095 = vadd.f32 %v1797, 0.0
        %v2096 = vadd.f32 %v1800, 0.0
        %v2097 = vadd.f32 %v1805, 0.0
        %v2098 = vadd.f32 %v1808, 0.0
        %v2099 = vadd.f32 %v1813, 0.0
        %v2100 = vadd.f32 %v1816, 0.0
        %v2101 = vadd.f32 %v1821, 0.0
        %v2102 = vadd.f32 %v1824, 0.0
        %v2103 = vadd.f32 %v1829, 0.0
        %v2104 = vadd.f32 %v1832, 0.0
        %v2105 = vadd.f32 %v1837, 0.0
        %v2106 = vadd.f32 %v1840, 0.0
        %v2107 = vadd.f32 %v1845, 0.0
        %v2108 = vadd.f32 %v1848, 0.0
        %v2109 = vadd.f32 %v1853, 0.0
        %v2110 = vadd.f32 %v1856, 0.0
        %v2111 = vadd.f32 %v1861, 0.0
        %v2112 = vadd.f32 %v1864, 0.0
        %v2113 = vadd.f32 %v1869, 0.0
        %v2114 = vadd.f32 %v1872, 0.0
        %v2115 = vadd.f32 %v1877, 0.0
        %v2116 = vadd.f32 %v1880, 0.0
        %v2117 = vadd.f32 %v1885, 0.0
        %v2118 = vadd.f32 %v1888, 0.0
        %v2119 = vadd.f32 %v1893, 0.0
        %v2120 = vadd.f32 %v1896, 0.0
        %v2121 = vadd.f32 %v1901, 0.0
        %v2122 = vadd.f32 %v1904, 0.0
        %v2123 = vadd.f32 %v1909, 0.0
        %v2124 = vadd.f32 %v1912, 0.0
        %v2125 = vadd.f32 %v1917, 0.0
        %v2126 = vadd.f32 %v1920, 0.0
        %v2127 = vadd.f32 %v1925, 0.0
        %v2128 = vadd.f32 %v1928, 0.0
        %v2129 = vadd.f32 %v1933, 0.0
        %v2130 = vadd.f32 %v1936, 0.0
        %v2131 = vand.u32 2147483647, %v1685
        %v2132 = vand.u32 2147483647, %v1688
        %v2133 = vand.u32 2147483647, %v1693
        %v2134 = vand.u32 2147483647, %v1696
        %v2135 = vand.u32 2147483647, %v1701
        %v2136 = vand.u32 2147483647, %v1704
        %v2137 = vand.u32 2147483647, %v1709
        %v2138 = vand.u32 2147483647, %v1712
        %v2139 = vand.u32 2147483647, %v1717
        %v2140 = vand.u32 2147483647, %v1720
        %v2141 = vand.u32 2147483647, %v1725
        %v2142 = vand.u32 2147483647, %v1728
        %v2143 = vand.u32 2147483647, %v1733
        %v2144 = vand.u32 2147483647, %v1736
        %v2145 = vand.u32 2147483647, %v1741
        %v2146 = vand.u32 2147483647, %v1744
        %v2147 = vand.u32 2147483647, %v1749
        %v2148 = vand.u32 2147483647, %v1752
        %v2149 = vand.u32 2147483647, %v1757
        %v2150 = vand.u32 2147483647, %v1760
        %v2151 = vand.u32 2147483647, %v1765
        %v2152 = vand.u32 2147483647, %v1768
        %v2153 = vand.u32 2147483647, %v1773
        %v2154 = vand.u32 2147483647, %v1776
        %v2155 = vand.u32 2147483647, %v1781
        %v2156 = vand.u32 2147483647, %v1784
        %v2157 = vand.u32 2147483647, %v1789
        %v2158 = vand.u32 2147483647, %v1792
        %v2159 = vand.u32 2147483647, %v1797
        %v2160 = vand.u32 2147483647, %v1800
        %v2161 = vand.u32 2147483647, %v1805
        %v2162 = vand.u32 2147483647, %v1808
        %v2163 = vand.u32 2147483647, %v1813
        %v2164 = vand.u32 2147483647, %v1816
        %v2165 = vand.u32 2147483647, %v1821
        %v2166 = vand.u32 2147483647, %v1824
        %v2167 = vand.u32 2147483647, %v1829
        %v2168 = vand.u32 2147483647, %v1832
        %v2169 = vand.u32 2147483647, %v1837
        %v2170 = vand.u32 2147483647, %v1840
        %v2171 = vand.u32 2147483647, %v1845
        %v2172 = vand.u32 2147483647, %v1848
        %v2173 = vand.u32 2147483647, %v1853
        %v2174 = vand.u32 2147483647, %v1856
        %v2175 = vand.u32 2147483647, %v1861
        %v2176 = vand.u32 2147483647, %v1864
        %v2177 = vand.u32 2147483647, %v1869
        %v2178 = vand.u32 2147483647, %v1872
        %v2179 = vand.u32 2147483647, %v1877
        %v2180 = vand.u32 2147483647, %v1880
        %v2181 = vand.u32 2147483647, %v1885
        %v2182 = vand.u32 2147483647, %v1888
        %v2183 = vand.u32 2147483647, %v1893
        %v2184 = vand.u32 2147483647, %v1896
        %v2185 = vand.u32 2147483647, %v1901
        %v2186 = vand.u32 2147483647, %v1904
        %v2187 = vand.u32 2147483647, %v1909
        %v2188 = vand.u32 2147483647, %v1912
        %v2189 = vand.u32 2147483647, %v1917
        %v2190 = vand.u32 2147483647, %v1920
        %v2191 = vand.u32 2147483647, %v1925
        %v2192 = vand.u32 2147483647, %v1928
        %v2193 = vand.u32 2147483647, %v1933
        %v2194 = vand.u32 2147483647, %v1936
        %v2195 = vsub.f32 0.0, %v2131
        %v2196 = vsub.f32 0.0, %v2132
        %v2197 = vsub.f32 0.0, %v2133
        %v2198 = vsub.f32 0.0, %v2134
        %v2199 = vsub.f32 0.0, %v2135
        %v2200 = vsub.f32 0.0, %v2136
        %v2201 = vsub.f32 0.0, %v2137
        %v2202 = vsub.f32 0.0, %v2138
        %v2203 = vsub.f32 0.0, %v2139
        %v2204 = vsub.f32 0.0, %v2140
        %v2205 = vsub.f32 0.0, %v2141
        %v2206 = vsub.f32 0.0, %v2142
        %v2207 = vsub.f32 0.0, %v2143
        %v2208 = vsub.f32 0.0, %v2144
        %v2209 = vsub.f32 0.0, %v2145
        %v2210 = vsub.f32 0.0, %v2146
        %v2211 = vsub.f32 0.0, %v2147
        %v2212 = vsub.f32 0.0, %v2148
        %v2213 = vsub.f32 0.0, %v2149
        %v2214 = vsub.f32 0.0, %v2150
        %v2215 = vsub.f32 0.0, %v2151
        %v2216 = vsub.f32 0.0, %v2152
        %v2217 = vsub.f32 0.0, %v2153
        %v2218 = vsub.f32 0.0, %v2154
        %v2219 = vsub.f32 0.0, %v2155
        %v2220 = vsub.f32 0.0, %v2156
        %v2221 = vsub.f32 0.0, %v2157
        %v2222 = vsub.f32 0.0, %v2158
        %v2223 = vsub.f32 0.0, %v2159
        %v2224 = vsub.f32 0.0, %v2160
        %v2225 = vsub.f32 0.0, %v2161
        %v2226 = vsub.f32 0.0, %v2162
        %v2227 = vsub.f32 0.0, %v2163
        %v2228 = vsub.f32 0.0, %v2164
        %v2229 = vsub.f32 0.0, %v2165
        %v2230 = vsub.f32 0.0, %v2166
        %v2231 = vsub.f32 0.0, %v2167
        %v2232 = vsub.f32 0.0, %v2168
        %v2233 = vsub.f32 0.0, %v2169
        %v2234 = vsub.f32 0.0, %v2170
        %v2235 = vsub.f32 0.0, %v2171
        %v2236 = vsub.f32 0.0, %v2172
        %v2237 = vsub.f32 0.0, %v2173
        %v2238 = vsub.f32 0.0, %v2174
        %v2239 = vsub.f32 0.0, %v2175
        %v2240 = vsub.f32 0.0, %v2176
        %v2241 = vsub.f32 0.0, %v2177
        %v2242 = vsub.f32 0.0, %v2178
        %v2243 = vsub.f32 0.0, %v2179
        %v2244 = vsub.f32 0.0, %v2180
        %v2245 = vsub.f32 0.0, %v2181
        %v2246 = vsub.f32 0.0, %v2182
        %v2247 = vsub.f32 0.0, %v2183
        %v2248 = vsub.f32 0.0, %v2184
        %v2249 = vsub.f32 0.0, %v2185
        %v2250 = vsub.f32 0.0, %v2186
        %v2251 = vsub.f32 0.0, %v2187
        %v2252 = vsub.f32 0.0, %v2188
        %v2253 = vsub.f32 0.0, %v2189
        %v2254 = vsub.f32 0.0, %v2190
        %v2255 = vsub.f32 0.0, %v2191
        %v2256 = vsub.f32 0.0, %v2192
        %v2257 = vsub.f32 0.0, %v2193
        %v2258 = vsub.f32 0.0, %v2194
        %v2259 = vmul.f32 %v2195, 1.442695
        %v2260 = vpow.pop %v2259
        %v2261 = vmul.f32 %v2196, 1.442695
        %v2262 = vpow.pop %v2261
        %v2263 = vmul.f32 %v2197, 1.442695
        %v2264 = vpow.pop %v2263
        %v2265 = vmul.f32 %v2198, 1.442695
        %v2266 = vpow.pop %v2265
        %v2267 = vmul.f32 %v2199, 1.442695
        %v2268 = vpow.pop %v2267
        %v2269 = vmul.f32 %v2200, 1.442695
        %v2270 = vpow.pop %v2269
        %v2271 = vmul.f32 %v2201, 1.442695
        %v2272 = vpow.pop %v2271
        %v2273 = vmul.f32 %v2202, 1.442695
        %v2274 = vpow.pop %v2273
        %v2275 = vmul.f32 %v2203, 1.442695
        %v2276 = vpow.pop %v2275
        %v2277 = vmul.f32 %v2204, 1.442695
        %v2278 = vpow.pop %v2277
        %v2279 = vmul.f32 %v2205, 1.442695
        %v2280 = vpow.pop %v2279
        %v2281 = vmul.f32 %v2206, 1.442695
        %v2282 = vpow.pop %v2281
        %v2283 = vmul.f32 %v2207, 1.442695
        %v2284 = vpow.pop %v2283
        %v2285 = vmul.f32 %v2208, 1.442695
        %v2286 = vpow.pop %v2285
        %v2287 = vmul.f32 %v2209, 1.442695
        %v2288 = vpow.pop %v2287
        %v2289 = vmul.f32 %v2210, 1.442695
        %v2290 = vpow.pop %v2289
        %v2291 = vmul.f32 %v2211, 1.442695
        %v2292 = vpow.pop %v2291
        %v2293 = vmul.f32 %v2212, 1.442695
        %v2294 = vpow.pop %v2293
        %v2295 = vmul.f32 %v2213, 1.442695
        %v2296 = vpow.pop %v2295
        %v2297 = vmul.f32 %v2214, 1.442695
        %v2298 = vpow.pop %v2297
        %v2299 = vmul.f32 %v2215, 1.442695
        %v2300 = vpow.pop %v2299
        %v2301 = vmul.f32 %v2216, 1.442695
        %v2302 = vpow.pop %v2301
        %v2303 = vmul.f32 %v2217, 1.442695
        %v2304 = vpow.pop %v2303
        %v2305 = vmul.f32 %v2218, 1.442695
        %v2306 = vpow.pop %v2305
        %v2307 = vmul.f32 %v2219, 1.442695
        %v2308 = vpow.pop %v2307
        %v2309 = vmul.f32 %v2220, 1.442695
        %v2310 = vpow.pop %v2309
        %v2311 = vmul.f32 %v2221, 1.442695
        %v2312 = vpow.pop %v2311
        %v2313 = vmul.f32 %v2222, 1.442695
        %v2314 = vpow.pop %v2313
        %v2315 = vmul.f32 %v2223, 1.442695
        %v2316 = vpow.pop %v2315
        %v2317 = vmul.f32 %v2224, 1.442695
        %v2318 = vpow.pop %v2317
        %v2319 = vmul.f32 %v2225, 1.442695
        %v2320 = vpow.pop %v2319
        %v2321 = vmul.f32 %v2226, 1.442695
        %v2322 = vpow.pop %v2321
        %v2323 = vmul.f32 %v2227, 1.442695
        %v2324 = vpow.pop %v2323
        %v2325 = vmul.f32 %v2228, 1.442695
        %v2326 = vpow.pop %v2325
        %v2327 = vmul.f32 %v2229, 1.442695
        %v2328 = vpow.pop %v2327
        %v2329 = vmul.f32 %v2230, 1.442695
        %v2330 = vpow.pop %v2329
        %v2331 = vmul.f32 %v2231, 1.442695
        %v2332 = vpow.pop %v2331
        %v2333 = vmul.f32 %v2232, 1.442695
        %v2334 = vpow.pop %v2333
        %v2335 = vmul.f32 %v2233, 1.442695
        %v2336 = vpow.pop %v2335
        %v2337 = vmul.f32 %v2234, 1.442695
        %v2338 = vpow.pop %v2337
        %v2339 = vmul.f32 %v2235, 1.442695
        %v2340 = vpow.pop %v2339
        %v2341 = vmul.f32 %v2236, 1.442695
        %v2342 = vpow.pop %v2341
        %v2343 = vmul.f32 %v2237, 1.442695
        %v2344 = vpow.pop %v2343
        %v2345 = vmul.f32 %v2238, 1.442695
        %v2346 = vpow.pop %v2345
        %v2347 = vmul.f32 %v2239, 1.442695
        %v2348 = vpow.pop %v2347
        %v2349 = vmul.f32 %v2240, 1.442695
        %v2350 = vpow.pop %v2349
        %v2351 = vmul.f32 %v2241, 1.442695
        %v2352 = vpow.pop %v2351
        %v2353 = vmul.f32 %v2242, 1.442695
        %v2354 = vpow.pop %v2353
        %v2355 = vmul.f32 %v2243, 1.442695
        %v2356 = vpow.pop %v2355
        %v2357 = vmul.f32 %v2244, 1.442695
        %v2358 = vpow.pop %v2357
        %v2359 = vmul.f32 %v2245, 1.442695
        %v2360 = vpow.pop %v2359
        %v2361 = vmul.f32 %v2246, 1.442695
        %v2362 = vpow.pop %v2361
        %v2363 = vmul.f32 %v2247, 1.442695
        %v2364 = vpow.pop %v2363
        %v2365 = vmul.f32 %v2248, 1.442695
        %v2366 = vpow.pop %v2365
        %v2367 = vmul.f32 %v2249, 1.442695
        %v2368 = vpow.pop %v2367
        %v2369 = vmul.f32 %v2250, 1.442695
        %v2370 = vpow.pop %v2369
        %v2371 = vmul.f32 %v2251, 1.442695
        %v2372 = vpow.pop %v2371
        %v2373 = vmul.f32 %v2252, 1.442695
        %v2374 = vpow.pop %v2373
        %v2375 = vmul.f32 %v2253, 1.442695
        %v2376 = vpow.pop %v2375
        %v2377 = vmul.f32 %v2254, 1.442695
        %v2378 = vpow.pop %v2377
        %v2379 = vmul.f32 %v2255, 1.442695
        %v2380 = vpow.pop %v2379
        %v2381 = vmul.f32 %v2256, 1.442695
        %v2382 = vpow.pop %v2381
        %v2383 = vmul.f32 %v2257, 1.442695
        %v2384 = vpow.pop %v2383
        %v2385 = vmul.f32 %v2258, 1.442695
        %v2386 = vpow.pop %v2385
        %v2387 = vadd.f32 %v2260, 1.0
        %v2388 = vlog2.pop %v2387
        %v2389 = vmul.f32 %v2388, 0.6931472
        %v2390 = vmul.f32 -0.5, %v2260
        %v2391 = vadd.f32 %v2390, 1.0
        %v2392 = vmul.f32 %v2391, %v2260
        %v2393 = vand.u32 2147483647, %v2260
        %vm2394 = vcmp.lt.f32.partialorder %v2393, 0.0004427343
        %v2395 = vsel %vm2394, %v2392, %v2389
        %v2396 = vadd.f32 %v2262, 1.0
        %v2397 = vlog2.pop %v2396
        %v2398 = vmul.f32 %v2397, 0.6931472
        %v2399 = vmul.f32 -0.5, %v2262
        %v2400 = vadd.f32 %v2399, 1.0
        %v2401 = vmul.f32 %v2400, %v2262
        %v2402 = vand.u32 2147483647, %v2262
        %vm2403 = vcmp.lt.f32.partialorder %v2402, 0.0004427343
        %v2404 = vsel %vm2403, %v2401, %v2398
        %v2405 = vadd.f32 %v2264, 1.0
        %v2406 = vlog2.pop %v2405
        %v2407 = vmul.f32 %v2406, 0.6931472
        %v2408 = vmul.f32 -0.5, %v2264
        %v2409 = vadd.f32 %v2408, 1.0
        %v2410 = vmul.f32 %v2409, %v2264
        %v2411 = vand.u32 2147483647, %v2264
        %vm2412 = vcmp.lt.f32.partialorder %v2411, 0.0004427343
        %v2413 = vsel %vm2412, %v2410, %v2407
        %v2414 = vadd.f32 %v2266, 1.0
        %v2415 = vlog2.pop %v2414
        %v2416 = vmul.f32 %v2415, 0.6931472
        %v2417 = vmul.f32 -0.5, %v2266
        %v2418 = vadd.f32 %v2417, 1.0
        %v2419 = vmul.f32 %v2418, %v2266
        %v2420 = vand.u32 2147483647, %v2266
        %vm2421 = vcmp.lt.f32.partialorder %v2420, 0.0004427343
        %v2422 = vsel %vm2421, %v2419, %v2416
        %v2423 = vadd.f32 %v2268, 1.0
        %v2424 = vlog2.pop %v2423
        %v2425 = vmul.f32 %v2424, 0.6931472
        %v2426 = vmul.f32 -0.5, %v2268
        %v2427 = vadd.f32 %v2426, 1.0
        %v2428 = vmul.f32 %v2427, %v2268
        %v2429 = vand.u32 2147483647, %v2268
        %vm2430 = vcmp.lt.f32.partialorder %v2429, 0.0004427343
        %v2431 = vsel %vm2430, %v2428, %v2425
        %v2432 = vadd.f32 %v2270, 1.0
        %v2433 = vlog2.pop %v2432
        %v2434 = vmul.f32 %v2433, 0.6931472
        %v2435 = vmul.f32 -0.5, %v2270
        %v2436 = vadd.f32 %v2435, 1.0
        %v2437 = vmul.f32 %v2436, %v2270
        %v2438 = vand.u32 2147483647, %v2270
        %vm2439 = vcmp.lt.f32.partialorder %v2438, 0.0004427343
        %v2440 = vsel %vm2439, %v2437, %v2434
        %v2441 = vadd.f32 %v2272, 1.0
        %v2442 = vlog2.pop %v2441
        %v2443 = vmul.f32 %v2442, 0.6931472
        %v2444 = vmul.f32 -0.5, %v2272
        %v2445 = vadd.f32 %v2444, 1.0
        %v2446 = vmul.f32 %v2445, %v2272
        %v2447 = vand.u32 2147483647, %v2272
        %vm2448 = vcmp.lt.f32.partialorder %v2447, 0.0004427343
        %v2449 = vsel %vm2448, %v2446, %v2443
        %v2450 = vadd.f32 %v2274, 1.0
        %v2451 = vlog2.pop %v2450
        %v2452 = vmul.f32 %v2451, 0.6931472
        %v2453 = vmul.f32 -0.5, %v2274
        %v2454 = vadd.f32 %v2453, 1.0
        %v2455 = vmul.f32 %v2454, %v2274
        %v2456 = vand.u32 2147483647, %v2274
        %vm2457 = vcmp.lt.f32.partialorder %v2456, 0.0004427343
        %v2458 = vsel %vm2457, %v2455, %v2452
        %v2459 = vadd.f32 %v2276, 1.0
        %v2460 = vlog2.pop %v2459
        %v2461 = vmul.f32 %v2460, 0.6931472
        %v2462 = vmul.f32 -0.5, %v2276
        %v2463 = vadd.f32 %v2462, 1.0
        %v2464 = vmul.f32 %v2463, %v2276
        %v2465 = vand.u32 2147483647, %v2276
        %vm2466 = vcmp.lt.f32.partialorder %v2465, 0.0004427343
        %v2467 = vsel %vm2466, %v2464, %v2461
        %v2468 = vadd.f32 %v2278, 1.0
        %v2469 = vlog2.pop %v2468
        %v2470 = vmul.f32 %v2469, 0.6931472
        %v2471 = vmul.f32 -0.5, %v2278
        %v2472 = vadd.f32 %v2471, 1.0
        %v2473 = vmul.f32 %v2472, %v2278
        %v2474 = vand.u32 2147483647, %v2278
        %vm2475 = vcmp.lt.f32.partialorder %v2474, 0.0004427343
        %v2476 = vsel %vm2475, %v2473, %v2470
        %v2477 = vadd.f32 %v2280, 1.0
        %v2478 = vlog2.pop %v2477
        %v2479 = vmul.f32 %v2478, 0.6931472
        %v2480 = vmul.f32 -0.5, %v2280
        %v2481 = vadd.f32 %v2480, 1.0
        %v2482 = vmul.f32 %v2481, %v2280
        %v2483 = vand.u32 2147483647, %v2280
        %vm2484 = vcmp.lt.f32.partialorder %v2483, 0.0004427343
        %v2485 = vsel %vm2484, %v2482, %v2479
        %v2486 = vadd.f32 %v2282, 1.0
        %v2487 = vlog2.pop %v2486
        %v2488 = vmul.f32 %v2487, 0.6931472
        %v2489 = vmul.f32 -0.5, %v2282
        %v2490 = vadd.f32 %v2489, 1.0
        %v2491 = vmul.f32 %v2490, %v2282
        %v2492 = vand.u32 2147483647, %v2282
        %vm2493 = vcmp.lt.f32.partialorder %v2492, 0.0004427343
        %v2494 = vsel %vm2493, %v2491, %v2488
        %v2495 = vadd.f32 %v2284, 1.0
        %v2496 = vlog2.pop %v2495
        %v2497 = vmul.f32 %v2496, 0.6931472
        %v2498 = vmul.f32 -0.5, %v2284
        %v2499 = vadd.f32 %v2498, 1.0
        %v2500 = vmul.f32 %v2499, %v2284
        %v2501 = vand.u32 2147483647, %v2284
        %vm2502 = vcmp.lt.f32.partialorder %v2501, 0.0004427343
        %v2503 = vsel %vm2502, %v2500, %v2497
        %v2504 = vadd.f32 %v2286, 1.0
        %v2505 = vlog2.pop %v2504
        %v2506 = vmul.f32 %v2505, 0.6931472
        %v2507 = vmul.f32 -0.5, %v2286
        %v2508 = vadd.f32 %v2507, 1.0
        %v2509 = vmul.f32 %v2508, %v2286
        %v2510 = vand.u32 2147483647, %v2286
        %vm2511 = vcmp.lt.f32.partialorder %v2510, 0.0004427343
        %v2512 = vsel %vm2511, %v2509, %v2506
        %v2513 = vadd.f32 %v2288, 1.0
        %v2514 = vlog2.pop %v2513
        %v2515 = vmul.f32 %v2514, 0.6931472
        %v2516 = vmul.f32 -0.5, %v2288
        %v2517 = vadd.f32 %v2516, 1.0
        %v2518 = vmul.f32 %v2517, %v2288
        %v2519 = vand.u32 2147483647, %v2288
        %vm2520 = vcmp.lt.f32.partialorder %v2519, 0.0004427343
        %v2521 = vsel %vm2520, %v2518, %v2515
        %v2522 = vadd.f32 %v2290, 1.0
        %v2523 = vlog2.pop %v2522
        %v2524 = vmul.f32 %v2523, 0.6931472
        %v2525 = vmul.f32 -0.5, %v2290
        %v2526 = vadd.f32 %v2525, 1.0
        %v2527 = vmul.f32 %v2526, %v2290
        %v2528 = vand.u32 2147483647, %v2290
        %vm2529 = vcmp.lt.f32.partialorder %v2528, 0.0004427343
        %v2530 = vsel %vm2529, %v2527, %v2524
        %v2531 = vadd.f32 %v2292, 1.0
        %v2532 = vlog2.pop %v2531
        %v2533 = vmul.f32 %v2532, 0.6931472
        %v2534 = vmul.f32 -0.5, %v2292
        %v2535 = vadd.f32 %v2534, 1.0
        %v2536 = vmul.f32 %v2535, %v2292
        %v2537 = vand.u32 2147483647, %v2292
        %vm2538 = vcmp.lt.f32.partialorder %v2537, 0.0004427343
        %v2539 = vsel %vm2538, %v2536, %v2533
        %v2540 = vadd.f32 %v2294, 1.0
        %v2541 = vlog2.pop %v2540
        %v2542 = vmul.f32 %v2541, 0.6931472
        %v2543 = vmul.f32 -0.5, %v2294
        %v2544 = vadd.f32 %v2543, 1.0
        %v2545 = vmul.f32 %v2544, %v2294
        %v2546 = vand.u32 2147483647, %v2294
        %vm2547 = vcmp.lt.f32.partialorder %v2546, 0.0004427343
        %v2548 = vsel %vm2547, %v2545, %v2542
        %v2549 = vadd.f32 %v2296, 1.0
        %v2550 = vlog2.pop %v2549
        %v2551 = vmul.f32 %v2550, 0.6931472
        %v2552 = vmul.f32 -0.5, %v2296
        %v2553 = vadd.f32 %v2552, 1.0
        %v2554 = vmul.f32 %v2553, %v2296
        %v2555 = vand.u32 2147483647, %v2296
        %vm2556 = vcmp.lt.f32.partialorder %v2555, 0.0004427343
        %v2557 = vsel %vm2556, %v2554, %v2551
        %v2558 = vadd.f32 %v2298, 1.0
        %v2559 = vlog2.pop %v2558
        %v2560 = vmul.f32 %v2559, 0.6931472
        %v2561 = vmul.f32 -0.5, %v2298
        %v2562 = vadd.f32 %v2561, 1.0
        %v2563 = vmul.f32 %v2562, %v2298
        %v2564 = vand.u32 2147483647, %v2298
        %vm2565 = vcmp.lt.f32.partialorder %v2564, 0.0004427343
        %v2566 = vsel %vm2565, %v2563, %v2560
        %v2567 = vadd.f32 %v2300, 1.0
        %v2568 = vlog2.pop %v2567
        %v2569 = vmul.f32 %v2568, 0.6931472
        %v2570 = vmul.f32 -0.5, %v2300
        %v2571 = vadd.f32 %v2570, 1.0
        %v2572 = vmul.f32 %v2571, %v2300
        %v2573 = vand.u32 2147483647, %v2300
        %vm2574 = vcmp.lt.f32.partialorder %v2573, 0.0004427343
        %v2575 = vsel %vm2574, %v2572, %v2569
        %v2576 = vadd.f32 %v2302, 1.0
        %v2577 = vlog2.pop %v2576
        %v2578 = vmul.f32 %v2577, 0.6931472
        %v2579 = vmul.f32 -0.5, %v2302
        %v2580 = vadd.f32 %v2579, 1.0
        %v2581 = vmul.f32 %v2580, %v2302
        %v2582 = vand.u32 2147483647, %v2302
        %vm2583 = vcmp.lt.f32.partialorder %v2582, 0.0004427343
        %v2584 = vsel %vm2583, %v2581, %v2578
        %v2585 = vadd.f32 %v2304, 1.0
        %v2586 = vlog2.pop %v2585
        %v2587 = vmul.f32 %v2586, 0.6931472
        %v2588 = vmul.f32 -0.5, %v2304
        %v2589 = vadd.f32 %v2588, 1.0
        %v2590 = vmul.f32 %v2589, %v2304
        %v2591 = vand.u32 2147483647, %v2304
        %vm2592 = vcmp.lt.f32.partialorder %v2591, 0.0004427343
        %v2593 = vsel %vm2592, %v2590, %v2587
        %v2594 = vadd.f32 %v2306, 1.0
        %v2595 = vlog2.pop %v2594
        %v2596 = vmul.f32 %v2595, 0.6931472
        %v2597 = vmul.f32 -0.5, %v2306
        %v2598 = vadd.f32 %v2597, 1.0
        %v2599 = vmul.f32 %v2598, %v2306
        %v2600 = vand.u32 2147483647, %v2306
        %vm2601 = vcmp.lt.f32.partialorder %v2600, 0.0004427343
        %v2602 = vsel %vm2601, %v2599, %v2596
        %v2603 = vadd.f32 %v2308, 1.0
        %v2604 = vlog2.pop %v2603
        %v2605 = vmul.f32 %v2604, 0.6931472
        %v2606 = vmul.f32 -0.5, %v2308
        %v2607 = vadd.f32 %v2606, 1.0
        %v2608 = vmul.f32 %v2607, %v2308
        %v2609 = vand.u32 2147483647, %v2308
        %vm2610 = vcmp.lt.f32.partialorder %v2609, 0.0004427343
        %v2611 = vsel %vm2610, %v2608, %v2605
        %v2612 = vadd.f32 %v2310, 1.0
        %v2613 = vlog2.pop %v2612
        %v2614 = vmul.f32 %v2613, 0.6931472
        %v2615 = vmul.f32 -0.5, %v2310
        %v2616 = vadd.f32 %v2615, 1.0
        %v2617 = vmul.f32 %v2616, %v2310
        %v2618 = vand.u32 2147483647, %v2310
        %vm2619 = vcmp.lt.f32.partialorder %v2618, 0.0004427343
        %v2620 = vsel %vm2619, %v2617, %v2614
        %v2621 = vadd.f32 %v2312, 1.0
        %v2622 = vlog2.pop %v2621
        %v2623 = vmul.f32 %v2622, 0.6931472
        %v2624 = vmul.f32 -0.5, %v2312
        %v2625 = vadd.f32 %v2624, 1.0
        %v2626 = vmul.f32 %v2625, %v2312
        %v2627 = vand.u32 2147483647, %v2312
        %vm2628 = vcmp.lt.f32.partialorder %v2627, 0.0004427343
        %v2629 = vsel %vm2628, %v2626, %v2623
        %v2630 = vadd.f32 %v2314, 1.0
        %v2631 = vlog2.pop %v2630
        %v2632 = vmul.f32 %v2631, 0.6931472
        %v2633 = vmul.f32 -0.5, %v2314
        %v2634 = vadd.f32 %v2633, 1.0
        %v2635 = vmul.f32 %v2634, %v2314
        %v2636 = vand.u32 2147483647, %v2314
        %vm2637 = vcmp.lt.f32.partialorder %v2636, 0.0004427343
        %v2638 = vsel %vm2637, %v2635, %v2632
        %v2639 = vadd.f32 %v2316, 1.0
        %v2640 = vlog2.pop %v2639
        %v2641 = vmul.f32 %v2640, 0.6931472
        %v2642 = vmul.f32 -0.5, %v2316
        %v2643 = vadd.f32 %v2642, 1.0
        %v2644 = vmul.f32 %v2643, %v2316
        %v2645 = vand.u32 2147483647, %v2316
        %vm2646 = vcmp.lt.f32.partialorder %v2645, 0.0004427343
        %v2647 = vsel %vm2646, %v2644, %v2641
        %v2648 = vadd.f32 %v2318, 1.0
        %v2649 = vlog2.pop %v2648
        %v2650 = vmul.f32 %v2649, 0.6931472
        %v2651 = vmul.f32 -0.5, %v2318
        %v2652 = vadd.f32 %v2651, 1.0
        %v2653 = vmul.f32 %v2652, %v2318
        %v2654 = vand.u32 2147483647, %v2318
        %vm2655 = vcmp.lt.f32.partialorder %v2654, 0.0004427343
        %v2656 = vsel %vm2655, %v2653, %v2650
        %v2657 = vadd.f32 %v2320, 1.0
        %v2658 = vlog2.pop %v2657
        %v2659 = vmul.f32 %v2658, 0.6931472
        %v2660 = vmul.f32 -0.5, %v2320
        %v2661 = vadd.f32 %v2660, 1.0
        %v2662 = vmul.f32 %v2661, %v2320
        %v2663 = vand.u32 2147483647, %v2320
        %vm2664 = vcmp.lt.f32.partialorder %v2663, 0.0004427343
        %v2665 = vsel %vm2664, %v2662, %v2659
        %v2666 = vadd.f32 %v2322, 1.0
        %v2667 = vlog2.pop %v2666
        %v2668 = vmul.f32 %v2667, 0.6931472
        %v2669 = vmul.f32 -0.5, %v2322
        %v2670 = vadd.f32 %v2669, 1.0
        %v2671 = vmul.f32 %v2670, %v2322
        %v2672 = vand.u32 2147483647, %v2322
        %vm2673 = vcmp.lt.f32.partialorder %v2672, 0.0004427343
        %v2674 = vsel %vm2673, %v2671, %v2668
        %v2675 = vadd.f32 %v2324, 1.0
        %v2676 = vlog2.pop %v2675
        %v2677 = vmul.f32 %v2676, 0.6931472
        %v2678 = vmul.f32 -0.5, %v2324
        %v2679 = vadd.f32 %v2678, 1.0
        %v2680 = vmul.f32 %v2679, %v2324
        %v2681 = vand.u32 2147483647, %v2324
        %vm2682 = vcmp.lt.f32.partialorder %v2681, 0.0004427343
        %v2683 = vsel %vm2682, %v2680, %v2677
        %v2684 = vadd.f32 %v2326, 1.0
        %v2685 = vlog2.pop %v2684
        %v2686 = vmul.f32 %v2685, 0.6931472
        %v2687 = vmul.f32 -0.5, %v2326
        %v2688 = vadd.f32 %v2687, 1.0
        %v2689 = vmul.f32 %v2688, %v2326
        %v2690 = vand.u32 2147483647, %v2326
        %vm2691 = vcmp.lt.f32.partialorder %v2690, 0.0004427343
        %v2692 = vsel %vm2691, %v2689, %v2686
        %v2693 = vadd.f32 %v2328, 1.0
        %v2694 = vlog2.pop %v2693
        %v2695 = vmul.f32 %v2694, 0.6931472
        %v2696 = vmul.f32 -0.5, %v2328
        %v2697 = vadd.f32 %v2696, 1.0
        %v2698 = vmul.f32 %v2697, %v2328
        %v2699 = vand.u32 2147483647, %v2328
        %vm2700 = vcmp.lt.f32.partialorder %v2699, 0.0004427343
        %v2701 = vsel %vm2700, %v2698, %v2695
        %v2702 = vadd.f32 %v2330, 1.0
        %v2703 = vlog2.pop %v2702
        %v2704 = vmul.f32 %v2703, 0.6931472
        %v2705 = vmul.f32 -0.5, %v2330
        %v2706 = vadd.f32 %v2705, 1.0
        %v2707 = vmul.f32 %v2706, %v2330
        %v2708 = vand.u32 2147483647, %v2330
        %vm2709 = vcmp.lt.f32.partialorder %v2708, 0.0004427343
        %v2710 = vsel %vm2709, %v2707, %v2704
        %v2711 = vadd.f32 %v2332, 1.0
        %v2712 = vlog2.pop %v2711
        %v2713 = vmul.f32 %v2712, 0.6931472
        %v2714 = vmul.f32 -0.5, %v2332
        %v2715 = vadd.f32 %v2714, 1.0
        %v2716 = vmul.f32 %v2715, %v2332
        %v2717 = vand.u32 2147483647, %v2332
        %vm2718 = vcmp.lt.f32.partialorder %v2717, 0.0004427343
        %v2719 = vsel %vm2718, %v2716, %v2713
        %v2720 = vadd.f32 %v2334, 1.0
        %v2721 = vlog2.pop %v2720
        %v2722 = vmul.f32 %v2721, 0.6931472
        %v2723 = vmul.f32 -0.5, %v2334
        %v2724 = vadd.f32 %v2723, 1.0
        %v2725 = vmul.f32 %v2724, %v2334
        %v2726 = vand.u32 2147483647, %v2334
        %vm2727 = vcmp.lt.f32.partialorder %v2726, 0.0004427343
        %v2728 = vsel %vm2727, %v2725, %v2722
        %v2729 = vadd.f32 %v2336, 1.0
        %v2730 = vlog2.pop %v2729
        %v2731 = vmul.f32 %v2730, 0.6931472
        %v2732 = vmul.f32 -0.5, %v2336
        %v2733 = vadd.f32 %v2732, 1.0
        %v2734 = vmul.f32 %v2733, %v2336
        %v2735 = vand.u32 2147483647, %v2336
        %vm2736 = vcmp.lt.f32.partialorder %v2735, 0.0004427343
        %v2737 = vsel %vm2736, %v2734, %v2731
        %v2738 = vadd.f32 %v2338, 1.0
        %v2739 = vlog2.pop %v2738
        %v2740 = vmul.f32 %v2739, 0.6931472
        %v2741 = vmul.f32 -0.5, %v2338
        %v2742 = vadd.f32 %v2741, 1.0
        %v2743 = vmul.f32 %v2742, %v2338
        %v2744 = vand.u32 2147483647, %v2338
        %vm2745 = vcmp.lt.f32.partialorder %v2744, 0.0004427343
        %v2746 = vsel %vm2745, %v2743, %v2740
        %v2747 = vadd.f32 %v2340, 1.0
        %v2748 = vlog2.pop %v2747
        %v2749 = vmul.f32 %v2748, 0.6931472
        %v2750 = vmul.f32 -0.5, %v2340
        %v2751 = vadd.f32 %v2750, 1.0
        %v2752 = vmul.f32 %v2751, %v2340
        %v2753 = vand.u32 2147483647, %v2340
        %vm2754 = vcmp.lt.f32.partialorder %v2753, 0.0004427343
        %v2755 = vsel %vm2754, %v2752, %v2749
        %v2756 = vadd.f32 %v2342, 1.0
        %v2757 = vlog2.pop %v2756
        %v2758 = vmul.f32 %v2757, 0.6931472
        %v2759 = vmul.f32 -0.5, %v2342
        %v2760 = vadd.f32 %v2759, 1.0
        %v2761 = vmul.f32 %v2760, %v2342
        %v2762 = vand.u32 2147483647, %v2342
        %vm2763 = vcmp.lt.f32.partialorder %v2762, 0.0004427343
        %v2764 = vsel %vm2763, %v2761, %v2758
        %v2765 = vadd.f32 %v2344, 1.0
        %v2766 = vlog2.pop %v2765
        %v2767 = vmul.f32 %v2766, 0.6931472
        %v2768 = vmul.f32 -0.5, %v2344
        %v2769 = vadd.f32 %v2768, 1.0
        %v2770 = vmul.f32 %v2769, %v2344
        %v2771 = vand.u32 2147483647, %v2344
        %vm2772 = vcmp.lt.f32.partialorder %v2771, 0.0004427343
        %v2773 = vsel %vm2772, %v2770, %v2767
        %v2774 = vadd.f32 %v2346, 1.0
        %v2775 = vlog2.pop %v2774
        %v2776 = vmul.f32 %v2775, 0.6931472
        %v2777 = vmul.f32 -0.5, %v2346
        %v2778 = vadd.f32 %v2777, 1.0
        %v2779 = vmul.f32 %v2778, %v2346
        %v2780 = vand.u32 2147483647, %v2346
        %vm2781 = vcmp.lt.f32.partialorder %v2780, 0.0004427343
        %v2782 = vsel %vm2781, %v2779, %v2776
        %v2783 = vadd.f32 %v2348, 1.0
        %v2784 = vlog2.pop %v2783
        %v2785 = vmul.f32 %v2784, 0.6931472
        %v2786 = vmul.f32 -0.5, %v2348
        %v2787 = vadd.f32 %v2786, 1.0
        %v2788 = vmul.f32 %v2787, %v2348
        %v2789 = vand.u32 2147483647, %v2348
        %vm2790 = vcmp.lt.f32.partialorder %v2789, 0.0004427343
        %v2791 = vsel %vm2790, %v2788, %v2785
        %v2792 = vadd.f32 %v2350, 1.0
        %v2793 = vlog2.pop %v2792
        %v2794 = vmul.f32 %v2793, 0.6931472
        %v2795 = vmul.f32 -0.5, %v2350
        %v2796 = vadd.f32 %v2795, 1.0
        %v2797 = vmul.f32 %v2796, %v2350
        %v2798 = vand.u32 2147483647, %v2350
        %vm2799 = vcmp.lt.f32.partialorder %v2798, 0.0004427343
        %v2800 = vsel %vm2799, %v2797, %v2794
        %v2801 = vadd.f32 %v2352, 1.0
        %v2802 = vlog2.pop %v2801
        %v2803 = vmul.f32 %v2802, 0.6931472
        %v2804 = vmul.f32 -0.5, %v2352
        %v2805 = vadd.f32 %v2804, 1.0
        %v2806 = vmul.f32 %v2805, %v2352
        %v2807 = vand.u32 2147483647, %v2352
        %vm2808 = vcmp.lt.f32.partialorder %v2807, 0.0004427343
        %v2809 = vsel %vm2808, %v2806, %v2803
        %v2810 = vadd.f32 %v2354, 1.0
        %v2811 = vlog2.pop %v2810
        %v2812 = vmul.f32 %v2811, 0.6931472
        %v2813 = vmul.f32 -0.5, %v2354
        %v2814 = vadd.f32 %v2813, 1.0
        %v2815 = vmul.f32 %v2814, %v2354
        %v2816 = vand.u32 2147483647, %v2354
        %vm2817 = vcmp.lt.f32.partialorder %v2816, 0.0004427343
        %v2818 = vsel %vm2817, %v2815, %v2812
        %v2819 = vadd.f32 %v2356, 1.0
        %v2820 = vlog2.pop %v2819
        %v2821 = vmul.f32 %v2820, 0.6931472
        %v2822 = vmul.f32 -0.5, %v2356
        %v2823 = vadd.f32 %v2822, 1.0
        %v2824 = vmul.f32 %v2823, %v2356
        %v2825 = vand.u32 2147483647, %v2356
        %vm2826 = vcmp.lt.f32.partialorder %v2825, 0.0004427343
        %v2827 = vsel %vm2826, %v2824, %v2821
        %v2828 = vadd.f32 %v2358, 1.0
        %v2829 = vlog2.pop %v2828
        %v2830 = vmul.f32 %v2829, 0.6931472
        %v2831 = vmul.f32 -0.5, %v2358
        %v2832 = vadd.f32 %v2831, 1.0
        %v2833 = vmul.f32 %v2832, %v2358
        %v2834 = vand.u32 2147483647, %v2358
        %vm2835 = vcmp.lt.f32.partialorder %v2834, 0.0004427343
        %v2836 = vsel %vm2835, %v2833, %v2830
        %v2837 = vadd.f32 %v2360, 1.0
        %v2838 = vlog2.pop %v2837
        %v2839 = vmul.f32 %v2838, 0.6931472
        %v2840 = vmul.f32 -0.5, %v2360
        %v2841 = vadd.f32 %v2840, 1.0
        %v2842 = vmul.f32 %v2841, %v2360
        %v2843 = vand.u32 2147483647, %v2360
        %vm2844 = vcmp.lt.f32.partialorder %v2843, 0.0004427343
        %v2845 = vsel %vm2844, %v2842, %v2839
        %v2846 = vadd.f32 %v2362, 1.0
        %v2847 = vlog2.pop %v2846
        %v2848 = vmul.f32 %v2847, 0.6931472
        %v2849 = vmul.f32 -0.5, %v2362
        %v2850 = vadd.f32 %v2849, 1.0
        %v2851 = vmul.f32 %v2850, %v2362
        %v2852 = vand.u32 2147483647, %v2362
        %vm2853 = vcmp.lt.f32.partialorder %v2852, 0.0004427343
        %v2854 = vsel %vm2853, %v2851, %v2848
        %v2855 = vadd.f32 %v2364, 1.0
        %v2856 = vlog2.pop %v2855
        %v2857 = vmul.f32 %v2856, 0.6931472
        %v2858 = vmul.f32 -0.5, %v2364
        %v2859 = vadd.f32 %v2858, 1.0
        %v2860 = vmul.f32 %v2859, %v2364
        %v2861 = vand.u32 2147483647, %v2364
        %vm2862 = vcmp.lt.f32.partialorder %v2861, 0.0004427343
        %v2863 = vsel %vm2862, %v2860, %v2857
        %v2864 = vadd.f32 %v2366, 1.0
        %v2865 = vlog2.pop %v2864
        %v2866 = vmul.f32 %v2865, 0.6931472
        %v2867 = vmul.f32 -0.5, %v2366
        %v2868 = vadd.f32 %v2867, 1.0
        %v2869 = vmul.f32 %v2868, %v2366
        %v2870 = vand.u32 2147483647, %v2366
        %vm2871 = vcmp.lt.f32.partialorder %v2870, 0.0004427343
        %v2872 = vsel %vm2871, %v2869, %v2866
        %v2873 = vadd.f32 %v2368, 1.0
        %v2874 = vlog2.pop %v2873
        %v2875 = vmul.f32 %v2874, 0.6931472
        %v2876 = vmul.f32 -0.5, %v2368
        %v2877 = vadd.f32 %v2876, 1.0
        %v2878 = vmul.f32 %v2877, %v2368
        %v2879 = vand.u32 2147483647, %v2368
        %vm2880 = vcmp.lt.f32.partialorder %v2879, 0.0004427343
        %v2881 = vsel %vm2880, %v2878, %v2875
        %v2882 = vadd.f32 %v2370, 1.0
        %v2883 = vlog2.pop %v2882
        %v2884 = vmul.f32 %v2883, 0.6931472
        %v2885 = vmul.f32 -0.5, %v2370
        %v2886 = vadd.f32 %v2885, 1.0
        %v2887 = vmul.f32 %v2886, %v2370
        %v2888 = vand.u32 2147483647, %v2370
        %vm2889 = vcmp.lt.f32.partialorder %v2888, 0.0004427343
        %v2890 = vsel %vm2889, %v2887, %v2884
        %v2891 = vadd.f32 %v2372, 1.0
        %v2892 = vlog2.pop %v2891
        %v2893 = vmul.f32 %v2892, 0.6931472
        %v2894 = vmul.f32 -0.5, %v2372
        %v2895 = vadd.f32 %v2894, 1.0
        %v2896 = vmul.f32 %v2895, %v2372
        %v2897 = vand.u32 2147483647, %v2372
        %vm2898 = vcmp.lt.f32.partialorder %v2897, 0.0004427343
        %v2899 = vsel %vm2898, %v2896, %v2893
        %v2900 = vadd.f32 %v2374, 1.0
        %v2901 = vlog2.pop %v2900
        %v2902 = vmul.f32 %v2901, 0.6931472
        %v2903 = vmul.f32 -0.5, %v2374
        %v2904 = vadd.f32 %v2903, 1.0
        %v2905 = vmul.f32 %v2904, %v2374
        %v2906 = vand.u32 2147483647, %v2374
        %vm2907 = vcmp.lt.f32.partialorder %v2906, 0.0004427343
        %v2908 = vsel %vm2907, %v2905, %v2902
        %v2909 = vadd.f32 %v2376, 1.0
        %v2910 = vlog2.pop %v2909
        %v2911 = vmul.f32 %v2910, 0.6931472
        %v2912 = vmul.f32 -0.5, %v2376
        %v2913 = vadd.f32 %v2912, 1.0
        %v2914 = vmul.f32 %v2913, %v2376
        %v2915 = vand.u32 2147483647, %v2376
        %vm2916 = vcmp.lt.f32.partialorder %v2915, 0.0004427343
        %v2917 = vsel %vm2916, %v2914, %v2911
        %v2918 = vadd.f32 %v2378, 1.0
        %v2919 = vlog2.pop %v2918
        %v2920 = vmul.f32 %v2919, 0.6931472
        %v2921 = vmul.f32 -0.5, %v2378
        %v2922 = vadd.f32 %v2921, 1.0
        %v2923 = vmul.f32 %v2922, %v2378
        %v2924 = vand.u32 2147483647, %v2378
        %vm2925 = vcmp.lt.f32.partialorder %v2924, 0.0004427343
        %v2926 = vsel %vm2925, %v2923, %v2920
        %v2927 = vadd.f32 %v2380, 1.0
        %v2928 = vlog2.pop %v2927
        %v2929 = vmul.f32 %v2928, 0.6931472
        %v2930 = vmul.f32 -0.5, %v2380
        %v2931 = vadd.f32 %v2930, 1.0
        %v2932 = vmul.f32 %v2931, %v2380
        %v2933 = vand.u32 2147483647, %v2380
        %vm2934 = vcmp.lt.f32.partialorder %v2933, 0.0004427343
        %v2935 = vsel %vm2934, %v2932, %v2929
        %v2936 = vadd.f32 %v2382, 1.0
        %v2937 = vlog2.pop %v2936
        %v2938 = vmul.f32 %v2937, 0.6931472
        %v2939 = vmul.f32 -0.5, %v2382
        %v2940 = vadd.f32 %v2939, 1.0
        %v2941 = vmul.f32 %v2940, %v2382
        %v2942 = vand.u32 2147483647, %v2382
        %vm2943 = vcmp.lt.f32.partialorder %v2942, 0.0004427343
        %v2944 = vsel %vm2943, %v2941, %v2938
        %v2945 = vadd.f32 %v2384, 1.0
        %v2946 = vlog2.pop %v2945
        %v2947 = vmul.f32 %v2946, 0.6931472
        %v2948 = vmul.f32 -0.5, %v2384
        %v2949 = vadd.f32 %v2948, 1.0
        %v2950 = vmul.f32 %v2949, %v2384
        %v2951 = vand.u32 2147483647, %v2384
        %vm2952 = vcmp.lt.f32.partialorder %v2951, 0.0004427343
        %v2953 = vsel %vm2952, %v2950, %v2947
        %v2954 = vadd.f32 %v2386, 1.0
        %v2955 = vlog2.pop %v2954
        %v2956 = vmul.f32 %v2955, 0.6931472
        %v2957 = vmul.f32 -0.5, %v2386
        %v2958 = vadd.f32 %v2957, 1.0
        %v2959 = vmul.f32 %v2958, %v2386
        %v2960 = vand.u32 2147483647, %v2386
        %vm2961 = vcmp.lt.f32.partialorder %v2960, 0.0004427343
        %v2962 = vsel %vm2961, %v2959, %v2956
        %v2963 = vadd.f32 %v1939, %v2395
        %v2964 = vadd.f32 %v1940, %v2404
        %v2965 = vadd.f32 %v1941, %v2413
        %v2966 = vadd.f32 %v1942, %v2422
        %v2967 = vadd.f32 %v1943, %v2431
        %v2968 = vadd.f32 %v1944, %v2440
        %v2969 = vadd.f32 %v1945, %v2449
        %v2970 = vadd.f32 %v1946, %v2458
        %v2971 = vadd.f32 %v1947, %v2467
        %v2972 = vadd.f32 %v1948, %v2476
        %v2973 = vadd.f32 %v1949, %v2485
        %v2974 = vadd.f32 %v1950, %v2494
        %v2975 = vadd.f32 %v1951, %v2503
        %v2976 = vadd.f32 %v1952, %v2512
        %v2977 = vadd.f32 %v1953, %v2521
        %v2978 = vadd.f32 %v1954, %v2530
        %v2979 = vadd.f32 %v1955, %v2539
        %v2980 = vadd.f32 %v1956, %v2548
        %v2981 = vadd.f32 %v1957, %v2557
        %v2982 = vadd.f32 %v1958, %v2566
        %v2983 = vadd.f32 %v1959, %v2575
        %v2984 = vadd.f32 %v1960, %v2584
        %v2985 = vadd.f32 %v1961, %v2593
        %v2986 = vadd.f32 %v1962, %v2602
        %v2987 = vadd.f32 %v1963, %v2611
        %v2988 = vadd.f32 %v1964, %v2620
        %v2989 = vadd.f32 %v1965, %v2629
        %v2990 = vadd.f32 %v1966, %v2638
        %v2991 = vadd.f32 %v1967, %v2647
        %v2992 = vadd.f32 %v1968, %v2656
        %v2993 = vadd.f32 %v1969, %v2665
        %v2994 = vadd.f32 %v1970, %v2674
        %v2995 = vadd.f32 %v1971, %v2683
        %v2996 = vadd.f32 %v1972, %v2692
        %v2997 = vadd.f32 %v1973, %v2701
        %v2998 = vadd.f32 %v1974, %v2710
        %v2999 = vadd.f32 %v1975, %v2719
        %v3000 = vadd.f32 %v1976, %v2728
        %v3001 = vadd.f32 %v1977, %v2737
        %v3002 = vadd.f32 %v1978, %v2746
        %v3003 = vadd.f32 %v1979, %v2755
        %v3004 = vadd.f32 %v1980, %v2764
        %v3005 = vadd.f32 %v1981, %v2773
        %v3006 = vadd.f32 %v1982, %v2782
        %v3007 = vadd.f32 %v1983, %v2791
        %v3008 = vadd.f32 %v1984, %v2800
        %v3009 = vadd.f32 %v1985, %v2809
        %v3010 = vadd.f32 %v1986, %v2818
        %v3011 = vadd.f32 %v1987, %v2827
        %v3012 = vadd.f32 %v1988, %v2836
        %v3013 = vadd.f32 %v1989, %v2845
        %v3014 = vadd.f32 %v1990, %v2854
        %v3015 = vadd.f32 %v1991, %v2863
        %v3016 = vadd.f32 %v1992, %v2872
        %v3017 = vadd.f32 %v1993, %v2881
        %v3018 = vadd.f32 %v1994, %v2890
        %v3019 = vadd.f32 %v1995, %v2899
        %v3020 = vadd.f32 %v1996, %v2908
        %v3021 = vadd.f32 %v1997, %v2917
        %v3022 = vadd.f32 %v1998, %v2926
        %v3023 = vadd.f32 %v1999, %v2935
        %v3024 = vadd.f32 %v2000, %v2944
        %v3025 = vadd.f32 %v2001, %v2953
        %v3026 = vadd.f32 %v2002, %v2962
        %v3027 = vsel %vm2003, %v2067, %v2963
        %v3028 = vsel %vm2004, %v2068, %v2964
        %v3029 = vsel %vm2005, %v2069, %v2965
        %v3030 = vsel %vm2006, %v2070, %v2966
        %v3031 = vsel %vm2007, %v2071, %v2967
        %v3032 = vsel %vm2008, %v2072, %v2968
        %v3033 = vsel %vm2009, %v2073, %v2969
        %v3034 = vsel %vm2010, %v2074, %v2970
        %v3035 = vsel %vm2011, %v2075, %v2971
        %v3036 = vsel %vm2012, %v2076, %v2972
        %v3037 = vsel %vm2013, %v2077, %v2973
        %v3038 = vsel %vm2014, %v2078, %v2974
        %v3039 = vsel %vm2015, %v2079, %v2975
        %v3040 = vsel %vm2016, %v2080, %v2976
        %v3041 = vsel %vm2017, %v2081, %v2977
        %v3042 = vsel %vm2018, %v2082, %v2978
        %v3043 = vsel %vm2019, %v2083, %v2979
        %v3044 = vsel %vm2020, %v2084, %v2980
        %v3045 = vsel %vm2021, %v2085, %v2981
        %v3046 = vsel %vm2022, %v2086, %v2982
        %v3047 = vsel %vm2023, %v2087, %v2983
        %v3048 = vsel %vm2024, %v2088, %v2984
        %v3049 = vsel %vm2025, %v2089, %v2985
        %v3050 = vsel %vm2026, %v2090, %v2986
        %v3051 = vsel %vm2027, %v2091, %v2987
        %v3052 = vsel %vm2028, %v2092, %v2988
        %v3053 = vsel %vm2029, %v2093, %v2989
        %v3054 = vsel %vm2030, %v2094, %v2990
        %v3055 = vsel %vm2031, %v2095, %v2991
        %v3056 = vsel %vm2032, %v2096, %v2992
        %v3057 = vsel %vm2033, %v2097, %v2993
        %v3058 = vsel %vm2034, %v2098, %v2994
        %v3059 = vsel %vm2035, %v2099, %v2995
        %v3060 = vsel %vm2036, %v2100, %v2996
        %v3061 = vsel %vm2037, %v2101, %v2997
        %v3062 = vsel %vm2038, %v2102, %v2998
        %v3063 = vsel %vm2039, %v2103, %v2999
        %v3064 = vsel %vm2040, %v2104, %v3000
        %v3065 = vsel %vm2041, %v2105, %v3001
        %v3066 = vsel %vm2042, %v2106, %v3002
        %v3067 = vsel %vm2043, %v2107, %v3003
        %v3068 = vsel %vm2044, %v2108, %v3004
        %v3069 = vsel %vm2045, %v2109, %v3005
        %v3070 = vsel %vm2046, %v2110, %v3006
        %v3071 = vsel %vm2047, %v2111, %v3007
        %v3072 = vsel %vm2048, %v2112, %v3008
        %v3073 = vsel %vm2049, %v2113, %v3009
        %v3074 = vsel %vm2050, %v2114, %v3010
        %v3075 = vsel %vm2051, %v2115, %v3011
        %v3076 = vsel %vm2052, %v2116, %v3012
        %v3077 = vsel %vm2053, %v2117, %v3013
        %v3078 = vsel %vm2054, %v2118, %v3014
        %v3079 = vsel %vm2055, %v2119, %v3015
        %v3080 = vsel %vm2056, %v2120, %v3016
        %v3081 = vsel %vm2057, %v2121, %v3017
        %v3082 = vsel %vm2058, %v2122, %v3018
        %v3083 = vsel %vm2059, %v2123, %v3019
        %v3084 = vsel %vm2060, %v2124, %v3020
        %v3085 = vsel %vm2061, %v2125, %v3021
        %v3086 = vsel %vm2062, %v2126, %v3022
        %v3087 = vsel %vm2063, %v2127, %v3023
        %v3088 = vsel %vm2064, %v2128, %v3024
        %v3089 = vsel %vm2065, %v2129, %v3025
        %v3090 = vsel %vm2066, %v2130, %v3026
        %v3091 = vpack.c.bf16 %v3028, %v3027
        %v3092 = vpack.c.bf16 %v3030, %v3029
        %v3093 = vpack.c.bf16 %v3032, %v3031
        %v3094 = vpack.c.bf16 %v3034, %v3033
        %v3095 = vpack.c.bf16 %v3036, %v3035
        %v3096 = vpack.c.bf16 %v3038, %v3037
        %v3097 = vpack.c.bf16 %v3040, %v3039
        %v3098 = vpack.c.bf16 %v3042, %v3041
        %v3099 = vpack.c.bf16 %v3044, %v3043
        %v3100 = vpack.c.bf16 %v3046, %v3045
        %v3101 = vpack.c.bf16 %v3048, %v3047
        %v3102 = vpack.c.bf16 %v3050, %v3049
        %v3103 = vpack.c.bf16 %v3052, %v3051
        %v3104 = vpack.c.bf16 %v3054, %v3053
        %v3105 = vpack.c.bf16 %v3056, %v3055
        %v3106 = vpack.c.bf16 %v3058, %v3057
        %v3107 = vpack.c.bf16 %v3060, %v3059
        %v3108 = vpack.c.bf16 %v3062, %v3061
        %v3109 = vpack.c.bf16 %v3064, %v3063
        %v3110 = vpack.c.bf16 %v3066, %v3065
        %v3111 = vpack.c.bf16 %v3068, %v3067
        %v3112 = vpack.c.bf16 %v3070, %v3069
        %v3113 = vpack.c.bf16 %v3072, %v3071
        %v3114 = vpack.c.bf16 %v3074, %v3073
        %v3115 = vpack.c.bf16 %v3076, %v3075
        %v3116 = vpack.c.bf16 %v3078, %v3077
        %v3117 = vpack.c.bf16 %v3080, %v3079
        %v3118 = vpack.c.bf16 %v3082, %v3081
        %v3119 = vpack.c.bf16 %v3084, %v3083
        %v3120 = vpack.c.bf16 %v3086, %v3085
        %v3121 = vpack.c.bf16 %v3088, %v3087
        %v3122 = vpack.c.bf16 %v3090, %v3089
        %v3123 = vld [vmem:[%s3] sm:$0xf]
        %v3124 = vld [vmem:[%s3 + $0x4] sm:$0xf]
        %v3125 = vld [vmem:[%s3 + $0x8] sm:$0xf]
        %v3126 = vld [vmem:[%s3 + $0xc] sm:$0xf]
        %v3128 = vlaneseq
        %v3129 = vshrl.u32 %v3128, 7
        %v3130 = vsub.s32 0, %v3129
        %v3131 = vrot.slane %v346, %v3130
        %v3137 = vunpack.c.l.b16 %v3123
        %v3138 = vunpack.c.l.b16 %v3124
        %v3139 = vunpack.c.l.b16 %v3125
        %v3140 = vunpack.c.l.b16 %v3126
        %v3141 = vpack.c.b16 %v3138, %v3137
        %v3142 = vpack.c.b16 %v3140, %v3139
        %v3146 = vsel %vm1553, %v3091, 0
        %v3149 = vsel %vm1553, %v3092, 0
        %v3152 = vsel %vm1553, %v3093, 0
        %v3155 = vsel %vm1553, %v3094, 0
        %v3158 = vsel %vm1553, %v3095, 0
        %v3161 = vsel %vm1553, %v3096, 0
        %v3164 = vsel %vm1553, %v3097, 0
        %v3167 = vsel %vm1553, %v3098, 0
        %v3170 = vsel %vm1553, %v3099, 0
        %v3173 = vsel %vm1553, %v3100, 0
        %v3176 = vsel %vm1553, %v3101, 0
        %v3179 = vsel %vm1553, %v3102, 0
        %v3182 = vsel %vm1553, %v3103, 0
        %v3185 = vsel %vm1553, %v3104, 0
        %v3188 = vsel %vm1553, %v3105, 0
        %v3191 = vsel %vm1553, %v3106, 0
        %v3194 = vsel %vm1553, %v3107, 0
        %v3197 = vsel %vm1553, %v3108, 0
        %v3200 = vsel %vm1553, %v3109, 0
        %v3203 = vsel %vm1553, %v3110, 0
        %v3206 = vsel %vm1553, %v3111, 0
        %v3209 = vsel %vm1553, %v3112, 0
        %v3212 = vsel %vm1553, %v3113, 0
        %v3215 = vsel %vm1553, %v3114, 0
        %v3218 = vsel %vm1553, %v3115, 0
        %v3221 = vsel %vm1553, %v3116, 0
        %v3224 = vsel %vm1553, %v3117, 0
        %v3227 = vsel %vm1553, %v3118, 0
        %v3230 = vsel %vm1553, %v3119, 0
        %v3233 = vsel %vm1553, %v3120, 0
        %v3236 = vsel %vm1553, %v3121, 0
        %v3239 = vsel %vm1553, %v3122, 0
        %3241 = vmatprep.subr.bf16.mxu0 0
        %3242 = vmatpush1.bf16.msra.mxu0 %v3141
        %3243 = vmatprep.subr.bf16.mxu0 0
        %3244 = vmatpush1.bf16.msra.mxu0 %v3142
        %3245 = vmatprep.subr.bf16.mxu0 0
        %3246 = vmatpush1.bf16.msra.mxu0 0
        %3247 = vmatprep.subr.bf16.mxu0 0
        %3248 = vmatpush1.bf16.msra.mxu0 0
        %3249 = vmatprep.subr.bf16.mxu0 0
        %3250 = vmatpush1.bf16.msra.mxu0 0
        %3251 = vmatprep.subr.bf16.mxu0 0
        %3252 = vmatpush1.bf16.msra.mxu0 0
        %3253 = vmatprep.subr.bf16.mxu0 0
        %3254 = vmatpush1.bf16.msra.mxu0 0
        %3255 = vmatprep.subr.bf16.mxu0 0
        %3256 = vmatpush1.bf16.msra.mxu0 0
        %3257 = vmatprep.subr.bf16.mxu0 0
        %3258 = vmatpush1.bf16.msra.mxu0 0
        %3259 = vmatprep.subr.bf16.mxu0 0
        %3260 = vmatpush1.bf16.msra.mxu0 0
        %3261 = vmatprep.subr.bf16.mxu0 0
        %3262 = vmatpush1.bf16.msra.mxu0 0
        %3263 = vmatprep.subr.bf16.mxu0 0
        %3264 = vmatpush1.bf16.msra.mxu0 0
        %3265 = vmatprep.subr.bf16.mxu0 0
        %3266 = vmatpush1.bf16.msra.mxu0 0
        %3267 = vmatprep.subr.bf16.mxu0 0
        %3268 = vmatpush1.bf16.msra.mxu0 0
        %3269 = vmatprep.subr.bf16.mxu0 0
        %3270 = vmatpush1.bf16.msra.mxu0 0
        %3271 = vmatprep.subr.bf16.mxu0 0
        %3272 = vmatpush1.bf16.msra.mxu0 0
        %3273 = vmatprep.mubr.bf16.mxu0 0
        %3274 = vmatmul.mubr.bf16.gmra.mrb[0].mxu0 %v3146
        %v3275 = vpop.f32.mrb[0].mxu0
        %v3276 = vadd.f32 %v3131, %v3275
        %v3277 = vpop.f32.mrb[0].mxu0
        %v3278 = vpop.f32.mrb[0].mxu0
        %v3279 = vadd.f32 %v3131, %v3278
        %v3280 = vpop.f32.mrb[0].mxu0
        %3281 = vmatprep.mubr.bf16.mxu0 0
        %3282 = vmatmul.mubr.bf16.gmra.mrb[0].mxu0 %v3149
        %v3283 = vpop.f32.mrb[0].mxu0
        %v3284 = vadd.f32 %v3131, %v3283
        %v3285 = vpop.f32.mrb[0].mxu0
        %v3286 = vpop.f32.mrb[0].mxu0
        %v3287 = vadd.f32 %v3131, %v3286
        %v3288 = vpop.f32.mrb[0].mxu0
        %3289 = vmatprep.mubr.bf16.mxu0 0
        %3290 = vmatmul.mubr.bf16.gmra.mrb[0].mxu0 %v3152
        %v3291 = vpop.f32.mrb[0].mxu0
        %v3292 = vadd.f32 %v3131, %v3291
        %v3293 = vpop.f32.mrb[0].mxu0
        %v3294 = vpop.f32.mrb[0].mxu0
        %v3295 = vadd.f32 %v3131, %v3294
        %v3296 = vpop.f32.mrb[0].mxu0
        %3297 = vmatprep.mubr.bf16.mxu0 0
        %3298 = vmatmul.mubr.bf16.gmra.mrb[0].mxu0 %v3155
        %v3299 = vpop.f32.mrb[0].mxu0
        %v3300 = vadd.f32 %v3131, %v3299
        %v3301 = vpop.f32.mrb[0].mxu0
        %v3302 = vpop.f32.mrb[0].mxu0
        %v3303 = vadd.f32 %v3131, %v3302
        %v3304 = vpop.f32.mrb[0].mxu0
        %3305 = vmatprep.mubr.bf16.mxu0 0
        %3306 = vmatmul.mubr.bf16.gmra.mrb[0].mxu0 %v3158
        %v3307 = vpop.f32.mrb[0].mxu0
        %v3308 = vadd.f32 %v3131, %v3307
        %v3309 = vpop.f32.mrb[0].mxu0
        %v3310 = vpop.f32.mrb[0].mxu0
        %v3311 = vadd.f32 %v3131, %v3310
        %v3312 = vpop.f32.mrb[0].mxu0
        %3313 = vmatprep.mubr.bf16.mxu0 0
        %3314 = vmatmul.mubr.bf16.gmra.mrb[0].mxu0 %v3161
        %v3315 = vpop.f32.mrb[0].mxu0
        %v3316 = vadd.f32 %v3131, %v3315
        %v3317 = vpop.f32.mrb[0].mxu0
        %v3318 = vpop.f32.mrb[0].mxu0
        %v3319 = vadd.f32 %v3131, %v3318
        %v3320 = vpop.f32.mrb[0].mxu0
        %3321 = vmatprep.mubr.bf16.mxu0 0
        %3322 = vmatmul.mubr.bf16.gmra.mrb[0].mxu0 %v3164
        %v3323 = vpop.f32.mrb[0].mxu0
        %v3324 = vadd.f32 %v3131, %v3323
        %v3325 = vpop.f32.mrb[0].mxu0
        %v3326 = vpop.f32.mrb[0].mxu0
        %v3327 = vadd.f32 %v3131, %v3326
        %v3328 = vpop.f32.mrb[0].mxu0
        %3329 = vmatprep.mubr.bf16.mxu0 0
        %3330 = vmatmul.mubr.bf16.gmra.mrb[0].mxu0 %v3167
        %v3331 = vpop.f32.mrb[0].mxu0
        %v3332 = vadd.f32 %v3131, %v3331
        %v3333 = vpop.f32.mrb[0].mxu0
        %v3334 = vpop.f32.mrb[0].mxu0
        %v3335 = vadd.f32 %v3131, %v3334
        %v3336 = vpop.f32.mrb[0].mxu0
        %3337 = vmatprep.mubr.bf16.mxu0 0
        %3338 = vmatmul.mubr.bf16.gmra.mrb[0].mxu0 %v3170
        %v3339 = vpop.f32.mrb[0].mxu0
        %v3340 = vadd.f32 %v3131, %v3339
        %v3341 = vpop.f32.mrb[0].mxu0
        %v3342 = vpop.f32.mrb[0].mxu0
        %v3343 = vadd.f32 %v3131, %v3342
        %v3344 = vpop.f32.mrb[0].mxu0
        %3345 = vmatprep.mubr.bf16.mxu0 0
        %3346 = vmatmul.mubr.bf16.gmra.mrb[0].mxu0 %v3173
        %v3347 = vpop.f32.mrb[0].mxu0
        %v3348 = vadd.f32 %v3131, %v3347
        %v3349 = vpop.f32.mrb[0].mxu0
        %v3350 = vpop.f32.mrb[0].mxu0
        %v3351 = vadd.f32 %v3131, %v3350
        %v3352 = vpop.f32.mrb[0].mxu0
        %3353 = vmatprep.mubr.bf16.mxu0 0
        %3354 = vmatmul.mubr.bf16.gmra.mrb[0].mxu0 %v3176
        %v3355 = vpop.f32.mrb[0].mxu0
        %v3356 = vadd.f32 %v3131, %v3355
        %v3357 = vpop.f32.mrb[0].mxu0
        %v3358 = vpop.f32.mrb[0].mxu0
        %v3359 = vadd.f32 %v3131, %v3358
        %v3360 = vpop.f32.mrb[0].mxu0
        %3361 = vmatprep.mubr.bf16.mxu0 0
        %3362 = vmatmul.mubr.bf16.gmra.mrb[0].mxu0 %v3179
        %v3363 = vpop.f32.mrb[0].mxu0
        %v3364 = vadd.f32 %v3131, %v3363
        %v3365 = vpop.f32.mrb[0].mxu0
        %v3366 = vpop.f32.mrb[0].mxu0
        %v3367 = vadd.f32 %v3131, %v3366
        %v3368 = vpop.f32.mrb[0].mxu0
        %3369 = vmatprep.mubr.bf16.mxu0 0
        %3370 = vmatmul.mubr.bf16.gmra.mrb[0].mxu0 %v3182
        %v3371 = vpop.f32.mrb[0].mxu0
        %v3372 = vadd.f32 %v3131, %v3371
        %v3373 = vpop.f32.mrb[0].mxu0
        %v3374 = vpop.f32.mrb[0].mxu0
        %v3375 = vadd.f32 %v3131, %v3374
        %v3376 = vpop.f32.mrb[0].mxu0
        %3377 = vmatprep.mubr.bf16.mxu0 0
        %3378 = vmatmul.mubr.bf16.gmra.mrb[0].mxu0 %v3185
        %v3379 = vpop.f32.mrb[0].mxu0
        %v3380 = vadd.f32 %v3131, %v3379
        %v3381 = vpop.f32.mrb[0].mxu0
        %v3382 = vpop.f32.mrb[0].mxu0
        %v3383 = vadd.f32 %v3131, %v3382
        %v3384 = vpop.f32.mrb[0].mxu0
        %3385 = vmatprep.mubr.bf16.mxu0 0
        %3386 = vmatmul.mubr.bf16.gmra.mrb[0].mxu0 %v3188
        %v3387 = vpop.f32.mrb[0].mxu0
        %v3388 = vadd.f32 %v3131, %v3387
        %v3389 = vpop.f32.mrb[0].mxu0
        %v3390 = vpop.f32.mrb[0].mxu0
        %v3391 = vadd.f32 %v3131, %v3390
        %v3392 = vpop.f32.mrb[0].mxu0
        %3393 = vmatprep.mubr.bf16.mxu0 0
        %3394 = vmatmul.mubr.bf16.gmra.mrb[0].mxu0 %v3191
        %v3395 = vpop.f32.mrb[0].mxu0
        %v3396 = vadd.f32 %v3131, %v3395
        %v3397 = vpop.f32.mrb[0].mxu0
        %v3398 = vpop.f32.mrb[0].mxu0
        %v3399 = vadd.f32 %v3131, %v3398
        %v3400 = vpop.f32.mrb[0].mxu0
        %3401 = vmatprep.mubr.bf16.mxu0 0
        %3402 = vmatmul.mubr.bf16.gmra.mrb[0].mxu0 %v3194
        %v3403 = vpop.f32.mrb[0].mxu0
        %v3404 = vadd.f32 %v3131, %v3403
        %v3405 = vpop.f32.mrb[0].mxu0
        %v3406 = vpop.f32.mrb[0].mxu0
        %v3407 = vadd.f32 %v3131, %v3406
        %v3408 = vpop.f32.mrb[0].mxu0
        %3409 = vmatprep.mubr.bf16.mxu0 0
        %3410 = vmatmul.mubr.bf16.gmra.mrb[0].mxu0 %v3197
        %v3411 = vpop.f32.mrb[0].mxu0
        %v3412 = vadd.f32 %v3131, %v3411
        %v3413 = vpop.f32.mrb[0].mxu0
        %v3414 = vpop.f32.mrb[0].mxu0
        %v3415 = vadd.f32 %v3131, %v3414
        %v3416 = vpop.f32.mrb[0].mxu0
        %3417 = vmatprep.mubr.bf16.mxu0 0
        %3418 = vmatmul.mubr.bf16.gmra.mrb[0].mxu0 %v3200
        %v3419 = vpop.f32.mrb[0].mxu0
        %v3420 = vadd.f32 %v3131, %v3419
        %v3421 = vpop.f32.mrb[0].mxu0
        %v3422 = vpop.f32.mrb[0].mxu0
        %v3423 = vadd.f32 %v3131, %v3422
        %v3424 = vpop.f32.mrb[0].mxu0
        %3425 = vmatprep.mubr.bf16.mxu0 0
        %3426 = vmatmul.mubr.bf16.gmra.mrb[0].mxu0 %v3203
        %v3427 = vpop.f32.mrb[0].mxu0
        %v3428 = vadd.f32 %v3131, %v3427
        %v3429 = vpop.f32.mrb[0].mxu0
        %v3430 = vpop.f32.mrb[0].mxu0
        %v3431 = vadd.f32 %v3131, %v3430
        %v3432 = vpop.f32.mrb[0].mxu0
        %3433 = vmatprep.mubr.bf16.mxu0 0
        %3434 = vmatmul.mubr.bf16.gmra.mrb[0].mxu0 %v3206
        %v3435 = vpop.f32.mrb[0].mxu0
        %v3436 = vadd.f32 %v3131, %v3435
        %v3437 = vpop.f32.mrb[0].mxu0
        %v3438 = vpop.f32.mrb[0].mxu0
        %v3439 = vadd.f32 %v3131, %v3438
        %v3440 = vpop.f32.mrb[0].mxu0
        %3441 = vmatprep.mubr.bf16.mxu0 0
        %3442 = vmatmul.mubr.bf16.gmra.mrb[0].mxu0 %v3209
        %v3443 = vpop.f32.mrb[0].mxu0
        %v3444 = vadd.f32 %v3131, %v3443
        %v3445 = vpop.f32.mrb[0].mxu0
        %v3446 = vpop.f32.mrb[0].mxu0
        %v3447 = vadd.f32 %v3131, %v3446
        %v3448 = vpop.f32.mrb[0].mxu0
        %3449 = vmatprep.mubr.bf16.mxu0 0
        %3450 = vmatmul.mubr.bf16.gmra.mrb[0].mxu0 %v3212
        %v3451 = vpop.f32.mrb[0].mxu0
        %v3452 = vadd.f32 %v3131, %v3451
        %v3453 = vpop.f32.mrb[0].mxu0
        %v3454 = vpop.f32.mrb[0].mxu0
        %v3455 = vadd.f32 %v3131, %v3454
        %v3456 = vpop.f32.mrb[0].mxu0
        %3457 = vmatprep.mubr.bf16.mxu0 0
        %3458 = vmatmul.mubr.bf16.gmra.mrb[0].mxu0 %v3215
        %v3459 = vpop.f32.mrb[0].mxu0
        %v3460 = vadd.f32 %v3131, %v3459
        %v3461 = vpop.f32.mrb[0].mxu0
        %v3462 = vpop.f32.mrb[0].mxu0
        %v3463 = vadd.f32 %v3131, %v3462
        %v3464 = vpop.f32.mrb[0].mxu0
        %3465 = vmatprep.mubr.bf16.mxu0 0
        %3466 = vmatmul.mubr.bf16.gmra.mrb[0].mxu0 %v3218
        %v3467 = vpop.f32.mrb[0].mxu0
        %v3468 = vadd.f32 %v3131, %v3467
        %v3469 = vpop.f32.mrb[0].mxu0
        %v3470 = vpop.f32.mrb[0].mxu0
        %v3471 = vadd.f32 %v3131, %v3470
        %v3472 = vpop.f32.mrb[0].mxu0
        %3473 = vmatprep.mubr.bf16.mxu0 0
        %3474 = vmatmul.mubr.bf16.gmra.mrb[0].mxu0 %v3221
        %v3475 = vpop.f32.mrb[0].mxu0
        %v3476 = vadd.f32 %v3131, %v3475
        %v3477 = vpop.f32.mrb[0].mxu0
        %v3478 = vpop.f32.mrb[0].mxu0
        %v3479 = vadd.f32 %v3131, %v3478
        %v3480 = vpop.f32.mrb[0].mxu0
        %3481 = vmatprep.mubr.bf16.mxu0 0
        %3482 = vmatmul.mubr.bf16.gmra.mrb[0].mxu0 %v3224
        %v3483 = vpop.f32.mrb[0].mxu0
        %v3484 = vadd.f32 %v3131, %v3483
        %v3485 = vpop.f32.mrb[0].mxu0
        %v3486 = vpop.f32.mrb[0].mxu0
        %v3487 = vadd.f32 %v3131, %v3486
        %v3488 = vpop.f32.mrb[0].mxu0
        %3489 = vmatprep.mubr.bf16.mxu0 0
        %3490 = vmatmul.mubr.bf16.gmra.mrb[0].mxu0 %v3227
        %v3491 = vpop.f32.mrb[0].mxu0
        %v3492 = vadd.f32 %v3131, %v3491
        %v3493 = vpop.f32.mrb[0].mxu0
        %v3494 = vpop.f32.mrb[0].mxu0
        %v3495 = vadd.f32 %v3131, %v3494
        %v3496 = vpop.f32.mrb[0].mxu0
        %3497 = vmatprep.mubr.bf16.mxu0 0
        %3498 = vmatmul.mubr.bf16.gmra.mrb[0].mxu0 %v3230
        %v3499 = vpop.f32.mrb[0].mxu0
        %v3500 = vadd.f32 %v3131, %v3499
        %v3501 = vpop.f32.mrb[0].mxu0
        %v3502 = vpop.f32.mrb[0].mxu0
        %v3503 = vadd.f32 %v3131, %v3502
        %v3504 = vpop.f32.mrb[0].mxu0
        %3505 = vmatprep.mubr.bf16.mxu0 0
        %3506 = vmatmul.mubr.bf16.gmra.mrb[0].mxu0 %v3233
        %v3507 = vpop.f32.mrb[0].mxu0
        %v3508 = vadd.f32 %v3131, %v3507
        %v3509 = vpop.f32.mrb[0].mxu0
        %v3510 = vpop.f32.mrb[0].mxu0
        %v3511 = vadd.f32 %v3131, %v3510
        %v3512 = vpop.f32.mrb[0].mxu0
        %3513 = vmatprep.mubr.bf16.mxu0 0
        %3514 = vmatmul.mubr.bf16.gmra.mrb[0].mxu0 %v3236
        %v3515 = vpop.f32.mrb[0].mxu0
        %v3516 = vadd.f32 %v3131, %v3515
        %v3517 = vpop.f32.mrb[0].mxu0
        %v3518 = vpop.f32.mrb[0].mxu0
        %v3519 = vadd.f32 %v3131, %v3518
        %v3520 = vpop.f32.mrb[0].mxu0
        %3521 = vmatprep.mubr.bf16.mxu0 0
        %3522 = vmatmul.mubr.bf16.gmra.mrb[0].mxu0 %v3239
        %v3523 = vpop.f32.mrb[0].mxu0
        %v3524 = vadd.f32 %v3131, %v3523
        %v3525 = vpop.f32.mrb[0].mxu0
        %v3526 = vpop.f32.mrb[0].mxu0
        %v3527 = vadd.f32 %v3131, %v3526
        %v3528 = vpop.f32.mrb[0].mxu0
        %3529 = vdwg.mxu0
        %v3530 = vadd.f32 %v281, %v3276
        %v3531 = vadd.f32 %v282, %v3279
        %v3532 = vadd.f32 %v283, %v3284
        %v3533 = vadd.f32 %v284, %v3287
        %v3534 = vadd.f32 %v285, %v3292
        %v3535 = vadd.f32 %v286, %v3295
        %v3536 = vadd.f32 %v287, %v3300
        %v3537 = vadd.f32 %v288, %v3303
        %v3538 = vadd.f32 %v289, %v3308
        %v3539 = vadd.f32 %v290, %v3311
        %v3540 = vadd.f32 %v291, %v3316
        %v3541 = vadd.f32 %v292, %v3319
        %v3542 = vadd.f32 %v293, %v3324
        %v3543 = vadd.f32 %v294, %v3327
        %v3544 = vadd.f32 %v295, %v3332
        %v3545 = vadd.f32 %v296, %v3335
        %v3546 = vadd.f32 %v297, %v3340
        %v3547 = vadd.f32 %v298, %v3343
        %v3548 = vadd.f32 %v299, %v3348
        %v3549 = vadd.f32 %v300, %v3351
        %v3550 = vadd.f32 %v301, %v3356
        %v3551 = vadd.f32 %v302, %v3359
        %v3552 = vadd.f32 %v303, %v3364
        %v3553 = vadd.f32 %v304, %v3367
        %v3554 = vadd.f32 %v305, %v3372
        %v3555 = vadd.f32 %v306, %v3375
        %v3556 = vadd.f32 %v307, %v3380
        %v3557 = vadd.f32 %v308, %v3383
        %v3558 = vadd.f32 %v309, %v3388
        %v3559 = vadd.f32 %v310, %v3391
        %v3560 = vadd.f32 %v311, %v3396
        %v3561 = vadd.f32 %v312, %v3399
        %v3562 = vadd.f32 %v313, %v3404
        %v3563 = vadd.f32 %v314, %v3407
        %v3564 = vadd.f32 %v315, %v3412
        %v3565 = vadd.f32 %v316, %v3415
        %v3566 = vadd.f32 %v317, %v3420
        %v3567 = vadd.f32 %v318, %v3423
        %v3568 = vadd.f32 %v319, %v3428
        %v3569 = vadd.f32 %v320, %v3431
        %v3570 = vadd.f32 %v321, %v3436
        %v3571 = vadd.f32 %v322, %v3439
        %v3572 = vadd.f32 %v323, %v3444
        %v3573 = vadd.f32 %v324, %v3447
        %v3574 = vadd.f32 %v325, %v3452
        %v3575 = vadd.f32 %v326, %v3455
        %v3576 = vadd.f32 %v327, %v3460
        %v3577 = vadd.f32 %v328, %v3463
        %v3578 = vadd.f32 %v329, %v3468
        %v3579 = vadd.f32 %v330, %v3471
        %v3580 = vadd.f32 %v331, %v3476
        %v3581 = vadd.f32 %v332, %v3479
        %v3582 = vadd.f32 %v333, %v3484
        %v3583 = vadd.f32 %v334, %v3487
        %v3584 = vadd.f32 %v335, %v3492
        %v3585 = vadd.f32 %v336, %v3495
        %v3586 = vadd.f32 %v337, %v3500
        %v3587 = vadd.f32 %v338, %v3503
        %v3588 = vadd.f32 %v339, %v3508
        %v3589 = vadd.f32 %v340, %v3511
        %v3590 = vadd.f32 %v341, %v3516
        %v3591 = vadd.f32 %v342, %v3519
        %v3592 = vadd.f32 %v343, %v3524
        %v3593 = vadd.f32 %v344, %v3527
        %s3594 = scalar_lea.vmem %s2, 1
        %v3595 = vld [vmem:[%s3594] sm:$0x1]
        %s3596 = scalar_lea.vmem %s4, 1
        %v3597 = vld [vmem:[%s3596] sm:$0x1]
        %v3598 = vmax.f32 %v3530, 0.0
        %v3599 = vmax.f32 %v3531, 0.0
        %v3600 = vmax.f32 %v3532, 0.0
        %v3601 = vmax.f32 %v3533, 0.0
        %v3602 = vmax.f32 %v3534, 0.0
        %v3603 = vmax.f32 %v3535, 0.0
        %v3604 = vmax.f32 %v3536, 0.0
        %v3605 = vmax.f32 %v3537, 0.0
        %v3606 = vmax.f32 %v3538, 0.0
        %v3607 = vmax.f32 %v3539, 0.0
        %v3608 = vmax.f32 %v3540, 0.0
        %v3609 = vmax.f32 %v3541, 0.0
        %v3610 = vmax.f32 %v3542, 0.0
        %v3611 = vmax.f32 %v3543, 0.0
        %v3612 = vmax.f32 %v3544, 0.0
        %v3613 = vmax.f32 %v3545, 0.0
        %v3614 = vmax.f32 %v3546, 0.0
        %v3615 = vmax.f32 %v3547, 0.0
        %v3616 = vmax.f32 %v3548, 0.0
        %v3617 = vmax.f32 %v3549, 0.0
        %v3618 = vmax.f32 %v3550, 0.0
        %v3619 = vmax.f32 %v3551, 0.0
        %v3620 = vmax.f32 %v3552, 0.0
        %v3621 = vmax.f32 %v3553, 0.0
        %v3622 = vmax.f32 %v3554, 0.0
        %v3623 = vmax.f32 %v3555, 0.0
        %v3624 = vmax.f32 %v3556, 0.0
        %v3625 = vmax.f32 %v3557, 0.0
        %v3626 = vmax.f32 %v3558, 0.0
        %v3627 = vmax.f32 %v3559, 0.0
        %v3628 = vmax.f32 %v3560, 0.0
        %v3629 = vmax.f32 %v3561, 0.0
        %v3630 = vmax.f32 %v3562, 0.0
        %v3631 = vmax.f32 %v3563, 0.0
        %v3632 = vmax.f32 %v3564, 0.0
        %v3633 = vmax.f32 %v3565, 0.0
        %v3634 = vmax.f32 %v3566, 0.0
        %v3635 = vmax.f32 %v3567, 0.0
        %v3636 = vmax.f32 %v3568, 0.0
        %v3637 = vmax.f32 %v3569, 0.0
        %v3638 = vmax.f32 %v3570, 0.0
        %v3639 = vmax.f32 %v3571, 0.0
        %v3640 = vmax.f32 %v3572, 0.0
        %v3641 = vmax.f32 %v3573, 0.0
        %v3642 = vmax.f32 %v3574, 0.0
        %v3643 = vmax.f32 %v3575, 0.0
        %v3644 = vmax.f32 %v3576, 0.0
        %v3645 = vmax.f32 %v3577, 0.0
        %v3646 = vmax.f32 %v3578, 0.0
        %v3647 = vmax.f32 %v3579, 0.0
        %v3648 = vmax.f32 %v3580, 0.0
        %v3649 = vmax.f32 %v3581, 0.0
        %v3650 = vmax.f32 %v3582, 0.0
        %v3651 = vmax.f32 %v3583, 0.0
        %v3652 = vmax.f32 %v3584, 0.0
        %v3653 = vmax.f32 %v3585, 0.0
        %v3654 = vmax.f32 %v3586, 0.0
        %v3655 = vmax.f32 %v3587, 0.0
        %v3656 = vmax.f32 %v3588, 0.0
        %v3657 = vmax.f32 %v3589, 0.0
        %v3658 = vmax.f32 %v3590, 0.0
        %v3659 = vmax.f32 %v3591, 0.0
        %v3660 = vmax.f32 %v3592, 0.0
        %v3661 = vmax.f32 %v3593, 0.0
        %vm3662 = vcmp.ne.f32.partialorder %v3530, %v3530
        %vm3663 = vcmp.ne.f32.partialorder %v3531, %v3531
        %vm3664 = vcmp.ne.f32.partialorder %v3532, %v3532
        %vm3665 = vcmp.ne.f32.partialorder %v3533, %v3533
        %vm3666 = vcmp.ne.f32.partialorder %v3534, %v3534
        %vm3667 = vcmp.ne.f32.partialorder %v3535, %v3535
        %vm3668 = vcmp.ne.f32.partialorder %v3536, %v3536
        %vm3669 = vcmp.ne.f32.partialorder %v3537, %v3537
        %vm3670 = vcmp.ne.f32.partialorder %v3538, %v3538
        %vm3671 = vcmp.ne.f32.partialorder %v3539, %v3539
        %vm3672 = vcmp.ne.f32.partialorder %v3540, %v3540
        %vm3673 = vcmp.ne.f32.partialorder %v3541, %v3541
        %vm3674 = vcmp.ne.f32.partialorder %v3542, %v3542
        %vm3675 = vcmp.ne.f32.partialorder %v3543, %v3543
        %vm3676 = vcmp.ne.f32.partialorder %v3544, %v3544
        %vm3677 = vcmp.ne.f32.partialorder %v3545, %v3545
        %vm3678 = vcmp.ne.f32.partialorder %v3546, %v3546
        %vm3679 = vcmp.ne.f32.partialorder %v3547, %v3547
        %vm3680 = vcmp.ne.f32.partialorder %v3548, %v3548
        %vm3681 = vcmp.ne.f32.partialorder %v3549, %v3549
        %vm3682 = vcmp.ne.f32.partialorder %v3550, %v3550
        %vm3683 = vcmp.ne.f32.partialorder %v3551, %v3551
        %vm3684 = vcmp.ne.f32.partialorder %v3552, %v3552
        %vm3685 = vcmp.ne.f32.partialorder %v3553, %v3553
        %vm3686 = vcmp.ne.f32.partialorder %v3554, %v3554
        %vm3687 = vcmp.ne.f32.partialorder %v3555, %v3555
        %vm3688 = vcmp.ne.f32.partialorder %v3556, %v3556
        %vm3689 = vcmp.ne.f32.partialorder %v3557, %v3557
        %vm3690 = vcmp.ne.f32.partialorder %v3558, %v3558
        %vm3691 = vcmp.ne.f32.partialorder %v3559, %v3559
        %vm3692 = vcmp.ne.f32.partialorder %v3560, %v3560
        %vm3693 = vcmp.ne.f32.partialorder %v3561, %v3561
        %vm3694 = vcmp.ne.f32.partialorder %v3562, %v3562
        %vm3695 = vcmp.ne.f32.partialorder %v3563, %v3563
        %vm3696 = vcmp.ne.f32.partialorder %v3564, %v3564
        %vm3697 = vcmp.ne.f32.partialorder %v3565, %v3565
        %vm3698 = vcmp.ne.f32.partialorder %v3566, %v3566
        %vm3699 = vcmp.ne.f32.partialorder %v3567, %v3567
        %vm3700 = vcmp.ne.f32.partialorder %v3568, %v3568
        %vm3701 = vcmp.ne.f32.partialorder %v3569, %v3569
        %vm3702 = vcmp.ne.f32.partialorder %v3570, %v3570
        %vm3703 = vcmp.ne.f32.partialorder %v3571, %v3571
        %vm3704 = vcmp.ne.f32.partialorder %v3572, %v3572
        %vm3705 = vcmp.ne.f32.partialorder %v3573, %v3573
        %vm3706 = vcmp.ne.f32.partialorder %v3574, %v3574
        %vm3707 = vcmp.ne.f32.partialorder %v3575, %v3575
        %vm3708 = vcmp.ne.f32.partialorder %v3576, %v3576
        %vm3709 = vcmp.ne.f32.partialorder %v3577, %v3577
        %vm3710 = vcmp.ne.f32.partialorder %v3578, %v3578
        %vm3711 = vcmp.ne.f32.partialorder %v3579, %v3579
        %vm3712 = vcmp.ne.f32.partialorder %v3580, %v3580
        %vm3713 = vcmp.ne.f32.partialorder %v3581, %v3581
        %vm3714 = vcmp.ne.f32.partialorder %v3582, %v3582
        %vm3715 = vcmp.ne.f32.partialorder %v3583, %v3583
        %vm3716 = vcmp.ne.f32.partialorder %v3584, %v3584
        %vm3717 = vcmp.ne.f32.partialorder %v3585, %v3585
        %vm3718 = vcmp.ne.f32.partialorder %v3586, %v3586
        %vm3719 = vcmp.ne.f32.partialorder %v3587, %v3587
        %vm3720 = vcmp.ne.f32.partialorder %v3588, %v3588
        %vm3721 = vcmp.ne.f32.partialorder %v3589, %v3589
        %vm3722 = vcmp.ne.f32.partialorder %v3590, %v3590
        %vm3723 = vcmp.ne.f32.partialorder %v3591, %v3591
        %vm3724 = vcmp.ne.f32.partialorder %v3592, %v3592
        %vm3725 = vcmp.ne.f32.partialorder %v3593, %v3593
        %v3726 = vadd.f32 %v3530, 0.0
        %v3727 = vadd.f32 %v3531, 0.0
        %v3728 = vadd.f32 %v3532, 0.0
        %v3729 = vadd.f32 %v3533, 0.0
        %v3730 = vadd.f32 %v3534, 0.0
        %v3731 = vadd.f32 %v3535, 0.0
        %v3732 = vadd.f32 %v3536, 0.0
        %v3733 = vadd.f32 %v3537, 0.0
        %v3734 = vadd.f32 %v3538, 0.0
        %v3735 = vadd.f32 %v3539, 0.0
        %v3736 = vadd.f32 %v3540, 0.0
        %v3737 = vadd.f32 %v3541, 0.0
        %v3738 = vadd.f32 %v3542, 0.0
        %v3739 = vadd.f32 %v3543, 0.0
        %v3740 = vadd.f32 %v3544, 0.0
        %v3741 = vadd.f32 %v3545, 0.0
        %v3742 = vadd.f32 %v3546, 0.0
        %v3743 = vadd.f32 %v3547, 0.0
        %v3744 = vadd.f32 %v3548, 0.0
        %v3745 = vadd.f32 %v3549, 0.0
        %v3746 = vadd.f32 %v3550, 0.0
        %v3747 = vadd.f32 %v3551, 0.0
        %v3748 = vadd.f32 %v3552, 0.0
        %v3749 = vadd.f32 %v3553, 0.0
        %v3750 = vadd.f32 %v3554, 0.0
        %v3751 = vadd.f32 %v3555, 0.0
        %v3752 = vadd.f32 %v3556, 0.0
        %v3753 = vadd.f32 %v3557, 0.0
        %v3754 = vadd.f32 %v3558, 0.0
        %v3755 = vadd.f32 %v3559, 0.0
        %v3756 = vadd.f32 %v3560, 0.0
        %v3757 = vadd.f32 %v3561, 0.0
        %v3758 = vadd.f32 %v3562, 0.0
        %v3759 = vadd.f32 %v3563, 0.0
        %v3760 = vadd.f32 %v3564, 0.0
        %v3761 = vadd.f32 %v3565, 0.0
        %v3762 = vadd.f32 %v3566, 0.0
        %v3763 = vadd.f32 %v3567, 0.0
        %v3764 = vadd.f32 %v3568, 0.0
        %v3765 = vadd.f32 %v3569, 0.0
        %v3766 = vadd.f32 %v3570, 0.0
        %v3767 = vadd.f32 %v3571, 0.0
        %v3768 = vadd.f32 %v3572, 0.0
        %v3769 = vadd.f32 %v3573, 0.0
        %v3770 = vadd.f32 %v3574, 0.0
        %v3771 = vadd.f32 %v3575, 0.0
        %v3772 = vadd.f32 %v3576, 0.0
        %v3773 = vadd.f32 %v3577, 0.0
        %v3774 = vadd.f32 %v3578, 0.0
        %v3775 = vadd.f32 %v3579, 0.0
        %v3776 = vadd.f32 %v3580, 0.0
        %v3777 = vadd.f32 %v3581, 0.0
        %v3778 = vadd.f32 %v3582, 0.0
        %v3779 = vadd.f32 %v3583, 0.0
        %v3780 = vadd.f32 %v3584, 0.0
        %v3781 = vadd.f32 %v3585, 0.0
        %v3782 = vadd.f32 %v3586, 0.0
        %v3783 = vadd.f32 %v3587, 0.0
        %v3784 = vadd.f32 %v3588, 0.0
        %v3785 = vadd.f32 %v3589, 0.0
        %v3786 = vadd.f32 %v3590, 0.0
        %v3787 = vadd.f32 %v3591, 0.0
        %v3788 = vadd.f32 %v3592, 0.0
        %v3789 = vadd.f32 %v3593, 0.0
        %v3790 = vand.u32 2147483647, %v3530
        %v3791 = vand.u32 2147483647, %v3531
        %v3792 = vand.u32 2147483647, %v3532
        %v3793 = vand.u32 2147483647, %v3533
        %v3794 = vand.u32 2147483647, %v3534
        %v3795 = vand.u32 2147483647, %v3535
        %v3796 = vand.u32 2147483647, %v3536
        %v3797 = vand.u32 2147483647, %v3537
        %v3798 = vand.u32 2147483647, %v3538
        %v3799 = vand.u32 2147483647, %v3539
        %v3800 = vand.u32 2147483647, %v3540
        %v3801 = vand.u32 2147483647, %v3541
        %v3802 = vand.u32 2147483647, %v3542
        %v3803 = vand.u32 2147483647, %v3543
        %v3804 = vand.u32 2147483647, %v3544
        %v3805 = vand.u32 2147483647, %v3545
        %v3806 = vand.u32 2147483647, %v3546
        %v3807 = vand.u32 2147483647, %v3547
        %v3808 = vand.u32 2147483647, %v3548
        %v3809 = vand.u32 2147483647, %v3549
        %v3810 = vand.u32 2147483647, %v3550
        %v3811 = vand.u32 2147483647, %v3551
        %v3812 = vand.u32 2147483647, %v3552
        %v3813 = vand.u32 2147483647, %v3553
        %v3814 = vand.u32 2147483647, %v3554
        %v3815 = vand.u32 2147483647, %v3555
        %v3816 = vand.u32 2147483647, %v3556
        %v3817 = vand.u32 2147483647, %v3557
        %v3818 = vand.u32 2147483647, %v3558
        %v3819 = vand.u32 2147483647, %v3559
        %v3820 = vand.u32 2147483647, %v3560
        %v3821 = vand.u32 2147483647, %v3561
        %v3822 = vand.u32 2147483647, %v3562
        %v3823 = vand.u32 2147483647, %v3563
        %v3824 = vand.u32 2147483647, %v3564
        %v3825 = vand.u32 2147483647, %v3565
        %v3826 = vand.u32 2147483647, %v3566
        %v3827 = vand.u32 2147483647, %v3567
        %v3828 = vand.u32 2147483647, %v3568
        %v3829 = vand.u32 2147483647, %v3569
        %v3830 = vand.u32 2147483647, %v3570
        %v3831 = vand.u32 2147483647, %v3571
        %v3832 = vand.u32 2147483647, %v3572
        %v3833 = vand.u32 2147483647, %v3573
        %v3834 = vand.u32 2147483647, %v3574
        %v3835 = vand.u32 2147483647, %v3575
        %v3836 = vand.u32 2147483647, %v3576
        %v3837 = vand.u32 2147483647, %v3577
        %v3838 = vand.u32 2147483647, %v3578
        %v3839 = vand.u32 2147483647, %v3579
        %v3840 = vand.u32 2147483647, %v3580
        %v3841 = vand.u32 2147483647, %v3581
        %v3842 = vand.u32 2147483647, %v3582
        %v3843 = vand.u32 2147483647, %v3583
        %v3844 = vand.u32 2147483647, %v3584
        %v3845 = vand.u32 2147483647, %v3585
        %v3846 = vand.u32 2147483647, %v3586
        %v3847 = vand.u32 2147483647, %v3587
        %v3848 = vand.u32 2147483647, %v3588
        %v3849 = vand.u32 2147483647, %v3589
        %v3850 = vand.u32 2147483647, %v3590
        %v3851 = vand.u32 2147483647, %v3591
        %v3852 = vand.u32 2147483647, %v3592
        %v3853 = vand.u32 2147483647, %v3593
        %v3854 = vsub.f32 0.0, %v3790
        %v3855 = vsub.f32 0.0, %v3791
        %v3856 = vsub.f32 0.0, %v3792
        %v3857 = vsub.f32 0.0, %v3793
        %v3858 = vsub.f32 0.0, %v3794
        %v3859 = vsub.f32 0.0, %v3795
        %v3860 = vsub.f32 0.0, %v3796
        %v3861 = vsub.f32 0.0, %v3797
        %v3862 = vsub.f32 0.0, %v3798
        %v3863 = vsub.f32 0.0, %v3799
        %v3864 = vsub.f32 0.0, %v3800
        %v3865 = vsub.f32 0.0, %v3801
        %v3866 = vsub.f32 0.0, %v3802
        %v3867 = vsub.f32 0.0, %v3803
        %v3868 = vsub.f32 0.0, %v3804
        %v3869 = vsub.f32 0.0, %v3805
        %v3870 = vsub.f32 0.0, %v3806
        %v3871 = vsub.f32 0.0, %v3807
        %v3872 = vsub.f32 0.0, %v3808
        %v3873 = vsub.f32 0.0, %v3809
        %v3874 = vsub.f32 0.0, %v3810
        %v3875 = vsub.f32 0.0, %v3811
        %v3876 = vsub.f32 0.0, %v3812
        %v3877 = vsub.f32 0.0, %v3813
        %v3878 = vsub.f32 0.0, %v3814
        %v3879 = vsub.f32 0.0, %v3815
        %v3880 = vsub.f32 0.0, %v3816
        %v3881 = vsub.f32 0.0, %v3817
        %v3882 = vsub.f32 0.0, %v3818
        %v3883 = vsub.f32 0.0, %v3819
        %v3884 = vsub.f32 0.0, %v3820
        %v3885 = vsub.f32 0.0, %v3821
        %v3886 = vsub.f32 0.0, %v3822
        %v3887 = vsub.f32 0.0, %v3823
        %v3888 = vsub.f32 0.0, %v3824
        %v3889 = vsub.f32 0.0, %v3825
        %v3890 = vsub.f32 0.0, %v3826
        %v3891 = vsub.f32 0.0, %v3827
        %v3892 = vsub.f32 0.0, %v3828
        %v3893 = vsub.f32 0.0, %v3829
        %v3894 = vsub.f32 0.0, %v3830
        %v3895 = vsub.f32 0.0, %v3831
        %v3896 = vsub.f32 0.0, %v3832
        %v3897 = vsub.f32 0.0, %v3833
        %v3898 = vsub.f32 0.0, %v3834
        %v3899 = vsub.f32 0.0, %v3835
        %v3900 = vsub.f32 0.0, %v3836
        %v3901 = vsub.f32 0.0, %v3837
        %v3902 = vsub.f32 0.0, %v3838
        %v3903 = vsub.f32 0.0, %v3839
        %v3904 = vsub.f32 0.0, %v3840
        %v3905 = vsub.f32 0.0, %v3841
        %v3906 = vsub.f32 0.0, %v3842
        %v3907 = vsub.f32 0.0, %v3843
        %v3908 = vsub.f32 0.0, %v3844
        %v3909 = vsub.f32 0.0, %v3845
        %v3910 = vsub.f32 0.0, %v3846
        %v3911 = vsub.f32 0.0, %v3847
        %v3912 = vsub.f32 0.0, %v3848
        %v3913 = vsub.f32 0.0, %v3849
        %v3914 = vsub.f32 0.0, %v3850
        %v3915 = vsub.f32 0.0, %v3851
        %v3916 = vsub.f32 0.0, %v3852
        %v3917 = vsub.f32 0.0, %v3853
        %v3918 = vmul.f32 %v3854, 1.442695
        %v3919 = vpow.pop %v3918
        %v3920 = vmul.f32 %v3855, 1.442695
        %v3921 = vpow.pop %v3920
        %v3922 = vmul.f32 %v3856, 1.442695
        %v3923 = vpow.pop %v3922
        %v3924 = vmul.f32 %v3857, 1.442695
        %v3925 = vpow.pop %v3924
        %v3926 = vmul.f32 %v3858, 1.442695
        %v3927 = vpow.pop %v3926
        %v3928 = vmul.f32 %v3859, 1.442695
        %v3929 = vpow.pop %v3928
        %v3930 = vmul.f32 %v3860, 1.442695
        %v3931 = vpow.pop %v3930
        %v3932 = vmul.f32 %v3861, 1.442695
        %v3933 = vpow.pop %v3932
        %v3934 = vmul.f32 %v3862, 1.442695
        %v3935 = vpow.pop %v3934
        %v3936 = vmul.f32 %v3863, 1.442695
        %v3937 = vpow.pop %v3936
        %v3938 = vmul.f32 %v3864, 1.442695
        %v3939 = vpow.pop %v3938
        %v3940 = vmul.f32 %v3865, 1.442695
        %v3941 = vpow.pop %v3940
        %v3942 = vmul.f32 %v3866, 1.442695
        %v3943 = vpow.pop %v3942
        %v3944 = vmul.f32 %v3867, 1.442695
        %v3945 = vpow.pop %v3944
        %v3946 = vmul.f32 %v3868, 1.442695
        %v3947 = vpow.pop %v3946
        %v3948 = vmul.f32 %v3869, 1.442695
        %v3949 = vpow.pop %v3948
        %v3950 = vmul.f32 %v3870, 1.442695
        %v3951 = vpow.pop %v3950
        %v3952 = vmul.f32 %v3871, 1.442695
        %v3953 = vpow.pop %v3952
        %v3954 = vmul.f32 %v3872, 1.442695
        %v3955 = vpow.pop %v3954
        %v3956 = vmul.f32 %v3873, 1.442695
        %v3957 = vpow.pop %v3956
        %v3958 = vmul.f32 %v3874, 1.442695
        %v3959 = vpow.pop %v3958
        %v3960 = vmul.f32 %v3875, 1.442695
        %v3961 = vpow.pop %v3960
        %v3962 = vmul.f32 %v3876, 1.442695
        %v3963 = vpow.pop %v3962
        %v3964 = vmul.f32 %v3877, 1.442695
        %v3965 = vpow.pop %v3964
        %v3966 = vmul.f32 %v3878, 1.442695
        %v3967 = vpow.pop %v3966
        %v3968 = vmul.f32 %v3879, 1.442695
        %v3969 = vpow.pop %v3968
        %v3970 = vmul.f32 %v3880, 1.442695
        %v3971 = vpow.pop %v3970
        %v3972 = vmul.f32 %v3881, 1.442695
        %v3973 = vpow.pop %v3972
        %v3974 = vmul.f32 %v3882, 1.442695
        %v3975 = vpow.pop %v3974
        %v3976 = vmul.f32 %v3883, 1.442695
        %v3977 = vpow.pop %v3976
        %v3978 = vmul.f32 %v3884, 1.442695
        %v3979 = vpow.pop %v3978
        %v3980 = vmul.f32 %v3885, 1.442695
        %v3981 = vpow.pop %v3980
        %v3982 = vmul.f32 %v3886, 1.442695
        %v3983 = vpow.pop %v3982
        %v3984 = vmul.f32 %v3887, 1.442695
        %v3985 = vpow.pop %v3984
        %v3986 = vmul.f32 %v3888, 1.442695
        %v3987 = vpow.pop %v3986
        %v3988 = vmul.f32 %v3889, 1.442695
        %v3989 = vpow.pop %v3988
        %v3990 = vmul.f32 %v3890, 1.442695
        %v3991 = vpow.pop %v3990
        %v3992 = vmul.f32 %v3891, 1.442695
        %v3993 = vpow.pop %v3992
        %v3994 = vmul.f32 %v3892, 1.442695
        %v3995 = vpow.pop %v3994
        %v3996 = vmul.f32 %v3893, 1.442695
        %v3997 = vpow.pop %v3996
        %v3998 = vmul.f32 %v3894, 1.442695
        %v3999 = vpow.pop %v3998
        %v4000 = vmul.f32 %v3895, 1.442695
        %v4001 = vpow.pop %v4000
        %v4002 = vmul.f32 %v3896, 1.442695
        %v4003 = vpow.pop %v4002
        %v4004 = vmul.f32 %v3897, 1.442695
        %v4005 = vpow.pop %v4004
        %v4006 = vmul.f32 %v3898, 1.442695
        %v4007 = vpow.pop %v4006
        %v4008 = vmul.f32 %v3899, 1.442695
        %v4009 = vpow.pop %v4008
        %v4010 = vmul.f32 %v3900, 1.442695
        %v4011 = vpow.pop %v4010
        %v4012 = vmul.f32 %v3901, 1.442695
        %v4013 = vpow.pop %v4012
        %v4014 = vmul.f32 %v3902, 1.442695
        %v4015 = vpow.pop %v4014
        %v4016 = vmul.f32 %v3903, 1.442695
        %v4017 = vpow.pop %v4016
        %v4018 = vmul.f32 %v3904, 1.442695
        %v4019 = vpow.pop %v4018
        %v4020 = vmul.f32 %v3905, 1.442695
        %v4021 = vpow.pop %v4020
        %v4022 = vmul.f32 %v3906, 1.442695
        %v4023 = vpow.pop %v4022
        %v4024 = vmul.f32 %v3907, 1.442695
        %v4025 = vpow.pop %v4024
        %v4026 = vmul.f32 %v3908, 1.442695
        %v4027 = vpow.pop %v4026
        %v4028 = vmul.f32 %v3909, 1.442695
        %v4029 = vpow.pop %v4028
        %v4030 = vmul.f32 %v3910, 1.442695
        %v4031 = vpow.pop %v4030
        %v4032 = vmul.f32 %v3911, 1.442695
        %v4033 = vpow.pop %v4032
        %v4034 = vmul.f32 %v3912, 1.442695
        %v4035 = vpow.pop %v4034
        %v4036 = vmul.f32 %v3913, 1.442695
        %v4037 = vpow.pop %v4036
        %v4038 = vmul.f32 %v3914, 1.442695
        %v4039 = vpow.pop %v4038
        %v4040 = vmul.f32 %v3915, 1.442695
        %v4041 = vpow.pop %v4040
        %v4042 = vmul.f32 %v3916, 1.442695
        %v4043 = vpow.pop %v4042
        %v4044 = vmul.f32 %v3917, 1.442695
        %v4045 = vpow.pop %v4044
        %v4046 = vadd.f32 %v3919, 1.0
        %v4047 = vlog2.pop %v4046
        %v4048 = vmul.f32 %v4047, 0.6931472
        %v4049 = vmul.f32 -0.5, %v3919
        %v4050 = vadd.f32 %v4049, 1.0
        %v4051 = vmul.f32 %v4050, %v3919
        %v4052 = vand.u32 2147483647, %v3919
        %vm4053 = vcmp.lt.f32.partialorder %v4052, 0.0004427343
        %v4054 = vsel %vm4053, %v4051, %v4048
        %v4055 = vadd.f32 %v3921, 1.0
        %v4056 = vlog2.pop %v4055
        %v4057 = vmul.f32 %v4056, 0.6931472
        %v4058 = vmul.f32 -0.5, %v3921
        %v4059 = vadd.f32 %v4058, 1.0
        %v4060 = vmul.f32 %v4059, %v3921
        %v4061 = vand.u32 2147483647, %v3921
        %vm4062 = vcmp.lt.f32.partialorder %v4061, 0.0004427343
        %v4063 = vsel %vm4062, %v4060, %v4057
        %v4064 = vadd.f32 %v3923, 1.0
        %v4065 = vlog2.pop %v4064
        %v4066 = vmul.f32 %v4065, 0.6931472
        %v4067 = vmul.f32 -0.5, %v3923
        %v4068 = vadd.f32 %v4067, 1.0
        %v4069 = vmul.f32 %v4068, %v3923
        %v4070 = vand.u32 2147483647, %v3923
        %vm4071 = vcmp.lt.f32.partialorder %v4070, 0.0004427343
        %v4072 = vsel %vm4071, %v4069, %v4066
        %v4073 = vadd.f32 %v3925, 1.0
        %v4074 = vlog2.pop %v4073
        %v4075 = vmul.f32 %v4074, 0.6931472
        %v4076 = vmul.f32 -0.5, %v3925
        %v4077 = vadd.f32 %v4076, 1.0
        %v4078 = vmul.f32 %v4077, %v3925
        %v4079 = vand.u32 2147483647, %v3925
        %vm4080 = vcmp.lt.f32.partialorder %v4079, 0.0004427343
        %v4081 = vsel %vm4080, %v4078, %v4075
        %v4082 = vadd.f32 %v3927, 1.0
        %v4083 = vlog2.pop %v4082
        %v4084 = vmul.f32 %v4083, 0.6931472
        %v4085 = vmul.f32 -0.5, %v3927
        %v4086 = vadd.f32 %v4085, 1.0
        %v4087 = vmul.f32 %v4086, %v3927
        %v4088 = vand.u32 2147483647, %v3927
        %vm4089 = vcmp.lt.f32.partialorder %v4088, 0.0004427343
        %v4090 = vsel %vm4089, %v4087, %v4084
        %v4091 = vadd.f32 %v3929, 1.0
        %v4092 = vlog2.pop %v4091
        %v4093 = vmul.f32 %v4092, 0.6931472
        %v4094 = vmul.f32 -0.5, %v3929
        %v4095 = vadd.f32 %v4094, 1.0
        %v4096 = vmul.f32 %v4095, %v3929
        %v4097 = vand.u32 2147483647, %v3929
        %vm4098 = vcmp.lt.f32.partialorder %v4097, 0.0004427343
        %v4099 = vsel %vm4098, %v4096, %v4093
        %v4100 = vadd.f32 %v3931, 1.0
        %v4101 = vlog2.pop %v4100
        %v4102 = vmul.f32 %v4101, 0.6931472
        %v4103 = vmul.f32 -0.5, %v3931
        %v4104 = vadd.f32 %v4103, 1.0
        %v4105 = vmul.f32 %v4104, %v3931
        %v4106 = vand.u32 2147483647, %v3931
        %vm4107 = vcmp.lt.f32.partialorder %v4106, 0.0004427343
        %v4108 = vsel %vm4107, %v4105, %v4102
        %v4109 = vadd.f32 %v3933, 1.0
        %v4110 = vlog2.pop %v4109
        %v4111 = vmul.f32 %v4110, 0.6931472
        %v4112 = vmul.f32 -0.5, %v3933
        %v4113 = vadd.f32 %v4112, 1.0
        %v4114 = vmul.f32 %v4113, %v3933
        %v4115 = vand.u32 2147483647, %v3933
        %vm4116 = vcmp.lt.f32.partialorder %v4115, 0.0004427343
        %v4117 = vsel %vm4116, %v4114, %v4111
        %v4118 = vadd.f32 %v3935, 1.0
        %v4119 = vlog2.pop %v4118
        %v4120 = vmul.f32 %v4119, 0.6931472
        %v4121 = vmul.f32 -0.5, %v3935
        %v4122 = vadd.f32 %v4121, 1.0
        %v4123 = vmul.f32 %v4122, %v3935
        %v4124 = vand.u32 2147483647, %v3935
        %vm4125 = vcmp.lt.f32.partialorder %v4124, 0.0004427343
        %v4126 = vsel %vm4125, %v4123, %v4120
        %v4127 = vadd.f32 %v3937, 1.0
        %v4128 = vlog2.pop %v4127
        %v4129 = vmul.f32 %v4128, 0.6931472
        %v4130 = vmul.f32 -0.5, %v3937
        %v4131 = vadd.f32 %v4130, 1.0
        %v4132 = vmul.f32 %v4131, %v3937
        %v4133 = vand.u32 2147483647, %v3937
        %vm4134 = vcmp.lt.f32.partialorder %v4133, 0.0004427343
        %v4135 = vsel %vm4134, %v4132, %v4129
        %v4136 = vadd.f32 %v3939, 1.0
        %v4137 = vlog2.pop %v4136
        %v4138 = vmul.f32 %v4137, 0.6931472
        %v4139 = vmul.f32 -0.5, %v3939
        %v4140 = vadd.f32 %v4139, 1.0
        %v4141 = vmul.f32 %v4140, %v3939
        %v4142 = vand.u32 2147483647, %v3939
        %vm4143 = vcmp.lt.f32.partialorder %v4142, 0.0004427343
        %v4144 = vsel %vm4143, %v4141, %v4138
        %v4145 = vadd.f32 %v3941, 1.0
        %v4146 = vlog2.pop %v4145
        %v4147 = vmul.f32 %v4146, 0.6931472
        %v4148 = vmul.f32 -0.5, %v3941
        %v4149 = vadd.f32 %v4148, 1.0
        %v4150 = vmul.f32 %v4149, %v3941
        %v4151 = vand.u32 2147483647, %v3941
        %vm4152 = vcmp.lt.f32.partialorder %v4151, 0.0004427343
        %v4153 = vsel %vm4152, %v4150, %v4147
        %v4154 = vadd.f32 %v3943, 1.0
        %v4155 = vlog2.pop %v4154
        %v4156 = vmul.f32 %v4155, 0.6931472
        %v4157 = vmul.f32 -0.5, %v3943
        %v4158 = vadd.f32 %v4157, 1.0
        %v4159 = vmul.f32 %v4158, %v3943
        %v4160 = vand.u32 2147483647, %v3943
        %vm4161 = vcmp.lt.f32.partialorder %v4160, 0.0004427343
        %v4162 = vsel %vm4161, %v4159, %v4156
        %v4163 = vadd.f32 %v3945, 1.0
        %v4164 = vlog2.pop %v4163
        %v4165 = vmul.f32 %v4164, 0.6931472
        %v4166 = vmul.f32 -0.5, %v3945
        %v4167 = vadd.f32 %v4166, 1.0
        %v4168 = vmul.f32 %v4167, %v3945
        %v4169 = vand.u32 2147483647, %v3945
        %vm4170 = vcmp.lt.f32.partialorder %v4169, 0.0004427343
        %v4171 = vsel %vm4170, %v4168, %v4165
        %v4172 = vadd.f32 %v3947, 1.0
        %v4173 = vlog2.pop %v4172
        %v4174 = vmul.f32 %v4173, 0.6931472
        %v4175 = vmul.f32 -0.5, %v3947
        %v4176 = vadd.f32 %v4175, 1.0
        %v4177 = vmul.f32 %v4176, %v3947
        %v4178 = vand.u32 2147483647, %v3947
        %vm4179 = vcmp.lt.f32.partialorder %v4178, 0.0004427343
        %v4180 = vsel %vm4179, %v4177, %v4174
        %v4181 = vadd.f32 %v3949, 1.0
        %v4182 = vlog2.pop %v4181
        %v4183 = vmul.f32 %v4182, 0.6931472
        %v4184 = vmul.f32 -0.5, %v3949
        %v4185 = vadd.f32 %v4184, 1.0
        %v4186 = vmul.f32 %v4185, %v3949
        %v4187 = vand.u32 2147483647, %v3949
        %vm4188 = vcmp.lt.f32.partialorder %v4187, 0.0004427343
        %v4189 = vsel %vm4188, %v4186, %v4183
        %v4190 = vadd.f32 %v3951, 1.0
        %v4191 = vlog2.pop %v4190
        %v4192 = vmul.f32 %v4191, 0.6931472
        %v4193 = vmul.f32 -0.5, %v3951
        %v4194 = vadd.f32 %v4193, 1.0
        %v4195 = vmul.f32 %v4194, %v3951
        %v4196 = vand.u32 2147483647, %v3951
        %vm4197 = vcmp.lt.f32.partialorder %v4196, 0.0004427343
        %v4198 = vsel %vm4197, %v4195, %v4192
        %v4199 = vadd.f32 %v3953, 1.0
        %v4200 = vlog2.pop %v4199
        %v4201 = vmul.f32 %v4200, 0.6931472
        %v4202 = vmul.f32 -0.5, %v3953
        %v4203 = vadd.f32 %v4202, 1.0
        %v4204 = vmul.f32 %v4203, %v3953
        %v4205 = vand.u32 2147483647, %v3953
        %vm4206 = vcmp.lt.f32.partialorder %v4205, 0.0004427343
        %v4207 = vsel %vm4206, %v4204, %v4201
        %v4208 = vadd.f32 %v3955, 1.0
        %v4209 = vlog2.pop %v4208
        %v4210 = vmul.f32 %v4209, 0.6931472
        %v4211 = vmul.f32 -0.5, %v3955
        %v4212 = vadd.f32 %v4211, 1.0
        %v4213 = vmul.f32 %v4212, %v3955
        %v4214 = vand.u32 2147483647, %v3955
        %vm4215 = vcmp.lt.f32.partialorder %v4214, 0.0004427343
        %v4216 = vsel %vm4215, %v4213, %v4210
        %v4217 = vadd.f32 %v3957, 1.0
        %v4218 = vlog2.pop %v4217
        %v4219 = vmul.f32 %v4218, 0.6931472
        %v4220 = vmul.f32 -0.5, %v3957
        %v4221 = vadd.f32 %v4220, 1.0
        %v4222 = vmul.f32 %v4221, %v3957
        %v4223 = vand.u32 2147483647, %v3957
        %vm4224 = vcmp.lt.f32.partialorder %v4223, 0.0004427343
        %v4225 = vsel %vm4224, %v4222, %v4219
        %v4226 = vadd.f32 %v3959, 1.0
        %v4227 = vlog2.pop %v4226
        %v4228 = vmul.f32 %v4227, 0.6931472
        %v4229 = vmul.f32 -0.5, %v3959
        %v4230 = vadd.f32 %v4229, 1.0
        %v4231 = vmul.f32 %v4230, %v3959
        %v4232 = vand.u32 2147483647, %v3959
        %vm4233 = vcmp.lt.f32.partialorder %v4232, 0.0004427343
        %v4234 = vsel %vm4233, %v4231, %v4228
        %v4235 = vadd.f32 %v3961, 1.0
        %v4236 = vlog2.pop %v4235
        %v4237 = vmul.f32 %v4236, 0.6931472
        %v4238 = vmul.f32 -0.5, %v3961
        %v4239 = vadd.f32 %v4238, 1.0
        %v4240 = vmul.f32 %v4239, %v3961
        %v4241 = vand.u32 2147483647, %v3961
        %vm4242 = vcmp.lt.f32.partialorder %v4241, 0.0004427343
        %v4243 = vsel %vm4242, %v4240, %v4237
        %v4244 = vadd.f32 %v3963, 1.0
        %v4245 = vlog2.pop %v4244
        %v4246 = vmul.f32 %v4245, 0.6931472
        %v4247 = vmul.f32 -0.5, %v3963
        %v4248 = vadd.f32 %v4247, 1.0
        %v4249 = vmul.f32 %v4248, %v3963
        %v4250 = vand.u32 2147483647, %v3963
        %vm4251 = vcmp.lt.f32.partialorder %v4250, 0.0004427343
        %v4252 = vsel %vm4251, %v4249, %v4246
        %v4253 = vadd.f32 %v3965, 1.0
        %v4254 = vlog2.pop %v4253
        %v4255 = vmul.f32 %v4254, 0.6931472
        %v4256 = vmul.f32 -0.5, %v3965
        %v4257 = vadd.f32 %v4256, 1.0
        %v4258 = vmul.f32 %v4257, %v3965
        %v4259 = vand.u32 2147483647, %v3965
        %vm4260 = vcmp.lt.f32.partialorder %v4259, 0.0004427343
        %v4261 = vsel %vm4260, %v4258, %v4255
        %v4262 = vadd.f32 %v3967, 1.0
        %v4263 = vlog2.pop %v4262
        %v4264 = vmul.f32 %v4263, 0.6931472
        %v4265 = vmul.f32 -0.5, %v3967
        %v4266 = vadd.f32 %v4265, 1.0
        %v4267 = vmul.f32 %v4266, %v3967
        %v4268 = vand.u32 2147483647, %v3967
        %vm4269 = vcmp.lt.f32.partialorder %v4268, 0.0004427343
        %v4270 = vsel %vm4269, %v4267, %v4264
        %v4271 = vadd.f32 %v3969, 1.0
        %v4272 = vlog2.pop %v4271
        %v4273 = vmul.f32 %v4272, 0.6931472
        %v4274 = vmul.f32 -0.5, %v3969
        %v4275 = vadd.f32 %v4274, 1.0
        %v4276 = vmul.f32 %v4275, %v3969
        %v4277 = vand.u32 2147483647, %v3969
        %vm4278 = vcmp.lt.f32.partialorder %v4277, 0.0004427343
        %v4279 = vsel %vm4278, %v4276, %v4273
        %v4280 = vadd.f32 %v3971, 1.0
        %v4281 = vlog2.pop %v4280
        %v4282 = vmul.f32 %v4281, 0.6931472
        %v4283 = vmul.f32 -0.5, %v3971
        %v4284 = vadd.f32 %v4283, 1.0
        %v4285 = vmul.f32 %v4284, %v3971
        %v4286 = vand.u32 2147483647, %v3971
        %vm4287 = vcmp.lt.f32.partialorder %v4286, 0.0004427343
        %v4288 = vsel %vm4287, %v4285, %v4282
        %v4289 = vadd.f32 %v3973, 1.0
        %v4290 = vlog2.pop %v4289
        %v4291 = vmul.f32 %v4290, 0.6931472
        %v4292 = vmul.f32 -0.5, %v3973
        %v4293 = vadd.f32 %v4292, 1.0
        %v4294 = vmul.f32 %v4293, %v3973
        %v4295 = vand.u32 2147483647, %v3973
        %vm4296 = vcmp.lt.f32.partialorder %v4295, 0.0004427343
        %v4297 = vsel %vm4296, %v4294, %v4291
        %v4298 = vadd.f32 %v3975, 1.0
        %v4299 = vlog2.pop %v4298
        %v4300 = vmul.f32 %v4299, 0.6931472
        %v4301 = vmul.f32 -0.5, %v3975
        %v4302 = vadd.f32 %v4301, 1.0
        %v4303 = vmul.f32 %v4302, %v3975
        %v4304 = vand.u32 2147483647, %v3975
        %vm4305 = vcmp.lt.f32.partialorder %v4304, 0.0004427343
        %v4306 = vsel %vm4305, %v4303, %v4300
        %v4307 = vadd.f32 %v3977, 1.0
        %v4308 = vlog2.pop %v4307
        %v4309 = vmul.f32 %v4308, 0.6931472
        %v4310 = vmul.f32 -0.5, %v3977
        %v4311 = vadd.f32 %v4310, 1.0
        %v4312 = vmul.f32 %v4311, %v3977
        %v4313 = vand.u32 2147483647, %v3977
        %vm4314 = vcmp.lt.f32.partialorder %v4313, 0.0004427343
        %v4315 = vsel %vm4314, %v4312, %v4309
        %v4316 = vadd.f32 %v3979, 1.0
        %v4317 = vlog2.pop %v4316
        %v4318 = vmul.f32 %v4317, 0.6931472
        %v4319 = vmul.f32 -0.5, %v3979
        %v4320 = vadd.f32 %v4319, 1.0
        %v4321 = vmul.f32 %v4320, %v3979
        %v4322 = vand.u32 2147483647, %v3979
        %vm4323 = vcmp.lt.f32.partialorder %v4322, 0.0004427343
        %v4324 = vsel %vm4323, %v4321, %v4318
        %v4325 = vadd.f32 %v3981, 1.0
        %v4326 = vlog2.pop %v4325
        %v4327 = vmul.f32 %v4326, 0.6931472
        %v4328 = vmul.f32 -0.5, %v3981
        %v4329 = vadd.f32 %v4328, 1.0
        %v4330 = vmul.f32 %v4329, %v3981
        %v4331 = vand.u32 2147483647, %v3981
        %vm4332 = vcmp.lt.f32.partialorder %v4331, 0.0004427343
        %v4333 = vsel %vm4332, %v4330, %v4327
        %v4334 = vadd.f32 %v3983, 1.0
        %v4335 = vlog2.pop %v4334
        %v4336 = vmul.f32 %v4335, 0.6931472
        %v4337 = vmul.f32 -0.5, %v3983
        %v4338 = vadd.f32 %v4337, 1.0
        %v4339 = vmul.f32 %v4338, %v3983
        %v4340 = vand.u32 2147483647, %v3983
        %vm4341 = vcmp.lt.f32.partialorder %v4340, 0.0004427343
        %v4342 = vsel %vm4341, %v4339, %v4336
        %v4343 = vadd.f32 %v3985, 1.0
        %v4344 = vlog2.pop %v4343
        %v4345 = vmul.f32 %v4344, 0.6931472
        %v4346 = vmul.f32 -0.5, %v3985
        %v4347 = vadd.f32 %v4346, 1.0
        %v4348 = vmul.f32 %v4347, %v3985
        %v4349 = vand.u32 2147483647, %v3985
        %vm4350 = vcmp.lt.f32.partialorder %v4349, 0.0004427343
        %v4351 = vsel %vm4350, %v4348, %v4345
        %v4352 = vadd.f32 %v3987, 1.0
        %v4353 = vlog2.pop %v4352
        %v4354 = vmul.f32 %v4353, 0.6931472
        %v4355 = vmul.f32 -0.5, %v3987
        %v4356 = vadd.f32 %v4355, 1.0
        %v4357 = vmul.f32 %v4356, %v3987
        %v4358 = vand.u32 2147483647, %v3987
        %vm4359 = vcmp.lt.f32.partialorder %v4358, 0.0004427343
        %v4360 = vsel %vm4359, %v4357, %v4354
        %v4361 = vadd.f32 %v3989, 1.0
        %v4362 = vlog2.pop %v4361
        %v4363 = vmul.f32 %v4362, 0.6931472
        %v4364 = vmul.f32 -0.5, %v3989
        %v4365 = vadd.f32 %v4364, 1.0
        %v4366 = vmul.f32 %v4365, %v3989
        %v4367 = vand.u32 2147483647, %v3989
        %vm4368 = vcmp.lt.f32.partialorder %v4367, 0.0004427343
        %v4369 = vsel %vm4368, %v4366, %v4363
        %v4370 = vadd.f32 %v3991, 1.0
        %v4371 = vlog2.pop %v4370
        %v4372 = vmul.f32 %v4371, 0.6931472
        %v4373 = vmul.f32 -0.5, %v3991
        %v4374 = vadd.f32 %v4373, 1.0
        %v4375 = vmul.f32 %v4374, %v3991
        %v4376 = vand.u32 2147483647, %v3991
        %vm4377 = vcmp.lt.f32.partialorder %v4376, 0.0004427343
        %v4378 = vsel %vm4377, %v4375, %v4372
        %v4379 = vadd.f32 %v3993, 1.0
        %v4380 = vlog2.pop %v4379
        %v4381 = vmul.f32 %v4380, 0.6931472
        %v4382 = vmul.f32 -0.5, %v3993
        %v4383 = vadd.f32 %v4382, 1.0
        %v4384 = vmul.f32 %v4383, %v3993
        %v4385 = vand.u32 2147483647, %v3993
        %vm4386 = vcmp.lt.f32.partialorder %v4385, 0.0004427343
        %v4387 = vsel %vm4386, %v4384, %v4381
        %v4388 = vadd.f32 %v3995, 1.0
        %v4389 = vlog2.pop %v4388
        %v4390 = vmul.f32 %v4389, 0.6931472
        %v4391 = vmul.f32 -0.5, %v3995
        %v4392 = vadd.f32 %v4391, 1.0
        %v4393 = vmul.f32 %v4392, %v3995
        %v4394 = vand.u32 2147483647, %v3995
        %vm4395 = vcmp.lt.f32.partialorder %v4394, 0.0004427343
        %v4396 = vsel %vm4395, %v4393, %v4390
        %v4397 = vadd.f32 %v3997, 1.0
        %v4398 = vlog2.pop %v4397
        %v4399 = vmul.f32 %v4398, 0.6931472
        %v4400 = vmul.f32 -0.5, %v3997
        %v4401 = vadd.f32 %v4400, 1.0
        %v4402 = vmul.f32 %v4401, %v3997
        %v4403 = vand.u32 2147483647, %v3997
        %vm4404 = vcmp.lt.f32.partialorder %v4403, 0.0004427343
        %v4405 = vsel %vm4404, %v4402, %v4399
        %v4406 = vadd.f32 %v3999, 1.0
        %v4407 = vlog2.pop %v4406
        %v4408 = vmul.f32 %v4407, 0.6931472
        %v4409 = vmul.f32 -0.5, %v3999
        %v4410 = vadd.f32 %v4409, 1.0
        %v4411 = vmul.f32 %v4410, %v3999
        %v4412 = vand.u32 2147483647, %v3999
        %vm4413 = vcmp.lt.f32.partialorder %v4412, 0.0004427343
        %v4414 = vsel %vm4413, %v4411, %v4408
        %v4415 = vadd.f32 %v4001, 1.0
        %v4416 = vlog2.pop %v4415
        %v4417 = vmul.f32 %v4416, 0.6931472
        %v4418 = vmul.f32 -0.5, %v4001
        %v4419 = vadd.f32 %v4418, 1.0
        %v4420 = vmul.f32 %v4419, %v4001
        %v4421 = vand.u32 2147483647, %v4001
        %vm4422 = vcmp.lt.f32.partialorder %v4421, 0.0004427343
        %v4423 = vsel %vm4422, %v4420, %v4417
        %v4424 = vadd.f32 %v4003, 1.0
        %v4425 = vlog2.pop %v4424
        %v4426 = vmul.f32 %v4425, 0.6931472
        %v4427 = vmul.f32 -0.5, %v4003
        %v4428 = vadd.f32 %v4427, 1.0
        %v4429 = vmul.f32 %v4428, %v4003
        %v4430 = vand.u32 2147483647, %v4003
        %vm4431 = vcmp.lt.f32.partialorder %v4430, 0.0004427343
        %v4432 = vsel %vm4431, %v4429, %v4426
        %v4433 = vadd.f32 %v4005, 1.0
        %v4434 = vlog2.pop %v4433
        %v4435 = vmul.f32 %v4434, 0.6931472
        %v4436 = vmul.f32 -0.5, %v4005
        %v4437 = vadd.f32 %v4436, 1.0
        %v4438 = vmul.f32 %v4437, %v4005
        %v4439 = vand.u32 2147483647, %v4005
        %vm4440 = vcmp.lt.f32.partialorder %v4439, 0.0004427343
        %v4441 = vsel %vm4440, %v4438, %v4435
        %v4442 = vadd.f32 %v4007, 1.0
        %v4443 = vlog2.pop %v4442
        %v4444 = vmul.f32 %v4443, 0.6931472
        %v4445 = vmul.f32 -0.5, %v4007
        %v4446 = vadd.f32 %v4445, 1.0
        %v4447 = vmul.f32 %v4446, %v4007
        %v4448 = vand.u32 2147483647, %v4007
        %vm4449 = vcmp.lt.f32.partialorder %v4448, 0.0004427343
        %v4450 = vsel %vm4449, %v4447, %v4444
        %v4451 = vadd.f32 %v4009, 1.0
        %v4452 = vlog2.pop %v4451
        %v4453 = vmul.f32 %v4452, 0.6931472
        %v4454 = vmul.f32 -0.5, %v4009
        %v4455 = vadd.f32 %v4454, 1.0
        %v4456 = vmul.f32 %v4455, %v4009
        %v4457 = vand.u32 2147483647, %v4009
        %vm4458 = vcmp.lt.f32.partialorder %v4457, 0.0004427343
        %v4459 = vsel %vm4458, %v4456, %v4453
        %v4460 = vadd.f32 %v4011, 1.0
        %v4461 = vlog2.pop %v4460
        %v4462 = vmul.f32 %v4461, 0.6931472
        %v4463 = vmul.f32 -0.5, %v4011
        %v4464 = vadd.f32 %v4463, 1.0
        %v4465 = vmul.f32 %v4464, %v4011
        %v4466 = vand.u32 2147483647, %v4011
        %vm4467 = vcmp.lt.f32.partialorder %v4466, 0.0004427343
        %v4468 = vsel %vm4467, %v4465, %v4462
        %v4469 = vadd.f32 %v4013, 1.0
        %v4470 = vlog2.pop %v4469
        %v4471 = vmul.f32 %v4470, 0.6931472
        %v4472 = vmul.f32 -0.5, %v4013
        %v4473 = vadd.f32 %v4472, 1.0
        %v4474 = vmul.f32 %v4473, %v4013
        %v4475 = vand.u32 2147483647, %v4013
        %vm4476 = vcmp.lt.f32.partialorder %v4475, 0.0004427343
        %v4477 = vsel %vm4476, %v4474, %v4471
        %v4478 = vadd.f32 %v4015, 1.0
        %v4479 = vlog2.pop %v4478
        %v4480 = vmul.f32 %v4479, 0.6931472
        %v4481 = vmul.f32 -0.5, %v4015
        %v4482 = vadd.f32 %v4481, 1.0
        %v4483 = vmul.f32 %v4482, %v4015
        %v4484 = vand.u32 2147483647, %v4015
        %vm4485 = vcmp.lt.f32.partialorder %v4484, 0.0004427343
        %v4486 = vsel %vm4485, %v4483, %v4480
        %v4487 = vadd.f32 %v4017, 1.0
        %v4488 = vlog2.pop %v4487
        %v4489 = vmul.f32 %v4488, 0.6931472
        %v4490 = vmul.f32 -0.5, %v4017
        %v4491 = vadd.f32 %v4490, 1.0
        %v4492 = vmul.f32 %v4491, %v4017
        %v4493 = vand.u32 2147483647, %v4017
        %vm4494 = vcmp.lt.f32.partialorder %v4493, 0.0004427343
        %v4495 = vsel %vm4494, %v4492, %v4489
        %v4496 = vadd.f32 %v4019, 1.0
        %v4497 = vlog2.pop %v4496
        %v4498 = vmul.f32 %v4497, 0.6931472
        %v4499 = vmul.f32 -0.5, %v4019
        %v4500 = vadd.f32 %v4499, 1.0
        %v4501 = vmul.f32 %v4500, %v4019
        %v4502 = vand.u32 2147483647, %v4019
        %vm4503 = vcmp.lt.f32.partialorder %v4502, 0.0004427343
        %v4504 = vsel %vm4503, %v4501, %v4498
        %v4505 = vadd.f32 %v4021, 1.0
        %v4506 = vlog2.pop %v4505
        %v4507 = vmul.f32 %v4506, 0.6931472
        %v4508 = vmul.f32 -0.5, %v4021
        %v4509 = vadd.f32 %v4508, 1.0
        %v4510 = vmul.f32 %v4509, %v4021
        %v4511 = vand.u32 2147483647, %v4021
        %vm4512 = vcmp.lt.f32.partialorder %v4511, 0.0004427343
        %v4513 = vsel %vm4512, %v4510, %v4507
        %v4514 = vadd.f32 %v4023, 1.0
        %v4515 = vlog2.pop %v4514
        %v4516 = vmul.f32 %v4515, 0.6931472
        %v4517 = vmul.f32 -0.5, %v4023
        %v4518 = vadd.f32 %v4517, 1.0
        %v4519 = vmul.f32 %v4518, %v4023
        %v4520 = vand.u32 2147483647, %v4023
        %vm4521 = vcmp.lt.f32.partialorder %v4520, 0.0004427343
        %v4522 = vsel %vm4521, %v4519, %v4516
        %v4523 = vadd.f32 %v4025, 1.0
        %v4524 = vlog2.pop %v4523
        %v4525 = vmul.f32 %v4524, 0.6931472
        %v4526 = vmul.f32 -0.5, %v4025
        %v4527 = vadd.f32 %v4526, 1.0
        %v4528 = vmul.f32 %v4527, %v4025
        %v4529 = vand.u32 2147483647, %v4025
        %vm4530 = vcmp.lt.f32.partialorder %v4529, 0.0004427343
        %v4531 = vsel %vm4530, %v4528, %v4525
        %v4532 = vadd.f32 %v4027, 1.0
        %v4533 = vlog2.pop %v4532
        %v4534 = vmul.f32 %v4533, 0.6931472
        %v4535 = vmul.f32 -0.5, %v4027
        %v4536 = vadd.f32 %v4535, 1.0
        %v4537 = vmul.f32 %v4536, %v4027
        %v4538 = vand.u32 2147483647, %v4027
        %vm4539 = vcmp.lt.f32.partialorder %v4538, 0.0004427343
        %v4540 = vsel %vm4539, %v4537, %v4534
        %v4541 = vadd.f32 %v4029, 1.0
        %v4542 = vlog2.pop %v4541
        %v4543 = vmul.f32 %v4542, 0.6931472
        %v4544 = vmul.f32 -0.5, %v4029
        %v4545 = vadd.f32 %v4544, 1.0
        %v4546 = vmul.f32 %v4545, %v4029
        %v4547 = vand.u32 2147483647, %v4029
        %vm4548 = vcmp.lt.f32.partialorder %v4547, 0.0004427343
        %v4549 = vsel %vm4548, %v4546, %v4543
        %v4550 = vadd.f32 %v4031, 1.0
        %v4551 = vlog2.pop %v4550
        %v4552 = vmul.f32 %v4551, 0.6931472
        %v4553 = vmul.f32 -0.5, %v4031
        %v4554 = vadd.f32 %v4553, 1.0
        %v4555 = vmul.f32 %v4554, %v4031
        %v4556 = vand.u32 2147483647, %v4031
        %vm4557 = vcmp.lt.f32.partialorder %v4556, 0.0004427343
        %v4558 = vsel %vm4557, %v4555, %v4552
        %v4559 = vadd.f32 %v4033, 1.0
        %v4560 = vlog2.pop %v4559
        %v4561 = vmul.f32 %v4560, 0.6931472
        %v4562 = vmul.f32 -0.5, %v4033
        %v4563 = vadd.f32 %v4562, 1.0
        %v4564 = vmul.f32 %v4563, %v4033
        %v4565 = vand.u32 2147483647, %v4033
        %vm4566 = vcmp.lt.f32.partialorder %v4565, 0.0004427343
        %v4567 = vsel %vm4566, %v4564, %v4561
        %v4568 = vadd.f32 %v4035, 1.0
        %v4569 = vlog2.pop %v4568
        %v4570 = vmul.f32 %v4569, 0.6931472
        %v4571 = vmul.f32 -0.5, %v4035
        %v4572 = vadd.f32 %v4571, 1.0
        %v4573 = vmul.f32 %v4572, %v4035
        %v4574 = vand.u32 2147483647, %v4035
        %vm4575 = vcmp.lt.f32.partialorder %v4574, 0.0004427343
        %v4576 = vsel %vm4575, %v4573, %v4570
        %v4577 = vadd.f32 %v4037, 1.0
        %v4578 = vlog2.pop %v4577
        %v4579 = vmul.f32 %v4578, 0.6931472
        %v4580 = vmul.f32 -0.5, %v4037
        %v4581 = vadd.f32 %v4580, 1.0
        %v4582 = vmul.f32 %v4581, %v4037
        %v4583 = vand.u32 2147483647, %v4037
        %vm4584 = vcmp.lt.f32.partialorder %v4583, 0.0004427343
        %v4585 = vsel %vm4584, %v4582, %v4579
        %v4586 = vadd.f32 %v4039, 1.0
        %v4587 = vlog2.pop %v4586
        %v4588 = vmul.f32 %v4587, 0.6931472
        %v4589 = vmul.f32 -0.5, %v4039
        %v4590 = vadd.f32 %v4589, 1.0
        %v4591 = vmul.f32 %v4590, %v4039
        %v4592 = vand.u32 2147483647, %v4039
        %vm4593 = vcmp.lt.f32.partialorder %v4592, 0.0004427343
        %v4594 = vsel %vm4593, %v4591, %v4588
        %v4595 = vadd.f32 %v4041, 1.0
        %v4596 = vlog2.pop %v4595
        %v4597 = vmul.f32 %v4596, 0.6931472
        %v4598 = vmul.f32 -0.5, %v4041
        %v4599 = vadd.f32 %v4598, 1.0
        %v4600 = vmul.f32 %v4599, %v4041
        %v4601 = vand.u32 2147483647, %v4041
        %vm4602 = vcmp.lt.f32.partialorder %v4601, 0.0004427343
        %v4603 = vsel %vm4602, %v4600, %v4597
        %v4604 = vadd.f32 %v4043, 1.0
        %v4605 = vlog2.pop %v4604
        %v4606 = vmul.f32 %v4605, 0.6931472
        %v4607 = vmul.f32 -0.5, %v4043
        %v4608 = vadd.f32 %v4607, 1.0
        %v4609 = vmul.f32 %v4608, %v4043
        %v4610 = vand.u32 2147483647, %v4043
        %vm4611 = vcmp.lt.f32.partialorder %v4610, 0.0004427343
        %v4612 = vsel %vm4611, %v4609, %v4606
        %v4613 = vadd.f32 %v4045, 1.0
        %v4614 = vlog2.pop %v4613
        %v4615 = vmul.f32 %v4614, 0.6931472
        %v4616 = vmul.f32 -0.5, %v4045
        %v4617 = vadd.f32 %v4616, 1.0
        %v4618 = vmul.f32 %v4617, %v4045
        %v4619 = vand.u32 2147483647, %v4045
        %vm4620 = vcmp.lt.f32.partialorder %v4619, 0.0004427343
        %v4621 = vsel %vm4620, %v4618, %v4615
        %v4622 = vadd.f32 %v3598, %v4054
        %v4623 = vadd.f32 %v3599, %v4063
        %v4624 = vadd.f32 %v3600, %v4072
        %v4625 = vadd.f32 %v3601, %v4081
        %v4626 = vadd.f32 %v3602, %v4090
        %v4627 = vadd.f32 %v3603, %v4099
        %v4628 = vadd.f32 %v3604, %v4108
        %v4629 = vadd.f32 %v3605, %v4117
        %v4630 = vadd.f32 %v3606, %v4126
        %v4631 = vadd.f32 %v3607, %v4135
        %v4632 = vadd.f32 %v3608, %v4144
        %v4633 = vadd.f32 %v3609, %v4153
        %v4634 = vadd.f32 %v3610, %v4162
        %v4635 = vadd.f32 %v3611, %v4171
        %v4636 = vadd.f32 %v3612, %v4180
        %v4637 = vadd.f32 %v3613, %v4189
        %v4638 = vadd.f32 %v3614, %v4198
        %v4639 = vadd.f32 %v3615, %v4207
        %v4640 = vadd.f32 %v3616, %v4216
        %v4641 = vadd.f32 %v3617, %v4225
        %v4642 = vadd.f32 %v3618, %v4234
        %v4643 = vadd.f32 %v3619, %v4243
        %v4644 = vadd.f32 %v3620, %v4252
        %v4645 = vadd.f32 %v3621, %v4261
        %v4646 = vadd.f32 %v3622, %v4270
        %v4647 = vadd.f32 %v3623, %v4279
        %v4648 = vadd.f32 %v3624, %v4288
        %v4649 = vadd.f32 %v3625, %v4297
        %v4650 = vadd.f32 %v3626, %v4306
        %v4651 = vadd.f32 %v3627, %v4315
        %v4652 = vadd.f32 %v3628, %v4324
        %v4653 = vadd.f32 %v3629, %v4333
        %v4654 = vadd.f32 %v3630, %v4342
        %v4655 = vadd.f32 %v3631, %v4351
        %v4656 = vadd.f32 %v3632, %v4360
        %v4657 = vadd.f32 %v3633, %v4369
        %v4658 = vadd.f32 %v3634, %v4378
        %v4659 = vadd.f32 %v3635, %v4387
        %v4660 = vadd.f32 %v3636, %v4396
        %v4661 = vadd.f32 %v3637, %v4405
        %v4662 = vadd.f32 %v3638, %v4414
        %v4663 = vadd.f32 %v3639, %v4423
        %v4664 = vadd.f32 %v3640, %v4432
        %v4665 = vadd.f32 %v3641, %v4441
        %v4666 = vadd.f32 %v3642, %v4450
        %v4667 = vadd.f32 %v3643, %v4459
        %v4668 = vadd.f32 %v3644, %v4468
        %v4669 = vadd.f32 %v3645, %v4477
        %v4670 = vadd.f32 %v3646, %v4486
        %v4671 = vadd.f32 %v3647, %v4495
        %v4672 = vadd.f32 %v3648, %v4504
        %v4673 = vadd.f32 %v3649, %v4513
        %v4674 = vadd.f32 %v3650, %v4522
        %v4675 = vadd.f32 %v3651, %v4531
        %v4676 = vadd.f32 %v3652, %v4540
        %v4677 = vadd.f32 %v3653, %v4549
        %v4678 = vadd.f32 %v3654, %v4558
        %v4679 = vadd.f32 %v3655, %v4567
        %v4680 = vadd.f32 %v3656, %v4576
        %v4681 = vadd.f32 %v3657, %v4585
        %v4682 = vadd.f32 %v3658, %v4594
        %v4683 = vadd.f32 %v3659, %v4603
        %v4684 = vadd.f32 %v3660, %v4612
        %v4685 = vadd.f32 %v3661, %v4621
        %v4686 = vsel %vm3662, %v3726, %v4622
        %v4687 = vsel %vm3663, %v3727, %v4623
        %v4688 = vsel %vm3664, %v3728, %v4624
        %v4689 = vsel %vm3665, %v3729, %v4625
        %v4690 = vsel %vm3666, %v3730, %v4626
        %v4691 = vsel %vm3667, %v3731, %v4627
        %v4692 = vsel %vm3668, %v3732, %v4628
        %v4693 = vsel %vm3669, %v3733, %v4629
        %v4694 = vsel %vm3670, %v3734, %v4630
        %v4695 = vsel %vm3671, %v3735, %v4631
        %v4696 = vsel %vm3672, %v3736, %v4632
        %v4697 = vsel %vm3673, %v3737, %v4633
        %v4698 = vsel %vm3674, %v3738, %v4634
        %v4699 = vsel %vm3675, %v3739, %v4635
        %v4700 = vsel %vm3676, %v3740, %v4636
        %v4701 = vsel %vm3677, %v3741, %v4637
        %v4702 = vsel %vm3678, %v3742, %v4638
        %v4703 = vsel %vm3679, %v3743, %v4639
        %v4704 = vsel %vm3680, %v3744, %v4640
        %v4705 = vsel %vm3681, %v3745, %v4641
        %v4706 = vsel %vm3682, %v3746, %v4642
        %v4707 = vsel %vm3683, %v3747, %v4643
        %v4708 = vsel %vm3684, %v3748, %v4644
        %v4709 = vsel %vm3685, %v3749, %v4645
        %v4710 = vsel %vm3686, %v3750, %v4646
        %v4711 = vsel %vm3687, %v3751, %v4647
        %v4712 = vsel %vm3688, %v3752, %v4648
        %v4713 = vsel %vm3689, %v3753, %v4649
        %v4714 = vsel %vm3690, %v3754, %v4650
        %v4715 = vsel %vm3691, %v3755, %v4651
        %v4716 = vsel %vm3692, %v3756, %v4652
        %v4717 = vsel %vm3693, %v3757, %v4653
        %v4718 = vsel %vm3694, %v3758, %v4654
        %v4719 = vsel %vm3695, %v3759, %v4655
        %v4720 = vsel %vm3696, %v3760, %v4656
        %v4721 = vsel %vm3697, %v3761, %v4657
        %v4722 = vsel %vm3698, %v3762, %v4658
        %v4723 = vsel %vm3699, %v3763, %v4659
        %v4724 = vsel %vm3700, %v3764, %v4660
        %v4725 = vsel %vm3701, %v3765, %v4661
        %v4726 = vsel %vm3702, %v3766, %v4662
        %v4727 = vsel %vm3703, %v3767, %v4663
        %v4728 = vsel %vm3704, %v3768, %v4664
        %v4729 = vsel %vm3705, %v3769, %v4665
        %v4730 = vsel %vm3706, %v3770, %v4666
        %v4731 = vsel %vm3707, %v3771, %v4667
        %v4732 = vsel %vm3708, %v3772, %v4668
        %v4733 = vsel %vm3709, %v3773, %v4669
        %v4734 = vsel %vm3710, %v3774, %v4670
        %v4735 = vsel %vm3711, %v3775, %v4671
        %v4736 = vsel %vm3712, %v3776, %v4672
        %v4737 = vsel %vm3713, %v3777, %v4673
        %v4738 = vsel %vm3714, %v3778, %v4674
        %v4739 = vsel %vm3715, %v3779, %v4675
        %v4740 = vsel %vm3716, %v3780, %v4676
        %v4741 = vsel %vm3717, %v3781, %v4677
        %v4742 = vsel %vm3718, %v3782, %v4678
        %v4743 = vsel %vm3719, %v3783, %v4679
        %v4744 = vsel %vm3720, %v3784, %v4680
        %v4745 = vsel %vm3721, %v3785, %v4681
        %v4746 = vsel %vm3722, %v3786, %v4682
        %v4747 = vsel %vm3723, %v3787, %v4683
        %v4748 = vsel %vm3724, %v3788, %v4684
        %v4749 = vsel %vm3725, %v3789, %v4685
        %v4750 = vpack.c.bf16 %v4687, %v4686
        %v4751 = vpack.c.bf16 %v4689, %v4688
        %v4752 = vpack.c.bf16 %v4691, %v4690
        %v4753 = vpack.c.bf16 %v4693, %v4692
        %v4754 = vpack.c.bf16 %v4695, %v4694
        %v4755 = vpack.c.bf16 %v4697, %v4696
        %v4756 = vpack.c.bf16 %v4699, %v4698
        %v4757 = vpack.c.bf16 %v4701, %v4700
        %v4758 = vpack.c.bf16 %v4703, %v4702
        %v4759 = vpack.c.bf16 %v4705, %v4704
        %v4760 = vpack.c.bf16 %v4707, %v4706
        %v4761 = vpack.c.bf16 %v4709, %v4708
        %v4762 = vpack.c.bf16 %v4711, %v4710
        %v4763 = vpack.c.bf16 %v4713, %v4712
        %v4764 = vpack.c.bf16 %v4715, %v4714
        %v4765 = vpack.c.bf16 %v4717, %v4716
        %v4766 = vpack.c.bf16 %v4719, %v4718
        %v4767 = vpack.c.bf16 %v4721, %v4720
        %v4768 = vpack.c.bf16 %v4723, %v4722
        %v4769 = vpack.c.bf16 %v4725, %v4724
        %v4770 = vpack.c.bf16 %v4727, %v4726
        %v4771 = vpack.c.bf16 %v4729, %v4728
        %v4772 = vpack.c.bf16 %v4731, %v4730
        %v4773 = vpack.c.bf16 %v4733, %v4732
        %v4774 = vpack.c.bf16 %v4735, %v4734
        %v4775 = vpack.c.bf16 %v4737, %v4736
        %v4776 = vpack.c.bf16 %v4739, %v4738
        %v4777 = vpack.c.bf16 %v4741, %v4740
        %v4778 = vpack.c.bf16 %v4743, %v4742
        %v4779 = vpack.c.bf16 %v4745, %v4744
        %v4780 = vpack.c.bf16 %v4747, %v4746
        %v4781 = vpack.c.bf16 %v4749, %v4748
        %s4782 = scalar_lea.vmem %s1, 16
        %v4783 = vld [vmem:[%s4782] sm:$0xf]
        %v4784 = vld [vmem:[%s4782 + $0x4] sm:$0xf]
        %v4785 = vld [vmem:[%s4782 + $0x8] sm:$0xf]
        %v4786 = vld [vmem:[%s4782 + $0xc] sm:$0xf]
        %v4788 = vlaneseq
        %v4789 = vshrl.u32 %v4788, 7
        %v4790 = vsub.s32 0, %v4789
        %v4791 = vrot.slane %v3595, %v4790
        %v4797 = vunpack.c.l.b16 %v4783
        %v4798 = vunpack.c.l.b16 %v4784
        %v4799 = vunpack.c.l.b16 %v4785
        %v4800 = vunpack.c.l.b16 %v4786
        %v4801 = vpack.c.b16 %v4798, %v4797
        %v4802 = vpack.c.b16 %v4800, %v4799
        %v4806 = vsel %vm1553, %v4750, 0
        %v4809 = vsel %vm1553, %v4751, 0
        %v4812 = vsel %vm1553, %v4752, 0
        %v4815 = vsel %vm1553, %v4753, 0
        %v4818 = vsel %vm1553, %v4754, 0
        %v4821 = vsel %vm1553, %v4755, 0
        %v4824 = vsel %vm1553, %v4756, 0
        %v4827 = vsel %vm1553, %v4757, 0
        %v4830 = vsel %vm1553, %v4758, 0
        %v4833 = vsel %vm1553, %v4759, 0
        %v4836 = vsel %vm1553, %v4760, 0
        %v4839 = vsel %vm1553, %v4761, 0
        %v4842 = vsel %vm1553, %v4762, 0
        %v4845 = vsel %vm1553, %v4763, 0
        %v4848 = vsel %vm1553, %v4764, 0
        %v4851 = vsel %vm1553, %v4765, 0
        %v4854 = vsel %vm1553, %v4766, 0
        %v4857 = vsel %vm1553, %v4767, 0
        %v4860 = vsel %vm1553, %v4768, 0
        %v4863 = vsel %vm1553, %v4769, 0
        %v4866 = vsel %vm1553, %v4770, 0
        %v4869 = vsel %vm1553, %v4771, 0
        %v4872 = vsel %vm1553, %v4772, 0
        %v4875 = vsel %vm1553, %v4773, 0
        %v4878 = vsel %vm1553, %v4774, 0
        %v4881 = vsel %vm1553, %v4775, 0
        %v4884 = vsel %vm1553, %v4776, 0
        %v4887 = vsel %vm1553, %v4777, 0
        %v4890 = vsel %vm1553, %v4778, 0
        %v4893 = vsel %vm1553, %v4779, 0
        %v4896 = vsel %vm1553, %v4780, 0
        %v4899 = vsel %vm1553, %v4781, 0
        %4901 = vmatprep.subr.bf16.mxu0 0
        %4902 = vmatpush1.bf16.msra.mxu0 %v4801
        %4903 = vmatprep.subr.bf16.mxu0 0
        %4904 = vmatpush1.bf16.msra.mxu0 %v4802
        %4905 = vmatprep.subr.bf16.mxu0 0
        %4906 = vmatpush1.bf16.msra.mxu0 0
        %4907 = vmatprep.subr.bf16.mxu0 0
        %4908 = vmatpush1.bf16.msra.mxu0 0
        %4909 = vmatprep.subr.bf16.mxu0 0
        %4910 = vmatpush1.bf16.msra.mxu0 0
        %4911 = vmatprep.subr.bf16.mxu0 0
        %4912 = vmatpush1.bf16.msra.mxu0 0
        %4913 = vmatprep.subr.bf16.mxu0 0
        %4914 = vmatpush1.bf16.msra.mxu0 0
        %4915 = vmatprep.subr.bf16.mxu0 0
        %4916 = vmatpush1.bf16.msra.mxu0 0
        %4917 = vmatprep.subr.bf16.mxu0 0
        %4918 = vmatpush1.bf16.msra.mxu0 0
        %4919 = vmatprep.subr.bf16.mxu0 0
        %4920 = vmatpush1.bf16.msra.mxu0 0
        %4921 = vmatprep.subr.bf16.mxu0 0
        %4922 = vmatpush1.bf16.msra.mxu0 0
        %4923 = vmatprep.subr.bf16.mxu0 0
        %4924 = vmatpush1.bf16.msra.mxu0 0
        %4925 = vmatprep.subr.bf16.mxu0 0
        %4926 = vmatpush1.bf16.msra.mxu0 0
        %4927 = vmatprep.subr.bf16.mxu0 0
        %4928 = vmatpush1.bf16.msra.mxu0 0
        %4929 = vmatprep.subr.bf16.mxu0 0
        %4930 = vmatpush1.bf16.msra.mxu0 0
        %4931 = vmatprep.subr.bf16.mxu0 0
        %4932 = vmatpush1.bf16.msra.mxu0 0
        %4933 = vmatprep.mubr.bf16.mxu0 0
        %4934 = vmatmul.mubr.bf16.gmra.mrb[0].mxu0 %v4806
        %v4935 = vpop.f32.mrb[0].mxu0
        %v4936 = vadd.f32 %v4791, %v4935
        %v4937 = vpop.f32.mrb[0].mxu0
        %v4938 = vpop.f32.mrb[0].mxu0
        %v4939 = vadd.f32 %v4791, %v4938
        %v4940 = vpop.f32.mrb[0].mxu0
        %4941 = vmatprep.mubr.bf16.mxu0 0
        %4942 = vmatmul.mubr.bf16.gmra.mrb[0].mxu0 %v4809
        %v4943 = vpop.f32.mrb[0].mxu0
        %v4944 = vadd.f32 %v4791, %v4943
        %v4945 = vpop.f32.mrb[0].mxu0
        %v4946 = vpop.f32.mrb[0].mxu0
        %v4947 = vadd.f32 %v4791, %v4946
        %v4948 = vpop.f32.mrb[0].mxu0
        %4949 = vmatprep.mubr.bf16.mxu0 0
        %4950 = vmatmul.mubr.bf16.gmra.mrb[0].mxu0 %v4812
        %v4951 = vpop.f32.mrb[0].mxu0
        %v4952 = vadd.f32 %v4791, %v4951
        %v4953 = vpop.f32.mrb[0].mxu0
        %v4954 = vpop.f32.mrb[0].mxu0
        %v4955 = vadd.f32 %v4791, %v4954
        %v4956 = vpop.f32.mrb[0].mxu0
        %4957 = vmatprep.mubr.bf16.mxu0 0
        %4958 = vmatmul.mubr.bf16.gmra.mrb[0].mxu0 %v4815
        %v4959 = vpop.f32.mrb[0].mxu0
        %v4960 = vadd.f32 %v4791, %v4959
        %v4961 = vpop.f32.mrb[0].mxu0
        %v4962 = vpop.f32.mrb[0].mxu0
        %v4963 = vadd.f32 %v4791, %v4962
        %v4964 = vpop.f32.mrb[0].mxu0
        %4965 = vmatprep.mubr.bf16.mxu0 0
        %4966 = vmatmul.mubr.bf16.gmra.mrb[0].mxu0 %v4818
        %v4967 = vpop.f32.mrb[0].mxu0
        %v4968 = vadd.f32 %v4791, %v4967
        %v4969 = vpop.f32.mrb[0].mxu0
        %v4970 = vpop.f32.mrb[0].mxu0
        %v4971 = vadd.f32 %v4791, %v4970
        %v4972 = vpop.f32.mrb[0].mxu0
        %4973 = vmatprep.mubr.bf16.mxu0 0
        %4974 = vmatmul.mubr.bf16.gmra.mrb[0].mxu0 %v4821
        %v4975 = vpop.f32.mrb[0].mxu0
        %v4976 = vadd.f32 %v4791, %v4975
        %v4977 = vpop.f32.mrb[0].mxu0
        %v4978 = vpop.f32.mrb[0].mxu0
        %v4979 = vadd.f32 %v4791, %v4978
        %v4980 = vpop.f32.mrb[0].mxu0
        %4981 = vmatprep.mubr.bf16.mxu0 0
        %4982 = vmatmul.mubr.bf16.gmra.mrb[0].mxu0 %v4824
        %v4983 = vpop.f32.mrb[0].mxu0
        %v4984 = vadd.f32 %v4791, %v4983
        %v4985 = vpop.f32.mrb[0].mxu0
        %v4986 = vpop.f32.mrb[0].mxu0
        %v4987 = vadd.f32 %v4791, %v4986
        %v4988 = vpop.f32.mrb[0].mxu0
        %4989 = vmatprep.mubr.bf16.mxu0 0
        %4990 = vmatmul.mubr.bf16.gmra.mrb[0].mxu0 %v4827
        %v4991 = vpop.f32.mrb[0].mxu0
        %v4992 = vadd.f32 %v4791, %v4991
        %v4993 = vpop.f32.mrb[0].mxu0
        %v4994 = vpop.f32.mrb[0].mxu0
        %v4995 = vadd.f32 %v4791, %v4994
        %v4996 = vpop.f32.mrb[0].mxu0
        %4997 = vmatprep.mubr.bf16.mxu0 0
        %4998 = vmatmul.mubr.bf16.gmra.mrb[0].mxu0 %v4830
        %v4999 = vpop.f32.mrb[0].mxu0
        %v5000 = vadd.f32 %v4791, %v4999
        %v5001 = vpop.f32.mrb[0].mxu0
        %v5002 = vpop.f32.mrb[0].mxu0
        %v5003 = vadd.f32 %v4791, %v5002
        %v5004 = vpop.f32.mrb[0].mxu0
        %5005 = vmatprep.mubr.bf16.mxu0 0
        %5006 = vmatmul.mubr.bf16.gmra.mrb[0].mxu0 %v4833
        %v5007 = vpop.f32.mrb[0].mxu0
        %v5008 = vadd.f32 %v4791, %v5007
        %v5009 = vpop.f32.mrb[0].mxu0
        %v5010 = vpop.f32.mrb[0].mxu0
        %v5011 = vadd.f32 %v4791, %v5010
        %v5012 = vpop.f32.mrb[0].mxu0
        %5013 = vmatprep.mubr.bf16.mxu0 0
        %5014 = vmatmul.mubr.bf16.gmra.mrb[0].mxu0 %v4836
        %v5015 = vpop.f32.mrb[0].mxu0
        %v5016 = vadd.f32 %v4791, %v5015
        %v5017 = vpop.f32.mrb[0].mxu0
        %v5018 = vpop.f32.mrb[0].mxu0
        %v5019 = vadd.f32 %v4791, %v5018
        %v5020 = vpop.f32.mrb[0].mxu0
        %5021 = vmatprep.mubr.bf16.mxu0 0
        %5022 = vmatmul.mubr.bf16.gmra.mrb[0].mxu0 %v4839
        %v5023 = vpop.f32.mrb[0].mxu0
        %v5024 = vadd.f32 %v4791, %v5023
        %v5025 = vpop.f32.mrb[0].mxu0
        %v5026 = vpop.f32.mrb[0].mxu0
        %v5027 = vadd.f32 %v4791, %v5026
        %v5028 = vpop.f32.mrb[0].mxu0
        %5029 = vmatprep.mubr.bf16.mxu0 0
        %5030 = vmatmul.mubr.bf16.gmra.mrb[0].mxu0 %v4842
        %v5031 = vpop.f32.mrb[0].mxu0
        %v5032 = vadd.f32 %v4791, %v5031
        %v5033 = vpop.f32.mrb[0].mxu0
        %v5034 = vpop.f32.mrb[0].mxu0
        %v5035 = vadd.f32 %v4791, %v5034
        %v5036 = vpop.f32.mrb[0].mxu0
        %5037 = vmatprep.mubr.bf16.mxu0 0
        %5038 = vmatmul.mubr.bf16.gmra.mrb[0].mxu0 %v4845
        %v5039 = vpop.f32.mrb[0].mxu0
        %v5040 = vadd.f32 %v4791, %v5039
        %v5041 = vpop.f32.mrb[0].mxu0
        %v5042 = vpop.f32.mrb[0].mxu0
        %v5043 = vadd.f32 %v4791, %v5042
        %v5044 = vpop.f32.mrb[0].mxu0
        %5045 = vmatprep.mubr.bf16.mxu0 0
        %5046 = vmatmul.mubr.bf16.gmra.mrb[0].mxu0 %v4848
        %v5047 = vpop.f32.mrb[0].mxu0
        %v5048 = vadd.f32 %v4791, %v5047
        %v5049 = vpop.f32.mrb[0].mxu0
        %v5050 = vpop.f32.mrb[0].mxu0
        %v5051 = vadd.f32 %v4791, %v5050
        %v5052 = vpop.f32.mrb[0].mxu0
        %5053 = vmatprep.mubr.bf16.mxu0 0
        %5054 = vmatmul.mubr.bf16.gmra.mrb[0].mxu0 %v4851
        %v5055 = vpop.f32.mrb[0].mxu0
        %v5056 = vadd.f32 %v4791, %v5055
        %v5057 = vpop.f32.mrb[0].mxu0
        %v5058 = vpop.f32.mrb[0].mxu0
        %v5059 = vadd.f32 %v4791, %v5058
        %v5060 = vpop.f32.mrb[0].mxu0
        %5061 = vmatprep.mubr.bf16.mxu0 0
        %5062 = vmatmul.mubr.bf16.gmra.mrb[0].mxu0 %v4854
        %v5063 = vpop.f32.mrb[0].mxu0
        %v5064 = vadd.f32 %v4791, %v5063
        %v5065 = vpop.f32.mrb[0].mxu0
        %v5066 = vpop.f32.mrb[0].mxu0
        %v5067 = vadd.f32 %v4791, %v5066
        %v5068 = vpop.f32.mrb[0].mxu0
        %5069 = vmatprep.mubr.bf16.mxu0 0
        %5070 = vmatmul.mubr.bf16.gmra.mrb[0].mxu0 %v4857
        %v5071 = vpop.f32.mrb[0].mxu0
        %v5072 = vadd.f32 %v4791, %v5071
        %v5073 = vpop.f32.mrb[0].mxu0
        %v5074 = vpop.f32.mrb[0].mxu0
        %v5075 = vadd.f32 %v4791, %v5074
        %v5076 = vpop.f32.mrb[0].mxu0
        %5077 = vmatprep.mubr.bf16.mxu0 0
        %5078 = vmatmul.mubr.bf16.gmra.mrb[0].mxu0 %v4860
        %v5079 = vpop.f32.mrb[0].mxu0
        %v5080 = vadd.f32 %v4791, %v5079
        %v5081 = vpop.f32.mrb[0].mxu0
        %v5082 = vpop.f32.mrb[0].mxu0
        %v5083 = vadd.f32 %v4791, %v5082
        %v5084 = vpop.f32.mrb[0].mxu0
        %5085 = vmatprep.mubr.bf16.mxu0 0
        %5086 = vmatmul.mubr.bf16.gmra.mrb[0].mxu0 %v4863
        %v5087 = vpop.f32.mrb[0].mxu0
        %v5088 = vadd.f32 %v4791, %v5087
        %v5089 = vpop.f32.mrb[0].mxu0
        %v5090 = vpop.f32.mrb[0].mxu0
        %v5091 = vadd.f32 %v4791, %v5090
        %v5092 = vpop.f32.mrb[0].mxu0
        %5093 = vmatprep.mubr.bf16.mxu0 0
        %5094 = vmatmul.mubr.bf16.gmra.mrb[0].mxu0 %v4866
        %v5095 = vpop.f32.mrb[0].mxu0
        %v5096 = vadd.f32 %v4791, %v5095
        %v5097 = vpop.f32.mrb[0].mxu0
        %v5098 = vpop.f32.mrb[0].mxu0
        %v5099 = vadd.f32 %v4791, %v5098
        %v5100 = vpop.f32.mrb[0].mxu0
        %5101 = vmatprep.mubr.bf16.mxu0 0
        %5102 = vmatmul.mubr.bf16.gmra.mrb[0].mxu0 %v4869
        %v5103 = vpop.f32.mrb[0].mxu0
        %v5104 = vadd.f32 %v4791, %v5103
        %v5105 = vpop.f32.mrb[0].mxu0
        %v5106 = vpop.f32.mrb[0].mxu0
        %v5107 = vadd.f32 %v4791, %v5106
        %v5108 = vpop.f32.mrb[0].mxu0
        %5109 = vmatprep.mubr.bf16.mxu0 0
        %5110 = vmatmul.mubr.bf16.gmra.mrb[0].mxu0 %v4872
        %v5111 = vpop.f32.mrb[0].mxu0
        %v5112 = vadd.f32 %v4791, %v5111
        %v5113 = vpop.f32.mrb[0].mxu0
        %v5114 = vpop.f32.mrb[0].mxu0
        %v5115 = vadd.f32 %v4791, %v5114
        %v5116 = vpop.f32.mrb[0].mxu0
        %5117 = vmatprep.mubr.bf16.mxu0 0
        %5118 = vmatmul.mubr.bf16.gmra.mrb[0].mxu0 %v4875
        %v5119 = vpop.f32.mrb[0].mxu0
        %v5120 = vadd.f32 %v4791, %v5119
        %v5121 = vpop.f32.mrb[0].mxu0
        %v5122 = vpop.f32.mrb[0].mxu0
        %v5123 = vadd.f32 %v4791, %v5122
        %v5124 = vpop.f32.mrb[0].mxu0
        %5125 = vmatprep.mubr.bf16.mxu0 0
        %5126 = vmatmul.mubr.bf16.gmra.mrb[0].mxu0 %v4878
        %v5127 = vpop.f32.mrb[0].mxu0
        %v5128 = vadd.f32 %v4791, %v5127
        %v5129 = vpop.f32.mrb[0].mxu0
        %v5130 = vpop.f32.mrb[0].mxu0
        %v5131 = vadd.f32 %v4791, %v5130
        %v5132 = vpop.f32.mrb[0].mxu0
        %5133 = vmatprep.mubr.bf16.mxu0 0
        %5134 = vmatmul.mubr.bf16.gmra.mrb[0].mxu0 %v4881
        %v5135 = vpop.f32.mrb[0].mxu0
        %v5136 = vadd.f32 %v4791, %v5135
        %v5137 = vpop.f32.mrb[0].mxu0
        %v5138 = vpop.f32.mrb[0].mxu0
        %v5139 = vadd.f32 %v4791, %v5138
        %v5140 = vpop.f32.mrb[0].mxu0
        %5141 = vmatprep.mubr.bf16.mxu0 0
        %5142 = vmatmul.mubr.bf16.gmra.mrb[0].mxu0 %v4884
        %v5143 = vpop.f32.mrb[0].mxu0
        %v5144 = vadd.f32 %v4791, %v5143
        %v5145 = vpop.f32.mrb[0].mxu0
        %v5146 = vpop.f32.mrb[0].mxu0
        %v5147 = vadd.f32 %v4791, %v5146
        %v5148 = vpop.f32.mrb[0].mxu0
        %5149 = vmatprep.mubr.bf16.mxu0 0
        %5150 = vmatmul.mubr.bf16.gmra.mrb[0].mxu0 %v4887
        %v5151 = vpop.f32.mrb[0].mxu0
        %v5152 = vadd.f32 %v4791, %v5151
        %v5153 = vpop.f32.mrb[0].mxu0
        %v5154 = vpop.f32.mrb[0].mxu0
        %v5155 = vadd.f32 %v4791, %v5154
        %v5156 = vpop.f32.mrb[0].mxu0
        %5157 = vmatprep.mubr.bf16.mxu0 0
        %5158 = vmatmul.mubr.bf16.gmra.mrb[0].mxu0 %v4890
        %v5159 = vpop.f32.mrb[0].mxu0
        %v5160 = vadd.f32 %v4791, %v5159
        %v5161 = vpop.f32.mrb[0].mxu0
        %v5162 = vpop.f32.mrb[0].mxu0
        %v5163 = vadd.f32 %v4791, %v5162
        %v5164 = vpop.f32.mrb[0].mxu0
        %5165 = vmatprep.mubr.bf16.mxu0 0
        %5166 = vmatmul.mubr.bf16.gmra.mrb[0].mxu0 %v4893
        %v5167 = vpop.f32.mrb[0].mxu0
        %v5168 = vadd.f32 %v4791, %v5167
        %v5169 = vpop.f32.mrb[0].mxu0
        %v5170 = vpop.f32.mrb[0].mxu0
        %v5171 = vadd.f32 %v4791, %v5170
        %v5172 = vpop.f32.mrb[0].mxu0
        %5173 = vmatprep.mubr.bf16.mxu0 0
        %5174 = vmatmul.mubr.bf16.gmra.mrb[0].mxu0 %v4896
        %v5175 = vpop.f32.mrb[0].mxu0
        %v5176 = vadd.f32 %v4791, %v5175
        %v5177 = vpop.f32.mrb[0].mxu0
        %v5178 = vpop.f32.mrb[0].mxu0
        %v5179 = vadd.f32 %v4791, %v5178
        %v5180 = vpop.f32.mrb[0].mxu0
        %5181 = vmatprep.mubr.bf16.mxu0 0
        %5182 = vmatmul.mubr.bf16.gmra.mrb[0].mxu0 %v4899
        %v5183 = vpop.f32.mrb[0].mxu0
        %v5184 = vadd.f32 %v4791, %v5183
        %v5185 = vpop.f32.mrb[0].mxu0
        %v5186 = vpop.f32.mrb[0].mxu0
        %v5187 = vadd.f32 %v4791, %v5186
        %v5188 = vpop.f32.mrb[0].mxu0
        %5189 = vdwg.mxu0
        %v5190 = vmax.f32 %v4936, 0.0
        %v5191 = vmax.f32 %v4939, 0.0
        %v5192 = vmax.f32 %v4944, 0.0
        %v5193 = vmax.f32 %v4947, 0.0
        %v5194 = vmax.f32 %v4952, 0.0
        %v5195 = vmax.f32 %v4955, 0.0
        %v5196 = vmax.f32 %v4960, 0.0
        %v5197 = vmax.f32 %v4963, 0.0
        %v5198 = vmax.f32 %v4968, 0.0
        %v5199 = vmax.f32 %v4971, 0.0
        %v5200 = vmax.f32 %v4976, 0.0
        %v5201 = vmax.f32 %v4979, 0.0
        %v5202 = vmax.f32 %v4984, 0.0
        %v5203 = vmax.f32 %v4987, 0.0
        %v5204 = vmax.f32 %v4992, 0.0
        %v5205 = vmax.f32 %v4995, 0.0
        %v5206 = vmax.f32 %v5000, 0.0
        %v5207 = vmax.f32 %v5003, 0.0
        %v5208 = vmax.f32 %v5008, 0.0
        %v5209 = vmax.f32 %v5011, 0.0
        %v5210 = vmax.f32 %v5016, 0.0
        %v5211 = vmax.f32 %v5019, 0.0
        %v5212 = vmax.f32 %v5024, 0.0
        %v5213 = vmax.f32 %v5027, 0.0
        %v5214 = vmax.f32 %v5032, 0.0
        %v5215 = vmax.f32 %v5035, 0.0
        %v5216 = vmax.f32 %v5040, 0.0
        %v5217 = vmax.f32 %v5043, 0.0
        %v5218 = vmax.f32 %v5048, 0.0
        %v5219 = vmax.f32 %v5051, 0.0
        %v5220 = vmax.f32 %v5056, 0.0
        %v5221 = vmax.f32 %v5059, 0.0
        %v5222 = vmax.f32 %v5064, 0.0
        %v5223 = vmax.f32 %v5067, 0.0
        %v5224 = vmax.f32 %v5072, 0.0
        %v5225 = vmax.f32 %v5075, 0.0
        %v5226 = vmax.f32 %v5080, 0.0
        %v5227 = vmax.f32 %v5083, 0.0
        %v5228 = vmax.f32 %v5088, 0.0
        %v5229 = vmax.f32 %v5091, 0.0
        %v5230 = vmax.f32 %v5096, 0.0
        %v5231 = vmax.f32 %v5099, 0.0
        %v5232 = vmax.f32 %v5104, 0.0
        %v5233 = vmax.f32 %v5107, 0.0
        %v5234 = vmax.f32 %v5112, 0.0
        %v5235 = vmax.f32 %v5115, 0.0
        %v5236 = vmax.f32 %v5120, 0.0
        %v5237 = vmax.f32 %v5123, 0.0
        %v5238 = vmax.f32 %v5128, 0.0
        %v5239 = vmax.f32 %v5131, 0.0
        %v5240 = vmax.f32 %v5136, 0.0
        %v5241 = vmax.f32 %v5139, 0.0
        %v5242 = vmax.f32 %v5144, 0.0
        %v5243 = vmax.f32 %v5147, 0.0
        %v5244 = vmax.f32 %v5152, 0.0
        %v5245 = vmax.f32 %v5155, 0.0
        %v5246 = vmax.f32 %v5160, 0.0
        %v5247 = vmax.f32 %v5163, 0.0
        %v5248 = vmax.f32 %v5168, 0.0
        %v5249 = vmax.f32 %v5171, 0.0
        %v5250 = vmax.f32 %v5176, 0.0
        %v5251 = vmax.f32 %v5179, 0.0
        %v5252 = vmax.f32 %v5184, 0.0
        %v5253 = vmax.f32 %v5187, 0.0
        %vm5254 = vcmp.ne.f32.partialorder %v4936, %v4936
        %vm5255 = vcmp.ne.f32.partialorder %v4939, %v4939
        %vm5256 = vcmp.ne.f32.partialorder %v4944, %v4944
        %vm5257 = vcmp.ne.f32.partialorder %v4947, %v4947
        %vm5258 = vcmp.ne.f32.partialorder %v4952, %v4952
        %vm5259 = vcmp.ne.f32.partialorder %v4955, %v4955
        %vm5260 = vcmp.ne.f32.partialorder %v4960, %v4960
        %vm5261 = vcmp.ne.f32.partialorder %v4963, %v4963
        %vm5262 = vcmp.ne.f32.partialorder %v4968, %v4968
        %vm5263 = vcmp.ne.f32.partialorder %v4971, %v4971
        %vm5264 = vcmp.ne.f32.partialorder %v4976, %v4976
        %vm5265 = vcmp.ne.f32.partialorder %v4979, %v4979
        %vm5266 = vcmp.ne.f32.partialorder %v4984, %v4984
        %vm5267 = vcmp.ne.f32.partialorder %v4987, %v4987
        %vm5268 = vcmp.ne.f32.partialorder %v4992, %v4992
        %vm5269 = vcmp.ne.f32.partialorder %v4995, %v4995
        %vm5270 = vcmp.ne.f32.partialorder %v5000, %v5000
        %vm5271 = vcmp.ne.f32.partialorder %v5003, %v5003
        %vm5272 = vcmp.ne.f32.partialorder %v5008, %v5008
        %vm5273 = vcmp.ne.f32.partialorder %v5011, %v5011
        %vm5274 = vcmp.ne.f32.partialorder %v5016, %v5016
        %vm5275 = vcmp.ne.f32.partialorder %v5019, %v5019
        %vm5276 = vcmp.ne.f32.partialorder %v5024, %v5024
        %vm5277 = vcmp.ne.f32.partialorder %v5027, %v5027
        %vm5278 = vcmp.ne.f32.partialorder %v5032, %v5032
        %vm5279 = vcmp.ne.f32.partialorder %v5035, %v5035
        %vm5280 = vcmp.ne.f32.partialorder %v5040, %v5040
        %vm5281 = vcmp.ne.f32.partialorder %v5043, %v5043
        %vm5282 = vcmp.ne.f32.partialorder %v5048, %v5048
        %vm5283 = vcmp.ne.f32.partialorder %v5051, %v5051
        %vm5284 = vcmp.ne.f32.partialorder %v5056, %v5056
        %vm5285 = vcmp.ne.f32.partialorder %v5059, %v5059
        %vm5286 = vcmp.ne.f32.partialorder %v5064, %v5064
        %vm5287 = vcmp.ne.f32.partialorder %v5067, %v5067
        %vm5288 = vcmp.ne.f32.partialorder %v5072, %v5072
        %vm5289 = vcmp.ne.f32.partialorder %v5075, %v5075
        %vm5290 = vcmp.ne.f32.partialorder %v5080, %v5080
        %vm5291 = vcmp.ne.f32.partialorder %v5083, %v5083
        %vm5292 = vcmp.ne.f32.partialorder %v5088, %v5088
        %vm5293 = vcmp.ne.f32.partialorder %v5091, %v5091
        %vm5294 = vcmp.ne.f32.partialorder %v5096, %v5096
        %vm5295 = vcmp.ne.f32.partialorder %v5099, %v5099
        %vm5296 = vcmp.ne.f32.partialorder %v5104, %v5104
        %vm5297 = vcmp.ne.f32.partialorder %v5107, %v5107
        %vm5298 = vcmp.ne.f32.partialorder %v5112, %v5112
        %vm5299 = vcmp.ne.f32.partialorder %v5115, %v5115
        %vm5300 = vcmp.ne.f32.partialorder %v5120, %v5120
        %vm5301 = vcmp.ne.f32.partialorder %v5123, %v5123
        %vm5302 = vcmp.ne.f32.partialorder %v5128, %v5128
        %vm5303 = vcmp.ne.f32.partialorder %v5131, %v5131
        %vm5304 = vcmp.ne.f32.partialorder %v5136, %v5136
        %vm5305 = vcmp.ne.f32.partialorder %v5139, %v5139
        %vm5306 = vcmp.ne.f32.partialorder %v5144, %v5144
        %vm5307 = vcmp.ne.f32.partialorder %v5147, %v5147
        %vm5308 = vcmp.ne.f32.partialorder %v5152, %v5152
        %vm5309 = vcmp.ne.f32.partialorder %v5155, %v5155
        %vm5310 = vcmp.ne.f32.partialorder %v5160, %v5160
        %vm5311 = vcmp.ne.f32.partialorder %v5163, %v5163
        %vm5312 = vcmp.ne.f32.partialorder %v5168, %v5168
        %vm5313 = vcmp.ne.f32.partialorder %v5171, %v5171
        %vm5314 = vcmp.ne.f32.partialorder %v5176, %v5176
        %vm5315 = vcmp.ne.f32.partialorder %v5179, %v5179
        %vm5316 = vcmp.ne.f32.partialorder %v5184, %v5184
        %vm5317 = vcmp.ne.f32.partialorder %v5187, %v5187
        %v5318 = vadd.f32 %v4936, 0.0
        %v5319 = vadd.f32 %v4939, 0.0
        %v5320 = vadd.f32 %v4944, 0.0
        %v5321 = vadd.f32 %v4947, 0.0
        %v5322 = vadd.f32 %v4952, 0.0
        %v5323 = vadd.f32 %v4955, 0.0
        %v5324 = vadd.f32 %v4960, 0.0
        %v5325 = vadd.f32 %v4963, 0.0
        %v5326 = vadd.f32 %v4968, 0.0
        %v5327 = vadd.f32 %v4971, 0.0
        %v5328 = vadd.f32 %v4976, 0.0
        %v5329 = vadd.f32 %v4979, 0.0
        %v5330 = vadd.f32 %v4984, 0.0
        %v5331 = vadd.f32 %v4987, 0.0
        %v5332 = vadd.f32 %v4992, 0.0
        %v5333 = vadd.f32 %v4995, 0.0
        %v5334 = vadd.f32 %v5000, 0.0
        %v5335 = vadd.f32 %v5003, 0.0
        %v5336 = vadd.f32 %v5008, 0.0
        %v5337 = vadd.f32 %v5011, 0.0
        %v5338 = vadd.f32 %v5016, 0.0
        %v5339 = vadd.f32 %v5019, 0.0
        %v5340 = vadd.f32 %v5024, 0.0
        %v5341 = vadd.f32 %v5027, 0.0
        %v5342 = vadd.f32 %v5032, 0.0
        %v5343 = vadd.f32 %v5035, 0.0
        %v5344 = vadd.f32 %v5040, 0.0
        %v5345 = vadd.f32 %v5043, 0.0
        %v5346 = vadd.f32 %v5048, 0.0
        %v5347 = vadd.f32 %v5051, 0.0
        %v5348 = vadd.f32 %v5056, 0.0
        %v5349 = vadd.f32 %v5059, 0.0
        %v5350 = vadd.f32 %v5064, 0.0
        %v5351 = vadd.f32 %v5067, 0.0
        %v5352 = vadd.f32 %v5072, 0.0
        %v5353 = vadd.f32 %v5075, 0.0
        %v5354 = vadd.f32 %v5080, 0.0
        %v5355 = vadd.f32 %v5083, 0.0
        %v5356 = vadd.f32 %v5088, 0.0
        %v5357 = vadd.f32 %v5091, 0.0
        %v5358 = vadd.f32 %v5096, 0.0
        %v5359 = vadd.f32 %v5099, 0.0
        %v5360 = vadd.f32 %v5104, 0.0
        %v5361 = vadd.f32 %v5107, 0.0
        %v5362 = vadd.f32 %v5112, 0.0
        %v5363 = vadd.f32 %v5115, 0.0
        %v5364 = vadd.f32 %v5120, 0.0
        %v5365 = vadd.f32 %v5123, 0.0
        %v5366 = vadd.f32 %v5128, 0.0
        %v5367 = vadd.f32 %v5131, 0.0
        %v5368 = vadd.f32 %v5136, 0.0
        %v5369 = vadd.f32 %v5139, 0.0
        %v5370 = vadd.f32 %v5144, 0.0
        %v5371 = vadd.f32 %v5147, 0.0
        %v5372 = vadd.f32 %v5152, 0.0
        %v5373 = vadd.f32 %v5155, 0.0
        %v5374 = vadd.f32 %v5160, 0.0
        %v5375 = vadd.f32 %v5163, 0.0
        %v5376 = vadd.f32 %v5168, 0.0
        %v5377 = vadd.f32 %v5171, 0.0
        %v5378 = vadd.f32 %v5176, 0.0
        %v5379 = vadd.f32 %v5179, 0.0
        %v5380 = vadd.f32 %v5184, 0.0
        %v5381 = vadd.f32 %v5187, 0.0
        %v5382 = vand.u32 2147483647, %v4936
        %v5383 = vand.u32 2147483647, %v4939
        %v5384 = vand.u32 2147483647, %v4944
        %v5385 = vand.u32 2147483647, %v4947
        %v5386 = vand.u32 2147483647, %v4952
        %v5387 = vand.u32 2147483647, %v4955
        %v5388 = vand.u32 2147483647, %v4960
        %v5389 = vand.u32 2147483647, %v4963
        %v5390 = vand.u32 2147483647, %v4968
        %v5391 = vand.u32 2147483647, %v4971
        %v5392 = vand.u32 2147483647, %v4976
        %v5393 = vand.u32 2147483647, %v4979
        %v5394 = vand.u32 2147483647, %v4984
        %v5395 = vand.u32 2147483647, %v4987
        %v5396 = vand.u32 2147483647, %v4992
        %v5397 = vand.u32 2147483647, %v4995
        %v5398 = vand.u32 2147483647, %v5000
        %v5399 = vand.u32 2147483647, %v5003
        %v5400 = vand.u32 2147483647, %v5008
        %v5401 = vand.u32 2147483647, %v5011
        %v5402 = vand.u32 2147483647, %v5016
        %v5403 = vand.u32 2147483647, %v5019
        %v5404 = vand.u32 2147483647, %v5024
        %v5405 = vand.u32 2147483647, %v5027
        %v5406 = vand.u32 2147483647, %v5032
        %v5407 = vand.u32 2147483647, %v5035
        %v5408 = vand.u32 2147483647, %v5040
        %v5409 = vand.u32 2147483647, %v5043
        %v5410 = vand.u32 2147483647, %v5048
        %v5411 = vand.u32 2147483647, %v5051
        %v5412 = vand.u32 2147483647, %v5056
        %v5413 = vand.u32 2147483647, %v5059
        %v5414 = vand.u32 2147483647, %v5064
        %v5415 = vand.u32 2147483647, %v5067
        %v5416 = vand.u32 2147483647, %v5072
        %v5417 = vand.u32 2147483647, %v5075
        %v5418 = vand.u32 2147483647, %v5080
        %v5419 = vand.u32 2147483647, %v5083
        %v5420 = vand.u32 2147483647, %v5088
        %v5421 = vand.u32 2147483647, %v5091
        %v5422 = vand.u32 2147483647, %v5096
        %v5423 = vand.u32 2147483647, %v5099
        %v5424 = vand.u32 2147483647, %v5104
        %v5425 = vand.u32 2147483647, %v5107
        %v5426 = vand.u32 2147483647, %v5112
        %v5427 = vand.u32 2147483647, %v5115
        %v5428 = vand.u32 2147483647, %v5120
        %v5429 = vand.u32 2147483647, %v5123
        %v5430 = vand.u32 2147483647, %v5128
        %v5431 = vand.u32 2147483647, %v5131
        %v5432 = vand.u32 2147483647, %v5136
        %v5433 = vand.u32 2147483647, %v5139
        %v5434 = vand.u32 2147483647, %v5144
        %v5435 = vand.u32 2147483647, %v5147
        %v5436 = vand.u32 2147483647, %v5152
        %v5437 = vand.u32 2147483647, %v5155
        %v5438 = vand.u32 2147483647, %v5160
        %v5439 = vand.u32 2147483647, %v5163
        %v5440 = vand.u32 2147483647, %v5168
        %v5441 = vand.u32 2147483647, %v5171
        %v5442 = vand.u32 2147483647, %v5176
        %v5443 = vand.u32 2147483647, %v5179
        %v5444 = vand.u32 2147483647, %v5184
        %v5445 = vand.u32 2147483647, %v5187
        %v5446 = vsub.f32 0.0, %v5382
        %v5447 = vsub.f32 0.0, %v5383
        %v5448 = vsub.f32 0.0, %v5384
        %v5449 = vsub.f32 0.0, %v5385
        %v5450 = vsub.f32 0.0, %v5386
        %v5451 = vsub.f32 0.0, %v5387
        %v5452 = vsub.f32 0.0, %v5388
        %v5453 = vsub.f32 0.0, %v5389
        %v5454 = vsub.f32 0.0, %v5390
        %v5455 = vsub.f32 0.0, %v5391
        %v5456 = vsub.f32 0.0, %v5392
        %v5457 = vsub.f32 0.0, %v5393
        %v5458 = vsub.f32 0.0, %v5394
        %v5459 = vsub.f32 0.0, %v5395
        %v5460 = vsub.f32 0.0, %v5396
        %v5461 = vsub.f32 0.0, %v5397
        %v5462 = vsub.f32 0.0, %v5398
        %v5463 = vsub.f32 0.0, %v5399
        %v5464 = vsub.f32 0.0, %v5400
        %v5465 = vsub.f32 0.0, %v5401
        %v5466 = vsub.f32 0.0, %v5402
        %v5467 = vsub.f32 0.0, %v5403
        %v5468 = vsub.f32 0.0, %v5404
        %v5469 = vsub.f32 0.0, %v5405
        %v5470 = vsub.f32 0.0, %v5406
        %v5471 = vsub.f32 0.0, %v5407
        %v5472 = vsub.f32 0.0, %v5408
        %v5473 = vsub.f32 0.0, %v5409
        %v5474 = vsub.f32 0.0, %v5410
        %v5475 = vsub.f32 0.0, %v5411
        %v5476 = vsub.f32 0.0, %v5412
        %v5477 = vsub.f32 0.0, %v5413
        %v5478 = vsub.f32 0.0, %v5414
        %v5479 = vsub.f32 0.0, %v5415
        %v5480 = vsub.f32 0.0, %v5416
        %v5481 = vsub.f32 0.0, %v5417
        %v5482 = vsub.f32 0.0, %v5418
        %v5483 = vsub.f32 0.0, %v5419
        %v5484 = vsub.f32 0.0, %v5420
        %v5485 = vsub.f32 0.0, %v5421
        %v5486 = vsub.f32 0.0, %v5422
        %v5487 = vsub.f32 0.0, %v5423
        %v5488 = vsub.f32 0.0, %v5424
        %v5489 = vsub.f32 0.0, %v5425
        %v5490 = vsub.f32 0.0, %v5426
        %v5491 = vsub.f32 0.0, %v5427
        %v5492 = vsub.f32 0.0, %v5428
        %v5493 = vsub.f32 0.0, %v5429
        %v5494 = vsub.f32 0.0, %v5430
        %v5495 = vsub.f32 0.0, %v5431
        %v5496 = vsub.f32 0.0, %v5432
        %v5497 = vsub.f32 0.0, %v5433
        %v5498 = vsub.f32 0.0, %v5434
        %v5499 = vsub.f32 0.0, %v5435
        %v5500 = vsub.f32 0.0, %v5436
        %v5501 = vsub.f32 0.0, %v5437
        %v5502 = vsub.f32 0.0, %v5438
        %v5503 = vsub.f32 0.0, %v5439
        %v5504 = vsub.f32 0.0, %v5440
        %v5505 = vsub.f32 0.0, %v5441
        %v5506 = vsub.f32 0.0, %v5442
        %v5507 = vsub.f32 0.0, %v5443
        %v5508 = vsub.f32 0.0, %v5444
        %v5509 = vsub.f32 0.0, %v5445
        %v5510 = vmul.f32 %v5446, 1.442695
        %v5511 = vpow.pop %v5510
        %v5512 = vmul.f32 %v5447, 1.442695
        %v5513 = vpow.pop %v5512
        %v5514 = vmul.f32 %v5448, 1.442695
        %v5515 = vpow.pop %v5514
        %v5516 = vmul.f32 %v5449, 1.442695
        %v5517 = vpow.pop %v5516
        %v5518 = vmul.f32 %v5450, 1.442695
        %v5519 = vpow.pop %v5518
        %v5520 = vmul.f32 %v5451, 1.442695
        %v5521 = vpow.pop %v5520
        %v5522 = vmul.f32 %v5452, 1.442695
        %v5523 = vpow.pop %v5522
        %v5524 = vmul.f32 %v5453, 1.442695
        %v5525 = vpow.pop %v5524
        %v5526 = vmul.f32 %v5454, 1.442695
        %v5527 = vpow.pop %v5526
        %v5528 = vmul.f32 %v5455, 1.442695
        %v5529 = vpow.pop %v5528
        %v5530 = vmul.f32 %v5456, 1.442695
        %v5531 = vpow.pop %v5530
        %v5532 = vmul.f32 %v5457, 1.442695
        %v5533 = vpow.pop %v5532
        %v5534 = vmul.f32 %v5458, 1.442695
        %v5535 = vpow.pop %v5534
        %v5536 = vmul.f32 %v5459, 1.442695
        %v5537 = vpow.pop %v5536
        %v5538 = vmul.f32 %v5460, 1.442695
        %v5539 = vpow.pop %v5538
        %v5540 = vmul.f32 %v5461, 1.442695
        %v5541 = vpow.pop %v5540
        %v5542 = vmul.f32 %v5462, 1.442695
        %v5543 = vpow.pop %v5542
        %v5544 = vmul.f32 %v5463, 1.442695
        %v5545 = vpow.pop %v5544
        %v5546 = vmul.f32 %v5464, 1.442695
        %v5547 = vpow.pop %v5546
        %v5548 = vmul.f32 %v5465, 1.442695
        %v5549 = vpow.pop %v5548
        %v5550 = vmul.f32 %v5466, 1.442695
        %v5551 = vpow.pop %v5550
        %v5552 = vmul.f32 %v5467, 1.442695
        %v5553 = vpow.pop %v5552
        %v5554 = vmul.f32 %v5468, 1.442695
        %v5555 = vpow.pop %v5554
        %v5556 = vmul.f32 %v5469, 1.442695
        %v5557 = vpow.pop %v5556
        %v5558 = vmul.f32 %v5470, 1.442695
        %v5559 = vpow.pop %v5558
        %v5560 = vmul.f32 %v5471, 1.442695
        %v5561 = vpow.pop %v5560
        %v5562 = vmul.f32 %v5472, 1.442695
        %v5563 = vpow.pop %v5562
        %v5564 = vmul.f32 %v5473, 1.442695
        %v5565 = vpow.pop %v5564
        %v5566 = vmul.f32 %v5474, 1.442695
        %v5567 = vpow.pop %v5566
        %v5568 = vmul.f32 %v5475, 1.442695
        %v5569 = vpow.pop %v5568
        %v5570 = vmul.f32 %v5476, 1.442695
        %v5571 = vpow.pop %v5570
        %v5572 = vmul.f32 %v5477, 1.442695
        %v5573 = vpow.pop %v5572
        %v5574 = vmul.f32 %v5478, 1.442695
        %v5575 = vpow.pop %v5574
        %v5576 = vmul.f32 %v5479, 1.442695
        %v5577 = vpow.pop %v5576
        %v5578 = vmul.f32 %v5480, 1.442695
        %v5579 = vpow.pop %v5578
        %v5580 = vmul.f32 %v5481, 1.442695
        %v5581 = vpow.pop %v5580
        %v5582 = vmul.f32 %v5482, 1.442695
        %v5583 = vpow.pop %v5582
        %v5584 = vmul.f32 %v5483, 1.442695
        %v5585 = vpow.pop %v5584
        %v5586 = vmul.f32 %v5484, 1.442695
        %v5587 = vpow.pop %v5586
        %v5588 = vmul.f32 %v5485, 1.442695
        %v5589 = vpow.pop %v5588
        %v5590 = vmul.f32 %v5486, 1.442695
        %v5591 = vpow.pop %v5590
        %v5592 = vmul.f32 %v5487, 1.442695
        %v5593 = vpow.pop %v5592
        %v5594 = vmul.f32 %v5488, 1.442695
        %v5595 = vpow.pop %v5594
        %v5596 = vmul.f32 %v5489, 1.442695
        %v5597 = vpow.pop %v5596
        %v5598 = vmul.f32 %v5490, 1.442695
        %v5599 = vpow.pop %v5598
        %v5600 = vmul.f32 %v5491, 1.442695
        %v5601 = vpow.pop %v5600
        %v5602 = vmul.f32 %v5492, 1.442695
        %v5603 = vpow.pop %v5602
        %v5604 = vmul.f32 %v5493, 1.442695
        %v5605 = vpow.pop %v5604
        %v5606 = vmul.f32 %v5494, 1.442695
        %v5607 = vpow.pop %v5606
        %v5608 = vmul.f32 %v5495, 1.442695
        %v5609 = vpow.pop %v5608
        %v5610 = vmul.f32 %v5496, 1.442695
        %v5611 = vpow.pop %v5610
        %v5612 = vmul.f32 %v5497, 1.442695
        %v5613 = vpow.pop %v5612
        %v5614 = vmul.f32 %v5498, 1.442695
        %v5615 = vpow.pop %v5614
        %v5616 = vmul.f32 %v5499, 1.442695
        %v5617 = vpow.pop %v5616
        %v5618 = vmul.f32 %v5500, 1.442695
        %v5619 = vpow.pop %v5618
        %v5620 = vmul.f32 %v5501, 1.442695
        %v5621 = vpow.pop %v5620
        %v5622 = vmul.f32 %v5502, 1.442695
        %v5623 = vpow.pop %v5622
        %v5624 = vmul.f32 %v5503, 1.442695
        %v5625 = vpow.pop %v5624
        %v5626 = vmul.f32 %v5504, 1.442695
        %v5627 = vpow.pop %v5626
        %v5628 = vmul.f32 %v5505, 1.442695
        %v5629 = vpow.pop %v5628
        %v5630 = vmul.f32 %v5506, 1.442695
        %v5631 = vpow.pop %v5630
        %v5632 = vmul.f32 %v5507, 1.442695
        %v5633 = vpow.pop %v5632
        %v5634 = vmul.f32 %v5508, 1.442695
        %v5635 = vpow.pop %v5634
        %v5636 = vmul.f32 %v5509, 1.442695
        %v5637 = vpow.pop %v5636
        %v5638 = vadd.f32 %v5511, 1.0
        %v5639 = vlog2.pop %v5638
        %v5640 = vmul.f32 %v5639, 0.6931472
        %v5641 = vmul.f32 -0.5, %v5511
        %v5642 = vadd.f32 %v5641, 1.0
        %v5643 = vmul.f32 %v5642, %v5511
        %v5644 = vand.u32 2147483647, %v5511
        %vm5645 = vcmp.lt.f32.partialorder %v5644, 0.0004427343
        %v5646 = vsel %vm5645, %v5643, %v5640
        %v5647 = vadd.f32 %v5513, 1.0
        %v5648 = vlog2.pop %v5647
        %v5649 = vmul.f32 %v5648, 0.6931472
        %v5650 = vmul.f32 -0.5, %v5513
        %v5651 = vadd.f32 %v5650, 1.0
        %v5652 = vmul.f32 %v5651, %v5513
        %v5653 = vand.u32 2147483647, %v5513
        %vm5654 = vcmp.lt.f32.partialorder %v5653, 0.0004427343
        %v5655 = vsel %vm5654, %v5652, %v5649
        %v5656 = vadd.f32 %v5515, 1.0
        %v5657 = vlog2.pop %v5656
        %v5658 = vmul.f32 %v5657, 0.6931472
        %v5659 = vmul.f32 -0.5, %v5515
        %v5660 = vadd.f32 %v5659, 1.0
        %v5661 = vmul.f32 %v5660, %v5515
        %v5662 = vand.u32 2147483647, %v5515
        %vm5663 = vcmp.lt.f32.partialorder %v5662, 0.0004427343
        %v5664 = vsel %vm5663, %v5661, %v5658
        %v5665 = vadd.f32 %v5517, 1.0
        %v5666 = vlog2.pop %v5665
        %v5667 = vmul.f32 %v5666, 0.6931472
        %v5668 = vmul.f32 -0.5, %v5517
        %v5669 = vadd.f32 %v5668, 1.0
        %v5670 = vmul.f32 %v5669, %v5517
        %v5671 = vand.u32 2147483647, %v5517
        %vm5672 = vcmp.lt.f32.partialorder %v5671, 0.0004427343
        %v5673 = vsel %vm5672, %v5670, %v5667
        %v5674 = vadd.f32 %v5519, 1.0
        %v5675 = vlog2.pop %v5674
        %v5676 = vmul.f32 %v5675, 0.6931472
        %v5677 = vmul.f32 -0.5, %v5519
        %v5678 = vadd.f32 %v5677, 1.0
        %v5679 = vmul.f32 %v5678, %v5519
        %v5680 = vand.u32 2147483647, %v5519
        %vm5681 = vcmp.lt.f32.partialorder %v5680, 0.0004427343
        %v5682 = vsel %vm5681, %v5679, %v5676
        %v5683 = vadd.f32 %v5521, 1.0
        %v5684 = vlog2.pop %v5683
        %v5685 = vmul.f32 %v5684, 0.6931472
        %v5686 = vmul.f32 -0.5, %v5521
        %v5687 = vadd.f32 %v5686, 1.0
        %v5688 = vmul.f32 %v5687, %v5521
        %v5689 = vand.u32 2147483647, %v5521
        %vm5690 = vcmp.lt.f32.partialorder %v5689, 0.0004427343
        %v5691 = vsel %vm5690, %v5688, %v5685
        %v5692 = vadd.f32 %v5523, 1.0
        %v5693 = vlog2.pop %v5692
        %v5694 = vmul.f32 %v5693, 0.6931472
        %v5695 = vmul.f32 -0.5, %v5523
        %v5696 = vadd.f32 %v5695, 1.0
        %v5697 = vmul.f32 %v5696, %v5523
        %v5698 = vand.u32 2147483647, %v5523
        %vm5699 = vcmp.lt.f32.partialorder %v5698, 0.0004427343
        %v5700 = vsel %vm5699, %v5697, %v5694
        %v5701 = vadd.f32 %v5525, 1.0
        %v5702 = vlog2.pop %v5701
        %v5703 = vmul.f32 %v5702, 0.6931472
        %v5704 = vmul.f32 -0.5, %v5525
        %v5705 = vadd.f32 %v5704, 1.0
        %v5706 = vmul.f32 %v5705, %v5525
        %v5707 = vand.u32 2147483647, %v5525
        %vm5708 = vcmp.lt.f32.partialorder %v5707, 0.0004427343
        %v5709 = vsel %vm5708, %v5706, %v5703
        %v5710 = vadd.f32 %v5527, 1.0
        %v5711 = vlog2.pop %v5710
        %v5712 = vmul.f32 %v5711, 0.6931472
        %v5713 = vmul.f32 -0.5, %v5527
        %v5714 = vadd.f32 %v5713, 1.0
        %v5715 = vmul.f32 %v5714, %v5527
        %v5716 = vand.u32 2147483647, %v5527
        %vm5717 = vcmp.lt.f32.partialorder %v5716, 0.0004427343
        %v5718 = vsel %vm5717, %v5715, %v5712
        %v5719 = vadd.f32 %v5529, 1.0
        %v5720 = vlog2.pop %v5719
        %v5721 = vmul.f32 %v5720, 0.6931472
        %v5722 = vmul.f32 -0.5, %v5529
        %v5723 = vadd.f32 %v5722, 1.0
        %v5724 = vmul.f32 %v5723, %v5529
        %v5725 = vand.u32 2147483647, %v5529
        %vm5726 = vcmp.lt.f32.partialorder %v5725, 0.0004427343
        %v5727 = vsel %vm5726, %v5724, %v5721
        %v5728 = vadd.f32 %v5531, 1.0
        %v5729 = vlog2.pop %v5728
        %v5730 = vmul.f32 %v5729, 0.6931472
        %v5731 = vmul.f32 -0.5, %v5531
        %v5732 = vadd.f32 %v5731, 1.0
        %v5733 = vmul.f32 %v5732, %v5531
        %v5734 = vand.u32 2147483647, %v5531
        %vm5735 = vcmp.lt.f32.partialorder %v5734, 0.0004427343
        %v5736 = vsel %vm5735, %v5733, %v5730
        %v5737 = vadd.f32 %v5533, 1.0
        %v5738 = vlog2.pop %v5737
        %v5739 = vmul.f32 %v5738, 0.6931472
        %v5740 = vmul.f32 -0.5, %v5533
        %v5741 = vadd.f32 %v5740, 1.0
        %v5742 = vmul.f32 %v5741, %v5533
        %v5743 = vand.u32 2147483647, %v5533
        %vm5744 = vcmp.lt.f32.partialorder %v5743, 0.0004427343
        %v5745 = vsel %vm5744, %v5742, %v5739
        %v5746 = vadd.f32 %v5535, 1.0
        %v5747 = vlog2.pop %v5746
        %v5748 = vmul.f32 %v5747, 0.6931472
        %v5749 = vmul.f32 -0.5, %v5535
        %v5750 = vadd.f32 %v5749, 1.0
        %v5751 = vmul.f32 %v5750, %v5535
        %v5752 = vand.u32 2147483647, %v5535
        %vm5753 = vcmp.lt.f32.partialorder %v5752, 0.0004427343
        %v5754 = vsel %vm5753, %v5751, %v5748
        %v5755 = vadd.f32 %v5537, 1.0
        %v5756 = vlog2.pop %v5755
        %v5757 = vmul.f32 %v5756, 0.6931472
        %v5758 = vmul.f32 -0.5, %v5537
        %v5759 = vadd.f32 %v5758, 1.0
        %v5760 = vmul.f32 %v5759, %v5537
        %v5761 = vand.u32 2147483647, %v5537
        %vm5762 = vcmp.lt.f32.partialorder %v5761, 0.0004427343
        %v5763 = vsel %vm5762, %v5760, %v5757
        %v5764 = vadd.f32 %v5539, 1.0
        %v5765 = vlog2.pop %v5764
        %v5766 = vmul.f32 %v5765, 0.6931472
        %v5767 = vmul.f32 -0.5, %v5539
        %v5768 = vadd.f32 %v5767, 1.0
        %v5769 = vmul.f32 %v5768, %v5539
        %v5770 = vand.u32 2147483647, %v5539
        %vm5771 = vcmp.lt.f32.partialorder %v5770, 0.0004427343
        %v5772 = vsel %vm5771, %v5769, %v5766
        %v5773 = vadd.f32 %v5541, 1.0
        %v5774 = vlog2.pop %v5773
        %v5775 = vmul.f32 %v5774, 0.6931472
        %v5776 = vmul.f32 -0.5, %v5541
        %v5777 = vadd.f32 %v5776, 1.0
        %v5778 = vmul.f32 %v5777, %v5541
        %v5779 = vand.u32 2147483647, %v5541
        %vm5780 = vcmp.lt.f32.partialorder %v5779, 0.0004427343
        %v5781 = vsel %vm5780, %v5778, %v5775
        %v5782 = vadd.f32 %v5543, 1.0
        %v5783 = vlog2.pop %v5782
        %v5784 = vmul.f32 %v5783, 0.6931472
        %v5785 = vmul.f32 -0.5, %v5543
        %v5786 = vadd.f32 %v5785, 1.0
        %v5787 = vmul.f32 %v5786, %v5543
        %v5788 = vand.u32 2147483647, %v5543
        %vm5789 = vcmp.lt.f32.partialorder %v5788, 0.0004427343
        %v5790 = vsel %vm5789, %v5787, %v5784
        %v5791 = vadd.f32 %v5545, 1.0
        %v5792 = vlog2.pop %v5791
        %v5793 = vmul.f32 %v5792, 0.6931472
        %v5794 = vmul.f32 -0.5, %v5545
        %v5795 = vadd.f32 %v5794, 1.0
        %v5796 = vmul.f32 %v5795, %v5545
        %v5797 = vand.u32 2147483647, %v5545
        %vm5798 = vcmp.lt.f32.partialorder %v5797, 0.0004427343
        %v5799 = vsel %vm5798, %v5796, %v5793
        %v5800 = vadd.f32 %v5547, 1.0
        %v5801 = vlog2.pop %v5800
        %v5802 = vmul.f32 %v5801, 0.6931472
        %v5803 = vmul.f32 -0.5, %v5547
        %v5804 = vadd.f32 %v5803, 1.0
        %v5805 = vmul.f32 %v5804, %v5547
        %v5806 = vand.u32 2147483647, %v5547
        %vm5807 = vcmp.lt.f32.partialorder %v5806, 0.0004427343
        %v5808 = vsel %vm5807, %v5805, %v5802
        %v5809 = vadd.f32 %v5549, 1.0
        %v5810 = vlog2.pop %v5809
        %v5811 = vmul.f32 %v5810, 0.6931472
        %v5812 = vmul.f32 -0.5, %v5549
        %v5813 = vadd.f32 %v5812, 1.0
        %v5814 = vmul.f32 %v5813, %v5549
        %v5815 = vand.u32 2147483647, %v5549
        %vm5816 = vcmp.lt.f32.partialorder %v5815, 0.0004427343
        %v5817 = vsel %vm5816, %v5814, %v5811
        %v5818 = vadd.f32 %v5551, 1.0
        %v5819 = vlog2.pop %v5818
        %v5820 = vmul.f32 %v5819, 0.6931472
        %v5821 = vmul.f32 -0.5, %v5551
        %v5822 = vadd.f32 %v5821, 1.0
        %v5823 = vmul.f32 %v5822, %v5551
        %v5824 = vand.u32 2147483647, %v5551
        %vm5825 = vcmp.lt.f32.partialorder %v5824, 0.0004427343
        %v5826 = vsel %vm5825, %v5823, %v5820
        %v5827 = vadd.f32 %v5553, 1.0
        %v5828 = vlog2.pop %v5827
        %v5829 = vmul.f32 %v5828, 0.6931472
        %v5830 = vmul.f32 -0.5, %v5553
        %v5831 = vadd.f32 %v5830, 1.0
        %v5832 = vmul.f32 %v5831, %v5553
        %v5833 = vand.u32 2147483647, %v5553
        %vm5834 = vcmp.lt.f32.partialorder %v5833, 0.0004427343
        %v5835 = vsel %vm5834, %v5832, %v5829
        %v5836 = vadd.f32 %v5555, 1.0
        %v5837 = vlog2.pop %v5836
        %v5838 = vmul.f32 %v5837, 0.6931472
        %v5839 = vmul.f32 -0.5, %v5555
        %v5840 = vadd.f32 %v5839, 1.0
        %v5841 = vmul.f32 %v5840, %v5555
        %v5842 = vand.u32 2147483647, %v5555
        %vm5843 = vcmp.lt.f32.partialorder %v5842, 0.0004427343
        %v5844 = vsel %vm5843, %v5841, %v5838
        %v5845 = vadd.f32 %v5557, 1.0
        %v5846 = vlog2.pop %v5845
        %v5847 = vmul.f32 %v5846, 0.6931472
        %v5848 = vmul.f32 -0.5, %v5557
        %v5849 = vadd.f32 %v5848, 1.0
        %v5850 = vmul.f32 %v5849, %v5557
        %v5851 = vand.u32 2147483647, %v5557
        %vm5852 = vcmp.lt.f32.partialorder %v5851, 0.0004427343
        %v5853 = vsel %vm5852, %v5850, %v5847
        %v5854 = vadd.f32 %v5559, 1.0
        %v5855 = vlog2.pop %v5854
        %v5856 = vmul.f32 %v5855, 0.6931472
        %v5857 = vmul.f32 -0.5, %v5559
        %v5858 = vadd.f32 %v5857, 1.0
        %v5859 = vmul.f32 %v5858, %v5559
        %v5860 = vand.u32 2147483647, %v5559
        %vm5861 = vcmp.lt.f32.partialorder %v5860, 0.0004427343
        %v5862 = vsel %vm5861, %v5859, %v5856
        %v5863 = vadd.f32 %v5561, 1.0
        %v5864 = vlog2.pop %v5863
        %v5865 = vmul.f32 %v5864, 0.6931472
        %v5866 = vmul.f32 -0.5, %v5561
        %v5867 = vadd.f32 %v5866, 1.0
        %v5868 = vmul.f32 %v5867, %v5561
        %v5869 = vand.u32 2147483647, %v5561
        %vm5870 = vcmp.lt.f32.partialorder %v5869, 0.0004427343
        %v5871 = vsel %vm5870, %v5868, %v5865
        %v5872 = vadd.f32 %v5563, 1.0
        %v5873 = vlog2.pop %v5872
        %v5874 = vmul.f32 %v5873, 0.6931472
        %v5875 = vmul.f32 -0.5, %v5563
        %v5876 = vadd.f32 %v5875, 1.0
        %v5877 = vmul.f32 %v5876, %v5563
        %v5878 = vand.u32 2147483647, %v5563
        %vm5879 = vcmp.lt.f32.partialorder %v5878, 0.0004427343
        %v5880 = vsel %vm5879, %v5877, %v5874
        %v5881 = vadd.f32 %v5565, 1.0
        %v5882 = vlog2.pop %v5881
        %v5883 = vmul.f32 %v5882, 0.6931472
        %v5884 = vmul.f32 -0.5, %v5565
        %v5885 = vadd.f32 %v5884, 1.0
        %v5886 = vmul.f32 %v5885, %v5565
        %v5887 = vand.u32 2147483647, %v5565
        %vm5888 = vcmp.lt.f32.partialorder %v5887, 0.0004427343
        %v5889 = vsel %vm5888, %v5886, %v5883
        %v5890 = vadd.f32 %v5567, 1.0
        %v5891 = vlog2.pop %v5890
        %v5892 = vmul.f32 %v5891, 0.6931472
        %v5893 = vmul.f32 -0.5, %v5567
        %v5894 = vadd.f32 %v5893, 1.0
        %v5895 = vmul.f32 %v5894, %v5567
        %v5896 = vand.u32 2147483647, %v5567
        %vm5897 = vcmp.lt.f32.partialorder %v5896, 0.0004427343
        %v5898 = vsel %vm5897, %v5895, %v5892
        %v5899 = vadd.f32 %v5569, 1.0
        %v5900 = vlog2.pop %v5899
        %v5901 = vmul.f32 %v5900, 0.6931472
        %v5902 = vmul.f32 -0.5, %v5569
        %v5903 = vadd.f32 %v5902, 1.0
        %v5904 = vmul.f32 %v5903, %v5569
        %v5905 = vand.u32 2147483647, %v5569
        %vm5906 = vcmp.lt.f32.partialorder %v5905, 0.0004427343
        %v5907 = vsel %vm5906, %v5904, %v5901
        %v5908 = vadd.f32 %v5571, 1.0
        %v5909 = vlog2.pop %v5908
        %v5910 = vmul.f32 %v5909, 0.6931472
        %v5911 = vmul.f32 -0.5, %v5571
        %v5912 = vadd.f32 %v5911, 1.0
        %v5913 = vmul.f32 %v5912, %v5571
        %v5914 = vand.u32 2147483647, %v5571
        %vm5915 = vcmp.lt.f32.partialorder %v5914, 0.0004427343
        %v5916 = vsel %vm5915, %v5913, %v5910
        %v5917 = vadd.f32 %v5573, 1.0
        %v5918 = vlog2.pop %v5917
        %v5919 = vmul.f32 %v5918, 0.6931472
        %v5920 = vmul.f32 -0.5, %v5573
        %v5921 = vadd.f32 %v5920, 1.0
        %v5922 = vmul.f32 %v5921, %v5573
        %v5923 = vand.u32 2147483647, %v5573
        %vm5924 = vcmp.lt.f32.partialorder %v5923, 0.0004427343
        %v5925 = vsel %vm5924, %v5922, %v5919
        %v5926 = vadd.f32 %v5575, 1.0
        %v5927 = vlog2.pop %v5926
        %v5928 = vmul.f32 %v5927, 0.6931472
        %v5929 = vmul.f32 -0.5, %v5575
        %v5930 = vadd.f32 %v5929, 1.0
        %v5931 = vmul.f32 %v5930, %v5575
        %v5932 = vand.u32 2147483647, %v5575
        %vm5933 = vcmp.lt.f32.partialorder %v5932, 0.0004427343
        %v5934 = vsel %vm5933, %v5931, %v5928
        %v5935 = vadd.f32 %v5577, 1.0
        %v5936 = vlog2.pop %v5935
        %v5937 = vmul.f32 %v5936, 0.6931472
        %v5938 = vmul.f32 -0.5, %v5577
        %v5939 = vadd.f32 %v5938, 1.0
        %v5940 = vmul.f32 %v5939, %v5577
        %v5941 = vand.u32 2147483647, %v5577
        %vm5942 = vcmp.lt.f32.partialorder %v5941, 0.0004427343
        %v5943 = vsel %vm5942, %v5940, %v5937
        %v5944 = vadd.f32 %v5579, 1.0
        %v5945 = vlog2.pop %v5944
        %v5946 = vmul.f32 %v5945, 0.6931472
        %v5947 = vmul.f32 -0.5, %v5579
        %v5948 = vadd.f32 %v5947, 1.0
        %v5949 = vmul.f32 %v5948, %v5579
        %v5950 = vand.u32 2147483647, %v5579
        %vm5951 = vcmp.lt.f32.partialorder %v5950, 0.0004427343
        %v5952 = vsel %vm5951, %v5949, %v5946
        %v5953 = vadd.f32 %v5581, 1.0
        %v5954 = vlog2.pop %v5953
        %v5955 = vmul.f32 %v5954, 0.6931472
        %v5956 = vmul.f32 -0.5, %v5581
        %v5957 = vadd.f32 %v5956, 1.0
        %v5958 = vmul.f32 %v5957, %v5581
        %v5959 = vand.u32 2147483647, %v5581
        %vm5960 = vcmp.lt.f32.partialorder %v5959, 0.0004427343
        %v5961 = vsel %vm5960, %v5958, %v5955
        %v5962 = vadd.f32 %v5583, 1.0
        %v5963 = vlog2.pop %v5962
        %v5964 = vmul.f32 %v5963, 0.6931472
        %v5965 = vmul.f32 -0.5, %v5583
        %v5966 = vadd.f32 %v5965, 1.0
        %v5967 = vmul.f32 %v5966, %v5583
        %v5968 = vand.u32 2147483647, %v5583
        %vm5969 = vcmp.lt.f32.partialorder %v5968, 0.0004427343
        %v5970 = vsel %vm5969, %v5967, %v5964
        %v5971 = vadd.f32 %v5585, 1.0
        %v5972 = vlog2.pop %v5971
        %v5973 = vmul.f32 %v5972, 0.6931472
        %v5974 = vmul.f32 -0.5, %v5585
        %v5975 = vadd.f32 %v5974, 1.0
        %v5976 = vmul.f32 %v5975, %v5585
        %v5977 = vand.u32 2147483647, %v5585
        %vm5978 = vcmp.lt.f32.partialorder %v5977, 0.0004427343
        %v5979 = vsel %vm5978, %v5976, %v5973
        %v5980 = vadd.f32 %v5587, 1.0
        %v5981 = vlog2.pop %v5980
        %v5982 = vmul.f32 %v5981, 0.6931472
        %v5983 = vmul.f32 -0.5, %v5587
        %v5984 = vadd.f32 %v5983, 1.0
        %v5985 = vmul.f32 %v5984, %v5587
        %v5986 = vand.u32 2147483647, %v5587
        %vm5987 = vcmp.lt.f32.partialorder %v5986, 0.0004427343
        %v5988 = vsel %vm5987, %v5985, %v5982
        %v5989 = vadd.f32 %v5589, 1.0
        %v5990 = vlog2.pop %v5989
        %v5991 = vmul.f32 %v5990, 0.6931472
        %v5992 = vmul.f32 -0.5, %v5589
        %v5993 = vadd.f32 %v5992, 1.0
        %v5994 = vmul.f32 %v5993, %v5589
        %v5995 = vand.u32 2147483647, %v5589
        %vm5996 = vcmp.lt.f32.partialorder %v5995, 0.0004427343
        %v5997 = vsel %vm5996, %v5994, %v5991
        %v5998 = vadd.f32 %v5591, 1.0
        %v5999 = vlog2.pop %v5998
        %v6000 = vmul.f32 %v5999, 0.6931472
        %v6001 = vmul.f32 -0.5, %v5591
        %v6002 = vadd.f32 %v6001, 1.0
        %v6003 = vmul.f32 %v6002, %v5591
        %v6004 = vand.u32 2147483647, %v5591
        %vm6005 = vcmp.lt.f32.partialorder %v6004, 0.0004427343
        %v6006 = vsel %vm6005, %v6003, %v6000
        %v6007 = vadd.f32 %v5593, 1.0
        %v6008 = vlog2.pop %v6007
        %v6009 = vmul.f32 %v6008, 0.6931472
        %v6010 = vmul.f32 -0.5, %v5593
        %v6011 = vadd.f32 %v6010, 1.0
        %v6012 = vmul.f32 %v6011, %v5593
        %v6013 = vand.u32 2147483647, %v5593
        %vm6014 = vcmp.lt.f32.partialorder %v6013, 0.0004427343
        %v6015 = vsel %vm6014, %v6012, %v6009
        %v6016 = vadd.f32 %v5595, 1.0
        %v6017 = vlog2.pop %v6016
        %v6018 = vmul.f32 %v6017, 0.6931472
        %v6019 = vmul.f32 -0.5, %v5595
        %v6020 = vadd.f32 %v6019, 1.0
        %v6021 = vmul.f32 %v6020, %v5595
        %v6022 = vand.u32 2147483647, %v5595
        %vm6023 = vcmp.lt.f32.partialorder %v6022, 0.0004427343
        %v6024 = vsel %vm6023, %v6021, %v6018
        %v6025 = vadd.f32 %v5597, 1.0
        %v6026 = vlog2.pop %v6025
        %v6027 = vmul.f32 %v6026, 0.6931472
        %v6028 = vmul.f32 -0.5, %v5597
        %v6029 = vadd.f32 %v6028, 1.0
        %v6030 = vmul.f32 %v6029, %v5597
        %v6031 = vand.u32 2147483647, %v5597
        %vm6032 = vcmp.lt.f32.partialorder %v6031, 0.0004427343
        %v6033 = vsel %vm6032, %v6030, %v6027
        %v6034 = vadd.f32 %v5599, 1.0
        %v6035 = vlog2.pop %v6034
        %v6036 = vmul.f32 %v6035, 0.6931472
        %v6037 = vmul.f32 -0.5, %v5599
        %v6038 = vadd.f32 %v6037, 1.0
        %v6039 = vmul.f32 %v6038, %v5599
        %v6040 = vand.u32 2147483647, %v5599
        %vm6041 = vcmp.lt.f32.partialorder %v6040, 0.0004427343
        %v6042 = vsel %vm6041, %v6039, %v6036
        %v6043 = vadd.f32 %v5601, 1.0
        %v6044 = vlog2.pop %v6043
        %v6045 = vmul.f32 %v6044, 0.6931472
        %v6046 = vmul.f32 -0.5, %v5601
        %v6047 = vadd.f32 %v6046, 1.0
        %v6048 = vmul.f32 %v6047, %v5601
        %v6049 = vand.u32 2147483647, %v5601
        %vm6050 = vcmp.lt.f32.partialorder %v6049, 0.0004427343
        %v6051 = vsel %vm6050, %v6048, %v6045
        %v6052 = vadd.f32 %v5603, 1.0
        %v6053 = vlog2.pop %v6052
        %v6054 = vmul.f32 %v6053, 0.6931472
        %v6055 = vmul.f32 -0.5, %v5603
        %v6056 = vadd.f32 %v6055, 1.0
        %v6057 = vmul.f32 %v6056, %v5603
        %v6058 = vand.u32 2147483647, %v5603
        %vm6059 = vcmp.lt.f32.partialorder %v6058, 0.0004427343
        %v6060 = vsel %vm6059, %v6057, %v6054
        %v6061 = vadd.f32 %v5605, 1.0
        %v6062 = vlog2.pop %v6061
        %v6063 = vmul.f32 %v6062, 0.6931472
        %v6064 = vmul.f32 -0.5, %v5605
        %v6065 = vadd.f32 %v6064, 1.0
        %v6066 = vmul.f32 %v6065, %v5605
        %v6067 = vand.u32 2147483647, %v5605
        %vm6068 = vcmp.lt.f32.partialorder %v6067, 0.0004427343
        %v6069 = vsel %vm6068, %v6066, %v6063
        %v6070 = vadd.f32 %v5607, 1.0
        %v6071 = vlog2.pop %v6070
        %v6072 = vmul.f32 %v6071, 0.6931472
        %v6073 = vmul.f32 -0.5, %v5607
        %v6074 = vadd.f32 %v6073, 1.0
        %v6075 = vmul.f32 %v6074, %v5607
        %v6076 = vand.u32 2147483647, %v5607
        %vm6077 = vcmp.lt.f32.partialorder %v6076, 0.0004427343
        %v6078 = vsel %vm6077, %v6075, %v6072
        %v6079 = vadd.f32 %v5609, 1.0
        %v6080 = vlog2.pop %v6079
        %v6081 = vmul.f32 %v6080, 0.6931472
        %v6082 = vmul.f32 -0.5, %v5609
        %v6083 = vadd.f32 %v6082, 1.0
        %v6084 = vmul.f32 %v6083, %v5609
        %v6085 = vand.u32 2147483647, %v5609
        %vm6086 = vcmp.lt.f32.partialorder %v6085, 0.0004427343
        %v6087 = vsel %vm6086, %v6084, %v6081
        %v6088 = vadd.f32 %v5611, 1.0
        %v6089 = vlog2.pop %v6088
        %v6090 = vmul.f32 %v6089, 0.6931472
        %v6091 = vmul.f32 -0.5, %v5611
        %v6092 = vadd.f32 %v6091, 1.0
        %v6093 = vmul.f32 %v6092, %v5611
        %v6094 = vand.u32 2147483647, %v5611
        %vm6095 = vcmp.lt.f32.partialorder %v6094, 0.0004427343
        %v6096 = vsel %vm6095, %v6093, %v6090
        %v6097 = vadd.f32 %v5613, 1.0
        %v6098 = vlog2.pop %v6097
        %v6099 = vmul.f32 %v6098, 0.6931472
        %v6100 = vmul.f32 -0.5, %v5613
        %v6101 = vadd.f32 %v6100, 1.0
        %v6102 = vmul.f32 %v6101, %v5613
        %v6103 = vand.u32 2147483647, %v5613
        %vm6104 = vcmp.lt.f32.partialorder %v6103, 0.0004427343
        %v6105 = vsel %vm6104, %v6102, %v6099
        %v6106 = vadd.f32 %v5615, 1.0
        %v6107 = vlog2.pop %v6106
        %v6108 = vmul.f32 %v6107, 0.6931472
        %v6109 = vmul.f32 -0.5, %v5615
        %v6110 = vadd.f32 %v6109, 1.0
        %v6111 = vmul.f32 %v6110, %v5615
        %v6112 = vand.u32 2147483647, %v5615
        %vm6113 = vcmp.lt.f32.partialorder %v6112, 0.0004427343
        %v6114 = vsel %vm6113, %v6111, %v6108
        %v6115 = vadd.f32 %v5617, 1.0
        %v6116 = vlog2.pop %v6115
        %v6117 = vmul.f32 %v6116, 0.6931472
        %v6118 = vmul.f32 -0.5, %v5617
        %v6119 = vadd.f32 %v6118, 1.0
        %v6120 = vmul.f32 %v6119, %v5617
        %v6121 = vand.u32 2147483647, %v5617
        %vm6122 = vcmp.lt.f32.partialorder %v6121, 0.0004427343
        %v6123 = vsel %vm6122, %v6120, %v6117
        %v6124 = vadd.f32 %v5619, 1.0
        %v6125 = vlog2.pop %v6124
        %v6126 = vmul.f32 %v6125, 0.6931472
        %v6127 = vmul.f32 -0.5, %v5619
        %v6128 = vadd.f32 %v6127, 1.0
        %v6129 = vmul.f32 %v6128, %v5619
        %v6130 = vand.u32 2147483647, %v5619
        %vm6131 = vcmp.lt.f32.partialorder %v6130, 0.0004427343
        %v6132 = vsel %vm6131, %v6129, %v6126
        %v6133 = vadd.f32 %v5621, 1.0
        %v6134 = vlog2.pop %v6133
        %v6135 = vmul.f32 %v6134, 0.6931472
        %v6136 = vmul.f32 -0.5, %v5621
        %v6137 = vadd.f32 %v6136, 1.0
        %v6138 = vmul.f32 %v6137, %v5621
        %v6139 = vand.u32 2147483647, %v5621
        %vm6140 = vcmp.lt.f32.partialorder %v6139, 0.0004427343
        %v6141 = vsel %vm6140, %v6138, %v6135
        %v6142 = vadd.f32 %v5623, 1.0
        %v6143 = vlog2.pop %v6142
        %v6144 = vmul.f32 %v6143, 0.6931472
        %v6145 = vmul.f32 -0.5, %v5623
        %v6146 = vadd.f32 %v6145, 1.0
        %v6147 = vmul.f32 %v6146, %v5623
        %v6148 = vand.u32 2147483647, %v5623
        %vm6149 = vcmp.lt.f32.partialorder %v6148, 0.0004427343
        %v6150 = vsel %vm6149, %v6147, %v6144
        %v6151 = vadd.f32 %v5625, 1.0
        %v6152 = vlog2.pop %v6151
        %v6153 = vmul.f32 %v6152, 0.6931472
        %v6154 = vmul.f32 -0.5, %v5625
        %v6155 = vadd.f32 %v6154, 1.0
        %v6156 = vmul.f32 %v6155, %v5625
        %v6157 = vand.u32 2147483647, %v5625
        %vm6158 = vcmp.lt.f32.partialorder %v6157, 0.0004427343
        %v6159 = vsel %vm6158, %v6156, %v6153
        %v6160 = vadd.f32 %v5627, 1.0
        %v6161 = vlog2.pop %v6160
        %v6162 = vmul.f32 %v6161, 0.6931472
        %v6163 = vmul.f32 -0.5, %v5627
        %v6164 = vadd.f32 %v6163, 1.0
        %v6165 = vmul.f32 %v6164, %v5627
        %v6166 = vand.u32 2147483647, %v5627
        %vm6167 = vcmp.lt.f32.partialorder %v6166, 0.0004427343
        %v6168 = vsel %vm6167, %v6165, %v6162
        %v6169 = vadd.f32 %v5629, 1.0
        %v6170 = vlog2.pop %v6169
        %v6171 = vmul.f32 %v6170, 0.6931472
        %v6172 = vmul.f32 -0.5, %v5629
        %v6173 = vadd.f32 %v6172, 1.0
        %v6174 = vmul.f32 %v6173, %v5629
        %v6175 = vand.u32 2147483647, %v5629
        %vm6176 = vcmp.lt.f32.partialorder %v6175, 0.0004427343
        %v6177 = vsel %vm6176, %v6174, %v6171
        %v6178 = vadd.f32 %v5631, 1.0
        %v6179 = vlog2.pop %v6178
        %v6180 = vmul.f32 %v6179, 0.6931472
        %v6181 = vmul.f32 -0.5, %v5631
        %v6182 = vadd.f32 %v6181, 1.0
        %v6183 = vmul.f32 %v6182, %v5631
        %v6184 = vand.u32 2147483647, %v5631
        %vm6185 = vcmp.lt.f32.partialorder %v6184, 0.0004427343
        %v6186 = vsel %vm6185, %v6183, %v6180
        %v6187 = vadd.f32 %v5633, 1.0
        %v6188 = vlog2.pop %v6187
        %v6189 = vmul.f32 %v6188, 0.6931472
        %v6190 = vmul.f32 -0.5, %v5633
        %v6191 = vadd.f32 %v6190, 1.0
        %v6192 = vmul.f32 %v6191, %v5633
        %v6193 = vand.u32 2147483647, %v5633
        %vm6194 = vcmp.lt.f32.partialorder %v6193, 0.0004427343
        %v6195 = vsel %vm6194, %v6192, %v6189
        %v6196 = vadd.f32 %v5635, 1.0
        %v6197 = vlog2.pop %v6196
        %v6198 = vmul.f32 %v6197, 0.6931472
        %v6199 = vmul.f32 -0.5, %v5635
        %v6200 = vadd.f32 %v6199, 1.0
        %v6201 = vmul.f32 %v6200, %v5635
        %v6202 = vand.u32 2147483647, %v5635
        %vm6203 = vcmp.lt.f32.partialorder %v6202, 0.0004427343
        %v6204 = vsel %vm6203, %v6201, %v6198
        %v6205 = vadd.f32 %v5637, 1.0
        %v6206 = vlog2.pop %v6205
        %v6207 = vmul.f32 %v6206, 0.6931472
        %v6208 = vmul.f32 -0.5, %v5637
        %v6209 = vadd.f32 %v6208, 1.0
        %v6210 = vmul.f32 %v6209, %v5637
        %v6211 = vand.u32 2147483647, %v5637
        %vm6212 = vcmp.lt.f32.partialorder %v6211, 0.0004427343
        %v6213 = vsel %vm6212, %v6210, %v6207
        %v6214 = vadd.f32 %v5190, %v5646
        %v6215 = vadd.f32 %v5191, %v5655
        %v6216 = vadd.f32 %v5192, %v5664
        %v6217 = vadd.f32 %v5193, %v5673
        %v6218 = vadd.f32 %v5194, %v5682
        %v6219 = vadd.f32 %v5195, %v5691
        %v6220 = vadd.f32 %v5196, %v5700
        %v6221 = vadd.f32 %v5197, %v5709
        %v6222 = vadd.f32 %v5198, %v5718
        %v6223 = vadd.f32 %v5199, %v5727
        %v6224 = vadd.f32 %v5200, %v5736
        %v6225 = vadd.f32 %v5201, %v5745
        %v6226 = vadd.f32 %v5202, %v5754
        %v6227 = vadd.f32 %v5203, %v5763
        %v6228 = vadd.f32 %v5204, %v5772
        %v6229 = vadd.f32 %v5205, %v5781
        %v6230 = vadd.f32 %v5206, %v5790
        %v6231 = vadd.f32 %v5207, %v5799
        %v6232 = vadd.f32 %v5208, %v5808
        %v6233 = vadd.f32 %v5209, %v5817
        %v6234 = vadd.f32 %v5210, %v5826
        %v6235 = vadd.f32 %v5211, %v5835
        %v6236 = vadd.f32 %v5212, %v5844
        %v6237 = vadd.f32 %v5213, %v5853
        %v6238 = vadd.f32 %v5214, %v5862
        %v6239 = vadd.f32 %v5215, %v5871
        %v6240 = vadd.f32 %v5216, %v5880
        %v6241 = vadd.f32 %v5217, %v5889
        %v6242 = vadd.f32 %v5218, %v5898
        %v6243 = vadd.f32 %v5219, %v5907
        %v6244 = vadd.f32 %v5220, %v5916
        %v6245 = vadd.f32 %v5221, %v5925
        %v6246 = vadd.f32 %v5222, %v5934
        %v6247 = vadd.f32 %v5223, %v5943
        %v6248 = vadd.f32 %v5224, %v5952
        %v6249 = vadd.f32 %v5225, %v5961
        %v6250 = vadd.f32 %v5226, %v5970
        %v6251 = vadd.f32 %v5227, %v5979
        %v6252 = vadd.f32 %v5228, %v5988
        %v6253 = vadd.f32 %v5229, %v5997
        %v6254 = vadd.f32 %v5230, %v6006
        %v6255 = vadd.f32 %v5231, %v6015
        %v6256 = vadd.f32 %v5232, %v6024
        %v6257 = vadd.f32 %v5233, %v6033
        %v6258 = vadd.f32 %v5234, %v6042
        %v6259 = vadd.f32 %v5235, %v6051
        %v6260 = vadd.f32 %v5236, %v6060
        %v6261 = vadd.f32 %v5237, %v6069
        %v6262 = vadd.f32 %v5238, %v6078
        %v6263 = vadd.f32 %v5239, %v6087
        %v6264 = vadd.f32 %v5240, %v6096
        %v6265 = vadd.f32 %v5241, %v6105
        %v6266 = vadd.f32 %v5242, %v6114
        %v6267 = vadd.f32 %v5243, %v6123
        %v6268 = vadd.f32 %v5244, %v6132
        %v6269 = vadd.f32 %v5245, %v6141
        %v6270 = vadd.f32 %v5246, %v6150
        %v6271 = vadd.f32 %v5247, %v6159
        %v6272 = vadd.f32 %v5248, %v6168
        %v6273 = vadd.f32 %v5249, %v6177
        %v6274 = vadd.f32 %v5250, %v6186
        %v6275 = vadd.f32 %v5251, %v6195
        %v6276 = vadd.f32 %v5252, %v6204
        %v6277 = vadd.f32 %v5253, %v6213
        %v6278 = vsel %vm5254, %v5318, %v6214
        %v6279 = vsel %vm5255, %v5319, %v6215
        %v6280 = vsel %vm5256, %v5320, %v6216
        %v6281 = vsel %vm5257, %v5321, %v6217
        %v6282 = vsel %vm5258, %v5322, %v6218
        %v6283 = vsel %vm5259, %v5323, %v6219
        %v6284 = vsel %vm5260, %v5324, %v6220
        %v6285 = vsel %vm5261, %v5325, %v6221
        %v6286 = vsel %vm5262, %v5326, %v6222
        %v6287 = vsel %vm5263, %v5327, %v6223
        %v6288 = vsel %vm5264, %v5328, %v6224
        %v6289 = vsel %vm5265, %v5329, %v6225
        %v6290 = vsel %vm5266, %v5330, %v6226
        %v6291 = vsel %vm5267, %v5331, %v6227
        %v6292 = vsel %vm5268, %v5332, %v6228
        %v6293 = vsel %vm5269, %v5333, %v6229
        %v6294 = vsel %vm5270, %v5334, %v6230
        %v6295 = vsel %vm5271, %v5335, %v6231
        %v6296 = vsel %vm5272, %v5336, %v6232
        %v6297 = vsel %vm5273, %v5337, %v6233
        %v6298 = vsel %vm5274, %v5338, %v6234
        %v6299 = vsel %vm5275, %v5339, %v6235
        %v6300 = vsel %vm5276, %v5340, %v6236
        %v6301 = vsel %vm5277, %v5341, %v6237
        %v6302 = vsel %vm5278, %v5342, %v6238
        %v6303 = vsel %vm5279, %v5343, %v6239
        %v6304 = vsel %vm5280, %v5344, %v6240
        %v6305 = vsel %vm5281, %v5345, %v6241
        %v6306 = vsel %vm5282, %v5346, %v6242
        %v6307 = vsel %vm5283, %v5347, %v6243
        %v6308 = vsel %vm5284, %v5348, %v6244
        %v6309 = vsel %vm5285, %v5349, %v6245
        %v6310 = vsel %vm5286, %v5350, %v6246
        %v6311 = vsel %vm5287, %v5351, %v6247
        %v6312 = vsel %vm5288, %v5352, %v6248
        %v6313 = vsel %vm5289, %v5353, %v6249
        %v6314 = vsel %vm5290, %v5354, %v6250
        %v6315 = vsel %vm5291, %v5355, %v6251
        %v6316 = vsel %vm5292, %v5356, %v6252
        %v6317 = vsel %vm5293, %v5357, %v6253
        %v6318 = vsel %vm5294, %v5358, %v6254
        %v6319 = vsel %vm5295, %v5359, %v6255
        %v6320 = vsel %vm5296, %v5360, %v6256
        %v6321 = vsel %vm5297, %v5361, %v6257
        %v6322 = vsel %vm5298, %v5362, %v6258
        %v6323 = vsel %vm5299, %v5363, %v6259
        %v6324 = vsel %vm5300, %v5364, %v6260
        %v6325 = vsel %vm5301, %v5365, %v6261
        %v6326 = vsel %vm5302, %v5366, %v6262
        %v6327 = vsel %vm5303, %v5367, %v6263
        %v6328 = vsel %vm5304, %v5368, %v6264
        %v6329 = vsel %vm5305, %v5369, %v6265
        %v6330 = vsel %vm5306, %v5370, %v6266
        %v6331 = vsel %vm5307, %v5371, %v6267
        %v6332 = vsel %vm5308, %v5372, %v6268
        %v6333 = vsel %vm5309, %v5373, %v6269
        %v6334 = vsel %vm5310, %v5374, %v6270
        %v6335 = vsel %vm5311, %v5375, %v6271
        %v6336 = vsel %vm5312, %v5376, %v6272
        %v6337 = vsel %vm5313, %v5377, %v6273
        %v6338 = vsel %vm5314, %v5378, %v6274
        %v6339 = vsel %vm5315, %v5379, %v6275
        %v6340 = vsel %vm5316, %v5380, %v6276
        %v6341 = vsel %vm5317, %v5381, %v6277
        %v6342 = vpack.c.bf16 %v6279, %v6278
        %v6343 = vpack.c.bf16 %v6281, %v6280
        %v6344 = vpack.c.bf16 %v6283, %v6282
        %v6345 = vpack.c.bf16 %v6285, %v6284
        %v6346 = vpack.c.bf16 %v6287, %v6286
        %v6347 = vpack.c.bf16 %v6289, %v6288
        %v6348 = vpack.c.bf16 %v6291, %v6290
        %v6349 = vpack.c.bf16 %v6293, %v6292
        %v6350 = vpack.c.bf16 %v6295, %v6294
        %v6351 = vpack.c.bf16 %v6297, %v6296
        %v6352 = vpack.c.bf16 %v6299, %v6298
        %v6353 = vpack.c.bf16 %v6301, %v6300
        %v6354 = vpack.c.bf16 %v6303, %v6302
        %v6355 = vpack.c.bf16 %v6305, %v6304
        %v6356 = vpack.c.bf16 %v6307, %v6306
        %v6357 = vpack.c.bf16 %v6309, %v6308
        %v6358 = vpack.c.bf16 %v6311, %v6310
        %v6359 = vpack.c.bf16 %v6313, %v6312
        %v6360 = vpack.c.bf16 %v6315, %v6314
        %v6361 = vpack.c.bf16 %v6317, %v6316
        %v6362 = vpack.c.bf16 %v6319, %v6318
        %v6363 = vpack.c.bf16 %v6321, %v6320
        %v6364 = vpack.c.bf16 %v6323, %v6322
        %v6365 = vpack.c.bf16 %v6325, %v6324
        %v6366 = vpack.c.bf16 %v6327, %v6326
        %v6367 = vpack.c.bf16 %v6329, %v6328
        %v6368 = vpack.c.bf16 %v6331, %v6330
        %v6369 = vpack.c.bf16 %v6333, %v6332
        %v6370 = vpack.c.bf16 %v6335, %v6334
        %v6371 = vpack.c.bf16 %v6337, %v6336
        %v6372 = vpack.c.bf16 %v6339, %v6338
        %v6373 = vpack.c.bf16 %v6341, %v6340
        %s6374 = scalar_lea.vmem %s3, 16
        %v6375 = vld [vmem:[%s6374] sm:$0xf]
        %v6376 = vld [vmem:[%s6374 + $0x4] sm:$0xf]
        %v6377 = vld [vmem:[%s6374 + $0x8] sm:$0xf]
        %v6378 = vld [vmem:[%s6374 + $0xc] sm:$0xf]
        %v6380 = vlaneseq
        %v6381 = vshrl.u32 %v6380, 7
        %v6382 = vsub.s32 0, %v6381
        %v6383 = vrot.slane %v3597, %v6382
        %v6389 = vunpack.c.l.b16 %v6375
        %v6390 = vunpack.c.l.b16 %v6376
        %v6391 = vunpack.c.l.b16 %v6377
        %v6392 = vunpack.c.l.b16 %v6378
        %v6393 = vpack.c.b16 %v6390, %v6389
        %v6394 = vpack.c.b16 %v6392, %v6391
        %v6398 = vsel %vm1553, %v6342, 0
        %v6401 = vsel %vm1553, %v6343, 0
        %v6404 = vsel %vm1553, %v6344, 0
        %v6407 = vsel %vm1553, %v6345, 0
        %v6410 = vsel %vm1553, %v6346, 0
        %v6413 = vsel %vm1553, %v6347, 0
        %v6416 = vsel %vm1553, %v6348, 0
        %v6419 = vsel %vm1553, %v6349, 0
        %v6422 = vsel %vm1553, %v6350, 0
        %v6425 = vsel %vm1553, %v6351, 0
        %v6428 = vsel %vm1553, %v6352, 0
        %v6431 = vsel %vm1553, %v6353, 0
        %v6434 = vsel %vm1553, %v6354, 0
        %v6437 = vsel %vm1553, %v6355, 0
        %v6440 = vsel %vm1553, %v6356, 0
        %v6443 = vsel %vm1553, %v6357, 0
        %v6446 = vsel %vm1553, %v6358, 0
        %v6449 = vsel %vm1553, %v6359, 0
        %v6452 = vsel %vm1553, %v6360, 0
        %v6455 = vsel %vm1553, %v6361, 0
        %v6458 = vsel %vm1553, %v6362, 0
        %v6461 = vsel %vm1553, %v6363, 0
        %v6464 = vsel %vm1553, %v6364, 0
        %v6467 = vsel %vm1553, %v6365, 0
        %v6470 = vsel %vm1553, %v6366, 0
        %v6473 = vsel %vm1553, %v6367, 0
        %v6476 = vsel %vm1553, %v6368, 0
        %v6479 = vsel %vm1553, %v6369, 0
        %v6482 = vsel %vm1553, %v6370, 0
        %v6485 = vsel %vm1553, %v6371, 0
        %v6488 = vsel %vm1553, %v6372, 0
        %v6491 = vsel %vm1553, %v6373, 0
        %6493 = vmatprep.subr.bf16.mxu0 0
        %6494 = vmatpush1.bf16.msra.mxu0 %v6393
        %6495 = vmatprep.subr.bf16.mxu0 0
        %6496 = vmatpush1.bf16.msra.mxu0 %v6394
        %6497 = vmatprep.subr.bf16.mxu0 0
        %6498 = vmatpush1.bf16.msra.mxu0 0
        %6499 = vmatprep.subr.bf16.mxu0 0
        %6500 = vmatpush1.bf16.msra.mxu0 0
        %6501 = vmatprep.subr.bf16.mxu0 0
        %6502 = vmatpush1.bf16.msra.mxu0 0
        %6503 = vmatprep.subr.bf16.mxu0 0
        %6504 = vmatpush1.bf16.msra.mxu0 0
        %6505 = vmatprep.subr.bf16.mxu0 0
        %6506 = vmatpush1.bf16.msra.mxu0 0
        %6507 = vmatprep.subr.bf16.mxu0 0
        %6508 = vmatpush1.bf16.msra.mxu0 0
        %6509 = vmatprep.subr.bf16.mxu0 0
        %6510 = vmatpush1.bf16.msra.mxu0 0
        %6511 = vmatprep.subr.bf16.mxu0 0
        %6512 = vmatpush1.bf16.msra.mxu0 0
        %6513 = vmatprep.subr.bf16.mxu0 0
        %6514 = vmatpush1.bf16.msra.mxu0 0
        %6515 = vmatprep.subr.bf16.mxu0 0
        %6516 = vmatpush1.bf16.msra.mxu0 0
        %6517 = vmatprep.subr.bf16.mxu0 0
        %6518 = vmatpush1.bf16.msra.mxu0 0
        %6519 = vmatprep.subr.bf16.mxu0 0
        %6520 = vmatpush1.bf16.msra.mxu0 0
        %6521 = vmatprep.subr.bf16.mxu0 0
        %6522 = vmatpush1.bf16.msra.mxu0 0
        %6523 = vmatprep.subr.bf16.mxu0 0
        %6524 = vmatpush1.bf16.msra.mxu0 0
        %6525 = vmatprep.mubr.bf16.mxu0 0
        %6526 = vmatmul.mubr.bf16.gmra.mrb[0].mxu0 %v6398
        %v6527 = vpop.f32.mrb[0].mxu0
        %v6528 = vadd.f32 %v6383, %v6527
        %v6529 = vpop.f32.mrb[0].mxu0
        %v6530 = vpop.f32.mrb[0].mxu0
        %v6531 = vadd.f32 %v6383, %v6530
        %v6532 = vpop.f32.mrb[0].mxu0
        %6533 = vmatprep.mubr.bf16.mxu0 0
        %6534 = vmatmul.mubr.bf16.gmra.mrb[0].mxu0 %v6401
        %v6535 = vpop.f32.mrb[0].mxu0
        %v6536 = vadd.f32 %v6383, %v6535
        %v6537 = vpop.f32.mrb[0].mxu0
        %v6538 = vpop.f32.mrb[0].mxu0
        %v6539 = vadd.f32 %v6383, %v6538
        %v6540 = vpop.f32.mrb[0].mxu0
        %6541 = vmatprep.mubr.bf16.mxu0 0
        %6542 = vmatmul.mubr.bf16.gmra.mrb[0].mxu0 %v6404
        %v6543 = vpop.f32.mrb[0].mxu0
        %v6544 = vadd.f32 %v6383, %v6543
        %v6545 = vpop.f32.mrb[0].mxu0
        %v6546 = vpop.f32.mrb[0].mxu0
        %v6547 = vadd.f32 %v6383, %v6546
        %v6548 = vpop.f32.mrb[0].mxu0
        %6549 = vmatprep.mubr.bf16.mxu0 0
        %6550 = vmatmul.mubr.bf16.gmra.mrb[0].mxu0 %v6407
        %v6551 = vpop.f32.mrb[0].mxu0
        %v6552 = vadd.f32 %v6383, %v6551
        %v6553 = vpop.f32.mrb[0].mxu0
        %v6554 = vpop.f32.mrb[0].mxu0
        %v6555 = vadd.f32 %v6383, %v6554
        %v6556 = vpop.f32.mrb[0].mxu0
        %6557 = vmatprep.mubr.bf16.mxu0 0
        %6558 = vmatmul.mubr.bf16.gmra.mrb[0].mxu0 %v6410
        %v6559 = vpop.f32.mrb[0].mxu0
        %v6560 = vadd.f32 %v6383, %v6559
        %v6561 = vpop.f32.mrb[0].mxu0
        %v6562 = vpop.f32.mrb[0].mxu0
        %v6563 = vadd.f32 %v6383, %v6562
        %v6564 = vpop.f32.mrb[0].mxu0
        %6565 = vmatprep.mubr.bf16.mxu0 0
        %6566 = vmatmul.mubr.bf16.gmra.mrb[0].mxu0 %v6413
        %v6567 = vpop.f32.mrb[0].mxu0
        %v6568 = vadd.f32 %v6383, %v6567
        %v6569 = vpop.f32.mrb[0].mxu0
        %v6570 = vpop.f32.mrb[0].mxu0
        %v6571 = vadd.f32 %v6383, %v6570
        %v6572 = vpop.f32.mrb[0].mxu0
        %6573 = vmatprep.mubr.bf16.mxu0 0
        %6574 = vmatmul.mubr.bf16.gmra.mrb[0].mxu0 %v6416
        %v6575 = vpop.f32.mrb[0].mxu0
        %v6576 = vadd.f32 %v6383, %v6575
        %v6577 = vpop.f32.mrb[0].mxu0
        %v6578 = vpop.f32.mrb[0].mxu0
        %v6579 = vadd.f32 %v6383, %v6578
        %v6580 = vpop.f32.mrb[0].mxu0
        %6581 = vmatprep.mubr.bf16.mxu0 0
        %6582 = vmatmul.mubr.bf16.gmra.mrb[0].mxu0 %v6419
        %v6583 = vpop.f32.mrb[0].mxu0
        %v6584 = vadd.f32 %v6383, %v6583
        %v6585 = vpop.f32.mrb[0].mxu0
        %v6586 = vpop.f32.mrb[0].mxu0
        %v6587 = vadd.f32 %v6383, %v6586
        %v6588 = vpop.f32.mrb[0].mxu0
        %6589 = vmatprep.mubr.bf16.mxu0 0
        %6590 = vmatmul.mubr.bf16.gmra.mrb[0].mxu0 %v6422
        %v6591 = vpop.f32.mrb[0].mxu0
        %v6592 = vadd.f32 %v6383, %v6591
        %v6593 = vpop.f32.mrb[0].mxu0
        %v6594 = vpop.f32.mrb[0].mxu0
        %v6595 = vadd.f32 %v6383, %v6594
        %v6596 = vpop.f32.mrb[0].mxu0
        %6597 = vmatprep.mubr.bf16.mxu0 0
        %6598 = vmatmul.mubr.bf16.gmra.mrb[0].mxu0 %v6425
        %v6599 = vpop.f32.mrb[0].mxu0
        %v6600 = vadd.f32 %v6383, %v6599
        %v6601 = vpop.f32.mrb[0].mxu0
        %v6602 = vpop.f32.mrb[0].mxu0
        %v6603 = vadd.f32 %v6383, %v6602
        %v6604 = vpop.f32.mrb[0].mxu0
        %6605 = vmatprep.mubr.bf16.mxu0 0
        %6606 = vmatmul.mubr.bf16.gmra.mrb[0].mxu0 %v6428
        %v6607 = vpop.f32.mrb[0].mxu0
        %v6608 = vadd.f32 %v6383, %v6607
        %v6609 = vpop.f32.mrb[0].mxu0
        %v6610 = vpop.f32.mrb[0].mxu0
        %v6611 = vadd.f32 %v6383, %v6610
        %v6612 = vpop.f32.mrb[0].mxu0
        %6613 = vmatprep.mubr.bf16.mxu0 0
        %6614 = vmatmul.mubr.bf16.gmra.mrb[0].mxu0 %v6431
        %v6615 = vpop.f32.mrb[0].mxu0
        %v6616 = vadd.f32 %v6383, %v6615
        %v6617 = vpop.f32.mrb[0].mxu0
        %v6618 = vpop.f32.mrb[0].mxu0
        %v6619 = vadd.f32 %v6383, %v6618
        %v6620 = vpop.f32.mrb[0].mxu0
        %6621 = vmatprep.mubr.bf16.mxu0 0
        %6622 = vmatmul.mubr.bf16.gmra.mrb[0].mxu0 %v6434
        %v6623 = vpop.f32.mrb[0].mxu0
        %v6624 = vadd.f32 %v6383, %v6623
        %v6625 = vpop.f32.mrb[0].mxu0
        %v6626 = vpop.f32.mrb[0].mxu0
        %v6627 = vadd.f32 %v6383, %v6626
        %v6628 = vpop.f32.mrb[0].mxu0
        %6629 = vmatprep.mubr.bf16.mxu0 0
        %6630 = vmatmul.mubr.bf16.gmra.mrb[0].mxu0 %v6437
        %v6631 = vpop.f32.mrb[0].mxu0
        %v6632 = vadd.f32 %v6383, %v6631
        %v6633 = vpop.f32.mrb[0].mxu0
        %v6634 = vpop.f32.mrb[0].mxu0
        %v6635 = vadd.f32 %v6383, %v6634
        %v6636 = vpop.f32.mrb[0].mxu0
        %6637 = vmatprep.mubr.bf16.mxu0 0
        %6638 = vmatmul.mubr.bf16.gmra.mrb[0].mxu0 %v6440
        %v6639 = vpop.f32.mrb[0].mxu0
        %v6640 = vadd.f32 %v6383, %v6639
        %v6641 = vpop.f32.mrb[0].mxu0
        %v6642 = vpop.f32.mrb[0].mxu0
        %v6643 = vadd.f32 %v6383, %v6642
        %v6644 = vpop.f32.mrb[0].mxu0
        %6645 = vmatprep.mubr.bf16.mxu0 0
        %6646 = vmatmul.mubr.bf16.gmra.mrb[0].mxu0 %v6443
        %v6647 = vpop.f32.mrb[0].mxu0
        %v6648 = vadd.f32 %v6383, %v6647
        %v6649 = vpop.f32.mrb[0].mxu0
        %v6650 = vpop.f32.mrb[0].mxu0
        %v6651 = vadd.f32 %v6383, %v6650
        %v6652 = vpop.f32.mrb[0].mxu0
        %6653 = vmatprep.mubr.bf16.mxu0 0
        %6654 = vmatmul.mubr.bf16.gmra.mrb[0].mxu0 %v6446
        %v6655 = vpop.f32.mrb[0].mxu0
        %v6656 = vadd.f32 %v6383, %v6655
        %v6657 = vpop.f32.mrb[0].mxu0
        %v6658 = vpop.f32.mrb[0].mxu0
        %v6659 = vadd.f32 %v6383, %v6658
        %v6660 = vpop.f32.mrb[0].mxu0
        %6661 = vmatprep.mubr.bf16.mxu0 0
        %6662 = vmatmul.mubr.bf16.gmra.mrb[0].mxu0 %v6449
        %v6663 = vpop.f32.mrb[0].mxu0
        %v6664 = vadd.f32 %v6383, %v6663
        %v6665 = vpop.f32.mrb[0].mxu0
        %v6666 = vpop.f32.mrb[0].mxu0
        %v6667 = vadd.f32 %v6383, %v6666
        %v6668 = vpop.f32.mrb[0].mxu0
        %6669 = vmatprep.mubr.bf16.mxu0 0
        %6670 = vmatmul.mubr.bf16.gmra.mrb[0].mxu0 %v6452
        %v6671 = vpop.f32.mrb[0].mxu0
        %v6672 = vadd.f32 %v6383, %v6671
        %v6673 = vpop.f32.mrb[0].mxu0
        %v6674 = vpop.f32.mrb[0].mxu0
        %v6675 = vadd.f32 %v6383, %v6674
        %v6676 = vpop.f32.mrb[0].mxu0
        %6677 = vmatprep.mubr.bf16.mxu0 0
        %6678 = vmatmul.mubr.bf16.gmra.mrb[0].mxu0 %v6455
        %v6679 = vpop.f32.mrb[0].mxu0
        %v6680 = vadd.f32 %v6383, %v6679
        %v6681 = vpop.f32.mrb[0].mxu0
        %v6682 = vpop.f32.mrb[0].mxu0
        %v6683 = vadd.f32 %v6383, %v6682
        %v6684 = vpop.f32.mrb[0].mxu0
        %6685 = vmatprep.mubr.bf16.mxu0 0
        %6686 = vmatmul.mubr.bf16.gmra.mrb[0].mxu0 %v6458
        %v6687 = vpop.f32.mrb[0].mxu0
        %v6688 = vadd.f32 %v6383, %v6687
        %v6689 = vpop.f32.mrb[0].mxu0
        %v6690 = vpop.f32.mrb[0].mxu0
        %v6691 = vadd.f32 %v6383, %v6690
        %v6692 = vpop.f32.mrb[0].mxu0
        %6693 = vmatprep.mubr.bf16.mxu0 0
        %6694 = vmatmul.mubr.bf16.gmra.mrb[0].mxu0 %v6461
        %v6695 = vpop.f32.mrb[0].mxu0
        %v6696 = vadd.f32 %v6383, %v6695
        %v6697 = vpop.f32.mrb[0].mxu0
        %v6698 = vpop.f32.mrb[0].mxu0
        %v6699 = vadd.f32 %v6383, %v6698
        %v6700 = vpop.f32.mrb[0].mxu0
        %6701 = vmatprep.mubr.bf16.mxu0 0
        %6702 = vmatmul.mubr.bf16.gmra.mrb[0].mxu0 %v6464
        %v6703 = vpop.f32.mrb[0].mxu0
        %v6704 = vadd.f32 %v6383, %v6703
        %v6705 = vpop.f32.mrb[0].mxu0
        %v6706 = vpop.f32.mrb[0].mxu0
        %v6707 = vadd.f32 %v6383, %v6706
        %v6708 = vpop.f32.mrb[0].mxu0
        %6709 = vmatprep.mubr.bf16.mxu0 0
        %6710 = vmatmul.mubr.bf16.gmra.mrb[0].mxu0 %v6467
        %v6711 = vpop.f32.mrb[0].mxu0
        %v6712 = vadd.f32 %v6383, %v6711
        %v6713 = vpop.f32.mrb[0].mxu0
        %v6714 = vpop.f32.mrb[0].mxu0
        %v6715 = vadd.f32 %v6383, %v6714
        %v6716 = vpop.f32.mrb[0].mxu0
        %6717 = vmatprep.mubr.bf16.mxu0 0
        %6718 = vmatmul.mubr.bf16.gmra.mrb[0].mxu0 %v6470
        %v6719 = vpop.f32.mrb[0].mxu0
        %v6720 = vadd.f32 %v6383, %v6719
        %v6721 = vpop.f32.mrb[0].mxu0
        %v6722 = vpop.f32.mrb[0].mxu0
        %v6723 = vadd.f32 %v6383, %v6722
        %v6724 = vpop.f32.mrb[0].mxu0
        %6725 = vmatprep.mubr.bf16.mxu0 0
        %6726 = vmatmul.mubr.bf16.gmra.mrb[0].mxu0 %v6473
        %v6727 = vpop.f32.mrb[0].mxu0
        %v6728 = vadd.f32 %v6383, %v6727
        %v6729 = vpop.f32.mrb[0].mxu0
        %v6730 = vpop.f32.mrb[0].mxu0
        %v6731 = vadd.f32 %v6383, %v6730
        %v6732 = vpop.f32.mrb[0].mxu0
        %6733 = vmatprep.mubr.bf16.mxu0 0
        %6734 = vmatmul.mubr.bf16.gmra.mrb[0].mxu0 %v6476
        %v6735 = vpop.f32.mrb[0].mxu0
        %v6736 = vadd.f32 %v6383, %v6735
        %v6737 = vpop.f32.mrb[0].mxu0
        %v6738 = vpop.f32.mrb[0].mxu0
        %v6739 = vadd.f32 %v6383, %v6738
        %v6740 = vpop.f32.mrb[0].mxu0
        %6741 = vmatprep.mubr.bf16.mxu0 0
        %6742 = vmatmul.mubr.bf16.gmra.mrb[0].mxu0 %v6479
        %v6743 = vpop.f32.mrb[0].mxu0
        %v6744 = vadd.f32 %v6383, %v6743
        %v6745 = vpop.f32.mrb[0].mxu0
        %v6746 = vpop.f32.mrb[0].mxu0
        %v6747 = vadd.f32 %v6383, %v6746
        %v6748 = vpop.f32.mrb[0].mxu0
        %6749 = vmatprep.mubr.bf16.mxu0 0
        %6750 = vmatmul.mubr.bf16.gmra.mrb[0].mxu0 %v6482
        %v6751 = vpop.f32.mrb[0].mxu0
        %v6752 = vadd.f32 %v6383, %v6751
        %v6753 = vpop.f32.mrb[0].mxu0
        %v6754 = vpop.f32.mrb[0].mxu0
        %v6755 = vadd.f32 %v6383, %v6754
        %v6756 = vpop.f32.mrb[0].mxu0
        %6757 = vmatprep.mubr.bf16.mxu0 0
        %6758 = vmatmul.mubr.bf16.gmra.mrb[0].mxu0 %v6485
        %v6759 = vpop.f32.mrb[0].mxu0
        %v6760 = vadd.f32 %v6383, %v6759
        %v6761 = vpop.f32.mrb[0].mxu0
        %v6762 = vpop.f32.mrb[0].mxu0
        %v6763 = vadd.f32 %v6383, %v6762
        %v6764 = vpop.f32.mrb[0].mxu0
        %6765 = vmatprep.mubr.bf16.mxu0 0
        %6766 = vmatmul.mubr.bf16.gmra.mrb[0].mxu0 %v6488
        %v6767 = vpop.f32.mrb[0].mxu0
        %v6768 = vadd.f32 %v6383, %v6767
        %v6769 = vpop.f32.mrb[0].mxu0
        %v6770 = vpop.f32.mrb[0].mxu0
        %v6771 = vadd.f32 %v6383, %v6770
        %v6772 = vpop.f32.mrb[0].mxu0
        %6773 = vmatprep.mubr.bf16.mxu0 0
        %6774 = vmatmul.mubr.bf16.gmra.mrb[0].mxu0 %v6491
        %v6775 = vpop.f32.mrb[0].mxu0
        %v6776 = vadd.f32 %v6383, %v6775
        %v6777 = vpop.f32.mrb[0].mxu0
        %v6778 = vpop.f32.mrb[0].mxu0
        %v6779 = vadd.f32 %v6383, %v6778
        %v6780 = vpop.f32.mrb[0].mxu0
        %6781 = vdwg.mxu0
        %v6782 = vadd.f32 %v3530, %v6528
        %v6783 = vadd.f32 %v3531, %v6531
        %v6784 = vadd.f32 %v3532, %v6536
        %v6785 = vadd.f32 %v3533, %v6539
        %v6786 = vadd.f32 %v3534, %v6544
        %v6787 = vadd.f32 %v3535, %v6547
        %v6788 = vadd.f32 %v3536, %v6552
        %v6789 = vadd.f32 %v3537, %v6555
        %v6790 = vadd.f32 %v3538, %v6560
        %v6791 = vadd.f32 %v3539, %v6563
        %v6792 = vadd.f32 %v3540, %v6568
        %v6793 = vadd.f32 %v3541, %v6571
        %v6794 = vadd.f32 %v3542, %v6576
        %v6795 = vadd.f32 %v3543, %v6579
        %v6796 = vadd.f32 %v3544, %v6584
        %v6797 = vadd.f32 %v3545, %v6587
        %v6798 = vadd.f32 %v3546, %v6592
        %v6799 = vadd.f32 %v3547, %v6595
        %v6800 = vadd.f32 %v3548, %v6600
        %v6801 = vadd.f32 %v3549, %v6603
        %v6802 = vadd.f32 %v3550, %v6608
        %v6803 = vadd.f32 %v3551, %v6611
        %v6804 = vadd.f32 %v3552, %v6616
        %v6805 = vadd.f32 %v3553, %v6619
        %v6806 = vadd.f32 %v3554, %v6624
        %v6807 = vadd.f32 %v3555, %v6627
        %v6808 = vadd.f32 %v3556, %v6632
        %v6809 = vadd.f32 %v3557, %v6635
        %v6810 = vadd.f32 %v3558, %v6640
        %v6811 = vadd.f32 %v3559, %v6643
        %v6812 = vadd.f32 %v3560, %v6648
        %v6813 = vadd.f32 %v3561, %v6651
        %v6814 = vadd.f32 %v3562, %v6656
        %v6815 = vadd.f32 %v3563, %v6659
        %v6816 = vadd.f32 %v3564, %v6664
        %v6817 = vadd.f32 %v3565, %v6667
        %v6818 = vadd.f32 %v3566, %v6672
        %v6819 = vadd.f32 %v3567, %v6675
        %v6820 = vadd.f32 %v3568, %v6680
        %v6821 = vadd.f32 %v3569, %v6683
        %v6822 = vadd.f32 %v3570, %v6688
        %v6823 = vadd.f32 %v3571, %v6691
        %v6824 = vadd.f32 %v3572, %v6696
        %v6825 = vadd.f32 %v3573, %v6699
        %v6826 = vadd.f32 %v3574, %v6704
        %v6827 = vadd.f32 %v3575, %v6707
        %v6828 = vadd.f32 %v3576, %v6712
        %v6829 = vadd.f32 %v3577, %v6715
        %v6830 = vadd.f32 %v3578, %v6720
        %v6831 = vadd.f32 %v3579, %v6723
        %v6832 = vadd.f32 %v3580, %v6728
        %v6833 = vadd.f32 %v3581, %v6731
        %v6834 = vadd.f32 %v3582, %v6736
        %v6835 = vadd.f32 %v3583, %v6739
        %v6836 = vadd.f32 %v3584, %v6744
        %v6837 = vadd.f32 %v3585, %v6747
        %v6838 = vadd.f32 %v3586, %v6752
        %v6839 = vadd.f32 %v3587, %v6755
        %v6840 = vadd.f32 %v3588, %v6760
        %v6841 = vadd.f32 %v3589, %v6763
        %v6842 = vadd.f32 %v3590, %v6768
        %v6843 = vadd.f32 %v3591, %v6771
        %v6844 = vadd.f32 %v3592, %v6776
        %v6845 = vadd.f32 %v3593, %v6779
        %v6846 = vpack.c.bf16 %v6783, %v6782
        %v6847 = vpack.c.bf16 %v6785, %v6784
        %v6848 = vpack.c.bf16 %v6787, %v6786
        %v6849 = vpack.c.bf16 %v6789, %v6788
        %v6850 = vpack.c.bf16 %v6791, %v6790
        %v6851 = vpack.c.bf16 %v6793, %v6792
        %v6852 = vpack.c.bf16 %v6795, %v6794
        %v6853 = vpack.c.bf16 %v6797, %v6796
        %v6854 = vpack.c.bf16 %v6799, %v6798
        %v6855 = vpack.c.bf16 %v6801, %v6800
        %v6856 = vpack.c.bf16 %v6803, %v6802
        %v6857 = vpack.c.bf16 %v6805, %v6804
        %v6858 = vpack.c.bf16 %v6807, %v6806
        %v6859 = vpack.c.bf16 %v6809, %v6808
        %v6860 = vpack.c.bf16 %v6811, %v6810
        %v6861 = vpack.c.bf16 %v6813, %v6812
        %v6862 = vpack.c.bf16 %v6815, %v6814
        %v6863 = vpack.c.bf16 %v6817, %v6816
        %v6864 = vpack.c.bf16 %v6819, %v6818
        %v6865 = vpack.c.bf16 %v6821, %v6820
        %v6866 = vpack.c.bf16 %v6823, %v6822
        %v6867 = vpack.c.bf16 %v6825, %v6824
        %v6868 = vpack.c.bf16 %v6827, %v6826
        %v6869 = vpack.c.bf16 %v6829, %v6828
        %v6870 = vpack.c.bf16 %v6831, %v6830
        %v6871 = vpack.c.bf16 %v6833, %v6832
        %v6872 = vpack.c.bf16 %v6835, %v6834
        %v6873 = vpack.c.bf16 %v6837, %v6836
        %v6874 = vpack.c.bf16 %v6839, %v6838
        %v6875 = vpack.c.bf16 %v6841, %v6840
        %v6876 = vpack.c.bf16 %v6843, %v6842
        %v6877 = vpack.c.bf16 %v6845, %v6844
        %v6878 = vld [vmem:[%s5] sm:$0xf]
        %v6879 = vld [vmem:[%s5 + $0x4] sm:$0xf]
        %v6880 = vld [vmem:[%s5 + $0x8] sm:$0xf]
        %v6881 = vld [vmem:[%s5 + $0xc] sm:$0xf]
        %v6882 = vld [vmem:[%s6] sm:$0x1]
        %v6884 = vlaneseq
        %v6885 = vshrl.u32 %v6884, 7
        %v6886 = vsub.s32 0, %v6885
        %v6887 = vrot.slane %v6882, %v6886
        %v6893 = vunpack.c.l.b16 %v6878
        %v6894 = vunpack.c.l.b16 %v6879
        %v6895 = vunpack.c.l.b16 %v6880
        %v6896 = vunpack.c.l.b16 %v6881
        %v6897 = vpack.c.b16 %v6894, %v6893
        %v6898 = vpack.c.b16 %v6896, %v6895
        %v6902 = vsel %vm1553, %v6846, 0
        %v6905 = vsel %vm1553, %v6847, 0
        %v6908 = vsel %vm1553, %v6848, 0
        %v6911 = vsel %vm1553, %v6849, 0
        %v6914 = vsel %vm1553, %v6850, 0
        %v6917 = vsel %vm1553, %v6851, 0
        %v6920 = vsel %vm1553, %v6852, 0
        %v6923 = vsel %vm1553, %v6853, 0
        %v6926 = vsel %vm1553, %v6854, 0
        %v6929 = vsel %vm1553, %v6855, 0
        %v6932 = vsel %vm1553, %v6856, 0
        %v6935 = vsel %vm1553, %v6857, 0
        %v6938 = vsel %vm1553, %v6858, 0
        %v6941 = vsel %vm1553, %v6859, 0
        %v6944 = vsel %vm1553, %v6860, 0
        %v6947 = vsel %vm1553, %v6861, 0
        %v6950 = vsel %vm1553, %v6862, 0
        %v6953 = vsel %vm1553, %v6863, 0
        %v6956 = vsel %vm1553, %v6864, 0
        %v6959 = vsel %vm1553, %v6865, 0
        %v6962 = vsel %vm1553, %v6866, 0
        %v6965 = vsel %vm1553, %v6867, 0
        %v6968 = vsel %vm1553, %v6868, 0
        %v6971 = vsel %vm1553, %v6869, 0
        %v6974 = vsel %vm1553, %v6870, 0
        %v6977 = vsel %vm1553, %v6871, 0
        %v6980 = vsel %vm1553, %v6872, 0
        %v6983 = vsel %vm1553, %v6873, 0
        %v6986 = vsel %vm1553, %v6874, 0
        %v6989 = vsel %vm1553, %v6875, 0
        %v6992 = vsel %vm1553, %v6876, 0
        %v6995 = vsel %vm1553, %v6877, 0
        %6997 = vmatprep.subr.bf16.mxu0 0
        %6998 = vmatpush1.bf16.msra.mxu0 %v6897
        %6999 = vmatprep.subr.bf16.mxu0 0
        %7000 = vmatpush1.bf16.msra.mxu0 %v6898
        %7001 = vmatprep.subr.bf16.mxu0 0
        %7002 = vmatpush1.bf16.msra.mxu0 0
        %7003 = vmatprep.subr.bf16.mxu0 0
        %7004 = vmatpush1.bf16.msra.mxu0 0
        %7005 = vmatprep.subr.bf16.mxu0 0
        %7006 = vmatpush1.bf16.msra.mxu0 0
        %7007 = vmatprep.subr.bf16.mxu0 0
        %7008 = vmatpush1.bf16.msra.mxu0 0
        %7009 = vmatprep.subr.bf16.mxu0 0
        %7010 = vmatpush1.bf16.msra.mxu0 0
        %7011 = vmatprep.subr.bf16.mxu0 0
        %7012 = vmatpush1.bf16.msra.mxu0 0
        %7013 = vmatprep.subr.bf16.mxu0 0
        %7014 = vmatpush1.bf16.msra.mxu0 0
        %7015 = vmatprep.subr.bf16.mxu0 0
        %7016 = vmatpush1.bf16.msra.mxu0 0
        %7017 = vmatprep.subr.bf16.mxu0 0
        %7018 = vmatpush1.bf16.msra.mxu0 0
        %7019 = vmatprep.subr.bf16.mxu0 0
        %7020 = vmatpush1.bf16.msra.mxu0 0
        %7021 = vmatprep.subr.bf16.mxu0 0
        %7022 = vmatpush1.bf16.msra.mxu0 0
        %7023 = vmatprep.subr.bf16.mxu0 0
        %7024 = vmatpush1.bf16.msra.mxu0 0
        %7025 = vmatprep.subr.bf16.mxu0 0
        %7026 = vmatpush1.bf16.msra.mxu0 0
        %7027 = vmatprep.subr.bf16.mxu0 0
        %7028 = vmatpush1.bf16.msra.mxu0 0
        %7029 = vmatprep.mubr.bf16.mxu0 0
        %7030 = vmatmul.mubr.bf16.gmra.mrb[0].mxu0 %v6902
        %v7031 = vpop.f32.mrb[0].mxu0
        %v7032 = vadd.f32 %v6887, %v7031
        %v7033 = vpop.f32.mrb[0].mxu0
        %v7034 = vpop.f32.mrb[0].mxu0
        %v7035 = vadd.f32 %v6887, %v7034
        %v7036 = vpop.f32.mrb[0].mxu0
        %7037 = vmatprep.mubr.bf16.mxu0 0
        %7038 = vmatmul.mubr.bf16.gmra.mrb[0].mxu0 %v6905
        %v7039 = vpop.f32.mrb[0].mxu0
        %v7040 = vadd.f32 %v6887, %v7039
        %v7041 = vpop.f32.mrb[0].mxu0
        %v7042 = vpop.f32.mrb[0].mxu0
        %v7043 = vadd.f32 %v6887, %v7042
        %v7044 = vpop.f32.mrb[0].mxu0
        %7045 = vmatprep.mubr.bf16.mxu0 0
        %7046 = vmatmul.mubr.bf16.gmra.mrb[0].mxu0 %v6908
        %v7047 = vpop.f32.mrb[0].mxu0
        %v7048 = vadd.f32 %v6887, %v7047
        %v7049 = vpop.f32.mrb[0].mxu0
        %v7050 = vpop.f32.mrb[0].mxu0
        %v7051 = vadd.f32 %v6887, %v7050
        %v7052 = vpop.f32.mrb[0].mxu0
        %7053 = vmatprep.mubr.bf16.mxu0 0
        %7054 = vmatmul.mubr.bf16.gmra.mrb[0].mxu0 %v6911
        %v7055 = vpop.f32.mrb[0].mxu0
        %v7056 = vadd.f32 %v6887, %v7055
        %v7057 = vpop.f32.mrb[0].mxu0
        %v7058 = vpop.f32.mrb[0].mxu0
        %v7059 = vadd.f32 %v6887, %v7058
        %v7060 = vpop.f32.mrb[0].mxu0
        %7061 = vmatprep.mubr.bf16.mxu0 0
        %7062 = vmatmul.mubr.bf16.gmra.mrb[0].mxu0 %v6914
        %v7063 = vpop.f32.mrb[0].mxu0
        %v7064 = vadd.f32 %v6887, %v7063
        %v7065 = vpop.f32.mrb[0].mxu0
        %v7066 = vpop.f32.mrb[0].mxu0
        %v7067 = vadd.f32 %v6887, %v7066
        %v7068 = vpop.f32.mrb[0].mxu0
        %7069 = vmatprep.mubr.bf16.mxu0 0
        %7070 = vmatmul.mubr.bf16.gmra.mrb[0].mxu0 %v6917
        %v7071 = vpop.f32.mrb[0].mxu0
        %v7072 = vadd.f32 %v6887, %v7071
        %v7073 = vpop.f32.mrb[0].mxu0
        %v7074 = vpop.f32.mrb[0].mxu0
        %v7075 = vadd.f32 %v6887, %v7074
        %v7076 = vpop.f32.mrb[0].mxu0
        %7077 = vmatprep.mubr.bf16.mxu0 0
        %7078 = vmatmul.mubr.bf16.gmra.mrb[0].mxu0 %v6920
        %v7079 = vpop.f32.mrb[0].mxu0
        %v7080 = vadd.f32 %v6887, %v7079
        %v7081 = vpop.f32.mrb[0].mxu0
        %v7082 = vpop.f32.mrb[0].mxu0
        %v7083 = vadd.f32 %v6887, %v7082
        %v7084 = vpop.f32.mrb[0].mxu0
        %7085 = vmatprep.mubr.bf16.mxu0 0
        %7086 = vmatmul.mubr.bf16.gmra.mrb[0].mxu0 %v6923
        %v7087 = vpop.f32.mrb[0].mxu0
        %v7088 = vadd.f32 %v6887, %v7087
        %v7089 = vpop.f32.mrb[0].mxu0
        %v7090 = vpop.f32.mrb[0].mxu0
        %v7091 = vadd.f32 %v6887, %v7090
        %v7092 = vpop.f32.mrb[0].mxu0
        %7093 = vmatprep.mubr.bf16.mxu0 0
        %7094 = vmatmul.mubr.bf16.gmra.mrb[0].mxu0 %v6926
        %v7095 = vpop.f32.mrb[0].mxu0
        %v7096 = vadd.f32 %v6887, %v7095
        %v7097 = vpop.f32.mrb[0].mxu0
        %v7098 = vpop.f32.mrb[0].mxu0
        %v7099 = vadd.f32 %v6887, %v7098
        %v7100 = vpop.f32.mrb[0].mxu0
        %7101 = vmatprep.mubr.bf16.mxu0 0
        %7102 = vmatmul.mubr.bf16.gmra.mrb[0].mxu0 %v6929
        %v7103 = vpop.f32.mrb[0].mxu0
        %v7104 = vadd.f32 %v6887, %v7103
        %v7105 = vpop.f32.mrb[0].mxu0
        %v7106 = vpop.f32.mrb[0].mxu0
        %v7107 = vadd.f32 %v6887, %v7106
        %v7108 = vpop.f32.mrb[0].mxu0
        %7109 = vmatprep.mubr.bf16.mxu0 0
        %7110 = vmatmul.mubr.bf16.gmra.mrb[0].mxu0 %v6932
        %v7111 = vpop.f32.mrb[0].mxu0
        %v7112 = vadd.f32 %v6887, %v7111
        %v7113 = vpop.f32.mrb[0].mxu0
        %v7114 = vpop.f32.mrb[0].mxu0
        %v7115 = vadd.f32 %v6887, %v7114
        %v7116 = vpop.f32.mrb[0].mxu0
        %7117 = vmatprep.mubr.bf16.mxu0 0
        %7118 = vmatmul.mubr.bf16.gmra.mrb[0].mxu0 %v6935
        %v7119 = vpop.f32.mrb[0].mxu0
        %v7120 = vadd.f32 %v6887, %v7119
        %v7121 = vpop.f32.mrb[0].mxu0
        %v7122 = vpop.f32.mrb[0].mxu0
        %v7123 = vadd.f32 %v6887, %v7122
        %v7124 = vpop.f32.mrb[0].mxu0
        %7125 = vmatprep.mubr.bf16.mxu0 0
        %7126 = vmatmul.mubr.bf16.gmra.mrb[0].mxu0 %v6938
        %v7127 = vpop.f32.mrb[0].mxu0
        %v7128 = vadd.f32 %v6887, %v7127
        %v7129 = vpop.f32.mrb[0].mxu0
        %v7130 = vpop.f32.mrb[0].mxu0
        %v7131 = vadd.f32 %v6887, %v7130
        %v7132 = vpop.f32.mrb[0].mxu0
        %7133 = vmatprep.mubr.bf16.mxu0 0
        %7134 = vmatmul.mubr.bf16.gmra.mrb[0].mxu0 %v6941
        %v7135 = vpop.f32.mrb[0].mxu0
        %v7136 = vadd.f32 %v6887, %v7135
        %v7137 = vpop.f32.mrb[0].mxu0
        %v7138 = vpop.f32.mrb[0].mxu0
        %v7139 = vadd.f32 %v6887, %v7138
        %v7140 = vpop.f32.mrb[0].mxu0
        %7141 = vmatprep.mubr.bf16.mxu0 0
        %7142 = vmatmul.mubr.bf16.gmra.mrb[0].mxu0 %v6944
        %v7143 = vpop.f32.mrb[0].mxu0
        %v7144 = vadd.f32 %v6887, %v7143
        %v7145 = vpop.f32.mrb[0].mxu0
        %v7146 = vpop.f32.mrb[0].mxu0
        %v7147 = vadd.f32 %v6887, %v7146
        %v7148 = vpop.f32.mrb[0].mxu0
        %7149 = vmatprep.mubr.bf16.mxu0 0
        %7150 = vmatmul.mubr.bf16.gmra.mrb[0].mxu0 %v6947
        %v7151 = vpop.f32.mrb[0].mxu0
        %v7152 = vadd.f32 %v6887, %v7151
        %v7153 = vpop.f32.mrb[0].mxu0
        %v7154 = vpop.f32.mrb[0].mxu0
        %v7155 = vadd.f32 %v6887, %v7154
        %v7156 = vpop.f32.mrb[0].mxu0
        %7157 = vmatprep.mubr.bf16.mxu0 0
        %7158 = vmatmul.mubr.bf16.gmra.mrb[0].mxu0 %v6950
        %v7159 = vpop.f32.mrb[0].mxu0
        %v7160 = vadd.f32 %v6887, %v7159
        %v7161 = vpop.f32.mrb[0].mxu0
        %v7162 = vpop.f32.mrb[0].mxu0
        %v7163 = vadd.f32 %v6887, %v7162
        %v7164 = vpop.f32.mrb[0].mxu0
        %7165 = vmatprep.mubr.bf16.mxu0 0
        %7166 = vmatmul.mubr.bf16.gmra.mrb[0].mxu0 %v6953
        %v7167 = vpop.f32.mrb[0].mxu0
        %v7168 = vadd.f32 %v6887, %v7167
        %v7169 = vpop.f32.mrb[0].mxu0
        %v7170 = vpop.f32.mrb[0].mxu0
        %v7171 = vadd.f32 %v6887, %v7170
        %v7172 = vpop.f32.mrb[0].mxu0
        %7173 = vmatprep.mubr.bf16.mxu0 0
        %7174 = vmatmul.mubr.bf16.gmra.mrb[0].mxu0 %v6956
        %v7175 = vpop.f32.mrb[0].mxu0
        %v7176 = vadd.f32 %v6887, %v7175
        %v7177 = vpop.f32.mrb[0].mxu0
        %v7178 = vpop.f32.mrb[0].mxu0
        %v7179 = vadd.f32 %v6887, %v7178
        %v7180 = vpop.f32.mrb[0].mxu0
        %7181 = vmatprep.mubr.bf16.mxu0 0
        %7182 = vmatmul.mubr.bf16.gmra.mrb[0].mxu0 %v6959
        %v7183 = vpop.f32.mrb[0].mxu0
        %v7184 = vadd.f32 %v6887, %v7183
        %v7185 = vpop.f32.mrb[0].mxu0
        %v7186 = vpop.f32.mrb[0].mxu0
        %v7187 = vadd.f32 %v6887, %v7186
        %v7188 = vpop.f32.mrb[0].mxu0
        %7189 = vmatprep.mubr.bf16.mxu0 0
        %7190 = vmatmul.mubr.bf16.gmra.mrb[0].mxu0 %v6962
        %v7191 = vpop.f32.mrb[0].mxu0
        %v7192 = vadd.f32 %v6887, %v7191
        %v7193 = vpop.f32.mrb[0].mxu0
        %v7194 = vpop.f32.mrb[0].mxu0
        %v7195 = vadd.f32 %v6887, %v7194
        %v7196 = vpop.f32.mrb[0].mxu0
        %7197 = vmatprep.mubr.bf16.mxu0 0
        %7198 = vmatmul.mubr.bf16.gmra.mrb[0].mxu0 %v6965
        %v7199 = vpop.f32.mrb[0].mxu0
        %v7200 = vadd.f32 %v6887, %v7199
        %v7201 = vpop.f32.mrb[0].mxu0
        %v7202 = vpop.f32.mrb[0].mxu0
        %v7203 = vadd.f32 %v6887, %v7202
        %v7204 = vpop.f32.mrb[0].mxu0
        %7205 = vmatprep.mubr.bf16.mxu0 0
        %7206 = vmatmul.mubr.bf16.gmra.mrb[0].mxu0 %v6968
        %v7207 = vpop.f32.mrb[0].mxu0
        %v7208 = vadd.f32 %v6887, %v7207
        %v7209 = vpop.f32.mrb[0].mxu0
        %v7210 = vpop.f32.mrb[0].mxu0
        %v7211 = vadd.f32 %v6887, %v7210
        %v7212 = vpop.f32.mrb[0].mxu0
        %7213 = vmatprep.mubr.bf16.mxu0 0
        %7214 = vmatmul.mubr.bf16.gmra.mrb[0].mxu0 %v6971
        %v7215 = vpop.f32.mrb[0].mxu0
        %v7216 = vadd.f32 %v6887, %v7215
        %v7217 = vpop.f32.mrb[0].mxu0
        %v7218 = vpop.f32.mrb[0].mxu0
        %v7219 = vadd.f32 %v6887, %v7218
        %v7220 = vpop.f32.mrb[0].mxu0
        %7221 = vmatprep.mubr.bf16.mxu0 0
        %7222 = vmatmul.mubr.bf16.gmra.mrb[0].mxu0 %v6974
        %v7223 = vpop.f32.mrb[0].mxu0
        %v7224 = vadd.f32 %v6887, %v7223
        %v7225 = vpop.f32.mrb[0].mxu0
        %v7226 = vpop.f32.mrb[0].mxu0
        %v7227 = vadd.f32 %v6887, %v7226
        %v7228 = vpop.f32.mrb[0].mxu0
        %7229 = vmatprep.mubr.bf16.mxu0 0
        %7230 = vmatmul.mubr.bf16.gmra.mrb[0].mxu0 %v6977
        %v7231 = vpop.f32.mrb[0].mxu0
        %v7232 = vadd.f32 %v6887, %v7231
        %v7233 = vpop.f32.mrb[0].mxu0
        %v7234 = vpop.f32.mrb[0].mxu0
        %v7235 = vadd.f32 %v6887, %v7234
        %v7236 = vpop.f32.mrb[0].mxu0
        %7237 = vmatprep.mubr.bf16.mxu0 0
        %7238 = vmatmul.mubr.bf16.gmra.mrb[0].mxu0 %v6980
        %v7239 = vpop.f32.mrb[0].mxu0
        %v7240 = vadd.f32 %v6887, %v7239
        %v7241 = vpop.f32.mrb[0].mxu0
        %v7242 = vpop.f32.mrb[0].mxu0
        %v7243 = vadd.f32 %v6887, %v7242
        %v7244 = vpop.f32.mrb[0].mxu0
        %7245 = vmatprep.mubr.bf16.mxu0 0
        %7246 = vmatmul.mubr.bf16.gmra.mrb[0].mxu0 %v6983
        %v7247 = vpop.f32.mrb[0].mxu0
        %v7248 = vadd.f32 %v6887, %v7247
        %v7249 = vpop.f32.mrb[0].mxu0
        %v7250 = vpop.f32.mrb[0].mxu0
        %v7251 = vadd.f32 %v6887, %v7250
        %v7252 = vpop.f32.mrb[0].mxu0
        %7253 = vmatprep.mubr.bf16.mxu0 0
        %7254 = vmatmul.mubr.bf16.gmra.mrb[0].mxu0 %v6986
        %v7255 = vpop.f32.mrb[0].mxu0
        %v7256 = vadd.f32 %v6887, %v7255
        %v7257 = vpop.f32.mrb[0].mxu0
        %v7258 = vpop.f32.mrb[0].mxu0
        %v7259 = vadd.f32 %v6887, %v7258
        %v7260 = vpop.f32.mrb[0].mxu0
        %7261 = vmatprep.mubr.bf16.mxu0 0
        %7262 = vmatmul.mubr.bf16.gmra.mrb[0].mxu0 %v6989
        %v7263 = vpop.f32.mrb[0].mxu0
        %v7264 = vadd.f32 %v6887, %v7263
        %v7265 = vpop.f32.mrb[0].mxu0
        %v7266 = vpop.f32.mrb[0].mxu0
        %v7267 = vadd.f32 %v6887, %v7266
        %v7268 = vpop.f32.mrb[0].mxu0
        %7269 = vmatprep.mubr.bf16.mxu0 0
        %7270 = vmatmul.mubr.bf16.gmra.mrb[0].mxu0 %v6992
        %v7271 = vpop.f32.mrb[0].mxu0
        %v7272 = vadd.f32 %v6887, %v7271
        %v7273 = vpop.f32.mrb[0].mxu0
        %v7274 = vpop.f32.mrb[0].mxu0
        %v7275 = vadd.f32 %v6887, %v7274
        %v7276 = vpop.f32.mrb[0].mxu0
        %7277 = vmatprep.mubr.bf16.mxu0 0
        %7278 = vmatmul.mubr.bf16.gmra.mrb[0].mxu0 %v6995
        %v7279 = vpop.f32.mrb[0].mxu0
        %v7280 = vadd.f32 %v6887, %v7279
        %v7281 = vpop.f32.mrb[0].mxu0
        %v7282 = vpop.f32.mrb[0].mxu0
        %v7283 = vadd.f32 %v6887, %v7282
        %v7284 = vpop.f32.mrb[0].mxu0
        %7285 = vdwg.mxu0
        %7286 = vst [vmem:[%s272] sm:$0xff] %v7032
        %7287 = vst [vmem:[%s272 + $0x8] sm:$0xff] %v7035
        %7288 = vst [vmem:[%s272 + $0x10] sm:$0xff] %v7040
        %7289 = vst [vmem:[%s272 + $0x18] sm:$0xff] %v7043
        %7290 = vst [vmem:[%s272 + $0x20] sm:$0xff] %v7048
        %7291 = vst [vmem:[%s272 + $0x28] sm:$0xff] %v7051
        %7292 = vst [vmem:[%s272 + $0x30] sm:$0xff] %v7056
        %7293 = vst [vmem:[%s272 + $0x38] sm:$0xff] %v7059
        %7294 = vst [vmem:[%s272 + $0x40] sm:$0xff] %v7064
        %7295 = vst [vmem:[%s272 + $0x48] sm:$0xff] %v7067
        %7296 = vst [vmem:[%s272 + $0x50] sm:$0xff] %v7072
        %7297 = vst [vmem:[%s272 + $0x58] sm:$0xff] %v7075
        %7298 = vst [vmem:[%s272 + $0x60] sm:$0xff] %v7080
        %7299 = vst [vmem:[%s272 + $0x68] sm:$0xff] %v7083
        %7300 = vst [vmem:[%s272 + $0x70] sm:$0xff] %v7088
        %7301 = vst [vmem:[%s272 + $0x78] sm:$0xff] %v7091
        %7302 = vst [vmem:[%s272 + $0x80] sm:$0xff] %v7096
        %7303 = vst [vmem:[%s272 + $0x88] sm:$0xff] %v7099
        %7304 = vst [vmem:[%s272 + $0x90] sm:$0xff] %v7104
        %7305 = vst [vmem:[%s272 + $0x98] sm:$0xff] %v7107
        %7306 = vst [vmem:[%s272 + $0xa0] sm:$0xff] %v7112
        %7307 = vst [vmem:[%s272 + $0xa8] sm:$0xff] %v7115
        %7308 = vst [vmem:[%s272 + $0xb0] sm:$0xff] %v7120
        %7309 = vst [vmem:[%s272 + $0xb8] sm:$0xff] %v7123
        %7310 = vst [vmem:[%s272 + $0xc0] sm:$0xff] %v7128
        %7311 = vst [vmem:[%s272 + $0xc8] sm:$0xff] %v7131
        %7312 = vst [vmem:[%s272 + $0xd0] sm:$0xff] %v7136
        %7313 = vst [vmem:[%s272 + $0xd8] sm:$0xff] %v7139
        %7314 = vst [vmem:[%s272 + $0xe0] sm:$0xff] %v7144
        %7315 = vst [vmem:[%s272 + $0xe8] sm:$0xff] %v7147
        %7316 = vst [vmem:[%s272 + $0xf0] sm:$0xff] %v7152
        %7317 = vst [vmem:[%s272 + $0xf8] sm:$0xff] %v7155
        %7318 = vst [vmem:[%s272 + $0x100] sm:$0xff] %v7160
        %7319 = vst [vmem:[%s272 + $0x108] sm:$0xff] %v7163
        %7320 = vst [vmem:[%s272 + $0x110] sm:$0xff] %v7168
        %7321 = vst [vmem:[%s272 + $0x118] sm:$0xff] %v7171
        %7322 = vst [vmem:[%s272 + $0x120] sm:$0xff] %v7176
        %7323 = vst [vmem:[%s272 + $0x128] sm:$0xff] %v7179
        %7324 = vst [vmem:[%s272 + $0x130] sm:$0xff] %v7184
        %7325 = vst [vmem:[%s272 + $0x138] sm:$0xff] %v7187
        %7326 = vst [vmem:[%s272 + $0x140] sm:$0xff] %v7192
        %7327 = vst [vmem:[%s272 + $0x148] sm:$0xff] %v7195
        %7328 = vst [vmem:[%s272 + $0x150] sm:$0xff] %v7200
        %7329 = vst [vmem:[%s272 + $0x158] sm:$0xff] %v7203
        %7330 = vst [vmem:[%s272 + $0x160] sm:$0xff] %v7208
        %7331 = vst [vmem:[%s272 + $0x168] sm:$0xff] %v7211
        %7332 = vst [vmem:[%s272 + $0x170] sm:$0xff] %v7216
        %7333 = vst [vmem:[%s272 + $0x178] sm:$0xff] %v7219
        %7334 = vst [vmem:[%s272 + $0x180] sm:$0xff] %v7224
        %7335 = vst [vmem:[%s272 + $0x188] sm:$0xff] %v7227
        %7336 = vst [vmem:[%s272 + $0x190] sm:$0xff] %v7232
        %7337 = vst [vmem:[%s272 + $0x198] sm:$0xff] %v7235
        %7338 = vst [vmem:[%s272 + $0x1a0] sm:$0xff] %v7240
        %7339 = vst [vmem:[%s272 + $0x1a8] sm:$0xff] %v7243
        %7340 = vst [vmem:[%s272 + $0x1b0] sm:$0xff] %v7248
        %7341 = vst [vmem:[%s272 + $0x1b8] sm:$0xff] %v7251
        %7342 = vst [vmem:[%s272 + $0x1c0] sm:$0xff] %v7256
        %7343 = vst [vmem:[%s272 + $0x1c8] sm:$0xff] %v7259
        %7344 = vst [vmem:[%s272 + $0x1d0] sm:$0xff] %v7264
        %7345 = vst [vmem:[%s272 + $0x1d8] sm:$0xff] %v7267
        %7346 = vst [vmem:[%s272 + $0x1e0] sm:$0xff] %v7272
        %7347 = vst [vmem:[%s272 + $0x1e8] sm:$0xff] %v7275
        %7348 = vst [vmem:[%s272 + $0x1f0] sm:$0xff] %v7280
        %7349 = vst [vmem:[%s272 + $0x1f8] sm:$0xff] %v7283
        %s7350 = sand.u32 %s181, 1
        %s7351 = scalar_lea.sflag [#allocation3], %s7350
        %s7352 = sand.u32 %s181, 1
        %s7353 = smul.addr %s7352, 512
        %s7354 = scalar_lea.vmem [#allocation2], %s7353
        // Predicated region
        $region49: #{tpu_custom_call.1} parent=47 // pred_check
          %p7355 = pneg %p191
        $region50: #{tpu_custom_call.1} parent=47 // pred_check_branch
          %7357 = sbr.rel (%p7355) target = $region52
        $region51: #{tpu_custom_call.1} parent=47 // pred_region
          %s7358 = smul.u32 64, %s21
          %s7360 = ssub.s32 8192, 8192
          %7361 = vsyncadd %s7351, %s7360
          %s7362 = smul.addr %s7358, 128
          %s7363 = scalar_lea.hbm %s7, %s7362
          %s7364 = sshll.u32 %s7354, 4
          %s7365 = int_to_ptr.vmem [resolvable:$true] %s7364
          %7370 = dma.vmem_to_hbm [thread:$0]  %s7365, 8192, %s7363, %s7351, 128, 128, 8
        $region52: #{tpu_custom_call.1} parent=47 // pred_fallthru
          _
      $region48: #{tpu_custom_call.1} parent=5 // pred_fallthru
        _
      %p7371 = scmp.le.s32.totalorder 2, %s16
      // Predicated region
      $region53: #{tpu_custom_call.1} parent=5 // pred_check
        %p7372 = pneg %p7371
      $region54: #{tpu_custom_call.1} parent=5 // pred_check_branch
        %7374 = sbr.rel (%p7372) target = $region56
      $region55: #{tpu_custom_call.1} parent=5 // pred_region
        %s7375 = ssub.s32 %s16, 2
        // Predicated region
        $region57: #{tpu_custom_call.1} parent=55 // pred_check
          %p7376 = pneg %p197
        $region58: #{tpu_custom_call.1} parent=55 // pred_check_branch
          %7378 = sbr.rel (%p7376) target = $region60
        $region59: #{tpu_custom_call.1} parent=55 // pred_region
          %s7379 = sand.u32 %s182, 1
          %s7380 = scalar_lea.sflag [#allocation3], %s7379
          %s7381 = sand.u32 %s182, 1
          %s7382 = smul.addr %s7381, 512
          %s7383 = scalar_lea.vmem [#allocation2], %s7382
          %7384 = dma.done %s7380, 8192
        $region60: #{tpu_custom_call.1} parent=55 // pred_fallthru
          _
      $region56: #{tpu_custom_call.1} parent=5 // pred_fallthru
        _
    $region6: #{tpu_custom_call.1} parent=1 // loop_footer
      %s20 = sadd.s32 1, %s16
    $region7: #{tpu_custom_call.1} parent=1 // loop_footer_branch
      %15 = sbr.rel target = $region3
    $region8: #{tpu_custom_call.1} parent=1 // loop_exit
      _
    %7385 = vsyncpa [#allocation3], 1
    %s7386 = scalar_lea.sflag [#allocation3], 1
    %7387 = vsyncpa %s7386, 1

</llo_original>
